<compile_context>
chip_gen: v7x
topology: tpu7x:2x2x1
jax: 0.10.0
libtpu: 0.0.40
codegen_flags: <defaults>
</compile_context>

<pallas_src>
import functools

import jax
import jax.numpy as jnp
from jax.experimental import pallas as pl
from jax.experimental.pallas import tpu as pltpu  # noqa: F401  (TPU backend)

# ----------------------------------------------------------------------------
# Mini yolov3-style config (same block semantics as parse_cfg output).
# ----------------------------------------------------------------------------
ANCHORS_STR = "4,6, 8,12, 12,10, 10,14, 16,24, 24,18"

CFG_BLOCKS = [
    {"type": "net", "height": "32", "width": "32", "channels": "3"},
    # 0
    {"type": "convolutional", "batch_normalize": "1", "filters": "8",
     "size": "3", "stride": "1", "pad": "1", "activation": "leaky"},
    # 1
    {"type": "convolutional", "batch_normalize": "1", "filters": "16",
     "size": "3", "stride": "2", "pad": "1", "activation": "leaky"},
    # 2
    {"type": "convolutional", "batch_normalize": "1", "filters": "8",
     "size": "1", "stride": "1", "pad": "1", "activation": "leaky"},
    # 3
    {"type": "convolutional", "batch_normalize": "1", "filters": "16",
     "size": "3", "stride": "1", "pad": "1", "activation": "leaky"},
    # 4
    {"type": "shortcut", "from": "-3", "activation": "linear"},
    # 5
    {"type": "convolutional", "batch_normalize": "1", "filters": "32",
     "size": "3", "stride": "2", "pad": "1", "activation": "leaky"},
    # 6  (detection conv: linear activation, bias, no BN)
    {"type": "convolutional", "filters": "21",
     "size": "1", "stride": "1", "pad": "1", "activation": "linear"},
    # 7
    {"type": "yolo", "mask": "0,1,2", "anchors": ANCHORS_STR, "classes": "2"},
    # 8
    {"type": "route", "layers": "-3"},
    # 9
    {"type": "convolutional", "batch_normalize": "1", "filters": "16",
     "size": "1", "stride": "1", "pad": "1", "activation": "leaky"},
    # 10
    {"type": "upsample", "stride": "2"},
    # 11
    {"type": "route", "layers": "-1, 4"},
    # 12
    {"type": "convolutional", "batch_normalize": "1", "filters": "16",
     "size": "3", "stride": "1", "pad": "1", "activation": "leaky"},
    # 13
    {"type": "convolutional", "filters": "21",
     "size": "1", "stride": "1", "pad": "1", "activation": "linear"},
    # 14
    {"type": "yolo", "mask": "3,4,5", "anchors": ANCHORS_STR, "classes": "2"},
]

LEAKY_SLOPE = 0.1
BN_EPS = 1e-5


def _round_up(x, m):
    return (x + m - 1) // m * m


# ----------------------------------------------------------------------------
# Pallas kernels (all grid-less: the whole conv fits in VMEM at these sizes)
# ----------------------------------------------------------------------------
def _conv_bn_act_core(p_ref, w_ref, g_ref, b_ref, o_ref, r_ref, *, leaky, inv_m):
    """Fused conv matmul + training-mode BatchNorm (batch stats) + LeakyReLU
    + optional residual add.  Matmul inputs are bf16, epilogue is f32.

    Zero-padded K columns / M rows contribute exactly 0 to acc, sum and ssq,
    so stats over the real M rows stay correct with inv_m = 1/M_real.
    """
    acc = jnp.dot(p_ref[...], w_ref[...], preferred_element_type=jnp.float32)
    mean = jnp.sum(acc, axis=0, keepdims=True) * inv_m
    var = jnp.sum(acc * acc, axis=0, keepdims=True) * inv_m - mean * mean
    var = jnp.maximum(var, 0.0)
    scale = g_ref[...] * jax.lax.rsqrt(var + BN_EPS)
    bias = b_ref[...] - mean * scale
    y = acc * scale + bias
    if leaky:
        y = jnp.where(y > 0, y, LEAKY_SLOPE * y)
    if r_ref is not None:                  # fused shortcut (post-activation)
        y = y + r_ref[...]
    o_ref[...] = y


def _conv_bn_act_kernel(p_ref, w_ref, g_ref, b_ref, o_ref, *, leaky, inv_m):
    _conv_bn_act_core(p_ref, w_ref, g_ref, b_ref, o_ref, None,
                      leaky=leaky, inv_m=inv_m)


def _conv_bn_act_res_kernel(p_ref, w_ref, g_ref, b_ref, r_ref, o_ref, *,
                            leaky, inv_m):
    _conv_bn_act_core(p_ref, w_ref, g_ref, b_ref, o_ref, r_ref,
                      leaky=leaky, inv_m=inv_m)


def _conv_bias_act_kernel(p_ref, w_ref, b_ref, o_ref, *, leaky):
    """Conv matmul + bias (+ optional LeakyReLU) for the non-BN detection convs.
    No per-channel scale multiply (it would be all-ones)."""
    acc = jnp.dot(p_ref[...], w_ref[...], preferred_element_type=jnp.float32)
    y = acc + b_ref[...]
    if leaky:
        y = jnp.where(y > 0, y, LEAKY_SLOPE * y)
    o_ref[...] = y


def _add_kernel(a_ref, b_ref, o_ref):
    o_ref[...] = a_ref[...] + b_ref[...]


# ----------------------------------------------------------------------------
# Layer wrappers (internal layout: NHWC)
# ----------------------------------------------------------------------------
def _im2col_nhwc(x, kh, kw, stride, pad):
    N, H, W, C = x.shape
    Ho = (H + 2 * pad - kh) // stride + 1
    Wo = (W + 2 * pad - kw) // stride + 1
    if pad:
        x = jnp.pad(x, ((0, 0), (pad, pad), (pad, pad), (0, 0)))
    if kh == 1 and kw == 1 and stride == 1:
        return x.reshape(N * Ho * Wo, C), Ho, Wo
    taps = []
    for dy in range(kh):
        for dx in range(kw):
            taps.append(x[:, dy:dy + stride * Ho:stride,
                          dx:dx + stride * Wo:stride, :])
    patches = jnp.stack(taps, axis=3).reshape(N * Ho * Wo, kh * kw * C)
    return patches, Ho, Wo


def conv_layer(x_nhwc, p, residual=None):
    """Convolution (+ fused BatchNorm + LeakyReLU + optional residual add)
    as a single grid-less Pallas kernel."""
    N, H, W, C = x_nhwc.shape
    kh, kw = p["kh"], p["kw"]
    O, K, Kp, Np_ = p["O"], p["K"], p["Kp"], p["Np"]

    patches, Ho, Wo = _im2col_nhwc(x_nhwc, kh, kw, p["stride"], p["pad"])
    M = N * Ho * Wo
    Mp = _round_up(M, 16)          # no-op for this config (M is 128-aligned)

    if (Mp, Kp) == (M, K):
        pmat = patches.astype(jnp.bfloat16)
    else:
        pmat = jnp.zeros((Mp, Kp), jnp.bfloat16).at[:M, :K].set(
            patches.astype(jnp.bfloat16))

    if p["bn"]:
        if residual is not None:
            rmat = jnp.zeros((Mp, Np_), jnp.float32).at[:M, :O].set(
                residual.reshape(M, O))
            kernel = functools.partial(_conv_bn_act_res_kernel,
                                       leaky=p["leaky"], inv_m=1.0 / M)
            args = (pmat, p["wmat"], p["gamma_p"], p["beta_p"], rmat)
        else:
            kernel = functools.partial(_conv_bn_act_kernel,
                                       leaky=p["leaky"], inv_m=1.0 / M)
            args = (pmat, p["wmat"], p["gamma_p"], p["beta_p"])
    else:
        kernel = functools.partial(_conv_bias_act_kernel, leaky=p["leaky"])
        args = (pmat, p["wmat"], p["bias_p"])

    out = pl.pallas_call(
        kernel,
        out_shape=jax.ShapeDtypeStruct((Mp, Np_), jnp.float32),
    )(*args)

    return out[:M, :O].reshape(N, Ho, Wo, O)       # NHWC


def pallas_add(a, b):
    """Generic shortcut add (fallback path; the config's only shortcut is
    fused into its producing conv instead)."""
    shp, n = a.shape, a.size
    npad = _round_up(n, 8 * 128)
    a2 = jnp.pad(a.reshape(-1), (0, npad - n)).reshape(npad // 128, 128)
    b2 = jnp.pad(b.reshape(-1), (0, npad - n)).reshape(npad // 128, 128)
    o = pl.pallas_call(
        _add_kernel, out_shape=jax.ShapeDtypeStruct(a2.shape, a.dtype))(a2, b2)
    return o.reshape(-1)[:n].reshape(shp)


def upsample_bilinear_x2(x):
    """nn.Upsample(scale_factor=2, mode='bilinear', align_corners=False),
    NHWC, plain JAX glue (gather + lerp, not the hot path)."""
    N, H, W, C = x.shape
    Ho, Wo = 2 * H, 2 * W

    def coords(out_size, in_size):
        c = (jnp.arange(out_size, dtype=jnp.float32) + 0.5) / 2.0 - 0.5
        c = jnp.clip(c, 0.0, in_size - 1)
        i0 = jnp.floor(c).astype(jnp.int32)
        i1 = jnp.minimum(i0 + 1, in_size - 1)
        return i0, i1, c - i0

    y0, y1, wy = coords(Ho, H)
    x0, x1, wx = coords(Wo, W)

    def g(yi, xi):
        return x[:, yi, :, :][:, :, xi, :]

    wx_b = wx[None, None, :, None]
    wy_b = wy[None, :, None, None]
    top = g(y0, x0) * (1.0 - wx_b) + g(y0, x1) * wx_b
    bot = g(y1, x0) * (1.0 - wx_b) + g(y1, x1) * wx_b
    return top * (1.0 - wy_b) + bot * wy_b


def predict_transform(pred, inp_dim, anchors, num_classes):
    """YOLO head decode (matches the standard predict_transform). Input NHWC."""
    B, G, _, C = pred.shape
    stride = inp_dim // G
    bbox_attrs = 5 + num_classes
    na = len(anchors)

    # NHWC (B,G,G,na*bbox) flattens to the same (B, G*G*na, bbox) ordering as
    # the PyTorch view/transpose/view sequence on NCHW.
    p = pred.reshape(B, G * G * na, bbox_attrs)

    anch = jnp.array(anchors, jnp.float32) / stride                # (na, 2)

    xs = jax.nn.sigmoid(p[:, :, 0])
    ys = jax.nn.sigmoid(p[:, :, 1])
    obj = jax.nn.sigmoid(p[:, :, 4])

    grid = jnp.arange(G, dtype=jnp.float32)
    a, b = jnp.meshgrid(grid, grid)                                # 'xy'
    xy_off = jnp.concatenate([a.reshape(-1, 1), b.reshape(-1, 1)], axis=1)
    xy_off = jnp.tile(xy_off, (1, na)).reshape(-1, 2)[None]        # (1,G*G*na,2)

    xy = jnp.stack([xs, ys], axis=-1) + xy_off
    anch_t = jnp.tile(anch, (G * G, 1))[None]                      # (1,G*G*na,2)
    wh = jnp.exp(p[:, :, 2:4]) * anch_t
    cls = jax.nn.sigmoid(p[:, :, 5:5 + num_classes])

    box = jnp.concatenate([xy, wh], axis=-1) * stride
    return jnp.concatenate([box, obj[..., None], cls], axis=-1)


# ----------------------------------------------------------------------------
# Model construction & forward pass (mirrors Darknet.forward semantics)
# ----------------------------------------------------------------------------
def init_params(blocks, key):
    """Synthesizes weights and pre-packs them in MXU-friendly layout:
    weight matrix (Kp, 128-padded Cout) in bf16, per-channel vectors padded."""
    params = []
    prev_filters = int(blocks[0].get("channels", 3))
    output_filters = []
    for i, blk in enumerate(blocks[1:]):
        p = None
        filters = prev_filters
        if blk["type"] == "convolutional":
            bn = int(blk.get("batch_normalize", 0))
            filters = int(blk["filters"])
            size = int(blk["size"])
            stride = int(blk["stride"])
            pad = (size - 1) // 2 if int(blk["pad"]) else 0
            key, k1, k2, k3 = jax.random.split(key, 4)
            w = 0.1 * jax.random.normal(
                k1, (filters, prev_filters, size, size), jnp.float32)
            K = size * size * prev_filters
            Kp, Np_ = _round_up(K, 128), _round_up(filters, 128)
            wmat = jnp.transpose(w, (2, 3, 1, 0)).reshape(K, filters)
            wpad = jnp.zeros((Kp, Np_), jnp.bfloat16).at[:K, :filters].set(
                wmat.astype(jnp.bfloat16))
            p = {"wmat": wpad, "kh": size, "kw": size, "stride": stride,
                 "pad": pad, "bn": bool(bn),
                 "leaky": blk["activation"] == "leaky",
                 "O": filters, "K": K, "Kp": Kp, "Np": Np_}
            if bn:
                gamma = 1.0 + 0.1 * jax.random.normal(k2, (filters,), jnp.float32)
                beta = 0.1 * jax.random.normal(k3, (filters,), jnp.float32)
                p["gamma_p"] = jnp.zeros((1, Np_), jnp.float32).at[0, :filters].set(gamma)
                p["beta_p"] = jnp.zeros((1, Np_), jnp.float32).at[0, :filters].set(beta)
            else:
                bias = 0.1 * jax.random.normal(k2, (filters,), jnp.float32)
                p["bias_p"] = jnp.zeros((1, Np_), jnp.float32).at[0, :filters].set(bias)
        elif blk["type"] == "route":
            layers = [int(a) for a in blk["layers"].split(",")]
            start = layers[0]
            end = layers[1] if len(layers) > 1 else 0
            if start > 0:
                start -= i
            if end > 0:
                end -= i
            if end < 0:
                filters = output_filters[i + start] + output_filters[i + end]
            else:
                filters = output_filters[i + start]
        # upsample / shortcut / yolo: filters unchanged
        params.append(p)
        prev_filters = filters
        output_filters.append(filters)
    return params


def build_fusion_plan(blocks):
    """conv layer index -> residual source index, when the following shortcut
    can be folded into the conv epilogue (producer output not used elsewhere)."""
    body = blocks[1:]
    n = len(body)
    refs = {j: 0 for j in range(n)}
    for j, blk in enumerate(body):
        if blk["type"] == "route":
            for a in blk["layers"].split(","):
                a = int(a)
                if a > 0:
                    a -= j
                refs[j + a] += 1
        elif blk["type"] == "shortcut":
            refs[j + int(blk["from"])] += 1
            refs[j - 1] += 1
    plan = {}
    for j, blk in enumerate(body):
        if blk["type"] != "shortcut":
            continue
        p_idx = j - 1
        if body[p_idx]["type"] == "convolutional" and refs[p_idx] == 1:
            plan[p_idx] = j + int(blk["from"])
    return plan


def _conv_out_shape(x_shape, p):
    N, H, W, _ = x_shape
    Ho = (H + 2 * p["pad"] - p["kh"]) // p["stride"] + 1
    Wo = (W + 2 * p["pad"] - p["kw"]) // p["stride"] + 1
    return (N, Ho, Wo, p["O"])


def darknet_forward(params, blocks, x_nchw):
    net_info = blocks[0]
    fusion_plan = build_fusion_plan(blocks)
    x = jnp.transpose(x_nchw, (0, 2, 3, 1))       # NCHW -> NHWC, once
    outputs = {}
    fused = {}
    detections = None
    for i, blk in enumerate(blocks[1:]):
        t = blk["type"]
        if t == "convolutional":
            res = None
            if i in fusion_plan:
                cand = outputs[fusion_plan[i]]
                if cand.shape == _conv_out_shape(x.shape, params[i]):
                    res = cand
            x = conv_layer(x, params[i], residual=res)
            fused[i] = res is not None
        elif t == "upsample":
            x = upsample_bilinear_x2(x)
        elif t == "route":
            layers = [int(a) for a in blk["layers"].split(",")]
            if layers[0] > 0:
                layers[0] -= i
            if len(layers) == 1:
                x = outputs[i + layers[0]]
            else:
                if layers[1] > 0:
                    layers[1] -= i
                x = jnp.concatenate(
                    [outputs[i + layers[0]], outputs[i + layers[1]]], axis=-1)
        elif t == "shortcut":
            if fused.get(i - 1, False):
                x = outputs[i - 1]          # add already folded into the conv
            else:
                x = pallas_add(outputs[i - 1], outputs[i + int(blk["from"])])
        elif t == "yolo":
            mask = [int(m) for m in blk["mask"].split(",")]
            anc = [int(a) for a in blk["anchors"].split(",")]
            anc = [(anc[k], anc[k + 1]) for k in range(0, len(anc), 2)]
            anc = [anc[m] for m in mask]
            inp_dim = int(net_info["height"])
            num_classes = int(blk["classes"])
            x = predict_transform(x, inp_dim, anc, num_classes)
            detections = x if detections is None else jnp.concatenate(
                [detections, x], axis=1)
        outputs[i] = x
    return detections


# ----------------------------------------------------------------------------
if __name__ == "__main__":
    key = jax.random.PRNGKey(0)
    kx, kp = jax.random.split(key)
    x = jax.random.normal(kx, (2, 3, 32, 32), jnp.float32)   # NCHW, like PyTorch
    params = init_params(CFG_BLOCKS, kp)

    forward = jax.jit(functools.partial(darknet_forward, params, CFG_BLOCKS))
    det = forward(x)
    det = jax.block_until_ready(det)

    # two YOLO heads: 8*8*3 + 16*16*3 = 960 boxes, 5+2 attrs each
    assert det.shape == (2, 960, 7), det.shape
    assert bool(jnp.all(jnp.isfinite(det)))
    print("KERNEL_OK")
</pallas_src>

<mosaic_0001>
module attributes {stable_mosaic.version = 11 : i64} {
  func.func @_conv_bn_act_kernel(%arg0: memref<2048x128xbf16, #tpu.memory_space<vmem>>, %arg1: memref<128x128xbf16, #tpu.memory_space<vmem>>, %arg2: memref<1x128xf32, #tpu.memory_space<vmem>>, %arg3: memref<1x128xf32, #tpu.memory_space<vmem>>, %arg4: memref<2048x128xf32, #tpu.memory_space<vmem>>) attributes {dimension_semantics = [], scalar_prefetch = 0 : i64, scratch_operands = 0 : i64, tpu.core_type = #tpu.core_type<tc>} {
    %c0 = arith.constant 0 : index
    %c0_0 = arith.constant 0 : index
    %0 = vector.load %arg0[%c0, %c0_0] : memref<2048x128xbf16, #tpu.memory_space<vmem>>, vector<2048x128xbf16>
    %c0_1 = arith.constant 0 : index
    %c0_2 = arith.constant 0 : index
    %1 = vector.load %arg1[%c0_1, %c0_2] : memref<128x128xbf16, #tpu.memory_space<vmem>>, vector<128x128xbf16>
    %cst = arith.constant dense<0.000000e+00> : vector<2048x128xf32>
    %2 = tpu.matmul %0, %1, %cst {dimension_numbers = #tpu.dot_dimension_numbers<[1], [0], [0], [1], [0, 0, 1, 1], [], []>} : vector<2048x128xbf16>, vector<128x128xbf16>, vector<2048x128xf32> -> vector<2048x128xf32>
    %cst_3 = arith.constant dense<0.000000e+00> : vector<128xf32>
    %3 = vector.multi_reduction <add>, %2, %cst_3 [0] : vector<2048x128xf32> to vector<128xf32>
    %4 = vector.shape_cast %3 : vector<128xf32> to vector<1x128xf32>
    %cst_4 = arith.constant 4.8828125E-4 : f32
    %5 = vector.broadcast %cst_4 : f32 to vector<1x128xf32>
    %6 = arith.mulf %4, %5 : vector<1x128xf32>
    %7 = arith.mulf %2, %2 : vector<2048x128xf32>
    %cst_5 = arith.constant dense<0.000000e+00> : vector<128xf32>
    %8 = vector.multi_reduction <add>, %7, %cst_5 [0] : vector<2048x128xf32> to vector<128xf32>
    %9 = vector.shape_cast %8 : vector<128xf32> to vector<1x128xf32>
    %cst_6 = arith.constant 4.8828125E-4 : f32
    %10 = vector.broadcast %cst_6 : f32 to vector<1x128xf32>
    %11 = arith.mulf %9, %10 : vector<1x128xf32>
    %12 = arith.mulf %6, %6 : vector<1x128xf32>
    %13 = arith.subf %11, %12 : vector<1x128xf32>
    %cst_7 = arith.constant 0.000000e+00 : f32
    %14 = vector.broadcast %cst_7 : f32 to vector<1x128xf32>
    %15 = arith.maximumf %13, %14 : vector<1x128xf32>
    %c0_8 = arith.constant 0 : index
    %c0_9 = arith.constant 0 : index
    %16 = vector.load %arg2[%c0_8, %c0_9] : memref<1x128xf32, #tpu.memory_space<vmem>>, vector<1x128xf32>
    %cst_10 = arith.constant 9.99999974E-6 : f32
    %17 = vector.broadcast %cst_10 : f32 to vector<1x128xf32>
    %18 = arith.addf %15, %17 : vector<1x128xf32>
    %19 = math.rsqrt %18 : vector<1x128xf32>
    %20 = arith.mulf %16, %19 : vector<1x128xf32>
    %c0_11 = arith.constant 0 : index
    %c0_12 = arith.constant 0 : index
    %21 = vector.load %arg3[%c0_11, %c0_12] : memref<1x128xf32, #tpu.memory_space<vmem>>, vector<1x128xf32>
    %22 = arith.mulf %6, %20 : vector<1x128xf32>
    %23 = arith.subf %21, %22 : vector<1x128xf32>
    %24 = vector.broadcast %20 : vector<1x128xf32> to vector<2048x128xf32>
    %25 = arith.mulf %2, %24 : vector<2048x128xf32>
    %26 = vector.broadcast %23 : vector<1x128xf32> to vector<2048x128xf32>
    %27 = arith.addf %25, %26 : vector<2048x128xf32>
    %cst_13 = arith.constant 0.000000e+00 : f32
    %28 = vector.broadcast %cst_13 : f32 to vector<2048x128xf32>
    %29 = arith.cmpf ogt, %27, %28 : vector<2048x128xf32>
    %cst_14 = arith.constant 1.000000e-01 : f32
    %30 = vector.broadcast %cst_14 : f32 to vector<2048x128xf32>
    %31 = arith.mulf %30, %27 : vector<2048x128xf32>
    %32 = arith.select %29, %27, %31 : vector<2048x128xi1>, vector<2048x128xf32>
    %c0_15 = arith.constant 0 : index
    %c0_16 = arith.constant 0 : index
    %33 = vector.load %arg4[%c0_15, %c0_16] : memref<2048x128xf32, #tpu.memory_space<vmem>>, vector<2048x128xf32>
    tpu.vector_store %arg4[%c0_15, %c0_16], %32 {strides = array<i32>} : memref<2048x128xf32, #tpu.memory_space<vmem>>, vector<2048x128xf32>,
    return
  }
}

module attributes {stable_mosaic.version = 11 : i64} {
  func.func @_conv_bn_act_kernel(%arg0: memref<512x128xbf16, #tpu.memory_space<vmem>>, %arg1: memref<128x128xbf16, #tpu.memory_space<vmem>>, %arg2: memref<1x128xf32, #tpu.memory_space<vmem>>, %arg3: memref<1x128xf32, #tpu.memory_space<vmem>>, %arg4: memref<512x128xf32, #tpu.memory_space<vmem>>) attributes {dimension_semantics = [], scalar_prefetch = 0 : i64, scratch_operands = 0 : i64, tpu.core_type = #tpu.core_type<tc>} {
    %c0 = arith.constant 0 : index
    %c0_0 = arith.constant 0 : index
    %0 = vector.load %arg0[%c0, %c0_0] : memref<512x128xbf16, #tpu.memory_space<vmem>>, vector<512x128xbf16>
    %c0_1 = arith.constant 0 : index
    %c0_2 = arith.constant 0 : index
    %1 = vector.load %arg1[%c0_1, %c0_2] : memref<128x128xbf16, #tpu.memory_space<vmem>>, vector<128x128xbf16>
    %cst = arith.constant dense<0.000000e+00> : vector<512x128xf32>
    %2 = tpu.matmul %0, %1, %cst {dimension_numbers = #tpu.dot_dimension_numbers<[1], [0], [0], [1], [0, 0, 1, 1], [], []>} : vector<512x128xbf16>, vector<128x128xbf16>, vector<512x128xf32> -> vector<512x128xf32>
    %cst_3 = arith.constant dense<0.000000e+00> : vector<128xf32>
    %3 = vector.multi_reduction <add>, %2, %cst_3 [0] : vector<512x128xf32> to vector<128xf32>
    %4 = vector.shape_cast %3 : vector<128xf32> to vector<1x128xf32>
    %cst_4 = arith.constant 0.001953125 : f32
    %5 = vector.broadcast %cst_4 : f32 to vector<1x128xf32>
    %6 = arith.mulf %4, %5 : vector<1x128xf32>
    %7 = arith.mulf %2, %2 : vector<512x128xf32>
    %cst_5 = arith.constant dense<0.000000e+00> : vector<128xf32>
    %8 = vector.multi_reduction <add>, %7, %cst_5 [0] : vector<512x128xf32> to vector<128xf32>
    %9 = vector.shape_cast %8 : vector<128xf32> to vector<1x128xf32>
    %cst_6 = arith.constant 0.001953125 : f32
    %10 = vector.broadcast %cst_6 : f32 to vector<1x128xf32>
    %11 = arith.mulf %9, %10 : vector<1x128xf32>
    %12 = arith.mulf %6, %6 : vector<1x128xf32>
    %13 = arith.subf %11, %12 : vector<1x128xf32>
    %cst_7 = arith.constant 0.000000e+00 : f32
    %14 = vector.broadcast %cst_7 : f32 to vector<1x128xf32>
    %15 = arith.maximumf %13, %14 : vector<1x128xf32>
    %c0_8 = arith.constant 0 : index
    %c0_9 = arith.constant 0 : index
    %16 = vector.load %arg2[%c0_8, %c0_9] : memref<1x128xf32, #tpu.memory_space<vmem>>, vector<1x128xf32>
    %cst_10 = arith.constant 9.99999974E-6 : f32
    %17 = vector.broadcast %cst_10 : f32 to vector<1x128xf32>
    %18 = arith.addf %15, %17 : vector<1x128xf32>
    %19 = math.rsqrt %18 : vector<1x128xf32>
    %20 = arith.mulf %16, %19 : vector<1x128xf32>
    %c0_11 = arith.constant 0 : index
    %c0_12 = arith.constant 0 : index
    %21 = vector.load %arg3[%c0_11, %c0_12] : memref<1x128xf32, #tpu.memory_space<vmem>>, vector<1x128xf32>
    %22 = arith.mulf %6, %20 : vector<1x128xf32>
    %23 = arith.subf %21, %22 : vector<1x128xf32>
    %24 = vector.broadcast %20 : vector<1x128xf32> to vector<512x128xf32>
    %25 = arith.mulf %2, %24 : vector<512x128xf32>
    %26 = vector.broadcast %23 : vector<1x128xf32> to vector<512x128xf32>
    %27 = arith.addf %25, %26 : vector<512x128xf32>
    %cst_13 = arith.constant 0.000000e+00 : f32
    %28 = vector.broadcast %cst_13 : f32 to vector<512x128xf32>
    %29 = arith.cmpf ogt, %27, %28 : vector<512x128xf32>
    %cst_14 = arith.constant 1.000000e-01 : f32
    %30 = vector.broadcast %cst_14 : f32 to vector<512x128xf32>
    %31 = arith.mulf %30, %27 : vector<512x128xf32>
    %32 = arith.select %29, %27, %31 : vector<512x128xi1>, vector<512x128xf32>
    %c0_15 = arith.constant 0 : index
    %c0_16 = arith.constant 0 : index
    %33 = vector.load %arg4[%c0_15, %c0_16] : memref<512x128xf32, #tpu.memory_space<vmem>>, vector<512x128xf32>
    tpu.vector_store %arg4[%c0_15, %c0_16], %32 {strides = array<i32>} : memref<512x128xf32, #tpu.memory_space<vmem>>, vector<512x128xf32>,
    return
  }
}

module attributes {stable_mosaic.version = 11 : i64} {
  func.func @_conv_bn_act_res_kernel(%arg0: memref<512x128xbf16, #tpu.memory_space<vmem>>, %arg1: memref<128x128xbf16, #tpu.memory_space<vmem>>, %arg2: memref<1x128xf32, #tpu.memory_space<vmem>>, %arg3: memref<1x128xf32, #tpu.memory_space<vmem>>, %arg4: memref<512x128xf32, #tpu.memory_space<vmem>>, %arg5: memref<512x128xf32, #tpu.memory_space<vmem>>) attributes {dimension_semantics = [], scalar_prefetch = 0 : i64, scratch_operands = 0 : i64, tpu.core_type = #tpu.core_type<tc>} {
    %c0 = arith.constant 0 : index
    %c0_0 = arith.constant 0 : index
    %0 = vector.load %arg0[%c0, %c0_0] : memref<512x128xbf16, #tpu.memory_space<vmem>>, vector<512x128xbf16>
    %c0_1 = arith.constant 0 : index
    %c0_2 = arith.constant 0 : index
    %1 = vector.load %arg1[%c0_1, %c0_2] : memref<128x128xbf16, #tpu.memory_space<vmem>>, vector<128x128xbf16>
    %cst = arith.constant dense<0.000000e+00> : vector<512x128xf32>
    %2 = tpu.matmul %0, %1, %cst {dimension_numbers = #tpu.dot_dimension_numbers<[1], [0], [0], [1], [0, 0, 1, 1], [], []>} : vector<512x128xbf16>, vector<128x128xbf16>, vector<512x128xf32> -> vector<512x128xf32>
    %cst_3 = arith.constant dense<0.000000e+00> : vector<128xf32>
    %3 = vector.multi_reduction <add>, %2, %cst_3 [0] : vector<512x128xf32> to vector<128xf32>
    %4 = vector.shape_cast %3 : vector<128xf32> to vector<1x128xf32>
    %cst_4 = arith.constant 0.001953125 : f32
    %5 = vector.broadcast %cst_4 : f32 to vector<1x128xf32>
    %6 = arith.mulf %4, %5 : vector<1x128xf32>
    %7 = arith.mulf %2, %2 : vector<512x128xf32>
    %cst_5 = arith.constant dense<0.000000e+00> : vector<128xf32>
    %8 = vector.multi_reduction <add>, %7, %cst_5 [0] : vector<512x128xf32> to vector<128xf32>
    %9 = vector.shape_cast %8 : vector<128xf32> to vector<1x128xf32>
    %cst_6 = arith.constant 0.001953125 : f32
    %10 = vector.broadcast %cst_6 : f32 to vector<1x128xf32>
    %11 = arith.mulf %9, %10 : vector<1x128xf32>
    %12 = arith.mulf %6, %6 : vector<1x128xf32>
    %13 = arith.subf %11, %12 : vector<1x128xf32>
    %cst_7 = arith.constant 0.000000e+00 : f32
    %14 = vector.broadcast %cst_7 : f32 to vector<1x128xf32>
    %15 = arith.maximumf %13, %14 : vector<1x128xf32>
    %c0_8 = arith.constant 0 : index
    %c0_9 = arith.constant 0 : index
    %16 = vector.load %arg2[%c0_8, %c0_9] : memref<1x128xf32, #tpu.memory_space<vmem>>, vector<1x128xf32>
    %cst_10 = arith.constant 9.99999974E-6 : f32
    %17 = vector.broadcast %cst_10 : f32 to vector<1x128xf32>
    %18 = arith.addf %15, %17 : vector<1x128xf32>
    %19 = math.rsqrt %18 : vector<1x128xf32>
    %20 = arith.mulf %16, %19 : vector<1x128xf32>
    %c0_11 = arith.constant 0 : index
    %c0_12 = arith.constant 0 : index
    %21 = vector.load %arg3[%c0_11, %c0_12] : memref<1x128xf32, #tpu.memory_space<vmem>>, vector<1x128xf32>
    %22 = arith.mulf %6, %20 : vector<1x128xf32>
    %23 = arith.subf %21, %22 : vector<1x128xf32>
    %24 = vector.broadcast %20 : vector<1x128xf32> to vector<512x128xf32>
    %25 = arith.mulf %2, %24 : vector<512x128xf32>
    %26 = vector.broadcast %23 : vector<1x128xf32> to vector<512x128xf32>
    %27 = arith.addf %25, %26 : vector<512x128xf32>
    %cst_13 = arith.constant 0.000000e+00 : f32
    %28 = vector.broadcast %cst_13 : f32 to vector<512x128xf32>
    %29 = arith.cmpf ogt, %27, %28 : vector<512x128xf32>
    %cst_14 = arith.constant 1.000000e-01 : f32
    %30 = vector.broadcast %cst_14 : f32 to vector<512x128xf32>
    %31 = arith.mulf %30, %27 : vector<512x128xf32>
    %32 = arith.select %29, %27, %31 : vector<512x128xi1>, vector<512x128xf32>
    %c0_15 = arith.constant 0 : index
    %c0_16 = arith.constant 0 : index
    %33 = vector.load %arg4[%c0_15, %c0_16] : memref<512x128xf32, #tpu.memory_space<vmem>>, vector<512x128xf32>
    %34 = arith.addf %32, %33 : vector<512x128xf32>
    %c0_17 = arith.constant 0 : index
    %c0_18 = arith.constant 0 : index
    %35 = vector.load %arg5[%c0_17, %c0_18] : memref<512x128xf32, #tpu.memory_space<vmem>>, vector<512x128xf32>
    tpu.vector_store %arg5[%c0_17, %c0_18], %34 {strides = array<i32>} : memref<512x128xf32, #tpu.memory_space<vmem>>, vector<512x128xf32>,
    return
  }
}

module attributes {stable_mosaic.version = 11 : i64} {
  func.func @_conv_bn_act_kernel(%arg0: memref<128x256xbf16, #tpu.memory_space<vmem>>, %arg1: memref<256x128xbf16, #tpu.memory_space<vmem>>, %arg2: memref<1x128xf32, #tpu.memory_space<vmem>>, %arg3: memref<1x128xf32, #tpu.memory_space<vmem>>, %arg4: memref<128x128xf32, #tpu.memory_space<vmem>>) attributes {dimension_semantics = [], scalar_prefetch = 0 : i64, scratch_operands = 0 : i64, tpu.core_type = #tpu.core_type<tc>} {
    %c0 = arith.constant 0 : index
    %c0_0 = arith.constant 0 : index
    %0 = vector.load %arg0[%c0, %c0_0] : memref<128x256xbf16, #tpu.memory_space<vmem>>, vector<128x256xbf16>
    %c0_1 = arith.constant 0 : index
    %c0_2 = arith.constant 0 : index
    %1 = vector.load %arg1[%c0_1, %c0_2] : memref<256x128xbf16, #tpu.memory_space<vmem>>, vector<256x128xbf16>
    %cst = arith.constant dense<0.000000e+00> : vector<128x128xf32>
    %2 = tpu.matmul %0, %1, %cst {dimension_numbers = #tpu.dot_dimension_numbers<[1], [0], [0], [1], [0, 0, 1, 1], [], []>} : vector<128x256xbf16>, vector<256x128xbf16>, vector<128x128xf32> -> vector<128x128xf32>
    %cst_3 = arith.constant dense<0.000000e+00> : vector<128xf32>
    %3 = vector.multi_reduction <add>, %2, %cst_3 [0] : vector<128x128xf32> to vector<128xf32>
    %4 = vector.shape_cast %3 : vector<128xf32> to vector<1x128xf32>
    %cst_4 = arith.constant 7.812500e-03 : f32
    %5 = vector.broadcast %cst_4 : f32 to vector<1x128xf32>
    %6 = arith.mulf %4, %5 : vector<1x128xf32>
    %7 = arith.mulf %2, %2 : vector<128x128xf32>
    %cst_5 = arith.constant dense<0.000000e+00> : vector<128xf32>
    %8 = vector.multi_reduction <add>, %7, %cst_5 [0] : vector<128x128xf32> to vector<128xf32>
    %9 = vector.shape_cast %8 : vector<128xf32> to vector<1x128xf32>
    %cst_6 = arith.constant 7.812500e-03 : f32
    %10 = vector.broadcast %cst_6 : f32 to vector<1x128xf32>
    %11 = arith.mulf %9, %10 : vector<1x128xf32>
    %12 = arith.mulf %6, %6 : vector<1x128xf32>
    %13 = arith.subf %11, %12 : vector<1x128xf32>
    %cst_7 = arith.constant 0.000000e+00 : f32
    %14 = vector.broadcast %cst_7 : f32 to vector<1x128xf32>
    %15 = arith.maximumf %13, %14 : vector<1x128xf32>
    %c0_8 = arith.constant 0 : index
    %c0_9 = arith.constant 0 : index
    %16 = vector.load %arg2[%c0_8, %c0_9] : memref<1x128xf32, #tpu.memory_space<vmem>>, vector<1x128xf32>
    %cst_10 = arith.constant 9.99999974E-6 : f32
    %17 = vector.broadcast %cst_10 : f32 to vector<1x128xf32>
    %18 = arith.addf %15, %17 : vector<1x128xf32>
    %19 = math.rsqrt %18 : vector<1x128xf32>
    %20 = arith.mulf %16, %19 : vector<1x128xf32>
    %c0_11 = arith.constant 0 : index
    %c0_12 = arith.constant 0 : index
    %21 = vector.load %arg3[%c0_11, %c0_12] : memref<1x128xf32, #tpu.memory_space<vmem>>, vector<1x128xf32>
    %22 = arith.mulf %6, %20 : vector<1x128xf32>
    %23 = arith.subf %21, %22 : vector<1x128xf32>
    %24 = vector.broadcast %20 : vector<1x128xf32> to vector<128x128xf32>
    %25 = arith.mulf %2, %24 : vector<128x128xf32>
    %26 = vector.broadcast %23 : vector<1x128xf32> to vector<128x128xf32>
    %27 = arith.addf %25, %26 : vector<128x128xf32>
    %cst_13 = arith.constant 0.000000e+00 : f32
    %28 = vector.broadcast %cst_13 : f32 to vector<128x128xf32>
    %29 = arith.cmpf ogt, %27, %28 : vector<128x128xf32>
    %cst_14 = arith.constant 1.000000e-01 : f32
    %30 = vector.broadcast %cst_14 : f32 to vector<128x128xf32>
    %31 = arith.mulf %30, %27 : vector<128x128xf32>
    %32 = arith.select %29, %27, %31 : vector<128x128xi1>, vector<128x128xf32>
    %c0_15 = arith.constant 0 : index
    %c0_16 = arith.constant 0 : index
    %33 = vector.load %arg4[%c0_15, %c0_16] : memref<128x128xf32, #tpu.memory_space<vmem>>, vector<128x128xf32>
    tpu.vector_store %arg4[%c0_15, %c0_16], %32 {strides = array<i32>} : memref<128x128xf32, #tpu.memory_space<vmem>>, vector<128x128xf32>,
    return
  }
}

module attributes {stable_mosaic.version = 11 : i64} {
  func.func @_conv_bn_act_kernel(%arg0: memref<128x128xbf16, #tpu.memory_space<vmem>>, %arg1: memref<128x128xbf16, #tpu.memory_space<vmem>>, %arg2: memref<1x128xf32, #tpu.memory_space<vmem>>, %arg3: memref<1x128xf32, #tpu.memory_space<vmem>>, %arg4: memref<128x128xf32, #tpu.memory_space<vmem>>) attributes {dimension_semantics = [], scalar_prefetch = 0 : i64, scratch_operands = 0 : i64, tpu.core_type = #tpu.core_type<tc>} {
    %c0 = arith.constant 0 : index
    %c0_0 = arith.constant 0 : index
    %0 = vector.load %arg0[%c0, %c0_0] : memref<128x128xbf16, #tpu.memory_space<vmem>>, vector<128x128xbf16>
    %c0_1 = arith.constant 0 : index
    %c0_2 = arith.constant 0 : index
    %1 = vector.load %arg1[%c0_1, %c0_2] : memref<128x128xbf16, #tpu.memory_space<vmem>>, vector<128x128xbf16>
    %cst = arith.constant dense<0.000000e+00> : vector<128x128xf32>
    %2 = tpu.matmul %0, %1, %cst {dimension_numbers = #tpu.dot_dimension_numbers<[1], [0], [0], [1], [0, 0, 1, 1], [], []>} : vector<128x128xbf16>, vector<128x128xbf16>, vector<128x128xf32> -> vector<128x128xf32>
    %cst_3 = arith.constant dense<0.000000e+00> : vector<128xf32>
    %3 = vector.multi_reduction <add>, %2, %cst_3 [0] : vector<128x128xf32> to vector<128xf32>
    %4 = vector.shape_cast %3 : vector<128xf32> to vector<1x128xf32>
    %cst_4 = arith.constant 7.812500e-03 : f32
    %5 = vector.broadcast %cst_4 : f32 to vector<1x128xf32>
    %6 = arith.mulf %4, %5 : vector<1x128xf32>
    %7 = arith.mulf %2, %2 : vector<128x128xf32>
    %cst_5 = arith.constant dense<0.000000e+00> : vector<128xf32>
    %8 = vector.multi_reduction <add>, %7, %cst_5 [0] : vector<128x128xf32> to vector<128xf32>
    %9 = vector.shape_cast %8 : vector<128xf32> to vector<1x128xf32>
    %cst_6 = arith.constant 7.812500e-03 : f32
    %10 = vector.broadcast %cst_6 : f32 to vector<1x128xf32>
    %11 = arith.mulf %9, %10 : vector<1x128xf32>
    %12 = arith.mulf %6, %6 : vector<1x128xf32>
    %13 = arith.subf %11, %12 : vector<1x128xf32>
    %cst_7 = arith.constant 0.000000e+00 : f32
    %14 = vector.broadcast %cst_7 : f32 to vector<1x128xf32>
    %15 = arith.maximumf %13, %14 : vector<1x128xf32>
    %c0_8 = arith.constant 0 : index
    %c0_9 = arith.constant 0 : index
    %16 = vector.load %arg2[%c0_8, %c0_9] : memref<1x128xf32, #tpu.memory_space<vmem>>, vector<1x128xf32>
    %cst_10 = arith.constant 9.99999974E-6 : f32
    %17 = vector.broadcast %cst_10 : f32 to vector<1x128xf32>
    %18 = arith.addf %15, %17 : vector<1x128xf32>
    %19 = math.rsqrt %18 : vector<1x128xf32>
    %20 = arith.mulf %16, %19 : vector<1x128xf32>
    %c0_11 = arith.constant 0 : index
    %c0_12 = arith.constant 0 : index
    %21 = vector.load %arg3[%c0_11, %c0_12] : memref<1x128xf32, #tpu.memory_space<vmem>>, vector<1x128xf32>
    %22 = arith.mulf %6, %20 : vector<1x128xf32>
    %23 = arith.subf %21, %22 : vector<1x128xf32>
    %24 = vector.broadcast %20 : vector<1x128xf32> to vector<128x128xf32>
    %25 = arith.mulf %2, %24 : vector<128x128xf32>
    %26 = vector.broadcast %23 : vector<1x128xf32> to vector<128x128xf32>
    %27 = arith.addf %25, %26 : vector<128x128xf32>
    %cst_13 = arith.constant 0.000000e+00 : f32
    %28 = vector.broadcast %cst_13 : f32 to vector<128x128xf32>
    %29 = arith.cmpf ogt, %27, %28 : vector<128x128xf32>
    %cst_14 = arith.constant 1.000000e-01 : f32
    %30 = vector.broadcast %cst_14 : f32 to vector<128x128xf32>
    %31 = arith.mulf %30, %27 : vector<128x128xf32>
    %32 = arith.select %29, %27, %31 : vector<128x128xi1>, vector<128x128xf32>
    %c0_15 = arith.constant 0 : index
    %c0_16 = arith.constant 0 : index
    %33 = vector.load %arg4[%c0_15, %c0_16] : memref<128x128xf32, #tpu.memory_space<vmem>>, vector<128x128xf32>
    tpu.vector_store %arg4[%c0_15, %c0_16], %32 {strides = array<i32>} : memref<128x128xf32, #tpu.memory_space<vmem>>, vector<128x128xf32>,
    return
  }
}

module attributes {stable_mosaic.version = 11 : i64} {
  func.func @_conv_bias_act_kernel(%arg0: memref<128x128xbf16, #tpu.memory_space<vmem>>, %arg1: memref<128x128xbf16, #tpu.memory_space<vmem>>, %arg2: memref<1x128xf32, #tpu.memory_space<vmem>>, %arg3: memref<128x128xf32, #tpu.memory_space<vmem>>) attributes {dimension_semantics = [], scalar_prefetch = 0 : i64, scratch_operands = 0 : i64, tpu.core_type = #tpu.core_type<tc>} {
    %c0 = arith.constant 0 : index
    %c0_0 = arith.constant 0 : index
    %0 = vector.load %arg0[%c0, %c0_0] : memref<128x128xbf16, #tpu.memory_space<vmem>>, vector<128x128xbf16>
    %c0_1 = arith.constant 0 : index
    %c0_2 = arith.constant 0 : index
    %1 = vector.load %arg1[%c0_1, %c0_2] : memref<128x128xbf16, #tpu.memory_space<vmem>>, vector<128x128xbf16>
    %cst = arith.constant dense<0.000000e+00> : vector<128x128xf32>
    %2 = tpu.matmul %0, %1, %cst {dimension_numbers = #tpu.dot_dimension_numbers<[1], [0], [0], [1], [0, 0, 1, 1], [], []>} : vector<128x128xbf16>, vector<128x128xbf16>, vector<128x128xf32> -> vector<128x128xf32>
    %c0_3 = arith.constant 0 : index
    %c0_4 = arith.constant 0 : index
    %3 = vector.load %arg2[%c0_3, %c0_4] : memref<1x128xf32, #tpu.memory_space<vmem>>, vector<1x128xf32>
    %4 = vector.broadcast %3 : vector<1x128xf32> to vector<128x128xf32>
    %5 = arith.addf %2, %4 : vector<128x128xf32>
    %c0_5 = arith.constant 0 : index
    %c0_6 = arith.constant 0 : index
    %6 = vector.load %arg3[%c0_5, %c0_6] : memref<128x128xf32, #tpu.memory_space<vmem>>, vector<128x128xf32>
    tpu.vector_store %arg3[%c0_5, %c0_6], %5 {strides = array<i32>} : memref<128x128xf32, #tpu.memory_space<vmem>>, vector<128x128xf32>,
    return
  }
}

module attributes {stable_mosaic.version = 11 : i64} {
  func.func @_conv_bn_act_kernel(%arg0: memref<512x384xbf16, #tpu.memory_space<vmem>>, %arg1: memref<384x128xbf16, #tpu.memory_space<vmem>>, %arg2: memref<1x128xf32, #tpu.memory_space<vmem>>, %arg3: memref<1x128xf32, #tpu.memory_space<vmem>>, %arg4: memref<512x128xf32, #tpu.memory_space<vmem>>) attributes {dimension_semantics = [], scalar_prefetch = 0 : i64, scratch_operands = 0 : i64, tpu.core_type = #tpu.core_type<tc>} {
    %c0 = arith.constant 0 : index
    %c0_0 = arith.constant 0 : index
    %0 = vector.load %arg0[%c0, %c0_0] : memref<512x384xbf16, #tpu.memory_space<vmem>>, vector<512x384xbf16>
    %c0_1 = arith.constant 0 : index
    %c0_2 = arith.constant 0 : index
    %1 = vector.load %arg1[%c0_1, %c0_2] : memref<384x128xbf16, #tpu.memory_space<vmem>>, vector<384x128xbf16>
    %cst = arith.constant dense<0.000000e+00> : vector<512x128xf32>
    %2 = tpu.matmul %0, %1, %cst {dimension_numbers = #tpu.dot_dimension_numbers<[1], [0], [0], [1], [0, 0, 1, 1], [], []>} : vector<512x384xbf16>, vector<384x128xbf16>, vector<512x128xf32> -> vector<512x128xf32>
    %cst_3 = arith.constant dense<0.000000e+00> : vector<128xf32>
    %3 = vector.multi_reduction <add>, %2, %cst_3 [0] : vector<512x128xf32> to vector<128xf32>
    %4 = vector.shape_cast %3 : vector<128xf32> to vector<1x128xf32>
    %cst_4 = arith.constant 0.001953125 : f32
    %5 = vector.broadcast %cst_4 : f32 to vector<1x128xf32>
    %6 = arith.mulf %4, %5 : vector<1x128xf32>
    %7 = arith.mulf %2, %2 : vector<512x128xf32>
    %cst_5 = arith.constant dense<0.000000e+00> : vector<128xf32>
    %8 = vector.multi_reduction <add>, %7, %cst_5 [0] : vector<512x128xf32> to vector<128xf32>
    %9 = vector.shape_cast %8 : vector<128xf32> to vector<1x128xf32>
    %cst_6 = arith.constant 0.001953125 : f32
    %10 = vector.broadcast %cst_6 : f32 to vector<1x128xf32>
    %11 = arith.mulf %9, %10 : vector<1x128xf32>
    %12 = arith.mulf %6, %6 : vector<1x128xf32>
    %13 = arith.subf %11, %12 : vector<1x128xf32>
    %cst_7 = arith.constant 0.000000e+00 : f32
    %14 = vector.broadcast %cst_7 : f32 to vector<1x128xf32>
    %15 = arith.maximumf %13, %14 : vector<1x128xf32>
    %c0_8 = arith.constant 0 : index
    %c0_9 = arith.constant 0 : index
    %16 = vector.load %arg2[%c0_8, %c0_9] : memref<1x128xf32, #tpu.memory_space<vmem>>, vector<1x128xf32>
    %cst_10 = arith.constant 9.99999974E-6 : f32
    %17 = vector.broadcast %cst_10 : f32 to vector<1x128xf32>
    %18 = arith.addf %15, %17 : vector<1x128xf32>
    %19 = math.rsqrt %18 : vector<1x128xf32>
    %20 = arith.mulf %16, %19 : vector<1x128xf32>
    %c0_11 = arith.constant 0 : index
    %c0_12 = arith.constant 0 : index
    %21 = vector.load %arg3[%c0_11, %c0_12] : memref<1x128xf32, #tpu.memory_space<vmem>>, vector<1x128xf32>
    %22 = arith.mulf %6, %20 : vector<1x128xf32>
    %23 = arith.subf %21, %22 : vector<1x128xf32>
    %24 = vector.broadcast %20 : vector<1x128xf32> to vector<512x128xf32>
    %25 = arith.mulf %2, %24 : vector<512x128xf32>
    %26 = vector.broadcast %23 : vector<1x128xf32> to vector<512x128xf32>
    %27 = arith.addf %25, %26 : vector<512x128xf32>
    %cst_13 = arith.constant 0.000000e+00 : f32
    %28 = vector.broadcast %cst_13 : f32 to vector<512x128xf32>
    %29 = arith.cmpf ogt, %27, %28 : vector<512x128xf32>
    %cst_14 = arith.constant 1.000000e-01 : f32
    %30 = vector.broadcast %cst_14 : f32 to vector<512x128xf32>
    %31 = arith.mulf %30, %27 : vector<512x128xf32>
    %32 = arith.select %29, %27, %31 : vector<512x128xi1>, vector<512x128xf32>
    %c0_15 = arith.constant 0 : index
    %c0_16 = arith.constant 0 : index
    %33 = vector.load %arg4[%c0_15, %c0_16] : memref<512x128xf32, #tpu.memory_space<vmem>>, vector<512x128xf32>
    tpu.vector_store %arg4[%c0_15, %c0_16], %32 {strides = array<i32>} : memref<512x128xf32, #tpu.memory_space<vmem>>, vector<512x128xf32>,
    return
  }
}

module attributes {stable_mosaic.version = 11 : i64} {
  func.func @_conv_bias_act_kernel(%arg0: memref<512x128xbf16, #tpu.memory_space<vmem>>, %arg1: memref<128x128xbf16, #tpu.memory_space<vmem>>, %arg2: memref<1x128xf32, #tpu.memory_space<vmem>>, %arg3: memref<512x128xf32, #tpu.memory_space<vmem>>) attributes {dimension_semantics = [], scalar_prefetch = 0 : i64, scratch_operands = 0 : i64, tpu.core_type = #tpu.core_type<tc>} {
    %c0 = arith.constant 0 : index
    %c0_0 = arith.constant 0 : index
    %0 = vector.load %arg0[%c0, %c0_0] : memref<512x128xbf16, #tpu.memory_space<vmem>>, vector<512x128xbf16>
    %c0_1 = arith.constant 0 : index
    %c0_2 = arith.constant 0 : index
    %1 = vector.load %arg1[%c0_1, %c0_2] : memref<128x128xbf16, #tpu.memory_space<vmem>>, vector<128x128xbf16>
    %cst = arith.constant dense<0.000000e+00> : vector<512x128xf32>
    %2 = tpu.matmul %0, %1, %cst {dimension_numbers = #tpu.dot_dimension_numbers<[1], [0], [0], [1], [0, 0, 1, 1], [], []>} : vector<512x128xbf16>, vector<128x128xbf16>, vector<512x128xf32> -> vector<512x128xf32>
    %c0_3 = arith.constant 0 : index
    %c0_4 = arith.constant 0 : index
    %3 = vector.load %arg2[%c0_3, %c0_4] : memref<1x128xf32, #tpu.memory_space<vmem>>, vector<1x128xf32>
    %4 = vector.broadcast %3 : vector<1x128xf32> to vector<512x128xf32>
    %5 = arith.addf %2, %4 : vector<512x128xf32>
    %c0_5 = arith.constant 0 : index
    %c0_6 = arith.constant 0 : index
    %6 = vector.load %arg3[%c0_5, %c0_6] : memref<512x128xf32, #tpu.memory_space<vmem>>, vector<512x128xf32>
    tpu.vector_store %arg3[%c0_5, %c0_6], %5 {strides = array<i32>} : memref<512x128xf32, #tpu.memory_space<vmem>>, vector<512x128xf32>,
    return
  }
}

</mosaic_0001>

<llo_original>
// kernel: darknet_forward.9
$region0: #{darknet_forward.9}
  #allocation0 [shape = 'u32[]', space=smem, size = 0x4, offset = 0x4, fixed_abs, tag = 'smem constant byte address 0x4 - core index']
  #allocation1 [shape = 'u32[144,128]{1,0:T(1,128)}', space=vmem, size = 0x12000, scoped, tag = 'internal scratch']
  %s0 = inlined_call_operand.vmem [shape: bf16[2048,128], index: 0, kind: input, shape index: {}]
  %s1 = inlined_call_operand.vmem [shape: bf16[128,128], index: 1, kind: input, shape index: {}]
  %s2 = inlined_call_operand.vmem [shape: f32[1,128], index: 2, kind: input, shape index: {}]
  %s3 = inlined_call_operand.vmem [shape: f32[1,128], index: 3, kind: input, shape index: {}]
  %s4 = inlined_call_operand.vmem [shape: f32[2048,128], index: 4, kind: output, shape index: {}]
  %s5 = sld [smem:[#allocation0]]
  $region26: #{darknet_forward.9} parent=0
    _
  %s7 = ssub.s32 1, %s5
  %s8 = scalar_select 0, %s7, %s5
  // Predicated region
  $region2: #{darknet_forward.9} parent=0 // pred_check
    _
  $region3: #{darknet_forward.9} parent=0 // pred_check_branch
    %10 = sbr.rel (0) target = $region5
  $region4: #{darknet_forward.9} parent=0 // pred_region
    _
  $region5: #{darknet_forward.9} parent=0 // pred_fallthru
    _
  // Predicated region
  $region6: #{darknet_forward.9} parent=0 // pred_check
    _
  $region7: #{darknet_forward.9} parent=0 // pred_check_branch
    %12 = sbr.rel (0) target = $region9
  $region8: #{darknet_forward.9} parent=0 // pred_region
    _
  $region9: #{darknet_forward.9} parent=0 // pred_fallthru
    _
  // Predicated region
  $region10: #{darknet_forward.9} parent=0 // pred_check
    _
  $region11: #{darknet_forward.9} parent=0 // pred_check_branch
    %14 = sbr.rel (0) target = $region13
  $region12: #{darknet_forward.9} parent=0 // pred_region
    _
  $region13: #{darknet_forward.9} parent=0 // pred_fallthru
    _
  // Predicated region
  $region14: #{darknet_forward.9} parent=0 // pred_check
    _
  $region15: #{darknet_forward.9} parent=0 // pred_check_branch
    %16 = sbr.rel (0) target = $region17
  $region16: #{darknet_forward.9} parent=0 // pred_region
    _
  $region17: #{darknet_forward.9} parent=0 // pred_fallthru
    _
  %v18 = vld [vmem:[%s0] sm:$0xf]
  %v19 = vld [vmem:[%s0 + $0x4] sm:$0xf]
  %v20 = vld [vmem:[%s0 + $0x8] sm:$0xf]
  %v21 = vld [vmem:[%s0 + $0xc] sm:$0xf]
  %v22 = vld [vmem:[%s0 + $0x10] sm:$0xf]
  %v23 = vld [vmem:[%s0 + $0x14] sm:$0xf]
  %v24 = vld [vmem:[%s0 + $0x18] sm:$0xf]
  %v25 = vld [vmem:[%s0 + $0x1c] sm:$0xf]
  %v26 = vld [vmem:[%s0 + $0x20] sm:$0xf]
  %v27 = vld [vmem:[%s0 + $0x24] sm:$0xf]
  %v28 = vld [vmem:[%s0 + $0x28] sm:$0xf]
  %v29 = vld [vmem:[%s0 + $0x2c] sm:$0xf]
  %v30 = vld [vmem:[%s0 + $0x30] sm:$0xf]
  %v31 = vld [vmem:[%s0 + $0x34] sm:$0xf]
  %v32 = vld [vmem:[%s0 + $0x38] sm:$0xf]
  %v33 = vld [vmem:[%s0 + $0x3c] sm:$0xf]
  %v34 = vld [vmem:[%s0 + $0x40] sm:$0xf]
  %v35 = vld [vmem:[%s0 + $0x44] sm:$0xf]
  %v36 = vld [vmem:[%s0 + $0x48] sm:$0xf]
  %v37 = vld [vmem:[%s0 + $0x4c] sm:$0xf]
  %v38 = vld [vmem:[%s0 + $0x50] sm:$0xf]
  %v39 = vld [vmem:[%s0 + $0x54] sm:$0xf]
  %v40 = vld [vmem:[%s0 + $0x58] sm:$0xf]
  %v41 = vld [vmem:[%s0 + $0x5c] sm:$0xf]
  %v42 = vld [vmem:[%s0 + $0x60] sm:$0xf]
  %v43 = vld [vmem:[%s0 + $0x64] sm:$0xf]
  %v44 = vld [vmem:[%s0 + $0x68] sm:$0xf]
  %v45 = vld [vmem:[%s0 + $0x6c] sm:$0xf]
  %v46 = vld [vmem:[%s0 + $0x70] sm:$0xf]
  %v47 = vld [vmem:[%s0 + $0x74] sm:$0xf]
  %v48 = vld [vmem:[%s0 + $0x78] sm:$0xf]
  %v49 = vld [vmem:[%s0 + $0x7c] sm:$0xf]
  %v50 = vld [vmem:[%s0 + $0x80] sm:$0xf]
  %v51 = vld [vmem:[%s0 + $0x84] sm:$0xf]
  %v52 = vld [vmem:[%s0 + $0x88] sm:$0xf]
  %v53 = vld [vmem:[%s0 + $0x8c] sm:$0xf]
  %v54 = vld [vmem:[%s0 + $0x90] sm:$0xf]
  %v55 = vld [vmem:[%s0 + $0x94] sm:$0xf]
  %v56 = vld [vmem:[%s0 + $0x98] sm:$0xf]
  %v57 = vld [vmem:[%s0 + $0x9c] sm:$0xf]
  %v58 = vld [vmem:[%s0 + $0xa0] sm:$0xf]
  %v59 = vld [vmem:[%s0 + $0xa4] sm:$0xf]
  %v60 = vld [vmem:[%s0 + $0xa8] sm:$0xf]
  %v61 = vld [vmem:[%s0 + $0xac] sm:$0xf]
  %v62 = vld [vmem:[%s0 + $0xb0] sm:$0xf]
  %v63 = vld [vmem:[%s0 + $0xb4] sm:$0xf]
  %v64 = vld [vmem:[%s0 + $0xb8] sm:$0xf]
  %v65 = vld [vmem:[%s0 + $0xbc] sm:$0xf]
  %v66 = vld [vmem:[%s0 + $0xc0] sm:$0xf]
  %v67 = vld [vmem:[%s0 + $0xc4] sm:$0xf]
  %v68 = vld [vmem:[%s0 + $0xc8] sm:$0xf]
  %v69 = vld [vmem:[%s0 + $0xcc] sm:$0xf]
  %v70 = vld [vmem:[%s0 + $0xd0] sm:$0xf]
  %v71 = vld [vmem:[%s0 + $0xd4] sm:$0xf]
  %v72 = vld [vmem:[%s0 + $0xd8] sm:$0xf]
  %v73 = vld [vmem:[%s0 + $0xdc] sm:$0xf]
  %v74 = vld [vmem:[%s0 + $0xe0] sm:$0xf]
  %v75 = vld [vmem:[%s0 + $0xe4] sm:$0xf]
  %v76 = vld [vmem:[%s0 + $0xe8] sm:$0xf]
  %v77 = vld [vmem:[%s0 + $0xec] sm:$0xf]
  %v78 = vld [vmem:[%s0 + $0xf0] sm:$0xf]
  %v79 = vld [vmem:[%s0 + $0xf4] sm:$0xf]
  %v80 = vld [vmem:[%s0 + $0xf8] sm:$0xf]
  %v81 = vld [vmem:[%s0 + $0xfc] sm:$0xf]
  %v82 = vld [vmem:[%s0 + $0x100] sm:$0xf]
  %v83 = vld [vmem:[%s0 + $0x104] sm:$0xf]
  %v84 = vld [vmem:[%s0 + $0x108] sm:$0xf]
  %v85 = vld [vmem:[%s0 + $0x10c] sm:$0xf]
  %v86 = vld [vmem:[%s0 + $0x110] sm:$0xf]
  %v87 = vld [vmem:[%s0 + $0x114] sm:$0xf]
  %v88 = vld [vmem:[%s0 + $0x118] sm:$0xf]
  %v89 = vld [vmem:[%s0 + $0x11c] sm:$0xf]
  %v90 = vld [vmem:[%s0 + $0x120] sm:$0xf]
  %v91 = vld [vmem:[%s0 + $0x124] sm:$0xf]
  %v92 = vld [vmem:[%s0 + $0x128] sm:$0xf]
  %v93 = vld [vmem:[%s0 + $0x12c] sm:$0xf]
  %v94 = vld [vmem:[%s0 + $0x130] sm:$0xf]
  %v95 = vld [vmem:[%s0 + $0x134] sm:$0xf]
  %v96 = vld [vmem:[%s0 + $0x138] sm:$0xf]
  %v97 = vld [vmem:[%s0 + $0x13c] sm:$0xf]
  %v98 = vld [vmem:[%s0 + $0x140] sm:$0xf]
  %v99 = vld [vmem:[%s0 + $0x144] sm:$0xf]
  %v100 = vld [vmem:[%s0 + $0x148] sm:$0xf]
  %v101 = vld [vmem:[%s0 + $0x14c] sm:$0xf]
  %v102 = vld [vmem:[%s0 + $0x150] sm:$0xf]
  %v103 = vld [vmem:[%s0 + $0x154] sm:$0xf]
  %v104 = vld [vmem:[%s0 + $0x158] sm:$0xf]
  %v105 = vld [vmem:[%s0 + $0x15c] sm:$0xf]
  %v106 = vld [vmem:[%s0 + $0x160] sm:$0xf]
  %v107 = vld [vmem:[%s0 + $0x164] sm:$0xf]
  %v108 = vld [vmem:[%s0 + $0x168] sm:$0xf]
  %v109 = vld [vmem:[%s0 + $0x16c] sm:$0xf]
  %v110 = vld [vmem:[%s0 + $0x170] sm:$0xf]
  %v111 = vld [vmem:[%s0 + $0x174] sm:$0xf]
  %v112 = vld [vmem:[%s0 + $0x178] sm:$0xf]
  %v113 = vld [vmem:[%s0 + $0x17c] sm:$0xf]
  %v114 = vld [vmem:[%s0 + $0x180] sm:$0xf]
  %v115 = vld [vmem:[%s0 + $0x184] sm:$0xf]
  %v116 = vld [vmem:[%s0 + $0x188] sm:$0xf]
  %v117 = vld [vmem:[%s0 + $0x18c] sm:$0xf]
  %v118 = vld [vmem:[%s0 + $0x190] sm:$0xf]
  %v119 = vld [vmem:[%s0 + $0x194] sm:$0xf]
  %v120 = vld [vmem:[%s0 + $0x198] sm:$0xf]
  %v121 = vld [vmem:[%s0 + $0x19c] sm:$0xf]
  %v122 = vld [vmem:[%s0 + $0x1a0] sm:$0xf]
  %v123 = vld [vmem:[%s0 + $0x1a4] sm:$0xf]
  %v124 = vld [vmem:[%s0 + $0x1a8] sm:$0xf]
  %v125 = vld [vmem:[%s0 + $0x1ac] sm:$0xf]
  %v126 = vld [vmem:[%s0 + $0x1b0] sm:$0xf]
  %v127 = vld [vmem:[%s0 + $0x1b4] sm:$0xf]
  %v128 = vld [vmem:[%s0 + $0x1b8] sm:$0xf]
  %v129 = vld [vmem:[%s0 + $0x1bc] sm:$0xf]
  %v130 = vld [vmem:[%s0 + $0x1c0] sm:$0xf]
  %v131 = vld [vmem:[%s0 + $0x1c4] sm:$0xf]
  %v132 = vld [vmem:[%s0 + $0x1c8] sm:$0xf]
  %v133 = vld [vmem:[%s0 + $0x1cc] sm:$0xf]
  %v134 = vld [vmem:[%s0 + $0x1d0] sm:$0xf]
  %v135 = vld [vmem:[%s0 + $0x1d4] sm:$0xf]
  %v136 = vld [vmem:[%s0 + $0x1d8] sm:$0xf]
  %v137 = vld [vmem:[%s0 + $0x1dc] sm:$0xf]
  %v138 = vld [vmem:[%s0 + $0x1e0] sm:$0xf]
  %v139 = vld [vmem:[%s0 + $0x1e4] sm:$0xf]
  %v140 = vld [vmem:[%s0 + $0x1e8] sm:$0xf]
  %v141 = vld [vmem:[%s0 + $0x1ec] sm:$0xf]
  %v142 = vld [vmem:[%s0 + $0x1f0] sm:$0xf]
  %v143 = vld [vmem:[%s0 + $0x1f4] sm:$0xf]
  %v144 = vld [vmem:[%s0 + $0x1f8] sm:$0xf]
  %v145 = vld [vmem:[%s0 + $0x1fc] sm:$0xf]
  %v146 = vld [vmem:[%s0 + $0x200] sm:$0xf]
  %v147 = vld [vmem:[%s0 + $0x204] sm:$0xf]
  %v148 = vld [vmem:[%s0 + $0x208] sm:$0xf]
  %v149 = vld [vmem:[%s0 + $0x20c] sm:$0xf]
  %v150 = vld [vmem:[%s0 + $0x210] sm:$0xf]
  %v151 = vld [vmem:[%s0 + $0x214] sm:$0xf]
  %v152 = vld [vmem:[%s0 + $0x218] sm:$0xf]
  %v153 = vld [vmem:[%s0 + $0x21c] sm:$0xf]
  %v154 = vld [vmem:[%s0 + $0x220] sm:$0xf]
  %v155 = vld [vmem:[%s0 + $0x224] sm:$0xf]
  %v156 = vld [vmem:[%s0 + $0x228] sm:$0xf]
  %v157 = vld [vmem:[%s0 + $0x22c] sm:$0xf]
  %v158 = vld [vmem:[%s0 + $0x230] sm:$0xf]
  %v159 = vld [vmem:[%s0 + $0x234] sm:$0xf]
  %v160 = vld [vmem:[%s0 + $0x238] sm:$0xf]
  %v161 = vld [vmem:[%s0 + $0x23c] sm:$0xf]
  %v162 = vld [vmem:[%s0 + $0x240] sm:$0xf]
  %v163 = vld [vmem:[%s0 + $0x244] sm:$0xf]
  %v164 = vld [vmem:[%s0 + $0x248] sm:$0xf]
  %v165 = vld [vmem:[%s0 + $0x24c] sm:$0xf]
  %v166 = vld [vmem:[%s0 + $0x250] sm:$0xf]
  %v167 = vld [vmem:[%s0 + $0x254] sm:$0xf]
  %v168 = vld [vmem:[%s0 + $0x258] sm:$0xf]
  %v169 = vld [vmem:[%s0 + $0x25c] sm:$0xf]
  %v170 = vld [vmem:[%s0 + $0x260] sm:$0xf]
  %v171 = vld [vmem:[%s0 + $0x264] sm:$0xf]
  %v172 = vld [vmem:[%s0 + $0x268] sm:$0xf]
  %v173 = vld [vmem:[%s0 + $0x26c] sm:$0xf]
  %v174 = vld [vmem:[%s0 + $0x270] sm:$0xf]
  %v175 = vld [vmem:[%s0 + $0x274] sm:$0xf]
  %v176 = vld [vmem:[%s0 + $0x278] sm:$0xf]
  %v177 = vld [vmem:[%s0 + $0x27c] sm:$0xf]
  %v178 = vld [vmem:[%s0 + $0x280] sm:$0xf]
  %v179 = vld [vmem:[%s0 + $0x284] sm:$0xf]
  %v180 = vld [vmem:[%s0 + $0x288] sm:$0xf]
  %v181 = vld [vmem:[%s0 + $0x28c] sm:$0xf]
  %v182 = vld [vmem:[%s0 + $0x290] sm:$0xf]
  %v183 = vld [vmem:[%s0 + $0x294] sm:$0xf]
  %v184 = vld [vmem:[%s0 + $0x298] sm:$0xf]
  %v185 = vld [vmem:[%s0 + $0x29c] sm:$0xf]
  %v186 = vld [vmem:[%s0 + $0x2a0] sm:$0xf]
  %v187 = vld [vmem:[%s0 + $0x2a4] sm:$0xf]
  %v188 = vld [vmem:[%s0 + $0x2a8] sm:$0xf]
  %v189 = vld [vmem:[%s0 + $0x2ac] sm:$0xf]
  %v190 = vld [vmem:[%s0 + $0x2b0] sm:$0xf]
  %v191 = vld [vmem:[%s0 + $0x2b4] sm:$0xf]
  %v192 = vld [vmem:[%s0 + $0x2b8] sm:$0xf]
  %v193 = vld [vmem:[%s0 + $0x2bc] sm:$0xf]
  %v194 = vld [vmem:[%s0 + $0x2c0] sm:$0xf]
  %v195 = vld [vmem:[%s0 + $0x2c4] sm:$0xf]
  %v196 = vld [vmem:[%s0 + $0x2c8] sm:$0xf]
  %v197 = vld [vmem:[%s0 + $0x2cc] sm:$0xf]
  %v198 = vld [vmem:[%s0 + $0x2d0] sm:$0xf]
  %v199 = vld [vmem:[%s0 + $0x2d4] sm:$0xf]
  %v200 = vld [vmem:[%s0 + $0x2d8] sm:$0xf]
  %v201 = vld [vmem:[%s0 + $0x2dc] sm:$0xf]
  %v202 = vld [vmem:[%s0 + $0x2e0] sm:$0xf]
  %v203 = vld [vmem:[%s0 + $0x2e4] sm:$0xf]
  %v204 = vld [vmem:[%s0 + $0x2e8] sm:$0xf]
  %v205 = vld [vmem:[%s0 + $0x2ec] sm:$0xf]
  %v206 = vld [vmem:[%s0 + $0x2f0] sm:$0xf]
  %v207 = vld [vmem:[%s0 + $0x2f4] sm:$0xf]
  %v208 = vld [vmem:[%s0 + $0x2f8] sm:$0xf]
  %v209 = vld [vmem:[%s0 + $0x2fc] sm:$0xf]
  %v210 = vld [vmem:[%s0 + $0x300] sm:$0xf]
  %v211 = vld [vmem:[%s0 + $0x304] sm:$0xf]
  %v212 = vld [vmem:[%s0 + $0x308] sm:$0xf]
  %v213 = vld [vmem:[%s0 + $0x30c] sm:$0xf]
  %v214 = vld [vmem:[%s0 + $0x310] sm:$0xf]
  %v215 = vld [vmem:[%s0 + $0x314] sm:$0xf]
  %v216 = vld [vmem:[%s0 + $0x318] sm:$0xf]
  %v217 = vld [vmem:[%s0 + $0x31c] sm:$0xf]
  %v218 = vld [vmem:[%s0 + $0x320] sm:$0xf]
  %v219 = vld [vmem:[%s0 + $0x324] sm:$0xf]
  %v220 = vld [vmem:[%s0 + $0x328] sm:$0xf]
  %v221 = vld [vmem:[%s0 + $0x32c] sm:$0xf]
  %v222 = vld [vmem:[%s0 + $0x330] sm:$0xf]
  %v223 = vld [vmem:[%s0 + $0x334] sm:$0xf]
  %v224 = vld [vmem:[%s0 + $0x338] sm:$0xf]
  %v225 = vld [vmem:[%s0 + $0x33c] sm:$0xf]
  %v226 = vld [vmem:[%s0 + $0x340] sm:$0xf]
  %v227 = vld [vmem:[%s0 + $0x344] sm:$0xf]
  %v228 = vld [vmem:[%s0 + $0x348] sm:$0xf]
  %v229 = vld [vmem:[%s0 + $0x34c] sm:$0xf]
  %v230 = vld [vmem:[%s0 + $0x350] sm:$0xf]
  %v231 = vld [vmem:[%s0 + $0x354] sm:$0xf]
  %v232 = vld [vmem:[%s0 + $0x358] sm:$0xf]
  %v233 = vld [vmem:[%s0 + $0x35c] sm:$0xf]
  %v234 = vld [vmem:[%s0 + $0x360] sm:$0xf]
  %v235 = vld [vmem:[%s0 + $0x364] sm:$0xf]
  %v236 = vld [vmem:[%s0 + $0x368] sm:$0xf]
  %v237 = vld [vmem:[%s0 + $0x36c] sm:$0xf]
  %v238 = vld [vmem:[%s0 + $0x370] sm:$0xf]
  %v239 = vld [vmem:[%s0 + $0x374] sm:$0xf]
  %v240 = vld [vmem:[%s0 + $0x378] sm:$0xf]
  %v241 = vld [vmem:[%s0 + $0x37c] sm:$0xf]
  %v242 = vld [vmem:[%s0 + $0x380] sm:$0xf]
  %v243 = vld [vmem:[%s0 + $0x384] sm:$0xf]
  %v244 = vld [vmem:[%s0 + $0x388] sm:$0xf]
  %v245 = vld [vmem:[%s0 + $0x38c] sm:$0xf]
  %v246 = vld [vmem:[%s0 + $0x390] sm:$0xf]
  %v247 = vld [vmem:[%s0 + $0x394] sm:$0xf]
  %v248 = vld [vmem:[%s0 + $0x398] sm:$0xf]
  %v249 = vld [vmem:[%s0 + $0x39c] sm:$0xf]
  %v250 = vld [vmem:[%s0 + $0x3a0] sm:$0xf]
  %v251 = vld [vmem:[%s0 + $0x3a4] sm:$0xf]
  %v252 = vld [vmem:[%s0 + $0x3a8] sm:$0xf]
  %v253 = vld [vmem:[%s0 + $0x3ac] sm:$0xf]
  %v254 = vld [vmem:[%s0 + $0x3b0] sm:$0xf]
  %v255 = vld [vmem:[%s0 + $0x3b4] sm:$0xf]
  %v256 = vld [vmem:[%s0 + $0x3b8] sm:$0xf]
  %v257 = vld [vmem:[%s0 + $0x3bc] sm:$0xf]
  %v258 = vld [vmem:[%s0 + $0x3c0] sm:$0xf]
  %v259 = vld [vmem:[%s0 + $0x3c4] sm:$0xf]
  %v260 = vld [vmem:[%s0 + $0x3c8] sm:$0xf]
  %v261 = vld [vmem:[%s0 + $0x3cc] sm:$0xf]
  %v262 = vld [vmem:[%s0 + $0x3d0] sm:$0xf]
  %v263 = vld [vmem:[%s0 + $0x3d4] sm:$0xf]
  %v264 = vld [vmem:[%s0 + $0x3d8] sm:$0xf]
  %v265 = vld [vmem:[%s0 + $0x3dc] sm:$0xf]
  %v266 = vld [vmem:[%s0 + $0x3e0] sm:$0xf]
  %v267 = vld [vmem:[%s0 + $0x3e4] sm:$0xf]
  %v268 = vld [vmem:[%s0 + $0x3e8] sm:$0xf]
  %v269 = vld [vmem:[%s0 + $0x3ec] sm:$0xf]
  %v270 = vld [vmem:[%s0 + $0x3f0] sm:$0xf]
  %v271 = vld [vmem:[%s0 + $0x3f4] sm:$0xf]
  %v272 = vld [vmem:[%s0 + $0x3f8] sm:$0xf]
  %v273 = vld [vmem:[%s0 + $0x3fc] sm:$0xf]
  %v274 = vld [vmem:[%s1] sm:$0xf]
  %v275 = vld [vmem:[%s1 + $0x4] sm:$0xf]
  %v276 = vld [vmem:[%s1 + $0x8] sm:$0xf]
  %v277 = vld [vmem:[%s1 + $0xc] sm:$0xf]
  %v278 = vld [vmem:[%s1 + $0x10] sm:$0xf]
  %v279 = vld [vmem:[%s1 + $0x14] sm:$0xf]
  %v280 = vld [vmem:[%s1 + $0x18] sm:$0xf]
  %v281 = vld [vmem:[%s1 + $0x1c] sm:$0xf]
  %v282 = vld [vmem:[%s1 + $0x20] sm:$0xf]
  %v283 = vld [vmem:[%s1 + $0x24] sm:$0xf]
  %v284 = vld [vmem:[%s1 + $0x28] sm:$0xf]
  %v285 = vld [vmem:[%s1 + $0x2c] sm:$0xf]
  %v286 = vld [vmem:[%s1 + $0x30] sm:$0xf]
  %v287 = vld [vmem:[%s1 + $0x34] sm:$0xf]
  %v288 = vld [vmem:[%s1 + $0x38] sm:$0xf]
  %v289 = vld [vmem:[%s1 + $0x3c] sm:$0xf]
  %v546 = vunpack.c.l.b16 %v18
  %v547 = vunpack.c.l.b16 %v19
  %v548 = vunpack.c.l.b16 %v20
  %v549 = vunpack.c.l.b16 %v21
  %v550 = vunpack.c.l.b16 %v22
  %v551 = vunpack.c.l.b16 %v23
  %v552 = vunpack.c.l.b16 %v24
  %v553 = vunpack.c.l.b16 %v25
  %v554 = vunpack.c.l.b16 %v26
  %v555 = vunpack.c.l.b16 %v27
  %v556 = vunpack.c.l.b16 %v28
  %v557 = vunpack.c.l.b16 %v29
  %v558 = vunpack.c.l.b16 %v30
  %v559 = vunpack.c.l.b16 %v31
  %v560 = vunpack.c.l.b16 %v32
  %v561 = vunpack.c.l.b16 %v33
  %v562 = vunpack.c.l.b16 %v34
  %v563 = vunpack.c.l.b16 %v35
  %v564 = vunpack.c.l.b16 %v36
  %v565 = vunpack.c.l.b16 %v37
  %v566 = vunpack.c.l.b16 %v38
  %v567 = vunpack.c.l.b16 %v39
  %v568 = vunpack.c.l.b16 %v40
  %v569 = vunpack.c.l.b16 %v41
  %v570 = vunpack.c.l.b16 %v42
  %v571 = vunpack.c.l.b16 %v43
  %v572 = vunpack.c.l.b16 %v44
  %v573 = vunpack.c.l.b16 %v45
  %v574 = vunpack.c.l.b16 %v46
  %v575 = vunpack.c.l.b16 %v47
  %v576 = vunpack.c.l.b16 %v48
  %v577 = vunpack.c.l.b16 %v49
  %v578 = vunpack.c.l.b16 %v50
  %v579 = vunpack.c.l.b16 %v51
  %v580 = vunpack.c.l.b16 %v52
  %v581 = vunpack.c.l.b16 %v53
  %v582 = vunpack.c.l.b16 %v54
  %v583 = vunpack.c.l.b16 %v55
  %v584 = vunpack.c.l.b16 %v56
  %v585 = vunpack.c.l.b16 %v57
  %v586 = vunpack.c.l.b16 %v58
  %v587 = vunpack.c.l.b16 %v59
  %v588 = vunpack.c.l.b16 %v60
  %v589 = vunpack.c.l.b16 %v61
  %v590 = vunpack.c.l.b16 %v62
  %v591 = vunpack.c.l.b16 %v63
  %v592 = vunpack.c.l.b16 %v64
  %v593 = vunpack.c.l.b16 %v65
  %v594 = vunpack.c.l.b16 %v66
  %v595 = vunpack.c.l.b16 %v67
  %v596 = vunpack.c.l.b16 %v68
  %v597 = vunpack.c.l.b16 %v69
  %v598 = vunpack.c.l.b16 %v70
  %v599 = vunpack.c.l.b16 %v71
  %v600 = vunpack.c.l.b16 %v72
  %v601 = vunpack.c.l.b16 %v73
  %v602 = vunpack.c.l.b16 %v74
  %v603 = vunpack.c.l.b16 %v75
  %v604 = vunpack.c.l.b16 %v76
  %v605 = vunpack.c.l.b16 %v77
  %v606 = vunpack.c.l.b16 %v78
  %v607 = vunpack.c.l.b16 %v79
  %v608 = vunpack.c.l.b16 %v80
  %v609 = vunpack.c.l.b16 %v81
  %v610 = vunpack.c.l.b16 %v82
  %v611 = vunpack.c.l.b16 %v83
  %v612 = vunpack.c.l.b16 %v84
  %v613 = vunpack.c.l.b16 %v85
  %v614 = vunpack.c.l.b16 %v86
  %v615 = vunpack.c.l.b16 %v87
  %v616 = vunpack.c.l.b16 %v88
  %v617 = vunpack.c.l.b16 %v89
  %v618 = vunpack.c.l.b16 %v90
  %v619 = vunpack.c.l.b16 %v91
  %v620 = vunpack.c.l.b16 %v92
  %v621 = vunpack.c.l.b16 %v93
  %v622 = vunpack.c.l.b16 %v94
  %v623 = vunpack.c.l.b16 %v95
  %v624 = vunpack.c.l.b16 %v96
  %v625 = vunpack.c.l.b16 %v97
  %v626 = vunpack.c.l.b16 %v98
  %v627 = vunpack.c.l.b16 %v99
  %v628 = vunpack.c.l.b16 %v100
  %v629 = vunpack.c.l.b16 %v101
  %v630 = vunpack.c.l.b16 %v102
  %v631 = vunpack.c.l.b16 %v103
  %v632 = vunpack.c.l.b16 %v104
  %v633 = vunpack.c.l.b16 %v105
  %v634 = vunpack.c.l.b16 %v106
  %v635 = vunpack.c.l.b16 %v107
  %v636 = vunpack.c.l.b16 %v108
  %v637 = vunpack.c.l.b16 %v109
  %v638 = vunpack.c.l.b16 %v110
  %v639 = vunpack.c.l.b16 %v111
  %v640 = vunpack.c.l.b16 %v112
  %v641 = vunpack.c.l.b16 %v113
  %v642 = vunpack.c.l.b16 %v114
  %v643 = vunpack.c.l.b16 %v115
  %v644 = vunpack.c.l.b16 %v116
  %v645 = vunpack.c.l.b16 %v117
  %v646 = vunpack.c.l.b16 %v118
  %v647 = vunpack.c.l.b16 %v119
  %v648 = vunpack.c.l.b16 %v120
  %v649 = vunpack.c.l.b16 %v121
  %v650 = vunpack.c.l.b16 %v122
  %v651 = vunpack.c.l.b16 %v123
  %v652 = vunpack.c.l.b16 %v124
  %v653 = vunpack.c.l.b16 %v125
  %v654 = vunpack.c.l.b16 %v126
  %v655 = vunpack.c.l.b16 %v127
  %v656 = vunpack.c.l.b16 %v128
  %v657 = vunpack.c.l.b16 %v129
  %v658 = vunpack.c.l.b16 %v130
  %v659 = vunpack.c.l.b16 %v131
  %v660 = vunpack.c.l.b16 %v132
  %v661 = vunpack.c.l.b16 %v133
  %v662 = vunpack.c.l.b16 %v134
  %v663 = vunpack.c.l.b16 %v135
  %v664 = vunpack.c.l.b16 %v136
  %v665 = vunpack.c.l.b16 %v137
  %v666 = vunpack.c.l.b16 %v138
  %v667 = vunpack.c.l.b16 %v139
  %v668 = vunpack.c.l.b16 %v140
  %v669 = vunpack.c.l.b16 %v141
  %v670 = vunpack.c.l.b16 %v142
  %v671 = vunpack.c.l.b16 %v143
  %v672 = vunpack.c.l.b16 %v144
  %v673 = vunpack.c.l.b16 %v145
  %v674 = vunpack.c.l.b16 %v146
  %v675 = vunpack.c.l.b16 %v147
  %v676 = vunpack.c.l.b16 %v148
  %v677 = vunpack.c.l.b16 %v149
  %v678 = vunpack.c.l.b16 %v150
  %v679 = vunpack.c.l.b16 %v151
  %v680 = vunpack.c.l.b16 %v152
  %v681 = vunpack.c.l.b16 %v153
  %v682 = vunpack.c.l.b16 %v154
  %v683 = vunpack.c.l.b16 %v155
  %v684 = vunpack.c.l.b16 %v156
  %v685 = vunpack.c.l.b16 %v157
  %v686 = vunpack.c.l.b16 %v158
  %v687 = vunpack.c.l.b16 %v159
  %v688 = vunpack.c.l.b16 %v160
  %v689 = vunpack.c.l.b16 %v161
  %v690 = vunpack.c.l.b16 %v162
  %v691 = vunpack.c.l.b16 %v163
  %v692 = vunpack.c.l.b16 %v164
  %v693 = vunpack.c.l.b16 %v165
  %v694 = vunpack.c.l.b16 %v166
  %v695 = vunpack.c.l.b16 %v167
  %v696 = vunpack.c.l.b16 %v168
  %v697 = vunpack.c.l.b16 %v169
  %v698 = vunpack.c.l.b16 %v170
  %v699 = vunpack.c.l.b16 %v171
  %v700 = vunpack.c.l.b16 %v172
  %v701 = vunpack.c.l.b16 %v173
  %v702 = vunpack.c.l.b16 %v174
  %v703 = vunpack.c.l.b16 %v175
  %v704 = vunpack.c.l.b16 %v176
  %v705 = vunpack.c.l.b16 %v177
  %v706 = vunpack.c.l.b16 %v178
  %v707 = vunpack.c.l.b16 %v179
  %v708 = vunpack.c.l.b16 %v180
  %v709 = vunpack.c.l.b16 %v181
  %v710 = vunpack.c.l.b16 %v182
  %v711 = vunpack.c.l.b16 %v183
  %v712 = vunpack.c.l.b16 %v184
  %v713 = vunpack.c.l.b16 %v185
  %v714 = vunpack.c.l.b16 %v186
  %v715 = vunpack.c.l.b16 %v187
  %v716 = vunpack.c.l.b16 %v188
  %v717 = vunpack.c.l.b16 %v189
  %v718 = vunpack.c.l.b16 %v190
  %v719 = vunpack.c.l.b16 %v191
  %v720 = vunpack.c.l.b16 %v192
  %v721 = vunpack.c.l.b16 %v193
  %v722 = vunpack.c.l.b16 %v194
  %v723 = vunpack.c.l.b16 %v195
  %v724 = vunpack.c.l.b16 %v196
  %v725 = vunpack.c.l.b16 %v197
  %v726 = vunpack.c.l.b16 %v198
  %v727 = vunpack.c.l.b16 %v199
  %v728 = vunpack.c.l.b16 %v200
  %v729 = vunpack.c.l.b16 %v201
  %v730 = vunpack.c.l.b16 %v202
  %v731 = vunpack.c.l.b16 %v203
  %v732 = vunpack.c.l.b16 %v204
  %v733 = vunpack.c.l.b16 %v205
  %v734 = vunpack.c.l.b16 %v206
  %v735 = vunpack.c.l.b16 %v207
  %v736 = vunpack.c.l.b16 %v208
  %v737 = vunpack.c.l.b16 %v209
  %v738 = vunpack.c.l.b16 %v210
  %v739 = vunpack.c.l.b16 %v211
  %v740 = vunpack.c.l.b16 %v212
  %v741 = vunpack.c.l.b16 %v213
  %v742 = vunpack.c.l.b16 %v214
  %v743 = vunpack.c.l.b16 %v215
  %v744 = vunpack.c.l.b16 %v216
  %v745 = vunpack.c.l.b16 %v217
  %v746 = vunpack.c.l.b16 %v218
  %v747 = vunpack.c.l.b16 %v219
  %v748 = vunpack.c.l.b16 %v220
  %v749 = vunpack.c.l.b16 %v221
  %v750 = vunpack.c.l.b16 %v222
  %v751 = vunpack.c.l.b16 %v223
  %v752 = vunpack.c.l.b16 %v224
  %v753 = vunpack.c.l.b16 %v225
  %v754 = vunpack.c.l.b16 %v226
  %v755 = vunpack.c.l.b16 %v227
  %v756 = vunpack.c.l.b16 %v228
  %v757 = vunpack.c.l.b16 %v229
  %v758 = vunpack.c.l.b16 %v230
  %v759 = vunpack.c.l.b16 %v231
  %v760 = vunpack.c.l.b16 %v232
  %v761 = vunpack.c.l.b16 %v233
  %v762 = vunpack.c.l.b16 %v234
  %v763 = vunpack.c.l.b16 %v235
  %v764 = vunpack.c.l.b16 %v236
  %v765 = vunpack.c.l.b16 %v237
  %v766 = vunpack.c.l.b16 %v238
  %v767 = vunpack.c.l.b16 %v239
  %v768 = vunpack.c.l.b16 %v240
  %v769 = vunpack.c.l.b16 %v241
  %v770 = vunpack.c.l.b16 %v242
  %v771 = vunpack.c.l.b16 %v243
  %v772 = vunpack.c.l.b16 %v244
  %v773 = vunpack.c.l.b16 %v245
  %v774 = vunpack.c.l.b16 %v246
  %v775 = vunpack.c.l.b16 %v247
  %v776 = vunpack.c.l.b16 %v248
  %v777 = vunpack.c.l.b16 %v249
  %v778 = vunpack.c.l.b16 %v250
  %v779 = vunpack.c.l.b16 %v251
  %v780 = vunpack.c.l.b16 %v252
  %v781 = vunpack.c.l.b16 %v253
  %v782 = vunpack.c.l.b16 %v254
  %v783 = vunpack.c.l.b16 %v255
  %v784 = vunpack.c.l.b16 %v256
  %v785 = vunpack.c.l.b16 %v257
  %v786 = vunpack.c.l.b16 %v258
  %v787 = vunpack.c.l.b16 %v259
  %v788 = vunpack.c.l.b16 %v260
  %v789 = vunpack.c.l.b16 %v261
  %v790 = vunpack.c.l.b16 %v262
  %v791 = vunpack.c.l.b16 %v263
  %v792 = vunpack.c.l.b16 %v264
  %v793 = vunpack.c.l.b16 %v265
  %v794 = vunpack.c.l.b16 %v266
  %v795 = vunpack.c.l.b16 %v267
  %v796 = vunpack.c.l.b16 %v268
  %v797 = vunpack.c.l.b16 %v269
  %v798 = vunpack.c.l.b16 %v270
  %v799 = vunpack.c.l.b16 %v271
  %v800 = vunpack.c.l.b16 %v272
  %v801 = vunpack.c.l.b16 %v273
  %v802 = vpack.c.b16 %v547, %v546
  %v803 = vpack.c.b16 %v549, %v548
  %v804 = vpack.c.b16 %v551, %v550
  %v805 = vpack.c.b16 %v553, %v552
  %v806 = vpack.c.b16 %v555, %v554
  %v807 = vpack.c.b16 %v557, %v556
  %v808 = vpack.c.b16 %v559, %v558
  %v809 = vpack.c.b16 %v561, %v560
  %v810 = vpack.c.b16 %v563, %v562
  %v811 = vpack.c.b16 %v565, %v564
  %v812 = vpack.c.b16 %v567, %v566
  %v813 = vpack.c.b16 %v569, %v568
  %v814 = vpack.c.b16 %v571, %v570
  %v815 = vpack.c.b16 %v573, %v572
  %v816 = vpack.c.b16 %v575, %v574
  %v817 = vpack.c.b16 %v577, %v576
  %v818 = vpack.c.b16 %v579, %v578
  %v819 = vpack.c.b16 %v581, %v580
  %v820 = vpack.c.b16 %v583, %v582
  %v821 = vpack.c.b16 %v585, %v584
  %v822 = vpack.c.b16 %v587, %v586
  %v823 = vpack.c.b16 %v589, %v588
  %v824 = vpack.c.b16 %v591, %v590
  %v825 = vpack.c.b16 %v593, %v592
  %v826 = vpack.c.b16 %v595, %v594
  %v827 = vpack.c.b16 %v597, %v596
  %v828 = vpack.c.b16 %v599, %v598
  %v829 = vpack.c.b16 %v601, %v600
  %v830 = vpack.c.b16 %v603, %v602
  %v831 = vpack.c.b16 %v605, %v604
  %v832 = vpack.c.b16 %v607, %v606
  %v833 = vpack.c.b16 %v609, %v608
  %v834 = vpack.c.b16 %v611, %v610
  %v835 = vpack.c.b16 %v613, %v612
  %v836 = vpack.c.b16 %v615, %v614
  %v837 = vpack.c.b16 %v617, %v616
  %v838 = vpack.c.b16 %v619, %v618
  %v839 = vpack.c.b16 %v621, %v620
  %v840 = vpack.c.b16 %v623, %v622
  %v841 = vpack.c.b16 %v625, %v624
  %v842 = vpack.c.b16 %v627, %v626
  %v843 = vpack.c.b16 %v629, %v628
  %v844 = vpack.c.b16 %v631, %v630
  %v845 = vpack.c.b16 %v633, %v632
  %v846 = vpack.c.b16 %v635, %v634
  %v847 = vpack.c.b16 %v637, %v636
  %v848 = vpack.c.b16 %v639, %v638
  %v849 = vpack.c.b16 %v641, %v640
  %v850 = vpack.c.b16 %v643, %v642
  %v851 = vpack.c.b16 %v645, %v644
  %v852 = vpack.c.b16 %v647, %v646
  %v853 = vpack.c.b16 %v649, %v648
  %v854 = vpack.c.b16 %v651, %v650
  %v855 = vpack.c.b16 %v653, %v652
  %v856 = vpack.c.b16 %v655, %v654
  %v857 = vpack.c.b16 %v657, %v656
  %v858 = vpack.c.b16 %v659, %v658
  %v859 = vpack.c.b16 %v661, %v660
  %v860 = vpack.c.b16 %v663, %v662
  %v861 = vpack.c.b16 %v665, %v664
  %v862 = vpack.c.b16 %v667, %v666
  %v863 = vpack.c.b16 %v669, %v668
  %v864 = vpack.c.b16 %v671, %v670
  %v865 = vpack.c.b16 %v673, %v672
  %v866 = vpack.c.b16 %v675, %v674
  %v867 = vpack.c.b16 %v677, %v676
  %v868 = vpack.c.b16 %v679, %v678
  %v869 = vpack.c.b16 %v681, %v680
  %v870 = vpack.c.b16 %v683, %v682
  %v871 = vpack.c.b16 %v685, %v684
  %v872 = vpack.c.b16 %v687, %v686
  %v873 = vpack.c.b16 %v689, %v688
  %v874 = vpack.c.b16 %v691, %v690
  %v875 = vpack.c.b16 %v693, %v692
  %v876 = vpack.c.b16 %v695, %v694
  %v877 = vpack.c.b16 %v697, %v696
  %v878 = vpack.c.b16 %v699, %v698
  %v879 = vpack.c.b16 %v701, %v700
  %v880 = vpack.c.b16 %v703, %v702
  %v881 = vpack.c.b16 %v705, %v704
  %v882 = vpack.c.b16 %v707, %v706
  %v883 = vpack.c.b16 %v709, %v708
  %v884 = vpack.c.b16 %v711, %v710
  %v885 = vpack.c.b16 %v713, %v712
  %v886 = vpack.c.b16 %v715, %v714
  %v887 = vpack.c.b16 %v717, %v716
  %v888 = vpack.c.b16 %v719, %v718
  %v889 = vpack.c.b16 %v721, %v720
  %v890 = vpack.c.b16 %v723, %v722
  %v891 = vpack.c.b16 %v725, %v724
  %v892 = vpack.c.b16 %v727, %v726
  %v893 = vpack.c.b16 %v729, %v728
  %v894 = vpack.c.b16 %v731, %v730
  %v895 = vpack.c.b16 %v733, %v732
  %v896 = vpack.c.b16 %v735, %v734
  %v897 = vpack.c.b16 %v737, %v736
  %v898 = vpack.c.b16 %v739, %v738
  %v899 = vpack.c.b16 %v741, %v740
  %v900 = vpack.c.b16 %v743, %v742
  %v901 = vpack.c.b16 %v745, %v744
  %v902 = vpack.c.b16 %v747, %v746
  %v903 = vpack.c.b16 %v749, %v748
  %v904 = vpack.c.b16 %v751, %v750
  %v905 = vpack.c.b16 %v753, %v752
  %v906 = vpack.c.b16 %v755, %v754
  %v907 = vpack.c.b16 %v757, %v756
  %v908 = vpack.c.b16 %v759, %v758
  %v909 = vpack.c.b16 %v761, %v760
  %v910 = vpack.c.b16 %v763, %v762
  %v911 = vpack.c.b16 %v765, %v764
  %v912 = vpack.c.b16 %v767, %v766
  %v913 = vpack.c.b16 %v769, %v768
  %v914 = vpack.c.b16 %v771, %v770
  %v915 = vpack.c.b16 %v773, %v772
  %v916 = vpack.c.b16 %v775, %v774
  %v917 = vpack.c.b16 %v777, %v776
  %v918 = vpack.c.b16 %v779, %v778
  %v919 = vpack.c.b16 %v781, %v780
  %v920 = vpack.c.b16 %v783, %v782
  %v921 = vpack.c.b16 %v785, %v784
  %v922 = vpack.c.b16 %v787, %v786
  %v923 = vpack.c.b16 %v789, %v788
  %v924 = vpack.c.b16 %v791, %v790
  %v925 = vpack.c.b16 %v793, %v792
  %v926 = vpack.c.b16 %v795, %v794
  %v927 = vpack.c.b16 %v797, %v796
  %v928 = vpack.c.b16 %v799, %v798
  %v929 = vpack.c.b16 %v801, %v800
  %v1074 = vunpack.c.l.b16 %v274
  %v1075 = vunpack.c.l.b16 %v275
  %v1076 = vunpack.c.l.b16 %v276
  %v1077 = vunpack.c.l.b16 %v277
  %v1078 = vunpack.c.l.b16 %v278
  %v1079 = vunpack.c.l.b16 %v279
  %v1080 = vunpack.c.l.b16 %v280
  %v1081 = vunpack.c.l.b16 %v281
  %v1082 = vunpack.c.l.b16 %v282
  %v1083 = vunpack.c.l.b16 %v283
  %v1084 = vunpack.c.l.b16 %v284
  %v1085 = vunpack.c.l.b16 %v285
  %v1086 = vunpack.c.l.b16 %v286
  %v1087 = vunpack.c.l.b16 %v287
  %v1088 = vunpack.c.l.b16 %v288
  %v1089 = vunpack.c.l.b16 %v289
  %v1090 = vpack.c.b16 %v1075, %v1074
  %v1091 = vpack.c.b16 %v1077, %v1076
  %v1092 = vpack.c.b16 %v1079, %v1078
  %v1093 = vpack.c.b16 %v1081, %v1080
  %v1094 = vpack.c.b16 %v1083, %v1082
  %v1095 = vpack.c.b16 %v1085, %v1084
  %v1096 = vpack.c.b16 %v1087, %v1086
  %v1097 = vpack.c.b16 %v1089, %v1088
  %1106 = vmatprep.subr.bf16.mxu0 0
  %1107 = vmatpush1.bf16.msra.mxu0 %v1090
  %1108 = vmatprep.subr.bf16.mxu0 0
  %1109 = vmatpush1.bf16.msra.mxu0 %v1091
  %1110 = vmatprep.subr.bf16.mxu0 0
  %1111 = vmatpush1.bf16.msra.mxu0 %v1092
  %1112 = vmatprep.subr.bf16.mxu0 0
  %1113 = vmatpush1.bf16.msra.mxu0 %v1093
  %1114 = vmatprep.subr.bf16.mxu0 0
  %1115 = vmatpush1.bf16.msra.mxu0 %v1094
  %1116 = vmatprep.subr.bf16.mxu0 0
  %1117 = vmatpush1.bf16.msra.mxu0 %v1095
  %1118 = vmatprep.subr.bf16.mxu0 0
  %1119 = vmatpush1.bf16.msra.mxu0 %v1096
  %1120 = vmatprep.subr.bf16.mxu0 0
  %1121 = vmatpush1.bf16.msra.mxu0 %v1097
  %1122 = vmatprep.subr.bf16.mxu0 0
  %1123 = vmatpush1.bf16.msra.mxu0 0
  %1124 = vmatprep.subr.bf16.mxu0 0
  %1125 = vmatpush1.bf16.msra.mxu0 0
  %1126 = vmatprep.subr.bf16.mxu0 0
  %1127 = vmatpush1.bf16.msra.mxu0 0
  %1128 = vmatprep.subr.bf16.mxu0 0
  %1129 = vmatpush1.bf16.msra.mxu0 0
  %1130 = vmatprep.subr.bf16.mxu0 0
  %1131 = vmatpush1.bf16.msra.mxu0 0
  %1132 = vmatprep.subr.bf16.mxu0 0
  %1133 = vmatpush1.bf16.msra.mxu0 0
  %1134 = vmatprep.subr.bf16.mxu0 0
  %1135 = vmatpush1.bf16.msra.mxu0 0
  %1136 = vmatprep.subr.bf16.mxu0 0
  %1137 = vmatpush1.bf16.msra.mxu0 0
  %1138 = vmatprep.mubr.bf16.mxu0 0
  %1139 = vmatmul.mubr.bf16.gmra.mrb[0].mxu0 %v802
  %v1140 = vpop.f32.mrb[0].mxu0
  %v1141 = vadd.f32 0.0, %v1140
  %v1142 = vpop.f32.mrb[0].mxu0
  %v1143 = vpop.f32.mrb[0].mxu0
  %v1144 = vadd.f32 0.0, %v1143
  %v1145 = vpop.f32.mrb[0].mxu0
  %1146 = vmatprep.mubr.bf16.mxu0 0
  %1147 = vmatmul.mubr.bf16.gmra.mrb[0].mxu0 %v803
  %v1148 = vpop.f32.mrb[0].mxu0
  %v1149 = vadd.f32 0.0, %v1148
  %v1150 = vpop.f32.mrb[0].mxu0
  %v1151 = vpop.f32.mrb[0].mxu0
  %v1152 = vadd.f32 0.0, %v1151
  %v1153 = vpop.f32.mrb[0].mxu0
  %1154 = vmatprep.mubr.bf16.mxu0 0
  %1155 = vmatmul.mubr.bf16.gmra.mrb[0].mxu0 %v804
  %v1156 = vpop.f32.mrb[0].mxu0
  %v1157 = vadd.f32 0.0, %v1156
  %v1158 = vpop.f32.mrb[0].mxu0
  %v1159 = vpop.f32.mrb[0].mxu0
  %v1160 = vadd.f32 0.0, %v1159
  %v1161 = vpop.f32.mrb[0].mxu0
  %1162 = vmatprep.mubr.bf16.mxu0 0
  %1163 = vmatmul.mubr.bf16.gmra.mrb[0].mxu0 %v805
  %v1164 = vpop.f32.mrb[0].mxu0
  %v1165 = vadd.f32 0.0, %v1164
  %v1166 = vpop.f32.mrb[0].mxu0
  %v1167 = vpop.f32.mrb[0].mxu0
  %v1168 = vadd.f32 0.0, %v1167
  %v1169 = vpop.f32.mrb[0].mxu0
  %1170 = vmatprep.mubr.bf16.mxu0 0
  %1171 = vmatmul.mubr.bf16.gmra.mrb[0].mxu0 %v806
  %v1172 = vpop.f32.mrb[0].mxu0
  %v1173 = vadd.f32 0.0, %v1172
  %v1174 = vpop.f32.mrb[0].mxu0
  %v1175 = vpop.f32.mrb[0].mxu0
  %v1176 = vadd.f32 0.0, %v1175
  %v1177 = vpop.f32.mrb[0].mxu0
  %1178 = vmatprep.mubr.bf16.mxu0 0
  %1179 = vmatmul.mubr.bf16.gmra.mrb[0].mxu0 %v807
  %v1180 = vpop.f32.mrb[0].mxu0
  %v1181 = vadd.f32 0.0, %v1180
  %v1182 = vpop.f32.mrb[0].mxu0
  %v1183 = vpop.f32.mrb[0].mxu0
  %v1184 = vadd.f32 0.0, %v1183
  %v1185 = vpop.f32.mrb[0].mxu0
  %1186 = vmatprep.mubr.bf16.mxu0 0
  %1187 = vmatmul.mubr.bf16.gmra.mrb[0].mxu0 %v808
  %v1188 = vpop.f32.mrb[0].mxu0
  %v1189 = vadd.f32 0.0, %v1188
  %v1190 = vpop.f32.mrb[0].mxu0
  %v1191 = vpop.f32.mrb[0].mxu0
  %v1192 = vadd.f32 0.0, %v1191
  %v1193 = vpop.f32.mrb[0].mxu0
  %1194 = vmatprep.mubr.bf16.mxu0 0
  %1195 = vmatmul.mubr.bf16.gmra.mrb[0].mxu0 %v809
  %v1196 = vpop.f32.mrb[0].mxu0
  %v1197 = vadd.f32 0.0, %v1196
  %v1198 = vpop.f32.mrb[0].mxu0
  %v1199 = vpop.f32.mrb[0].mxu0
  %v1200 = vadd.f32 0.0, %v1199
  %v1201 = vpop.f32.mrb[0].mxu0
  %1202 = vmatprep.mubr.bf16.mxu0 0
  %1203 = vmatmul.mubr.bf16.gmra.mrb[0].mxu0 %v810
  %v1204 = vpop.f32.mrb[0].mxu0
  %v1205 = vadd.f32 0.0, %v1204
  %v1206 = vpop.f32.mrb[0].mxu0
  %v1207 = vpop.f32.mrb[0].mxu0
  %v1208 = vadd.f32 0.0, %v1207
  %v1209 = vpop.f32.mrb[0].mxu0
  %1210 = vmatprep.mubr.bf16.mxu0 0
  %1211 = vmatmul.mubr.bf16.gmra.mrb[0].mxu0 %v811
  %v1212 = vpop.f32.mrb[0].mxu0
  %v1213 = vadd.f32 0.0, %v1212
  %v1214 = vpop.f32.mrb[0].mxu0
  %v1215 = vpop.f32.mrb[0].mxu0
  %v1216 = vadd.f32 0.0, %v1215
  %v1217 = vpop.f32.mrb[0].mxu0
  %1218 = vmatprep.mubr.bf16.mxu0 0
  %1219 = vmatmul.mubr.bf16.gmra.mrb[0].mxu0 %v812
  %v1220 = vpop.f32.mrb[0].mxu0
  %v1221 = vadd.f32 0.0, %v1220
  %v1222 = vpop.f32.mrb[0].mxu0
  %v1223 = vpop.f32.mrb[0].mxu0
  %v1224 = vadd.f32 0.0, %v1223
  %v1225 = vpop.f32.mrb[0].mxu0
  %1226 = vmatprep.mubr.bf16.mxu0 0
  %1227 = vmatmul.mubr.bf16.gmra.mrb[0].mxu0 %v813
  %v1228 = vpop.f32.mrb[0].mxu0
  %v1229 = vadd.f32 0.0, %v1228
  %v1230 = vpop.f32.mrb[0].mxu0
  %v1231 = vpop.f32.mrb[0].mxu0
  %v1232 = vadd.f32 0.0, %v1231
  %v1233 = vpop.f32.mrb[0].mxu0
  %1234 = vmatprep.mubr.bf16.mxu0 0
  %1235 = vmatmul.mubr.bf16.gmra.mrb[0].mxu0 %v814
  %v1236 = vpop.f32.mrb[0].mxu0
  %v1237 = vadd.f32 0.0, %v1236
  %v1238 = vpop.f32.mrb[0].mxu0
  %v1239 = vpop.f32.mrb[0].mxu0
  %v1240 = vadd.f32 0.0, %v1239
  %v1241 = vpop.f32.mrb[0].mxu0
  %1242 = vmatprep.mubr.bf16.mxu0 0
  %1243 = vmatmul.mubr.bf16.gmra.mrb[0].mxu0 %v815
  %v1244 = vpop.f32.mrb[0].mxu0
  %v1245 = vadd.f32 0.0, %v1244
  %v1246 = vpop.f32.mrb[0].mxu0
  %v1247 = vpop.f32.mrb[0].mxu0
  %v1248 = vadd.f32 0.0, %v1247
  %v1249 = vpop.f32.mrb[0].mxu0
  %1250 = vmatprep.mubr.bf16.mxu0 0
  %1251 = vmatmul.mubr.bf16.gmra.mrb[0].mxu0 %v816
  %v1252 = vpop.f32.mrb[0].mxu0
  %v1253 = vadd.f32 0.0, %v1252
  %v1254 = vpop.f32.mrb[0].mxu0
  %v1255 = vpop.f32.mrb[0].mxu0
  %v1256 = vadd.f32 0.0, %v1255
  %v1257 = vpop.f32.mrb[0].mxu0
  %1258 = vmatprep.mubr.bf16.mxu0 0
  %1259 = vmatmul.mubr.bf16.gmra.mrb[0].mxu0 %v817
  %v1260 = vpop.f32.mrb[0].mxu0
  %v1261 = vadd.f32 0.0, %v1260
  %v1262 = vpop.f32.mrb[0].mxu0
  %v1263 = vpop.f32.mrb[0].mxu0
  %v1264 = vadd.f32 0.0, %v1263
  %v1265 = vpop.f32.mrb[0].mxu0
  %1266 = vmatprep.mubr.bf16.mxu0 0
  %1267 = vmatmul.mubr.bf16.gmra.mrb[0].mxu0 %v818
  %v1268 = vpop.f32.mrb[0].mxu0
  %v1269 = vadd.f32 0.0, %v1268
  %v1270 = vpop.f32.mrb[0].mxu0
  %v1271 = vpop.f32.mrb[0].mxu0
  %v1272 = vadd.f32 0.0, %v1271
  %v1273 = vpop.f32.mrb[0].mxu0
  %1274 = vmatprep.mubr.bf16.mxu0 0
  %1275 = vmatmul.mubr.bf16.gmra.mrb[0].mxu0 %v819
  %v1276 = vpop.f32.mrb[0].mxu0
  %v1277 = vadd.f32 0.0, %v1276
  %v1278 = vpop.f32.mrb[0].mxu0
  %v1279 = vpop.f32.mrb[0].mxu0
  %v1280 = vadd.f32 0.0, %v1279
  %v1281 = vpop.f32.mrb[0].mxu0
  %1282 = vmatprep.mubr.bf16.mxu0 0
  %1283 = vmatmul.mubr.bf16.gmra.mrb[0].mxu0 %v820
  %v1284 = vpop.f32.mrb[0].mxu0
  %v1285 = vadd.f32 0.0, %v1284
  %v1286 = vpop.f32.mrb[0].mxu0
  %v1287 = vpop.f32.mrb[0].mxu0
  %v1288 = vadd.f32 0.0, %v1287
  %v1289 = vpop.f32.mrb[0].mxu0
  %1290 = vmatprep.mubr.bf16.mxu0 0
  %1291 = vmatmul.mubr.bf16.gmra.mrb[0].mxu0 %v821
  %v1292 = vpop.f32.mrb[0].mxu0
  %v1293 = vadd.f32 0.0, %v1292
  %v1294 = vpop.f32.mrb[0].mxu0
  %v1295 = vpop.f32.mrb[0].mxu0
  %v1296 = vadd.f32 0.0, %v1295
  %v1297 = vpop.f32.mrb[0].mxu0
  %1298 = vmatprep.mubr.bf16.mxu0 0
  %1299 = vmatmul.mubr.bf16.gmra.mrb[0].mxu0 %v822
  %v1300 = vpop.f32.mrb[0].mxu0
  %v1301 = vadd.f32 0.0, %v1300
  %v1302 = vpop.f32.mrb[0].mxu0
  %v1303 = vpop.f32.mrb[0].mxu0
  %v1304 = vadd.f32 0.0, %v1303
  %v1305 = vpop.f32.mrb[0].mxu0
  %1306 = vmatprep.mubr.bf16.mxu0 0
  %1307 = vmatmul.mubr.bf16.gmra.mrb[0].mxu0 %v823
  %v1308 = vpop.f32.mrb[0].mxu0
  %v1309 = vadd.f32 0.0, %v1308
  %v1310 = vpop.f32.mrb[0].mxu0
  %v1311 = vpop.f32.mrb[0].mxu0
  %v1312 = vadd.f32 0.0, %v1311
  %v1313 = vpop.f32.mrb[0].mxu0
  %1314 = vmatprep.mubr.bf16.mxu0 0
  %1315 = vmatmul.mubr.bf16.gmra.mrb[0].mxu0 %v824
  %v1316 = vpop.f32.mrb[0].mxu0
  %v1317 = vadd.f32 0.0, %v1316
  %v1318 = vpop.f32.mrb[0].mxu0
  %v1319 = vpop.f32.mrb[0].mxu0
  %v1320 = vadd.f32 0.0, %v1319
  %v1321 = vpop.f32.mrb[0].mxu0
  %1322 = vmatprep.mubr.bf16.mxu0 0
  %1323 = vmatmul.mubr.bf16.gmra.mrb[0].mxu0 %v825
  %v1324 = vpop.f32.mrb[0].mxu0
  %v1325 = vadd.f32 0.0, %v1324
  %v1326 = vpop.f32.mrb[0].mxu0
  %v1327 = vpop.f32.mrb[0].mxu0
  %v1328 = vadd.f32 0.0, %v1327
  %v1329 = vpop.f32.mrb[0].mxu0
  %1330 = vmatprep.mubr.bf16.mxu0 0
  %1331 = vmatmul.mubr.bf16.gmra.mrb[0].mxu0 %v826
  %v1332 = vpop.f32.mrb[0].mxu0
  %v1333 = vadd.f32 0.0, %v1332
  %v1334 = vpop.f32.mrb[0].mxu0
  %v1335 = vpop.f32.mrb[0].mxu0
  %v1336 = vadd.f32 0.0, %v1335
  %v1337 = vpop.f32.mrb[0].mxu0
  %1338 = vmatprep.mubr.bf16.mxu0 0
  %1339 = vmatmul.mubr.bf16.gmra.mrb[0].mxu0 %v827
  %v1340 = vpop.f32.mrb[0].mxu0
  %v1341 = vadd.f32 0.0, %v1340
  %v1342 = vpop.f32.mrb[0].mxu0
  %v1343 = vpop.f32.mrb[0].mxu0
  %v1344 = vadd.f32 0.0, %v1343
  %v1345 = vpop.f32.mrb[0].mxu0
  %1346 = vmatprep.mubr.bf16.mxu0 0
  %1347 = vmatmul.mubr.bf16.gmra.mrb[0].mxu0 %v828
  %v1348 = vpop.f32.mrb[0].mxu0
  %v1349 = vadd.f32 0.0, %v1348
  %v1350 = vpop.f32.mrb[0].mxu0
  %v1351 = vpop.f32.mrb[0].mxu0
  %v1352 = vadd.f32 0.0, %v1351
  %v1353 = vpop.f32.mrb[0].mxu0
  %1354 = vmatprep.mubr.bf16.mxu0 0
  %1355 = vmatmul.mubr.bf16.gmra.mrb[0].mxu0 %v829
  %v1356 = vpop.f32.mrb[0].mxu0
  %v1357 = vadd.f32 0.0, %v1356
  %v1358 = vpop.f32.mrb[0].mxu0
  %v1359 = vpop.f32.mrb[0].mxu0
  %v1360 = vadd.f32 0.0, %v1359
  %v1361 = vpop.f32.mrb[0].mxu0
  %1362 = vmatprep.mubr.bf16.mxu0 0
  %1363 = vmatmul.mubr.bf16.gmra.mrb[0].mxu0 %v830
  %v1364 = vpop.f32.mrb[0].mxu0
  %v1365 = vadd.f32 0.0, %v1364
  %v1366 = vpop.f32.mrb[0].mxu0
  %v1367 = vpop.f32.mrb[0].mxu0
  %v1368 = vadd.f32 0.0, %v1367
  %v1369 = vpop.f32.mrb[0].mxu0
  %1370 = vmatprep.mubr.bf16.mxu0 0
  %1371 = vmatmul.mubr.bf16.gmra.mrb[0].mxu0 %v831
  %v1372 = vpop.f32.mrb[0].mxu0
  %v1373 = vadd.f32 0.0, %v1372
  %v1374 = vpop.f32.mrb[0].mxu0
  %v1375 = vpop.f32.mrb[0].mxu0
  %v1376 = vadd.f32 0.0, %v1375
  %v1377 = vpop.f32.mrb[0].mxu0
  %1378 = vmatprep.mubr.bf16.mxu0 0
  %1379 = vmatmul.mubr.bf16.gmra.mrb[0].mxu0 %v832
  %v1380 = vpop.f32.mrb[0].mxu0
  %v1381 = vadd.f32 0.0, %v1380
  %v1382 = vpop.f32.mrb[0].mxu0
  %v1383 = vpop.f32.mrb[0].mxu0
  %v1384 = vadd.f32 0.0, %v1383
  %v1385 = vpop.f32.mrb[0].mxu0
  %1386 = vmatprep.mubr.bf16.mxu0 0
  %1387 = vmatmul.mubr.bf16.gmra.mrb[0].mxu0 %v833
  %v1388 = vpop.f32.mrb[0].mxu0
  %v1389 = vadd.f32 0.0, %v1388
  %v1390 = vpop.f32.mrb[0].mxu0
  %v1391 = vpop.f32.mrb[0].mxu0
  %v1392 = vadd.f32 0.0, %v1391
  %v1393 = vpop.f32.mrb[0].mxu0
  %1394 = vmatprep.mubr.bf16.mxu0 0
  %1395 = vmatmul.mubr.bf16.gmra.mrb[0].mxu0 %v834
  %v1396 = vpop.f32.mrb[0].mxu0
  %v1397 = vadd.f32 0.0, %v1396
  %v1398 = vpop.f32.mrb[0].mxu0
  %v1399 = vpop.f32.mrb[0].mxu0
  %v1400 = vadd.f32 0.0, %v1399
  %v1401 = vpop.f32.mrb[0].mxu0
  %1402 = vmatprep.mubr.bf16.mxu0 0
  %1403 = vmatmul.mubr.bf16.gmra.mrb[0].mxu0 %v835
  %v1404 = vpop.f32.mrb[0].mxu0
  %v1405 = vadd.f32 0.0, %v1404
  %v1406 = vpop.f32.mrb[0].mxu0
  %v1407 = vpop.f32.mrb[0].mxu0
  %v1408 = vadd.f32 0.0, %v1407
  %v1409 = vpop.f32.mrb[0].mxu0
  %1410 = vmatprep.mubr.bf16.mxu0 0
  %1411 = vmatmul.mubr.bf16.gmra.mrb[0].mxu0 %v836
  %v1412 = vpop.f32.mrb[0].mxu0
  %v1413 = vadd.f32 0.0, %v1412
  %v1414 = vpop.f32.mrb[0].mxu0
  %v1415 = vpop.f32.mrb[0].mxu0
  %v1416 = vadd.f32 0.0, %v1415
  %v1417 = vpop.f32.mrb[0].mxu0
  %1418 = vmatprep.mubr.bf16.mxu0 0
  %1419 = vmatmul.mubr.bf16.gmra.mrb[0].mxu0 %v837
  %v1420 = vpop.f32.mrb[0].mxu0
  %v1421 = vadd.f32 0.0, %v1420
  %v1422 = vpop.f32.mrb[0].mxu0
  %v1423 = vpop.f32.mrb[0].mxu0
  %v1424 = vadd.f32 0.0, %v1423
  %v1425 = vpop.f32.mrb[0].mxu0
  %1426 = vmatprep.mubr.bf16.mxu0 0
  %1427 = vmatmul.mubr.bf16.gmra.mrb[0].mxu0 %v838
  %v1428 = vpop.f32.mrb[0].mxu0
  %v1429 = vadd.f32 0.0, %v1428
  %v1430 = vpop.f32.mrb[0].mxu0
  %v1431 = vpop.f32.mrb[0].mxu0
  %v1432 = vadd.f32 0.0, %v1431
  %v1433 = vpop.f32.mrb[0].mxu0
  %1434 = vmatprep.mubr.bf16.mxu0 0
  %1435 = vmatmul.mubr.bf16.gmra.mrb[0].mxu0 %v839
  %v1436 = vpop.f32.mrb[0].mxu0
  %v1437 = vadd.f32 0.0, %v1436
  %v1438 = vpop.f32.mrb[0].mxu0
  %v1439 = vpop.f32.mrb[0].mxu0
  %v1440 = vadd.f32 0.0, %v1439
  %v1441 = vpop.f32.mrb[0].mxu0
  %1442 = vmatprep.mubr.bf16.mxu0 0
  %1443 = vmatmul.mubr.bf16.gmra.mrb[0].mxu0 %v840
  %v1444 = vpop.f32.mrb[0].mxu0
  %v1445 = vadd.f32 0.0, %v1444
  %v1446 = vpop.f32.mrb[0].mxu0
  %v1447 = vpop.f32.mrb[0].mxu0
  %v1448 = vadd.f32 0.0, %v1447
  %v1449 = vpop.f32.mrb[0].mxu0
  %1450 = vmatprep.mubr.bf16.mxu0 0
  %1451 = vmatmul.mubr.bf16.gmra.mrb[0].mxu0 %v841
  %v1452 = vpop.f32.mrb[0].mxu0
  %v1453 = vadd.f32 0.0, %v1452
  %v1454 = vpop.f32.mrb[0].mxu0
  %v1455 = vpop.f32.mrb[0].mxu0
  %v1456 = vadd.f32 0.0, %v1455
  %v1457 = vpop.f32.mrb[0].mxu0
  %1458 = vmatprep.mubr.bf16.mxu0 0
  %1459 = vmatmul.mubr.bf16.gmra.mrb[0].mxu0 %v842
  %v1460 = vpop.f32.mrb[0].mxu0
  %v1461 = vadd.f32 0.0, %v1460
  %v1462 = vpop.f32.mrb[0].mxu0
  %v1463 = vpop.f32.mrb[0].mxu0
  %v1464 = vadd.f32 0.0, %v1463
  %v1465 = vpop.f32.mrb[0].mxu0
  %1466 = vmatprep.mubr.bf16.mxu0 0
  %1467 = vmatmul.mubr.bf16.gmra.mrb[0].mxu0 %v843
  %v1468 = vpop.f32.mrb[0].mxu0
  %v1469 = vadd.f32 0.0, %v1468
  %v1470 = vpop.f32.mrb[0].mxu0
  %v1471 = vpop.f32.mrb[0].mxu0
  %v1472 = vadd.f32 0.0, %v1471
  %v1473 = vpop.f32.mrb[0].mxu0
  %1474 = vmatprep.mubr.bf16.mxu0 0
  %1475 = vmatmul.mubr.bf16.gmra.mrb[0].mxu0 %v844
  %v1476 = vpop.f32.mrb[0].mxu0
  %v1477 = vadd.f32 0.0, %v1476
  %v1478 = vpop.f32.mrb[0].mxu0
  %v1479 = vpop.f32.mrb[0].mxu0
  %v1480 = vadd.f32 0.0, %v1479
  %v1481 = vpop.f32.mrb[0].mxu0
  %1482 = vmatprep.mubr.bf16.mxu0 0
  %1483 = vmatmul.mubr.bf16.gmra.mrb[0].mxu0 %v845
  %v1484 = vpop.f32.mrb[0].mxu0
  %v1485 = vadd.f32 0.0, %v1484
  %v1486 = vpop.f32.mrb[0].mxu0
  %v1487 = vpop.f32.mrb[0].mxu0
  %v1488 = vadd.f32 0.0, %v1487
  %v1489 = vpop.f32.mrb[0].mxu0
  %1490 = vmatprep.mubr.bf16.mxu0 0
  %1491 = vmatmul.mubr.bf16.gmra.mrb[0].mxu0 %v846
  %v1492 = vpop.f32.mrb[0].mxu0
  %v1493 = vadd.f32 0.0, %v1492
  %v1494 = vpop.f32.mrb[0].mxu0
  %v1495 = vpop.f32.mrb[0].mxu0
  %v1496 = vadd.f32 0.0, %v1495
  %v1497 = vpop.f32.mrb[0].mxu0
  %1498 = vmatprep.mubr.bf16.mxu0 0
  %1499 = vmatmul.mubr.bf16.gmra.mrb[0].mxu0 %v847
  %v1500 = vpop.f32.mrb[0].mxu0
  %v1501 = vadd.f32 0.0, %v1500
  %v1502 = vpop.f32.mrb[0].mxu0
  %v1503 = vpop.f32.mrb[0].mxu0
  %v1504 = vadd.f32 0.0, %v1503
  %v1505 = vpop.f32.mrb[0].mxu0
  %1506 = vmatprep.mubr.bf16.mxu0 0
  %1507 = vmatmul.mubr.bf16.gmra.mrb[0].mxu0 %v848
  %v1508 = vpop.f32.mrb[0].mxu0
  %v1509 = vadd.f32 0.0, %v1508
  %v1510 = vpop.f32.mrb[0].mxu0
  %v1511 = vpop.f32.mrb[0].mxu0
  %v1512 = vadd.f32 0.0, %v1511
  %v1513 = vpop.f32.mrb[0].mxu0
  %1514 = vmatprep.mubr.bf16.mxu0 0
  %1515 = vmatmul.mubr.bf16.gmra.mrb[0].mxu0 %v849
  %v1516 = vpop.f32.mrb[0].mxu0
  %v1517 = vadd.f32 0.0, %v1516
  %v1518 = vpop.f32.mrb[0].mxu0
  %v1519 = vpop.f32.mrb[0].mxu0
  %v1520 = vadd.f32 0.0, %v1519
  %v1521 = vpop.f32.mrb[0].mxu0
  %1522 = vmatprep.mubr.bf16.mxu0 0
  %1523 = vmatmul.mubr.bf16.gmra.mrb[0].mxu0 %v850
  %v1524 = vpop.f32.mrb[0].mxu0
  %v1525 = vadd.f32 0.0, %v1524
  %v1526 = vpop.f32.mrb[0].mxu0
  %v1527 = vpop.f32.mrb[0].mxu0
  %v1528 = vadd.f32 0.0, %v1527
  %v1529 = vpop.f32.mrb[0].mxu0
  %1530 = vmatprep.mubr.bf16.mxu0 0
  %1531 = vmatmul.mubr.bf16.gmra.mrb[0].mxu0 %v851
  %v1532 = vpop.f32.mrb[0].mxu0
  %v1533 = vadd.f32 0.0, %v1532
  %v1534 = vpop.f32.mrb[0].mxu0
  %v1535 = vpop.f32.mrb[0].mxu0
  %v1536 = vadd.f32 0.0, %v1535
  %v1537 = vpop.f32.mrb[0].mxu0
  %1538 = vmatprep.mubr.bf16.mxu0 0
  %1539 = vmatmul.mubr.bf16.gmra.mrb[0].mxu0 %v852
  %v1540 = vpop.f32.mrb[0].mxu0
  %v1541 = vadd.f32 0.0, %v1540
  %v1542 = vpop.f32.mrb[0].mxu0
  %v1543 = vpop.f32.mrb[0].mxu0
  %v1544 = vadd.f32 0.0, %v1543
  %v1545 = vpop.f32.mrb[0].mxu0
  %1546 = vmatprep.mubr.bf16.mxu0 0
  %1547 = vmatmul.mubr.bf16.gmra.mrb[0].mxu0 %v853
  %v1548 = vpop.f32.mrb[0].mxu0
  %v1549 = vadd.f32 0.0, %v1548
  %v1550 = vpop.f32.mrb[0].mxu0
  %v1551 = vpop.f32.mrb[0].mxu0
  %v1552 = vadd.f32 0.0, %v1551
  %v1553 = vpop.f32.mrb[0].mxu0
  %1554 = vmatprep.mubr.bf16.mxu0 0
  %1555 = vmatmul.mubr.bf16.gmra.mrb[0].mxu0 %v854
  %v1556 = vpop.f32.mrb[0].mxu0
  %v1557 = vadd.f32 0.0, %v1556
  %v1558 = vpop.f32.mrb[0].mxu0
  %v1559 = vpop.f32.mrb[0].mxu0
  %v1560 = vadd.f32 0.0, %v1559
  %v1561 = vpop.f32.mrb[0].mxu0
  %1562 = vmatprep.mubr.bf16.mxu0 0
  %1563 = vmatmul.mubr.bf16.gmra.mrb[0].mxu0 %v855
  %v1564 = vpop.f32.mrb[0].mxu0
  %v1565 = vadd.f32 0.0, %v1564
  %v1566 = vpop.f32.mrb[0].mxu0
  %v1567 = vpop.f32.mrb[0].mxu0
  %v1568 = vadd.f32 0.0, %v1567
  %v1569 = vpop.f32.mrb[0].mxu0
  %1570 = vmatprep.mubr.bf16.mxu0 0
  %1571 = vmatmul.mubr.bf16.gmra.mrb[0].mxu0 %v856
  %v1572 = vpop.f32.mrb[0].mxu0
  %v1573 = vadd.f32 0.0, %v1572
  %v1574 = vpop.f32.mrb[0].mxu0
  %v1575 = vpop.f32.mrb[0].mxu0
  %v1576 = vadd.f32 0.0, %v1575
  %v1577 = vpop.f32.mrb[0].mxu0
  %1578 = vmatprep.mubr.bf16.mxu0 0
  %1579 = vmatmul.mubr.bf16.gmra.mrb[0].mxu0 %v857
  %v1580 = vpop.f32.mrb[0].mxu0
  %v1581 = vadd.f32 0.0, %v1580
  %v1582 = vpop.f32.mrb[0].mxu0
  %v1583 = vpop.f32.mrb[0].mxu0
  %v1584 = vadd.f32 0.0, %v1583
  %v1585 = vpop.f32.mrb[0].mxu0
  %1586 = vmatprep.mubr.bf16.mxu0 0
  %1587 = vmatmul.mubr.bf16.gmra.mrb[0].mxu0 %v858
  %v1588 = vpop.f32.mrb[0].mxu0
  %v1589 = vadd.f32 0.0, %v1588
  %v1590 = vpop.f32.mrb[0].mxu0
  %v1591 = vpop.f32.mrb[0].mxu0
  %v1592 = vadd.f32 0.0, %v1591
  %v1593 = vpop.f32.mrb[0].mxu0
  %1594 = vmatprep.mubr.bf16.mxu0 0
  %1595 = vmatmul.mubr.bf16.gmra.mrb[0].mxu0 %v859
  %v1596 = vpop.f32.mrb[0].mxu0
  %v1597 = vadd.f32 0.0, %v1596
  %v1598 = vpop.f32.mrb[0].mxu0
  %v1599 = vpop.f32.mrb[0].mxu0
  %v1600 = vadd.f32 0.0, %v1599
  %v1601 = vpop.f32.mrb[0].mxu0
  %1602 = vmatprep.mubr.bf16.mxu0 0
  %1603 = vmatmul.mubr.bf16.gmra.mrb[0].mxu0 %v860
  %v1604 = vpop.f32.mrb[0].mxu0
  %v1605 = vadd.f32 0.0, %v1604
  %v1606 = vpop.f32.mrb[0].mxu0
  %v1607 = vpop.f32.mrb[0].mxu0
  %v1608 = vadd.f32 0.0, %v1607
  %v1609 = vpop.f32.mrb[0].mxu0
  %1610 = vmatprep.mubr.bf16.mxu0 0
  %1611 = vmatmul.mubr.bf16.gmra.mrb[0].mxu0 %v861
  %v1612 = vpop.f32.mrb[0].mxu0
  %v1613 = vadd.f32 0.0, %v1612
  %v1614 = vpop.f32.mrb[0].mxu0
  %v1615 = vpop.f32.mrb[0].mxu0
  %v1616 = vadd.f32 0.0, %v1615
  %v1617 = vpop.f32.mrb[0].mxu0
  %1618 = vmatprep.mubr.bf16.mxu0 0
  %1619 = vmatmul.mubr.bf16.gmra.mrb[0].mxu0 %v862
  %v1620 = vpop.f32.mrb[0].mxu0
  %v1621 = vadd.f32 0.0, %v1620
  %v1622 = vpop.f32.mrb[0].mxu0
  %v1623 = vpop.f32.mrb[0].mxu0
  %v1624 = vadd.f32 0.0, %v1623
  %v1625 = vpop.f32.mrb[0].mxu0
  %1626 = vmatprep.mubr.bf16.mxu0 0
  %1627 = vmatmul.mubr.bf16.gmra.mrb[0].mxu0 %v863
  %v1628 = vpop.f32.mrb[0].mxu0
  %v1629 = vadd.f32 0.0, %v1628
  %v1630 = vpop.f32.mrb[0].mxu0
  %v1631 = vpop.f32.mrb[0].mxu0
  %v1632 = vadd.f32 0.0, %v1631
  %v1633 = vpop.f32.mrb[0].mxu0
  %1634 = vmatprep.mubr.bf16.mxu0 0
  %1635 = vmatmul.mubr.bf16.gmra.mrb[0].mxu0 %v864
  %v1636 = vpop.f32.mrb[0].mxu0
  %v1637 = vadd.f32 0.0, %v1636
  %v1638 = vpop.f32.mrb[0].mxu0
  %v1639 = vpop.f32.mrb[0].mxu0
  %v1640 = vadd.f32 0.0, %v1639
  %v1641 = vpop.f32.mrb[0].mxu0
  %1642 = vmatprep.mubr.bf16.mxu0 0
  %1643 = vmatmul.mubr.bf16.gmra.mrb[0].mxu0 %v865
  %v1644 = vpop.f32.mrb[0].mxu0
  %v1645 = vadd.f32 0.0, %v1644
  %v1646 = vpop.f32.mrb[0].mxu0
  %v1647 = vpop.f32.mrb[0].mxu0
  %v1648 = vadd.f32 0.0, %v1647
  %v1649 = vpop.f32.mrb[0].mxu0
  %1650 = vmatprep.mubr.bf16.mxu0 0
  %1651 = vmatmul.mubr.bf16.gmra.mrb[0].mxu0 %v866
  %v1652 = vpop.f32.mrb[0].mxu0
  %v1653 = vadd.f32 0.0, %v1652
  %v1654 = vpop.f32.mrb[0].mxu0
  %v1655 = vpop.f32.mrb[0].mxu0
  %v1656 = vadd.f32 0.0, %v1655
  %v1657 = vpop.f32.mrb[0].mxu0
  %1658 = vmatprep.mubr.bf16.mxu0 0
  %1659 = vmatmul.mubr.bf16.gmra.mrb[0].mxu0 %v867
  %v1660 = vpop.f32.mrb[0].mxu0
  %v1661 = vadd.f32 0.0, %v1660
  %v1662 = vpop.f32.mrb[0].mxu0
  %v1663 = vpop.f32.mrb[0].mxu0
  %v1664 = vadd.f32 0.0, %v1663
  %v1665 = vpop.f32.mrb[0].mxu0
  %1666 = vmatprep.mubr.bf16.mxu0 0
  %1667 = vmatmul.mubr.bf16.gmra.mrb[0].mxu0 %v868
  %v1668 = vpop.f32.mrb[0].mxu0
  %v1669 = vadd.f32 0.0, %v1668
  %v1670 = vpop.f32.mrb[0].mxu0
  %v1671 = vpop.f32.mrb[0].mxu0
  %v1672 = vadd.f32 0.0, %v1671
  %v1673 = vpop.f32.mrb[0].mxu0
  %1674 = vmatprep.mubr.bf16.mxu0 0
  %1675 = vmatmul.mubr.bf16.gmra.mrb[0].mxu0 %v869
  %v1676 = vpop.f32.mrb[0].mxu0
  %v1677 = vadd.f32 0.0, %v1676
  %v1678 = vpop.f32.mrb[0].mxu0
  %v1679 = vpop.f32.mrb[0].mxu0
  %v1680 = vadd.f32 0.0, %v1679
  %v1681 = vpop.f32.mrb[0].mxu0
  %1682 = vmatprep.mubr.bf16.mxu0 0
  %1683 = vmatmul.mubr.bf16.gmra.mrb[0].mxu0 %v870
  %v1684 = vpop.f32.mrb[0].mxu0
  %v1685 = vadd.f32 0.0, %v1684
  %v1686 = vpop.f32.mrb[0].mxu0
  %v1687 = vpop.f32.mrb[0].mxu0
  %v1688 = vadd.f32 0.0, %v1687
  %v1689 = vpop.f32.mrb[0].mxu0
  %1690 = vmatprep.mubr.bf16.mxu0 0
  %1691 = vmatmul.mubr.bf16.gmra.mrb[0].mxu0 %v871
  %v1692 = vpop.f32.mrb[0].mxu0
  %v1693 = vadd.f32 0.0, %v1692
  %v1694 = vpop.f32.mrb[0].mxu0
  %v1695 = vpop.f32.mrb[0].mxu0
  %v1696 = vadd.f32 0.0, %v1695
  %v1697 = vpop.f32.mrb[0].mxu0
  %1698 = vmatprep.mubr.bf16.mxu0 0
  %1699 = vmatmul.mubr.bf16.gmra.mrb[0].mxu0 %v872
  %v1700 = vpop.f32.mrb[0].mxu0
  %v1701 = vadd.f32 0.0, %v1700
  %v1702 = vpop.f32.mrb[0].mxu0
  %v1703 = vpop.f32.mrb[0].mxu0
  %v1704 = vadd.f32 0.0, %v1703
  %v1705 = vpop.f32.mrb[0].mxu0
  %1706 = vmatprep.mubr.bf16.mxu0 0
  %1707 = vmatmul.mubr.bf16.gmra.mrb[0].mxu0 %v873
  %v1708 = vpop.f32.mrb[0].mxu0
  %v1709 = vadd.f32 0.0, %v1708
  %v1710 = vpop.f32.mrb[0].mxu0
  %v1711 = vpop.f32.mrb[0].mxu0
  %v1712 = vadd.f32 0.0, %v1711
  %v1713 = vpop.f32.mrb[0].mxu0
  %1714 = vmatprep.mubr.bf16.mxu0 0
  %1715 = vmatmul.mubr.bf16.gmra.mrb[0].mxu0 %v874
  %v1716 = vpop.f32.mrb[0].mxu0
  %v1717 = vadd.f32 0.0, %v1716
  %v1718 = vpop.f32.mrb[0].mxu0
  %v1719 = vpop.f32.mrb[0].mxu0
  %v1720 = vadd.f32 0.0, %v1719
  %v1721 = vpop.f32.mrb[0].mxu0
  %1722 = vmatprep.mubr.bf16.mxu0 0
  %1723 = vmatmul.mubr.bf16.gmra.mrb[0].mxu0 %v875
  %v1724 = vpop.f32.mrb[0].mxu0
  %v1725 = vadd.f32 0.0, %v1724
  %v1726 = vpop.f32.mrb[0].mxu0
  %v1727 = vpop.f32.mrb[0].mxu0
  %v1728 = vadd.f32 0.0, %v1727
  %v1729 = vpop.f32.mrb[0].mxu0
  %1730 = vmatprep.mubr.bf16.mxu0 0
  %1731 = vmatmul.mubr.bf16.gmra.mrb[0].mxu0 %v876
  %v1732 = vpop.f32.mrb[0].mxu0
  %v1733 = vadd.f32 0.0, %v1732
  %v1734 = vpop.f32.mrb[0].mxu0
  %v1735 = vpop.f32.mrb[0].mxu0
  %v1736 = vadd.f32 0.0, %v1735
  %v1737 = vpop.f32.mrb[0].mxu0
  %1738 = vmatprep.mubr.bf16.mxu0 0
  %1739 = vmatmul.mubr.bf16.gmra.mrb[0].mxu0 %v877
  %v1740 = vpop.f32.mrb[0].mxu0
  %v1741 = vadd.f32 0.0, %v1740
  %v1742 = vpop.f32.mrb[0].mxu0
  %v1743 = vpop.f32.mrb[0].mxu0
  %v1744 = vadd.f32 0.0, %v1743
  %v1745 = vpop.f32.mrb[0].mxu0
  %1746 = vmatprep.mubr.bf16.mxu0 0
  %1747 = vmatmul.mubr.bf16.gmra.mrb[0].mxu0 %v878
  %v1748 = vpop.f32.mrb[0].mxu0
  %v1749 = vadd.f32 0.0, %v1748
  %v1750 = vpop.f32.mrb[0].mxu0
  %v1751 = vpop.f32.mrb[0].mxu0
  %v1752 = vadd.f32 0.0, %v1751
  %v1753 = vpop.f32.mrb[0].mxu0
  %1754 = vmatprep.mubr.bf16.mxu0 0
  %1755 = vmatmul.mubr.bf16.gmra.mrb[0].mxu0 %v879
  %v1756 = vpop.f32.mrb[0].mxu0
  %v1757 = vadd.f32 0.0, %v1756
  %v1758 = vpop.f32.mrb[0].mxu0
  %v1759 = vpop.f32.mrb[0].mxu0
  %v1760 = vadd.f32 0.0, %v1759
  %v1761 = vpop.f32.mrb[0].mxu0
  %1762 = vmatprep.mubr.bf16.mxu0 0
  %1763 = vmatmul.mubr.bf16.gmra.mrb[0].mxu0 %v880
  %v1764 = vpop.f32.mrb[0].mxu0
  %v1765 = vadd.f32 0.0, %v1764
  %v1766 = vpop.f32.mrb[0].mxu0
  %v1767 = vpop.f32.mrb[0].mxu0
  %v1768 = vadd.f32 0.0, %v1767
  %v1769 = vpop.f32.mrb[0].mxu0
  %1770 = vmatprep.mubr.bf16.mxu0 0
  %1771 = vmatmul.mubr.bf16.gmra.mrb[0].mxu0 %v881
  %v1772 = vpop.f32.mrb[0].mxu0
  %v1773 = vadd.f32 0.0, %v1772
  %v1774 = vpop.f32.mrb[0].mxu0
  %v1775 = vpop.f32.mrb[0].mxu0
  %v1776 = vadd.f32 0.0, %v1775
  %v1777 = vpop.f32.mrb[0].mxu0
  %1778 = vmatprep.mubr.bf16.mxu0 0
  %1779 = vmatmul.mubr.bf16.gmra.mrb[0].mxu0 %v882
  %v1780 = vpop.f32.mrb[0].mxu0
  %v1781 = vadd.f32 0.0, %v1780
  %v1782 = vpop.f32.mrb[0].mxu0
  %v1783 = vpop.f32.mrb[0].mxu0
  %v1784 = vadd.f32 0.0, %v1783
  %v1785 = vpop.f32.mrb[0].mxu0
  %1786 = vmatprep.mubr.bf16.mxu0 0
  %1787 = vmatmul.mubr.bf16.gmra.mrb[0].mxu0 %v883
  %v1788 = vpop.f32.mrb[0].mxu0
  %v1789 = vadd.f32 0.0, %v1788
  %v1790 = vpop.f32.mrb[0].mxu0
  %v1791 = vpop.f32.mrb[0].mxu0
  %v1792 = vadd.f32 0.0, %v1791
  %v1793 = vpop.f32.mrb[0].mxu0
  %1794 = vmatprep.mubr.bf16.mxu0 0
  %1795 = vmatmul.mubr.bf16.gmra.mrb[0].mxu0 %v884
  %v1796 = vpop.f32.mrb[0].mxu0
  %v1797 = vadd.f32 0.0, %v1796
  %v1798 = vpop.f32.mrb[0].mxu0
  %v1799 = vpop.f32.mrb[0].mxu0
  %v1800 = vadd.f32 0.0, %v1799
  %v1801 = vpop.f32.mrb[0].mxu0
  %1802 = vmatprep.mubr.bf16.mxu0 0
  %1803 = vmatmul.mubr.bf16.gmra.mrb[0].mxu0 %v885
  %v1804 = vpop.f32.mrb[0].mxu0
  %v1805 = vadd.f32 0.0, %v1804
  %v1806 = vpop.f32.mrb[0].mxu0
  %v1807 = vpop.f32.mrb[0].mxu0
  %v1808 = vadd.f32 0.0, %v1807
  %v1809 = vpop.f32.mrb[0].mxu0
  %1810 = vmatprep.mubr.bf16.mxu0 0
  %1811 = vmatmul.mubr.bf16.gmra.mrb[0].mxu0 %v886
  %v1812 = vpop.f32.mrb[0].mxu0
  %v1813 = vadd.f32 0.0, %v1812
  %v1814 = vpop.f32.mrb[0].mxu0
  %v1815 = vpop.f32.mrb[0].mxu0
  %v1816 = vadd.f32 0.0, %v1815
  %v1817 = vpop.f32.mrb[0].mxu0
  %1818 = vmatprep.mubr.bf16.mxu0 0
  %1819 = vmatmul.mubr.bf16.gmra.mrb[0].mxu0 %v887
  %v1820 = vpop.f32.mrb[0].mxu0
  %v1821 = vadd.f32 0.0, %v1820
  %v1822 = vpop.f32.mrb[0].mxu0
  %v1823 = vpop.f32.mrb[0].mxu0
  %v1824 = vadd.f32 0.0, %v1823
  %v1825 = vpop.f32.mrb[0].mxu0
  %1826 = vmatprep.mubr.bf16.mxu0 0
  %1827 = vmatmul.mubr.bf16.gmra.mrb[0].mxu0 %v888
  %v1828 = vpop.f32.mrb[0].mxu0
  %v1829 = vadd.f32 0.0, %v1828
  %v1830 = vpop.f32.mrb[0].mxu0
  %v1831 = vpop.f32.mrb[0].mxu0
  %v1832 = vadd.f32 0.0, %v1831
  %v1833 = vpop.f32.mrb[0].mxu0
  %1834 = vmatprep.mubr.bf16.mxu0 0
  %1835 = vmatmul.mubr.bf16.gmra.mrb[0].mxu0 %v889
  %v1836 = vpop.f32.mrb[0].mxu0
  %v1837 = vadd.f32 0.0, %v1836
  %v1838 = vpop.f32.mrb[0].mxu0
  %v1839 = vpop.f32.mrb[0].mxu0
  %v1840 = vadd.f32 0.0, %v1839
  %v1841 = vpop.f32.mrb[0].mxu0
  %1842 = vmatprep.mubr.bf16.mxu0 0
  %1843 = vmatmul.mubr.bf16.gmra.mrb[0].mxu0 %v890
  %v1844 = vpop.f32.mrb[0].mxu0
  %v1845 = vadd.f32 0.0, %v1844
  %v1846 = vpop.f32.mrb[0].mxu0
  %v1847 = vpop.f32.mrb[0].mxu0
  %v1848 = vadd.f32 0.0, %v1847
  %v1849 = vpop.f32.mrb[0].mxu0
  %1850 = vmatprep.mubr.bf16.mxu0 0
  %1851 = vmatmul.mubr.bf16.gmra.mrb[0].mxu0 %v891
  %v1852 = vpop.f32.mrb[0].mxu0
  %v1853 = vadd.f32 0.0, %v1852
  %v1854 = vpop.f32.mrb[0].mxu0
  %v1855 = vpop.f32.mrb[0].mxu0
  %v1856 = vadd.f32 0.0, %v1855
  %v1857 = vpop.f32.mrb[0].mxu0
  %1858 = vmatprep.mubr.bf16.mxu0 0
  %1859 = vmatmul.mubr.bf16.gmra.mrb[0].mxu0 %v892
  %v1860 = vpop.f32.mrb[0].mxu0
  %v1861 = vadd.f32 0.0, %v1860
  %v1862 = vpop.f32.mrb[0].mxu0
  %v1863 = vpop.f32.mrb[0].mxu0
  %v1864 = vadd.f32 0.0, %v1863
  %v1865 = vpop.f32.mrb[0].mxu0
  %1866 = vmatprep.mubr.bf16.mxu0 0
  %1867 = vmatmul.mubr.bf16.gmra.mrb[0].mxu0 %v893
  %v1868 = vpop.f32.mrb[0].mxu0
  %v1869 = vadd.f32 0.0, %v1868
  %v1870 = vpop.f32.mrb[0].mxu0
  %v1871 = vpop.f32.mrb[0].mxu0
  %v1872 = vadd.f32 0.0, %v1871
  %v1873 = vpop.f32.mrb[0].mxu0
  %1874 = vmatprep.mubr.bf16.mxu0 0
  %1875 = vmatmul.mubr.bf16.gmra.mrb[0].mxu0 %v894
  %v1876 = vpop.f32.mrb[0].mxu0
  %v1877 = vadd.f32 0.0, %v1876
  %v1878 = vpop.f32.mrb[0].mxu0
  %v1879 = vpop.f32.mrb[0].mxu0
  %v1880 = vadd.f32 0.0, %v1879
  %v1881 = vpop.f32.mrb[0].mxu0
  %1882 = vmatprep.mubr.bf16.mxu0 0
  %1883 = vmatmul.mubr.bf16.gmra.mrb[0].mxu0 %v895
  %v1884 = vpop.f32.mrb[0].mxu0
  %v1885 = vadd.f32 0.0, %v1884
  %v1886 = vpop.f32.mrb[0].mxu0
  %v1887 = vpop.f32.mrb[0].mxu0
  %v1888 = vadd.f32 0.0, %v1887
  %v1889 = vpop.f32.mrb[0].mxu0
  %1890 = vmatprep.mubr.bf16.mxu0 0
  %1891 = vmatmul.mubr.bf16.gmra.mrb[0].mxu0 %v896
  %v1892 = vpop.f32.mrb[0].mxu0
  %v1893 = vadd.f32 0.0, %v1892
  %v1894 = vpop.f32.mrb[0].mxu0
  %v1895 = vpop.f32.mrb[0].mxu0
  %v1896 = vadd.f32 0.0, %v1895
  %v1897 = vpop.f32.mrb[0].mxu0
  %1898 = vmatprep.mubr.bf16.mxu0 0
  %1899 = vmatmul.mubr.bf16.gmra.mrb[0].mxu0 %v897
  %v1900 = vpop.f32.mrb[0].mxu0
  %v1901 = vadd.f32 0.0, %v1900
  %v1902 = vpop.f32.mrb[0].mxu0
  %v1903 = vpop.f32.mrb[0].mxu0
  %v1904 = vadd.f32 0.0, %v1903
  %v1905 = vpop.f32.mrb[0].mxu0
  %1906 = vmatprep.mubr.bf16.mxu0 0
  %1907 = vmatmul.mubr.bf16.gmra.mrb[0].mxu0 %v898
  %v1908 = vpop.f32.mrb[0].mxu0
  %v1909 = vadd.f32 0.0, %v1908
  %v1910 = vpop.f32.mrb[0].mxu0
  %v1911 = vpop.f32.mrb[0].mxu0
  %v1912 = vadd.f32 0.0, %v1911
  %v1913 = vpop.f32.mrb[0].mxu0
  %1914 = vmatprep.mubr.bf16.mxu0 0
  %1915 = vmatmul.mubr.bf16.gmra.mrb[0].mxu0 %v899
  %v1916 = vpop.f32.mrb[0].mxu0
  %v1917 = vadd.f32 0.0, %v1916
  %v1918 = vpop.f32.mrb[0].mxu0
  %v1919 = vpop.f32.mrb[0].mxu0
  %v1920 = vadd.f32 0.0, %v1919
  %v1921 = vpop.f32.mrb[0].mxu0
  %1922 = vmatprep.mubr.bf16.mxu0 0
  %1923 = vmatmul.mubr.bf16.gmra.mrb[0].mxu0 %v900
  %v1924 = vpop.f32.mrb[0].mxu0
  %v1925 = vadd.f32 0.0, %v1924
  %v1926 = vpop.f32.mrb[0].mxu0
  %v1927 = vpop.f32.mrb[0].mxu0
  %v1928 = vadd.f32 0.0, %v1927
  %v1929 = vpop.f32.mrb[0].mxu0
  %1930 = vmatprep.mubr.bf16.mxu0 0
  %1931 = vmatmul.mubr.bf16.gmra.mrb[0].mxu0 %v901
  %v1932 = vpop.f32.mrb[0].mxu0
  %v1933 = vadd.f32 0.0, %v1932
  %v1934 = vpop.f32.mrb[0].mxu0
  %v1935 = vpop.f32.mrb[0].mxu0
  %v1936 = vadd.f32 0.0, %v1935
  %v1937 = vpop.f32.mrb[0].mxu0
  %1938 = vmatprep.mubr.bf16.mxu0 0
  %1939 = vmatmul.mubr.bf16.gmra.mrb[0].mxu0 %v902
  %v1940 = vpop.f32.mrb[0].mxu0
  %v1941 = vadd.f32 0.0, %v1940
  %v1942 = vpop.f32.mrb[0].mxu0
  %v1943 = vpop.f32.mrb[0].mxu0
  %v1944 = vadd.f32 0.0, %v1943
  %v1945 = vpop.f32.mrb[0].mxu0
  %1946 = vmatprep.mubr.bf16.mxu0 0
  %1947 = vmatmul.mubr.bf16.gmra.mrb[0].mxu0 %v903
  %v1948 = vpop.f32.mrb[0].mxu0
  %v1949 = vadd.f32 0.0, %v1948
  %v1950 = vpop.f32.mrb[0].mxu0
  %v1951 = vpop.f32.mrb[0].mxu0
  %v1952 = vadd.f32 0.0, %v1951
  %v1953 = vpop.f32.mrb[0].mxu0
  %1954 = vmatprep.mubr.bf16.mxu0 0
  %1955 = vmatmul.mubr.bf16.gmra.mrb[0].mxu0 %v904
  %v1956 = vpop.f32.mrb[0].mxu0
  %v1957 = vadd.f32 0.0, %v1956
  %v1958 = vpop.f32.mrb[0].mxu0
  %v1959 = vpop.f32.mrb[0].mxu0
  %v1960 = vadd.f32 0.0, %v1959
  %v1961 = vpop.f32.mrb[0].mxu0
  %1962 = vmatprep.mubr.bf16.mxu0 0
  %1963 = vmatmul.mubr.bf16.gmra.mrb[0].mxu0 %v905
  %v1964 = vpop.f32.mrb[0].mxu0
  %v1965 = vadd.f32 0.0, %v1964
  %v1966 = vpop.f32.mrb[0].mxu0
  %v1967 = vpop.f32.mrb[0].mxu0
  %v1968 = vadd.f32 0.0, %v1967
  %v1969 = vpop.f32.mrb[0].mxu0
  %1970 = vmatprep.mubr.bf16.mxu0 0
  %1971 = vmatmul.mubr.bf16.gmra.mrb[0].mxu0 %v906
  %v1972 = vpop.f32.mrb[0].mxu0
  %v1973 = vadd.f32 0.0, %v1972
  %v1974 = vpop.f32.mrb[0].mxu0
  %v1975 = vpop.f32.mrb[0].mxu0
  %v1976 = vadd.f32 0.0, %v1975
  %v1977 = vpop.f32.mrb[0].mxu0
  %1978 = vmatprep.mubr.bf16.mxu0 0
  %1979 = vmatmul.mubr.bf16.gmra.mrb[0].mxu0 %v907
  %v1980 = vpop.f32.mrb[0].mxu0
  %v1981 = vadd.f32 0.0, %v1980
  %v1982 = vpop.f32.mrb[0].mxu0
  %v1983 = vpop.f32.mrb[0].mxu0
  %v1984 = vadd.f32 0.0, %v1983
  %v1985 = vpop.f32.mrb[0].mxu0
  %1986 = vmatprep.mubr.bf16.mxu0 0
  %1987 = vmatmul.mubr.bf16.gmra.mrb[0].mxu0 %v908
  %v1988 = vpop.f32.mrb[0].mxu0
  %v1989 = vadd.f32 0.0, %v1988
  %v1990 = vpop.f32.mrb[0].mxu0
  %v1991 = vpop.f32.mrb[0].mxu0
  %v1992 = vadd.f32 0.0, %v1991
  %v1993 = vpop.f32.mrb[0].mxu0
  %1994 = vmatprep.mubr.bf16.mxu0 0
  %1995 = vmatmul.mubr.bf16.gmra.mrb[0].mxu0 %v909
  %v1996 = vpop.f32.mrb[0].mxu0
  %v1997 = vadd.f32 0.0, %v1996
  %v1998 = vpop.f32.mrb[0].mxu0
  %v1999 = vpop.f32.mrb[0].mxu0
  %v2000 = vadd.f32 0.0, %v1999
  %v2001 = vpop.f32.mrb[0].mxu0
  %2002 = vmatprep.mubr.bf16.mxu0 0
  %2003 = vmatmul.mubr.bf16.gmra.mrb[0].mxu0 %v910
  %v2004 = vpop.f32.mrb[0].mxu0
  %v2005 = vadd.f32 0.0, %v2004
  %v2006 = vpop.f32.mrb[0].mxu0
  %v2007 = vpop.f32.mrb[0].mxu0
  %v2008 = vadd.f32 0.0, %v2007
  %v2009 = vpop.f32.mrb[0].mxu0
  %2010 = vmatprep.mubr.bf16.mxu0 0
  %2011 = vmatmul.mubr.bf16.gmra.mrb[0].mxu0 %v911
  %v2012 = vpop.f32.mrb[0].mxu0
  %v2013 = vadd.f32 0.0, %v2012
  %v2014 = vpop.f32.mrb[0].mxu0
  %v2015 = vpop.f32.mrb[0].mxu0
  %v2016 = vadd.f32 0.0, %v2015
  %v2017 = vpop.f32.mrb[0].mxu0
  %2018 = vmatprep.mubr.bf16.mxu0 0
  %2019 = vmatmul.mubr.bf16.gmra.mrb[0].mxu0 %v912
  %v2020 = vpop.f32.mrb[0].mxu0
  %v2021 = vadd.f32 0.0, %v2020
  %v2022 = vpop.f32.mrb[0].mxu0
  %v2023 = vpop.f32.mrb[0].mxu0
  %v2024 = vadd.f32 0.0, %v2023
  %v2025 = vpop.f32.mrb[0].mxu0
  %2026 = vmatprep.mubr.bf16.mxu0 0
  %2027 = vmatmul.mubr.bf16.gmra.mrb[0].mxu0 %v913
  %v2028 = vpop.f32.mrb[0].mxu0
  %v2029 = vadd.f32 0.0, %v2028
  %v2030 = vpop.f32.mrb[0].mxu0
  %v2031 = vpop.f32.mrb[0].mxu0
  %v2032 = vadd.f32 0.0, %v2031
  %v2033 = vpop.f32.mrb[0].mxu0
  %2034 = vmatprep.mubr.bf16.mxu0 0
  %2035 = vmatmul.mubr.bf16.gmra.mrb[0].mxu0 %v914
  %v2036 = vpop.f32.mrb[0].mxu0
  %v2037 = vadd.f32 0.0, %v2036
  %v2038 = vpop.f32.mrb[0].mxu0
  %v2039 = vpop.f32.mrb[0].mxu0
  %v2040 = vadd.f32 0.0, %v2039
  %v2041 = vpop.f32.mrb[0].mxu0
  %2042 = vmatprep.mubr.bf16.mxu0 0
  %2043 = vmatmul.mubr.bf16.gmra.mrb[0].mxu0 %v915
  %v2044 = vpop.f32.mrb[0].mxu0
  %v2045 = vadd.f32 0.0, %v2044
  %v2046 = vpop.f32.mrb[0].mxu0
  %v2047 = vpop.f32.mrb[0].mxu0
  %v2048 = vadd.f32 0.0, %v2047
  %v2049 = vpop.f32.mrb[0].mxu0
  %2050 = vmatprep.mubr.bf16.mxu0 0
  %2051 = vmatmul.mubr.bf16.gmra.mrb[0].mxu0 %v916
  %v2052 = vpop.f32.mrb[0].mxu0
  %v2053 = vadd.f32 0.0, %v2052
  %v2054 = vpop.f32.mrb[0].mxu0
  %v2055 = vpop.f32.mrb[0].mxu0
  %v2056 = vadd.f32 0.0, %v2055
  %v2057 = vpop.f32.mrb[0].mxu0
  %2058 = vmatprep.mubr.bf16.mxu0 0
  %2059 = vmatmul.mubr.bf16.gmra.mrb[0].mxu0 %v917
  %v2060 = vpop.f32.mrb[0].mxu0
  %v2061 = vadd.f32 0.0, %v2060
  %v2062 = vpop.f32.mrb[0].mxu0
  %v2063 = vpop.f32.mrb[0].mxu0
  %v2064 = vadd.f32 0.0, %v2063
  %v2065 = vpop.f32.mrb[0].mxu0
  %2066 = vmatprep.mubr.bf16.mxu0 0
  %2067 = vmatmul.mubr.bf16.gmra.mrb[0].mxu0 %v918
  %v2068 = vpop.f32.mrb[0].mxu0
  %v2069 = vadd.f32 0.0, %v2068
  %v2070 = vpop.f32.mrb[0].mxu0
  %v2071 = vpop.f32.mrb[0].mxu0
  %v2072 = vadd.f32 0.0, %v2071
  %v2073 = vpop.f32.mrb[0].mxu0
  %2074 = vmatprep.mubr.bf16.mxu0 0
  %2075 = vmatmul.mubr.bf16.gmra.mrb[0].mxu0 %v919
  %v2076 = vpop.f32.mrb[0].mxu0
  %v2077 = vadd.f32 0.0, %v2076
  %v2078 = vpop.f32.mrb[0].mxu0
  %v2079 = vpop.f32.mrb[0].mxu0
  %v2080 = vadd.f32 0.0, %v2079
  %v2081 = vpop.f32.mrb[0].mxu0
  %2082 = vmatprep.mubr.bf16.mxu0 0
  %2083 = vmatmul.mubr.bf16.gmra.mrb[0].mxu0 %v920
  %v2084 = vpop.f32.mrb[0].mxu0
  %v2085 = vadd.f32 0.0, %v2084
  %v2086 = vpop.f32.mrb[0].mxu0
  %v2087 = vpop.f32.mrb[0].mxu0
  %v2088 = vadd.f32 0.0, %v2087
  %v2089 = vpop.f32.mrb[0].mxu0
  %2090 = vmatprep.mubr.bf16.mxu0 0
  %2091 = vmatmul.mubr.bf16.gmra.mrb[0].mxu0 %v921
  %v2092 = vpop.f32.mrb[0].mxu0
  %v2093 = vadd.f32 0.0, %v2092
  %v2094 = vpop.f32.mrb[0].mxu0
  %v2095 = vpop.f32.mrb[0].mxu0
  %v2096 = vadd.f32 0.0, %v2095
  %v2097 = vpop.f32.mrb[0].mxu0
  %2098 = vmatprep.mubr.bf16.mxu0 0
  %2099 = vmatmul.mubr.bf16.gmra.mrb[0].mxu0 %v922
  %v2100 = vpop.f32.mrb[0].mxu0
  %v2101 = vadd.f32 0.0, %v2100
  %v2102 = vpop.f32.mrb[0].mxu0
  %v2103 = vpop.f32.mrb[0].mxu0
  %v2104 = vadd.f32 0.0, %v2103
  %v2105 = vpop.f32.mrb[0].mxu0
  %2106 = vmatprep.mubr.bf16.mxu0 0
  %2107 = vmatmul.mubr.bf16.gmra.mrb[0].mxu0 %v923
  %v2108 = vpop.f32.mrb[0].mxu0
  %v2109 = vadd.f32 0.0, %v2108
  %v2110 = vpop.f32.mrb[0].mxu0
  %v2111 = vpop.f32.mrb[0].mxu0
  %v2112 = vadd.f32 0.0, %v2111
  %v2113 = vpop.f32.mrb[0].mxu0
  %2114 = vmatprep.mubr.bf16.mxu0 0
  %2115 = vmatmul.mubr.bf16.gmra.mrb[0].mxu0 %v924
  %v2116 = vpop.f32.mrb[0].mxu0
  %v2117 = vadd.f32 0.0, %v2116
  %v2118 = vpop.f32.mrb[0].mxu0
  %v2119 = vpop.f32.mrb[0].mxu0
  %v2120 = vadd.f32 0.0, %v2119
  %v2121 = vpop.f32.mrb[0].mxu0
  %2122 = vmatprep.mubr.bf16.mxu0 0
  %2123 = vmatmul.mubr.bf16.gmra.mrb[0].mxu0 %v925
  %v2124 = vpop.f32.mrb[0].mxu0
  %v2125 = vadd.f32 0.0, %v2124
  %v2126 = vpop.f32.mrb[0].mxu0
  %v2127 = vpop.f32.mrb[0].mxu0
  %v2128 = vadd.f32 0.0, %v2127
  %v2129 = vpop.f32.mrb[0].mxu0
  %2130 = vmatprep.mubr.bf16.mxu0 0
  %2131 = vmatmul.mubr.bf16.gmra.mrb[0].mxu0 %v926
  %v2132 = vpop.f32.mrb[0].mxu0
  %v2133 = vadd.f32 0.0, %v2132
  %v2134 = vpop.f32.mrb[0].mxu0
  %v2135 = vpop.f32.mrb[0].mxu0
  %v2136 = vadd.f32 0.0, %v2135
  %v2137 = vpop.f32.mrb[0].mxu0
  %2138 = vmatprep.mubr.bf16.mxu0 0
  %2139 = vmatmul.mubr.bf16.gmra.mrb[0].mxu0 %v927
  %v2140 = vpop.f32.mrb[0].mxu0
  %v2141 = vadd.f32 0.0, %v2140
  %v2142 = vpop.f32.mrb[0].mxu0
  %v2143 = vpop.f32.mrb[0].mxu0
  %v2144 = vadd.f32 0.0, %v2143
  %v2145 = vpop.f32.mrb[0].mxu0
  %2146 = vmatprep.mubr.bf16.mxu0 0
  %2147 = vmatmul.mubr.bf16.gmra.mrb[0].mxu0 %v928
  %v2148 = vpop.f32.mrb[0].mxu0
  %v2149 = vadd.f32 0.0, %v2148
  %v2150 = vpop.f32.mrb[0].mxu0
  %v2151 = vpop.f32.mrb[0].mxu0
  %v2152 = vadd.f32 0.0, %v2151
  %v2153 = vpop.f32.mrb[0].mxu0
  %2154 = vmatprep.mubr.bf16.mxu0 0
  %2155 = vmatmul.mubr.bf16.gmra.mrb[0].mxu0 %v929
  %v2156 = vpop.f32.mrb[0].mxu0
  %v2157 = vadd.f32 0.0, %v2156
  %v2158 = vpop.f32.mrb[0].mxu0
  %v2159 = vpop.f32.mrb[0].mxu0
  %v2160 = vadd.f32 0.0, %v2159
  %v2161 = vpop.f32.mrb[0].mxu0
  %2162 = vdwg.mxu0
  %v2163 = vadd.f32 %v1141, %v1144
  %v2164 = vadd.f32 %v2163, %v1149
  %v2165 = vadd.f32 %v2164, %v1152
  %v2166 = vadd.f32 %v2165, %v1157
  %v2167 = vadd.f32 %v2166, %v1160
  %v2168 = vadd.f32 %v2167, %v1165
  %v2169 = vadd.f32 %v2168, %v1168
  %v2170 = vadd.f32 %v2169, %v1173
  %v2171 = vadd.f32 %v2170, %v1176
  %v2172 = vadd.f32 %v2171, %v1181
  %v2173 = vadd.f32 %v2172, %v1184
  %v2174 = vadd.f32 %v2173, %v1189
  %v2175 = vadd.f32 %v2174, %v1192
  %v2176 = vadd.f32 %v2175, %v1197
  %v2177 = vadd.f32 %v2176, %v1200
  %v2178 = vadd.f32 %v2177, %v1205
  %v2179 = vadd.f32 %v2178, %v1208
  %v2180 = vadd.f32 %v2179, %v1213
  %v2181 = vadd.f32 %v2180, %v1216
  %v2182 = vadd.f32 %v2181, %v1221
  %v2183 = vadd.f32 %v2182, %v1224
  %v2184 = vadd.f32 %v2183, %v1229
  %v2185 = vadd.f32 %v2184, %v1232
  %v2186 = vadd.f32 %v2185, %v1237
  %v2187 = vadd.f32 %v2186, %v1240
  %v2188 = vadd.f32 %v2187, %v1245
  %v2189 = vadd.f32 %v2188, %v1248
  %v2190 = vadd.f32 %v2189, %v1253
  %v2191 = vadd.f32 %v2190, %v1256
  %v2192 = vadd.f32 %v2191, %v1261
  %v2193 = vadd.f32 %v2192, %v1264
  %v2194 = vadd.f32 %v2193, %v1269
  %v2195 = vadd.f32 %v2194, %v1272
  %v2196 = vadd.f32 %v2195, %v1277
  %v2197 = vadd.f32 %v2196, %v1280
  %v2198 = vadd.f32 %v2197, %v1285
  %v2199 = vadd.f32 %v2198, %v1288
  %v2200 = vadd.f32 %v2199, %v1293
  %v2201 = vadd.f32 %v2200, %v1296
  %v2202 = vadd.f32 %v2201, %v1301
  %v2203 = vadd.f32 %v2202, %v1304
  %v2204 = vadd.f32 %v2203, %v1309
  %v2205 = vadd.f32 %v2204, %v1312
  %v2206 = vadd.f32 %v2205, %v1317
  %v2207 = vadd.f32 %v2206, %v1320
  %v2208 = vadd.f32 %v2207, %v1325
  %v2209 = vadd.f32 %v2208, %v1328
  %v2210 = vadd.f32 %v2209, %v1333
  %v2211 = vadd.f32 %v2210, %v1336
  %v2212 = vadd.f32 %v2211, %v1341
  %v2213 = vadd.f32 %v2212, %v1344
  %v2214 = vadd.f32 %v2213, %v1349
  %v2215 = vadd.f32 %v2214, %v1352
  %v2216 = vadd.f32 %v2215, %v1357
  %v2217 = vadd.f32 %v2216, %v1360
  %v2218 = vadd.f32 %v2217, %v1365
  %v2219 = vadd.f32 %v2218, %v1368
  %v2220 = vadd.f32 %v2219, %v1373
  %v2221 = vadd.f32 %v2220, %v1376
  %v2222 = vadd.f32 %v2221, %v1381
  %v2223 = vadd.f32 %v2222, %v1384
  %v2224 = vadd.f32 %v2223, %v1389
  %v2225 = vadd.f32 %v2224, %v1392
  %v2226 = vadd.f32 %v2225, %v1397
  %v2227 = vadd.f32 %v2226, %v1400
  %v2228 = vadd.f32 %v2227, %v1405
  %v2229 = vadd.f32 %v2228, %v1408
  %v2230 = vadd.f32 %v2229, %v1413
  %v2231 = vadd.f32 %v2230, %v1416
  %v2232 = vadd.f32 %v2231, %v1421
  %v2233 = vadd.f32 %v2232, %v1424
  %v2234 = vadd.f32 %v2233, %v1429
  %v2235 = vadd.f32 %v2234, %v1432
  %v2236 = vadd.f32 %v2235, %v1437
  %v2237 = vadd.f32 %v2236, %v1440
  %v2238 = vadd.f32 %v2237, %v1445
  %v2239 = vadd.f32 %v2238, %v1448
  %v2240 = vadd.f32 %v2239, %v1453
  %v2241 = vadd.f32 %v2240, %v1456
  %v2242 = vadd.f32 %v2241, %v1461
  %v2243 = vadd.f32 %v2242, %v1464
  %v2244 = vadd.f32 %v2243, %v1469
  %v2245 = vadd.f32 %v2244, %v1472
  %v2246 = vadd.f32 %v2245, %v1477
  %v2247 = vadd.f32 %v2246, %v1480
  %v2248 = vadd.f32 %v2247, %v1485
  %v2249 = vadd.f32 %v2248, %v1488
  %v2250 = vadd.f32 %v2249, %v1493
  %v2251 = vadd.f32 %v2250, %v1496
  %v2252 = vadd.f32 %v2251, %v1501
  %v2253 = vadd.f32 %v2252, %v1504
  %v2254 = vadd.f32 %v2253, %v1509
  %v2255 = vadd.f32 %v2254, %v1512
  %v2256 = vadd.f32 %v2255, %v1517
  %v2257 = vadd.f32 %v2256, %v1520
  %v2258 = vadd.f32 %v2257, %v1525
  %v2259 = vadd.f32 %v2258, %v1528
  %v2260 = vadd.f32 %v2259, %v1533
  %v2261 = vadd.f32 %v2260, %v1536
  %v2262 = vadd.f32 %v2261, %v1541
  %v2263 = vadd.f32 %v2262, %v1544
  %v2264 = vadd.f32 %v2263, %v1549
  %v2265 = vadd.f32 %v2264, %v1552
  %v2266 = vadd.f32 %v2265, %v1557
  %v2267 = vadd.f32 %v2266, %v1560
  %v2268 = vadd.f32 %v2267, %v1565
  %v2269 = vadd.f32 %v2268, %v1568
  %v2270 = vadd.f32 %v2269, %v1573
  %v2271 = vadd.f32 %v2270, %v1576
  %v2272 = vadd.f32 %v2271, %v1581
  %v2273 = vadd.f32 %v2272, %v1584
  %v2274 = vadd.f32 %v2273, %v1589
  %v2275 = vadd.f32 %v2274, %v1592
  %v2276 = vadd.f32 %v2275, %v1597
  %v2277 = vadd.f32 %v2276, %v1600
  %v2278 = vadd.f32 %v2277, %v1605
  %v2279 = vadd.f32 %v2278, %v1608
  %v2280 = vadd.f32 %v2279, %v1613
  %v2281 = vadd.f32 %v2280, %v1616
  %v2282 = vadd.f32 %v2281, %v1621
  %v2283 = vadd.f32 %v2282, %v1624
  %v2284 = vadd.f32 %v2283, %v1629
  %v2285 = vadd.f32 %v2284, %v1632
  %v2286 = vadd.f32 %v2285, %v1637
  %v2287 = vadd.f32 %v2286, %v1640
  %v2288 = vadd.f32 %v2287, %v1645
  %v2289 = vadd.f32 %v2288, %v1648
  %v2290 = vadd.f32 %v2289, %v1653
  %v2291 = vadd.f32 %v2290, %v1656
  %v2292 = vadd.f32 %v2291, %v1661
  %v2293 = vadd.f32 %v2292, %v1664
  %v2294 = vadd.f32 %v2293, %v1669
  %v2295 = vadd.f32 %v2294, %v1672
  %v2296 = vadd.f32 %v2295, %v1677
  %v2297 = vadd.f32 %v2296, %v1680
  %v2298 = vadd.f32 %v2297, %v1685
  %v2299 = vadd.f32 %v2298, %v1688
  %v2300 = vadd.f32 %v2299, %v1693
  %v2301 = vadd.f32 %v2300, %v1696
  %v2302 = vadd.f32 %v2301, %v1701
  %v2303 = vadd.f32 %v2302, %v1704
  %v2304 = vadd.f32 %v2303, %v1709
  %v2305 = vadd.f32 %v2304, %v1712
  %v2306 = vadd.f32 %v2305, %v1717
  %v2307 = vadd.f32 %v2306, %v1720
  %v2308 = vadd.f32 %v2307, %v1725
  %v2309 = vadd.f32 %v2308, %v1728
  %v2310 = vadd.f32 %v2309, %v1733
  %v2311 = vadd.f32 %v2310, %v1736
  %v2312 = vadd.f32 %v2311, %v1741
  %v2313 = vadd.f32 %v2312, %v1744
  %v2314 = vadd.f32 %v2313, %v1749
  %v2315 = vadd.f32 %v2314, %v1752
  %v2316 = vadd.f32 %v2315, %v1757
  %v2317 = vadd.f32 %v2316, %v1760
  %v2318 = vadd.f32 %v2317, %v1765
  %v2319 = vadd.f32 %v2318, %v1768
  %v2320 = vadd.f32 %v2319, %v1773
  %v2321 = vadd.f32 %v2320, %v1776
  %v2322 = vadd.f32 %v2321, %v1781
  %v2323 = vadd.f32 %v2322, %v1784
  %v2324 = vadd.f32 %v2323, %v1789
  %v2325 = vadd.f32 %v2324, %v1792
  %v2326 = vadd.f32 %v2325, %v1797
  %v2327 = vadd.f32 %v2326, %v1800
  %v2328 = vadd.f32 %v2327, %v1805
  %v2329 = vadd.f32 %v2328, %v1808
  %v2330 = vadd.f32 %v2329, %v1813
  %v2331 = vadd.f32 %v2330, %v1816
  %v2332 = vadd.f32 %v2331, %v1821
  %v2333 = vadd.f32 %v2332, %v1824
  %v2334 = vadd.f32 %v2333, %v1829
  %v2335 = vadd.f32 %v2334, %v1832
  %v2336 = vadd.f32 %v2335, %v1837
  %v2337 = vadd.f32 %v2336, %v1840
  %v2338 = vadd.f32 %v2337, %v1845
  %v2339 = vadd.f32 %v2338, %v1848
  %v2340 = vadd.f32 %v2339, %v1853
  %v2341 = vadd.f32 %v2340, %v1856
  %v2342 = vadd.f32 %v2341, %v1861
  %v2343 = vadd.f32 %v2342, %v1864
  %v2344 = vadd.f32 %v2343, %v1869
  %v2345 = vadd.f32 %v2344, %v1872
  %v2346 = vadd.f32 %v2345, %v1877
  %v2347 = vadd.f32 %v2346, %v1880
  %v2348 = vadd.f32 %v2347, %v1885
  %v2349 = vadd.f32 %v2348, %v1888
  %v2350 = vadd.f32 %v2349, %v1893
  %v2351 = vadd.f32 %v2350, %v1896
  %v2352 = vadd.f32 %v2351, %v1901
  %v2353 = vadd.f32 %v2352, %v1904
  %v2354 = vadd.f32 %v2353, %v1909
  %v2355 = vadd.f32 %v2354, %v1912
  %v2356 = vadd.f32 %v2355, %v1917
  %v2357 = vadd.f32 %v2356, %v1920
  %v2358 = vadd.f32 %v2357, %v1925
  %v2359 = vadd.f32 %v2358, %v1928
  %v2360 = vadd.f32 %v2359, %v1933
  %v2361 = vadd.f32 %v2360, %v1936
  %v2362 = vadd.f32 %v2361, %v1941
  %v2363 = vadd.f32 %v2362, %v1944
  %v2364 = vadd.f32 %v2363, %v1949
  %v2365 = vadd.f32 %v2364, %v1952
  %v2366 = vadd.f32 %v2365, %v1957
  %v2367 = vadd.f32 %v2366, %v1960
  %v2368 = vadd.f32 %v2367, %v1965
  %v2369 = vadd.f32 %v2368, %v1968
  %v2370 = vadd.f32 %v2369, %v1973
  %v2371 = vadd.f32 %v2370, %v1976
  %v2372 = vadd.f32 %v2371, %v1981
  %v2373 = vadd.f32 %v2372, %v1984
  %v2374 = vadd.f32 %v2373, %v1989
  %v2375 = vadd.f32 %v2374, %v1992
  %v2376 = vadd.f32 %v2375, %v1997
  %v2377 = vadd.f32 %v2376, %v2000
  %v2378 = vadd.f32 %v2377, %v2005
  %v2379 = vadd.f32 %v2378, %v2008
  %v2380 = vadd.f32 %v2379, %v2013
  %v2381 = vadd.f32 %v2380, %v2016
  %v2382 = vadd.f32 %v2381, %v2021
  %v2383 = vadd.f32 %v2382, %v2024
  %v2384 = vadd.f32 %v2383, %v2029
  %v2385 = vadd.f32 %v2384, %v2032
  %v2386 = vadd.f32 %v2385, %v2037
  %v2387 = vadd.f32 %v2386, %v2040
  %v2388 = vadd.f32 %v2387, %v2045
  %v2389 = vadd.f32 %v2388, %v2048
  %v2390 = vadd.f32 %v2389, %v2053
  %v2391 = vadd.f32 %v2390, %v2056
  %v2392 = vadd.f32 %v2391, %v2061
  %v2393 = vadd.f32 %v2392, %v2064
  %v2394 = vadd.f32 %v2393, %v2069
  %v2395 = vadd.f32 %v2394, %v2072
  %v2396 = vadd.f32 %v2395, %v2077
  %v2397 = vadd.f32 %v2396, %v2080
  %v2398 = vadd.f32 %v2397, %v2085
  %v2399 = vadd.f32 %v2398, %v2088
  %v2400 = vadd.f32 %v2399, %v2093
  %v2401 = vadd.f32 %v2400, %v2096
  %v2402 = vadd.f32 %v2401, %v2101
  %v2403 = vadd.f32 %v2402, %v2104
  %v2404 = vadd.f32 %v2403, %v2109
  %v2405 = vadd.f32 %v2404, %v2112
  %v2406 = vadd.f32 %v2405, %v2117
  %v2407 = vadd.f32 %v2406, %v2120
  %v2408 = vadd.f32 %v2407, %v2125
  %v2409 = vadd.f32 %v2408, %v2128
  %v2410 = vadd.f32 %v2409, %v2133
  %v2411 = vadd.f32 %v2410, %v2136
  %v2412 = vadd.f32 %v2411, %v2141
  %v2413 = vadd.f32 %v2412, %v2144
  %v2414 = vadd.f32 %v2413, %v2149
  %v2415 = vadd.f32 %v2414, %v2152
  %v2416 = vadd.f32 %v2415, %v2157
  %v2417 = vadd.f32 %v2416, %v2160
  %v2418 = vrot.slane %v2417, 4
  %v2419 = vadd.f32 %v2417, %v2418
  %v2420 = vrot.slane %v2419, 2
  %v2421 = vadd.f32 %v2419, %v2420
  %v2422 = vrot.slane %v2421, 1
  %v2423 = vadd.f32 %v2421, %v2422
  %v2424 = vmul.f32 %v2423, 0.00048828125
  %v2425 = vmul.f32 %v1141, %v1141
  %v2426 = vmul.f32 %v1144, %v1144
  %v2427 = vmul.f32 %v1149, %v1149
  %v2428 = vmul.f32 %v1152, %v1152
  %v2429 = vmul.f32 %v1157, %v1157
  %v2430 = vmul.f32 %v1160, %v1160
  %v2431 = vmul.f32 %v1165, %v1165
  %v2432 = vmul.f32 %v1168, %v1168
  %v2433 = vmul.f32 %v1173, %v1173
  %v2434 = vmul.f32 %v1176, %v1176
  %v2435 = vmul.f32 %v1181, %v1181
  %v2436 = vmul.f32 %v1184, %v1184
  %v2437 = vmul.f32 %v1189, %v1189
  %v2438 = vmul.f32 %v1192, %v1192
  %v2439 = vmul.f32 %v1197, %v1197
  %v2440 = vmul.f32 %v1200, %v1200
  %v2441 = vmul.f32 %v1205, %v1205
  %v2442 = vmul.f32 %v1208, %v1208
  %v2443 = vmul.f32 %v1213, %v1213
  %v2444 = vmul.f32 %v1216, %v1216
  %v2445 = vmul.f32 %v1221, %v1221
  %v2446 = vmul.f32 %v1224, %v1224
  %v2447 = vmul.f32 %v1229, %v1229
  %v2448 = vmul.f32 %v1232, %v1232
  %v2449 = vmul.f32 %v1237, %v1237
  %v2450 = vmul.f32 %v1240, %v1240
  %v2451 = vmul.f32 %v1245, %v1245
  %v2452 = vmul.f32 %v1248, %v1248
  %v2453 = vmul.f32 %v1253, %v1253
  %v2454 = vmul.f32 %v1256, %v1256
  %v2455 = vmul.f32 %v1261, %v1261
  %v2456 = vmul.f32 %v1264, %v1264
  %v2457 = vmul.f32 %v1269, %v1269
  %v2458 = vmul.f32 %v1272, %v1272
  %v2459 = vmul.f32 %v1277, %v1277
  %v2460 = vmul.f32 %v1280, %v1280
  %v2461 = vmul.f32 %v1285, %v1285
  %v2462 = vmul.f32 %v1288, %v1288
  %v2463 = vmul.f32 %v1293, %v1293
  %v2464 = vmul.f32 %v1296, %v1296
  %v2465 = vmul.f32 %v1301, %v1301
  %v2466 = vmul.f32 %v1304, %v1304
  %v2467 = vmul.f32 %v1309, %v1309
  %v2468 = vmul.f32 %v1312, %v1312
  %v2469 = vmul.f32 %v1317, %v1317
  %v2470 = vmul.f32 %v1320, %v1320
  %v2471 = vmul.f32 %v1325, %v1325
  %v2472 = vmul.f32 %v1328, %v1328
  %v2473 = vmul.f32 %v1333, %v1333
  %v2474 = vmul.f32 %v1336, %v1336
  %v2475 = vmul.f32 %v1341, %v1341
  %v2476 = vmul.f32 %v1344, %v1344
  %v2477 = vmul.f32 %v1349, %v1349
  %v2478 = vmul.f32 %v1352, %v1352
  %v2479 = vmul.f32 %v1357, %v1357
  %v2480 = vmul.f32 %v1360, %v1360
  %v2481 = vmul.f32 %v1365, %v1365
  %v2482 = vmul.f32 %v1368, %v1368
  %v2483 = vmul.f32 %v1373, %v1373
  %v2484 = vmul.f32 %v1376, %v1376
  %v2485 = vmul.f32 %v1381, %v1381
  %v2486 = vmul.f32 %v1384, %v1384
  %v2487 = vmul.f32 %v1389, %v1389
  %v2488 = vmul.f32 %v1392, %v1392
  %v2489 = vmul.f32 %v1397, %v1397
  %v2490 = vmul.f32 %v1400, %v1400
  %v2491 = vmul.f32 %v1405, %v1405
  %v2492 = vmul.f32 %v1408, %v1408
  %v2493 = vmul.f32 %v1413, %v1413
  %v2494 = vmul.f32 %v1416, %v1416
  %v2495 = vmul.f32 %v1421, %v1421
  %v2496 = vmul.f32 %v1424, %v1424
  %v2497 = vmul.f32 %v1429, %v1429
  %v2498 = vmul.f32 %v1432, %v1432
  %v2499 = vmul.f32 %v1437, %v1437
  %v2500 = vmul.f32 %v1440, %v1440
  %v2501 = vmul.f32 %v1445, %v1445
  %v2502 = vmul.f32 %v1448, %v1448
  %v2503 = vmul.f32 %v1453, %v1453
  %v2504 = vmul.f32 %v1456, %v1456
  %v2505 = vmul.f32 %v1461, %v1461
  %v2506 = vmul.f32 %v1464, %v1464
  %v2507 = vmul.f32 %v1469, %v1469
  %v2508 = vmul.f32 %v1472, %v1472
  %v2509 = vmul.f32 %v1477, %v1477
  %v2510 = vmul.f32 %v1480, %v1480
  %v2511 = vmul.f32 %v1485, %v1485
  %v2512 = vmul.f32 %v1488, %v1488
  %v2513 = vmul.f32 %v1493, %v1493
  %v2514 = vmul.f32 %v1496, %v1496
  %v2515 = vmul.f32 %v1501, %v1501
  %v2516 = vmul.f32 %v1504, %v1504
  %v2517 = vmul.f32 %v1509, %v1509
  %v2518 = vmul.f32 %v1512, %v1512
  %v2519 = vmul.f32 %v1517, %v1517
  %v2520 = vmul.f32 %v1520, %v1520
  %v2521 = vmul.f32 %v1525, %v1525
  %v2522 = vmul.f32 %v1528, %v1528
  %v2523 = vmul.f32 %v1533, %v1533
  %v2524 = vmul.f32 %v1536, %v1536
  %v2525 = vmul.f32 %v1541, %v1541
  %v2526 = vmul.f32 %v1544, %v1544
  %v2527 = vmul.f32 %v1549, %v1549
  %v2528 = vmul.f32 %v1552, %v1552
  %v2529 = vmul.f32 %v1557, %v1557
  %v2530 = vmul.f32 %v1560, %v1560
  %v2531 = vmul.f32 %v1565, %v1565
  %v2532 = vmul.f32 %v1568, %v1568
  %v2533 = vmul.f32 %v1573, %v1573
  %v2534 = vmul.f32 %v1576, %v1576
  %v2535 = vmul.f32 %v1581, %v1581
  %v2536 = vmul.f32 %v1584, %v1584
  %v2537 = vmul.f32 %v1589, %v1589
  %v2538 = vmul.f32 %v1592, %v1592
  %v2539 = vmul.f32 %v1597, %v1597
  %v2540 = vmul.f32 %v1600, %v1600
  %v2541 = vmul.f32 %v1605, %v1605
  %v2542 = vmul.f32 %v1608, %v1608
  %v2543 = vmul.f32 %v1613, %v1613
  %v2544 = vmul.f32 %v1616, %v1616
  %v2545 = vmul.f32 %v1621, %v1621
  %v2546 = vmul.f32 %v1624, %v1624
  %v2547 = vmul.f32 %v1629, %v1629
  %v2548 = vmul.f32 %v1632, %v1632
  %v2549 = vmul.f32 %v1637, %v1637
  %v2550 = vmul.f32 %v1640, %v1640
  %v2551 = vmul.f32 %v1645, %v1645
  %v2552 = vmul.f32 %v1648, %v1648
  %v2553 = vmul.f32 %v1653, %v1653
  %v2554 = vmul.f32 %v1656, %v1656
  %v2555 = vmul.f32 %v1661, %v1661
  %v2556 = vmul.f32 %v1664, %v1664
  %v2557 = vmul.f32 %v1669, %v1669
  %v2558 = vmul.f32 %v1672, %v1672
  %v2559 = vmul.f32 %v1677, %v1677
  %v2560 = vmul.f32 %v1680, %v1680
  %v2561 = vmul.f32 %v1685, %v1685
  %v2562 = vmul.f32 %v1688, %v1688
  %v2563 = vmul.f32 %v1693, %v1693
  %v2564 = vmul.f32 %v1696, %v1696
  %v2565 = vmul.f32 %v1701, %v1701
  %v2566 = vmul.f32 %v1704, %v1704
  %v2567 = vmul.f32 %v1709, %v1709
  %v2568 = vmul.f32 %v1712, %v1712
  %v2569 = vmul.f32 %v1717, %v1717
  %v2570 = vmul.f32 %v1720, %v1720
  %v2571 = vmul.f32 %v1725, %v1725
  %v2572 = vmul.f32 %v1728, %v1728
  %v2573 = vmul.f32 %v1733, %v1733
  %v2574 = vmul.f32 %v1736, %v1736
  %v2575 = vmul.f32 %v1741, %v1741
  %v2576 = vmul.f32 %v1744, %v1744
  %v2577 = vmul.f32 %v1749, %v1749
  %v2578 = vmul.f32 %v1752, %v1752
  %v2579 = vmul.f32 %v1757, %v1757
  %v2580 = vmul.f32 %v1760, %v1760
  %v2581 = vmul.f32 %v1765, %v1765
  %v2582 = vmul.f32 %v1768, %v1768
  %v2583 = vmul.f32 %v1773, %v1773
  %v2584 = vmul.f32 %v1776, %v1776
  %v2585 = vmul.f32 %v1781, %v1781
  %v2586 = vmul.f32 %v1784, %v1784
  %v2587 = vmul.f32 %v1789, %v1789
  %v2588 = vmul.f32 %v1792, %v1792
  %v2589 = vmul.f32 %v1797, %v1797
  %v2590 = vmul.f32 %v1800, %v1800
  %v2591 = vmul.f32 %v1805, %v1805
  %v2592 = vmul.f32 %v1808, %v1808
  %v2593 = vmul.f32 %v1813, %v1813
  %v2594 = vmul.f32 %v1816, %v1816
  %v2595 = vmul.f32 %v1821, %v1821
  %v2596 = vmul.f32 %v1824, %v1824
  %v2597 = vmul.f32 %v1829, %v1829
  %v2598 = vmul.f32 %v1832, %v1832
  %v2599 = vmul.f32 %v1837, %v1837
  %v2600 = vmul.f32 %v1840, %v1840
  %v2601 = vmul.f32 %v1845, %v1845
  %v2602 = vmul.f32 %v1848, %v1848
  %v2603 = vmul.f32 %v1853, %v1853
  %v2604 = vmul.f32 %v1856, %v1856
  %v2605 = vmul.f32 %v1861, %v1861
  %v2606 = vmul.f32 %v1864, %v1864
  %v2607 = vmul.f32 %v1869, %v1869
  %v2608 = vmul.f32 %v1872, %v1872
  %v2609 = vmul.f32 %v1877, %v1877
  %v2610 = vmul.f32 %v1880, %v1880
  %v2611 = vmul.f32 %v1885, %v1885
  %v2612 = vmul.f32 %v1888, %v1888
  %v2613 = vmul.f32 %v1893, %v1893
  %v2614 = vmul.f32 %v1896, %v1896
  %v2615 = vmul.f32 %v1901, %v1901
  %v2616 = vmul.f32 %v1904, %v1904
  %v2617 = vmul.f32 %v1909, %v1909
  %v2618 = vmul.f32 %v1912, %v1912
  %v2619 = vmul.f32 %v1917, %v1917
  %v2620 = vmul.f32 %v1920, %v1920
  %v2621 = vmul.f32 %v1925, %v1925
  %v2622 = vmul.f32 %v1928, %v1928
  %v2623 = vmul.f32 %v1933, %v1933
  %v2624 = vmul.f32 %v1936, %v1936
  %v2625 = vmul.f32 %v1941, %v1941
  %v2626 = vmul.f32 %v1944, %v1944
  %v2627 = vmul.f32 %v1949, %v1949
  %v2628 = vmul.f32 %v1952, %v1952
  %v2629 = vmul.f32 %v1957, %v1957
  %v2630 = vmul.f32 %v1960, %v1960
  %v2631 = vmul.f32 %v1965, %v1965
  %v2632 = vmul.f32 %v1968, %v1968
  %v2633 = vmul.f32 %v1973, %v1973
  %v2634 = vmul.f32 %v1976, %v1976
  %v2635 = vmul.f32 %v1981, %v1981
  %v2636 = vmul.f32 %v1984, %v1984
  %v2637 = vmul.f32 %v1989, %v1989
  %v2638 = vmul.f32 %v1992, %v1992
  %v2639 = vmul.f32 %v1997, %v1997
  %v2640 = vmul.f32 %v2000, %v2000
  %v2641 = vmul.f32 %v2005, %v2005
  %v2642 = vmul.f32 %v2008, %v2008
  %v2643 = vmul.f32 %v2013, %v2013
  %v2644 = vmul.f32 %v2016, %v2016
  %v2645 = vmul.f32 %v2021, %v2021
  %v2646 = vmul.f32 %v2024, %v2024
  %v2647 = vmul.f32 %v2029, %v2029
  %v2648 = vmul.f32 %v2032, %v2032
  %v2649 = vmul.f32 %v2037, %v2037
  %v2650 = vmul.f32 %v2040, %v2040
  %v2651 = vmul.f32 %v2045, %v2045
  %v2652 = vmul.f32 %v2048, %v2048
  %v2653 = vmul.f32 %v2053, %v2053
  %v2654 = vmul.f32 %v2056, %v2056
  %v2655 = vmul.f32 %v2061, %v2061
  %v2656 = vmul.f32 %v2064, %v2064
  %v2657 = vmul.f32 %v2069, %v2069
  %v2658 = vmul.f32 %v2072, %v2072
  %v2659 = vmul.f32 %v2077, %v2077
  %v2660 = vmul.f32 %v2080, %v2080
  %v2661 = vmul.f32 %v2085, %v2085
  %v2662 = vmul.f32 %v2088, %v2088
  %v2663 = vmul.f32 %v2093, %v2093
  %v2664 = vmul.f32 %v2096, %v2096
  %v2665 = vmul.f32 %v2101, %v2101
  %v2666 = vmul.f32 %v2104, %v2104
  %v2667 = vmul.f32 %v2109, %v2109
  %v2668 = vmul.f32 %v2112, %v2112
  %v2669 = vmul.f32 %v2117, %v2117
  %v2670 = vmul.f32 %v2120, %v2120
  %v2671 = vmul.f32 %v2125, %v2125
  %v2672 = vmul.f32 %v2128, %v2128
  %v2673 = vmul.f32 %v2133, %v2133
  %v2674 = vmul.f32 %v2136, %v2136
  %v2675 = vmul.f32 %v2141, %v2141
  %v2676 = vmul.f32 %v2144, %v2144
  %v2677 = vmul.f32 %v2149, %v2149
  %v2678 = vmul.f32 %v2152, %v2152
  %v2679 = vmul.f32 %v2157, %v2157
  %v2680 = vmul.f32 %v2160, %v2160
  %v2681 = vadd.f32 %v2425, %v2426
  %v2682 = vadd.f32 %v2681, %v2427
  %v2683 = vadd.f32 %v2682, %v2428
  %v2684 = vadd.f32 %v2683, %v2429
  %v2685 = vadd.f32 %v2684, %v2430
  %v2686 = vadd.f32 %v2685, %v2431
  %v2687 = vadd.f32 %v2686, %v2432
  %v2688 = vadd.f32 %v2687, %v2433
  %v2689 = vadd.f32 %v2688, %v2434
  %v2690 = vadd.f32 %v2689, %v2435
  %v2691 = vadd.f32 %v2690, %v2436
  %v2692 = vadd.f32 %v2691, %v2437
  %v2693 = vadd.f32 %v2692, %v2438
  %v2694 = vadd.f32 %v2693, %v2439
  %v2695 = vadd.f32 %v2694, %v2440
  %v2696 = vadd.f32 %v2695, %v2441
  %v2697 = vadd.f32 %v2696, %v2442
  %v2698 = vadd.f32 %v2697, %v2443
  %v2699 = vadd.f32 %v2698, %v2444
  %v2700 = vadd.f32 %v2699, %v2445
  %v2701 = vadd.f32 %v2700, %v2446
  %v2702 = vadd.f32 %v2701, %v2447
  %v2703 = vadd.f32 %v2702, %v2448
  %v2704 = vadd.f32 %v2703, %v2449
  %v2705 = vadd.f32 %v2704, %v2450
  %v2706 = vadd.f32 %v2705, %v2451
  %v2707 = vadd.f32 %v2706, %v2452
  %v2708 = vadd.f32 %v2707, %v2453
  %v2709 = vadd.f32 %v2708, %v2454
  %v2710 = vadd.f32 %v2709, %v2455
  %v2711 = vadd.f32 %v2710, %v2456
  %v2712 = vadd.f32 %v2711, %v2457
  %v2713 = vadd.f32 %v2712, %v2458
  %v2714 = vadd.f32 %v2713, %v2459
  %v2715 = vadd.f32 %v2714, %v2460
  %v2716 = vadd.f32 %v2715, %v2461
  %v2717 = vadd.f32 %v2716, %v2462
  %v2718 = vadd.f32 %v2717, %v2463
  %v2719 = vadd.f32 %v2718, %v2464
  %v2720 = vadd.f32 %v2719, %v2465
  %v2721 = vadd.f32 %v2720, %v2466
  %v2722 = vadd.f32 %v2721, %v2467
  %v2723 = vadd.f32 %v2722, %v2468
  %v2724 = vadd.f32 %v2723, %v2469
  %v2725 = vadd.f32 %v2724, %v2470
  %v2726 = vadd.f32 %v2725, %v2471
  %v2727 = vadd.f32 %v2726, %v2472
  %v2728 = vadd.f32 %v2727, %v2473
  %v2729 = vadd.f32 %v2728, %v2474
  %v2730 = vadd.f32 %v2729, %v2475
  %v2731 = vadd.f32 %v2730, %v2476
  %v2732 = vadd.f32 %v2731, %v2477
  %v2733 = vadd.f32 %v2732, %v2478
  %v2734 = vadd.f32 %v2733, %v2479
  %v2735 = vadd.f32 %v2734, %v2480
  %v2736 = vadd.f32 %v2735, %v2481
  %v2737 = vadd.f32 %v2736, %v2482
  %v2738 = vadd.f32 %v2737, %v2483
  %v2739 = vadd.f32 %v2738, %v2484
  %v2740 = vadd.f32 %v2739, %v2485
  %v2741 = vadd.f32 %v2740, %v2486
  %v2742 = vadd.f32 %v2741, %v2487
  %v2743 = vadd.f32 %v2742, %v2488
  %v2744 = vadd.f32 %v2743, %v2489
  %v2745 = vadd.f32 %v2744, %v2490
  %v2746 = vadd.f32 %v2745, %v2491
  %v2747 = vadd.f32 %v2746, %v2492
  %v2748 = vadd.f32 %v2747, %v2493
  %v2749 = vadd.f32 %v2748, %v2494
  %v2750 = vadd.f32 %v2749, %v2495
  %v2751 = vadd.f32 %v2750, %v2496
  %v2752 = vadd.f32 %v2751, %v2497
  %v2753 = vadd.f32 %v2752, %v2498
  %v2754 = vadd.f32 %v2753, %v2499
  %v2755 = vadd.f32 %v2754, %v2500
  %v2756 = vadd.f32 %v2755, %v2501
  %v2757 = vadd.f32 %v2756, %v2502
  %v2758 = vadd.f32 %v2757, %v2503
  %v2759 = vadd.f32 %v2758, %v2504
  %v2760 = vadd.f32 %v2759, %v2505
  %v2761 = vadd.f32 %v2760, %v2506
  %v2762 = vadd.f32 %v2761, %v2507
  %v2763 = vadd.f32 %v2762, %v2508
  %v2764 = vadd.f32 %v2763, %v2509
  %v2765 = vadd.f32 %v2764, %v2510
  %v2766 = vadd.f32 %v2765, %v2511
  %v2767 = vadd.f32 %v2766, %v2512
  %v2768 = vadd.f32 %v2767, %v2513
  %v2769 = vadd.f32 %v2768, %v2514
  %v2770 = vadd.f32 %v2769, %v2515
  %v2771 = vadd.f32 %v2770, %v2516
  %v2772 = vadd.f32 %v2771, %v2517
  %v2773 = vadd.f32 %v2772, %v2518
  %v2774 = vadd.f32 %v2773, %v2519
  %v2775 = vadd.f32 %v2774, %v2520
  %v2776 = vadd.f32 %v2775, %v2521
  %v2777 = vadd.f32 %v2776, %v2522
  %v2778 = vadd.f32 %v2777, %v2523
  %v2779 = vadd.f32 %v2778, %v2524
  %v2780 = vadd.f32 %v2779, %v2525
  %v2781 = vadd.f32 %v2780, %v2526
  %v2782 = vadd.f32 %v2781, %v2527
  %v2783 = vadd.f32 %v2782, %v2528
  %v2784 = vadd.f32 %v2783, %v2529
  %v2785 = vadd.f32 %v2784, %v2530
  %v2786 = vadd.f32 %v2785, %v2531
  %v2787 = vadd.f32 %v2786, %v2532
  %v2788 = vadd.f32 %v2787, %v2533
  %v2789 = vadd.f32 %v2788, %v2534
  %v2790 = vadd.f32 %v2789, %v2535
  %v2791 = vadd.f32 %v2790, %v2536
  %v2792 = vadd.f32 %v2791, %v2537
  %v2793 = vadd.f32 %v2792, %v2538
  %v2794 = vadd.f32 %v2793, %v2539
  %v2795 = vadd.f32 %v2794, %v2540
  %v2796 = vadd.f32 %v2795, %v2541
  %v2797 = vadd.f32 %v2796, %v2542
  %v2798 = vadd.f32 %v2797, %v2543
  %v2799 = vadd.f32 %v2798, %v2544
  %v2800 = vadd.f32 %v2799, %v2545
  %v2801 = vadd.f32 %v2800, %v2546
  %v2802 = vadd.f32 %v2801, %v2547
  %v2803 = vadd.f32 %v2802, %v2548
  %v2804 = vadd.f32 %v2803, %v2549
  %v2805 = vadd.f32 %v2804, %v2550
  %v2806 = vadd.f32 %v2805, %v2551
  %v2807 = vadd.f32 %v2806, %v2552
  %v2808 = vadd.f32 %v2807, %v2553
  %v2809 = vadd.f32 %v2808, %v2554
  %v2810 = vadd.f32 %v2809, %v2555
  %v2811 = vadd.f32 %v2810, %v2556
  %v2812 = vadd.f32 %v2811, %v2557
  %v2813 = vadd.f32 %v2812, %v2558
  %v2814 = vadd.f32 %v2813, %v2559
  %v2815 = vadd.f32 %v2814, %v2560
  %v2816 = vadd.f32 %v2815, %v2561
  %v2817 = vadd.f32 %v2816, %v2562
  %v2818 = vadd.f32 %v2817, %v2563
  %v2819 = vadd.f32 %v2818, %v2564
  %v2820 = vadd.f32 %v2819, %v2565
  %v2821 = vadd.f32 %v2820, %v2566
  %v2822 = vadd.f32 %v2821, %v2567
  %v2823 = vadd.f32 %v2822, %v2568
  %v2824 = vadd.f32 %v2823, %v2569
  %v2825 = vadd.f32 %v2824, %v2570
  %v2826 = vadd.f32 %v2825, %v2571
  %v2827 = vadd.f32 %v2826, %v2572
  %v2828 = vadd.f32 %v2827, %v2573
  %v2829 = vadd.f32 %v2828, %v2574
  %v2830 = vadd.f32 %v2829, %v2575
  %v2831 = vadd.f32 %v2830, %v2576
  %v2832 = vadd.f32 %v2831, %v2577
  %v2833 = vadd.f32 %v2832, %v2578
  %v2834 = vadd.f32 %v2833, %v2579
  %v2835 = vadd.f32 %v2834, %v2580
  %v2836 = vadd.f32 %v2835, %v2581
  %v2837 = vadd.f32 %v2836, %v2582
  %v2838 = vadd.f32 %v2837, %v2583
  %v2839 = vadd.f32 %v2838, %v2584
  %v2840 = vadd.f32 %v2839, %v2585
  %v2841 = vadd.f32 %v2840, %v2586
  %v2842 = vadd.f32 %v2841, %v2587
  %v2843 = vadd.f32 %v2842, %v2588
  %v2844 = vadd.f32 %v2843, %v2589
  %v2845 = vadd.f32 %v2844, %v2590
  %v2846 = vadd.f32 %v2845, %v2591
  %v2847 = vadd.f32 %v2846, %v2592
  %v2848 = vadd.f32 %v2847, %v2593
  %v2849 = vadd.f32 %v2848, %v2594
  %v2850 = vadd.f32 %v2849, %v2595
  %v2851 = vadd.f32 %v2850, %v2596
  %v2852 = vadd.f32 %v2851, %v2597
  %v2853 = vadd.f32 %v2852, %v2598
  %v2854 = vadd.f32 %v2853, %v2599
  %v2855 = vadd.f32 %v2854, %v2600
  %v2856 = vadd.f32 %v2855, %v2601
  %v2857 = vadd.f32 %v2856, %v2602
  %v2858 = vadd.f32 %v2857, %v2603
  %v2859 = vadd.f32 %v2858, %v2604
  %v2860 = vadd.f32 %v2859, %v2605
  %v2861 = vadd.f32 %v2860, %v2606
  %v2862 = vadd.f32 %v2861, %v2607
  %v2863 = vadd.f32 %v2862, %v2608
  %v2864 = vadd.f32 %v2863, %v2609
  %v2865 = vadd.f32 %v2864, %v2610
  %v2866 = vadd.f32 %v2865, %v2611
  %v2867 = vadd.f32 %v2866, %v2612
  %v2868 = vadd.f32 %v2867, %v2613
  %v2869 = vadd.f32 %v2868, %v2614
  %v2870 = vadd.f32 %v2869, %v2615
  %v2871 = vadd.f32 %v2870, %v2616
  %v2872 = vadd.f32 %v2871, %v2617
  %v2873 = vadd.f32 %v2872, %v2618
  %v2874 = vadd.f32 %v2873, %v2619
  %v2875 = vadd.f32 %v2874, %v2620
  %v2876 = vadd.f32 %v2875, %v2621
  %v2877 = vadd.f32 %v2876, %v2622
  %v2878 = vadd.f32 %v2877, %v2623
  %v2879 = vadd.f32 %v2878, %v2624
  %v2880 = vadd.f32 %v2879, %v2625
  %v2881 = vadd.f32 %v2880, %v2626
  %v2882 = vadd.f32 %v2881, %v2627
  %v2883 = vadd.f32 %v2882, %v2628
  %v2884 = vadd.f32 %v2883, %v2629
  %v2885 = vadd.f32 %v2884, %v2630
  %v2886 = vadd.f32 %v2885, %v2631
  %v2887 = vadd.f32 %v2886, %v2632
  %v2888 = vadd.f32 %v2887, %v2633
  %v2889 = vadd.f32 %v2888, %v2634
  %v2890 = vadd.f32 %v2889, %v2635
  %v2891 = vadd.f32 %v2890, %v2636
  %v2892 = vadd.f32 %v2891, %v2637
  %v2893 = vadd.f32 %v2892, %v2638
  %v2894 = vadd.f32 %v2893, %v2639
  %v2895 = vadd.f32 %v2894, %v2640
  %v2896 = vadd.f32 %v2895, %v2641
  %v2897 = vadd.f32 %v2896, %v2642
  %v2898 = vadd.f32 %v2897, %v2643
  %v2899 = vadd.f32 %v2898, %v2644
  %v2900 = vadd.f32 %v2899, %v2645
  %v2901 = vadd.f32 %v2900, %v2646
  %v2902 = vadd.f32 %v2901, %v2647
  %v2903 = vadd.f32 %v2902, %v2648
  %v2904 = vadd.f32 %v2903, %v2649
  %v2905 = vadd.f32 %v2904, %v2650
  %v2906 = vadd.f32 %v2905, %v2651
  %v2907 = vadd.f32 %v2906, %v2652
  %v2908 = vadd.f32 %v2907, %v2653
  %v2909 = vadd.f32 %v2908, %v2654
  %v2910 = vadd.f32 %v2909, %v2655
  %v2911 = vadd.f32 %v2910, %v2656
  %v2912 = vadd.f32 %v2911, %v2657
  %v2913 = vadd.f32 %v2912, %v2658
  %v2914 = vadd.f32 %v2913, %v2659
  %v2915 = vadd.f32 %v2914, %v2660
  %v2916 = vadd.f32 %v2915, %v2661
  %v2917 = vadd.f32 %v2916, %v2662
  %v2918 = vadd.f32 %v2917, %v2663
  %v2919 = vadd.f32 %v2918, %v2664
  %v2920 = vadd.f32 %v2919, %v2665
  %v2921 = vadd.f32 %v2920, %v2666
  %v2922 = vadd.f32 %v2921, %v2667
  %v2923 = vadd.f32 %v2922, %v2668
  %v2924 = vadd.f32 %v2923, %v2669
  %v2925 = vadd.f32 %v2924, %v2670
  %v2926 = vadd.f32 %v2925, %v2671
  %v2927 = vadd.f32 %v2926, %v2672
  %v2928 = vadd.f32 %v2927, %v2673
  %v2929 = vadd.f32 %v2928, %v2674
  %v2930 = vadd.f32 %v2929, %v2675
  %v2931 = vadd.f32 %v2930, %v2676
  %v2932 = vadd.f32 %v2931, %v2677
  %v2933 = vadd.f32 %v2932, %v2678
  %v2934 = vadd.f32 %v2933, %v2679
  %v2935 = vadd.f32 %v2934, %v2680
  %v2936 = vrot.slane %v2935, 4
  %v2937 = vadd.f32 %v2935, %v2936
  %v2938 = vrot.slane %v2937, 2
  %v2939 = vadd.f32 %v2937, %v2938
  %v2940 = vrot.slane %v2939, 1
  %v2941 = vadd.f32 %v2939, %v2940
  %v2942 = vmul.f32 %v2941, 0.00048828125
  %v2943 = vmul.f32 %v2424, %v2424
  %v2944 = vsub.f32 %v2942, %v2943
  %v2945 = vmax.f32 %v2944, 0.0
  %v2946 = vld [vmem:[%s2] sm:$0x1]
  %v2947 = vadd.f32 %v2945, 1e-05
  %v2948 = vrsqrt.pop %v2947
  %v2949 = vmul.f32 %v2946, %v2948
  %v2950 = vld [vmem:[%s3] sm:$0x1]
  %v2951 = vmul.f32 %v2424, %v2949
  %v2952 = vsub.f32 %v2950, %v2951
  %v2954 = vlaneseq
  %v2955 = vshrl.u32 %v2954, 7
  %v2956 = vsub.s32 0, %v2955
  %v2957 = vrot.slane %v2949, %v2956
  %v2959 = vmul.f32 %v1141, %v2957
  %v2960 = vmul.f32 %v1144, %v2957
  %v2961 = vmul.f32 %v1149, %v2957
  %v2962 = vmul.f32 %v1152, %v2957
  %v2963 = vmul.f32 %v1157, %v2957
  %v2964 = vmul.f32 %v1160, %v2957
  %v2965 = vmul.f32 %v1165, %v2957
  %v2966 = vmul.f32 %v1168, %v2957
  %v2967 = vmul.f32 %v1173, %v2957
  %v2968 = vmul.f32 %v1176, %v2957
  %v2969 = vmul.f32 %v1181, %v2957
  %v2970 = vmul.f32 %v1184, %v2957
  %v2971 = vmul.f32 %v1189, %v2957
  %v2972 = vmul.f32 %v1192, %v2957
  %v2973 = vmul.f32 %v1197, %v2957
  %v2974 = vmul.f32 %v1200, %v2957
  %v2975 = vmul.f32 %v1205, %v2957
  %v2976 = vmul.f32 %v1208, %v2957
  %v2977 = vmul.f32 %v1213, %v2957
  %v2978 = vmul.f32 %v1216, %v2957
  %v2979 = vmul.f32 %v1221, %v2957
  %v2980 = vmul.f32 %v1224, %v2957
  %v2981 = vmul.f32 %v1229, %v2957
  %v2982 = vmul.f32 %v1232, %v2957
  %v2983 = vmul.f32 %v1237, %v2957
  %v2984 = vmul.f32 %v1240, %v2957
  %v2985 = vmul.f32 %v1245, %v2957
  %v2986 = vmul.f32 %v1248, %v2957
  %v2987 = vmul.f32 %v1253, %v2957
  %v2988 = vmul.f32 %v1256, %v2957
  %v2989 = vmul.f32 %v1261, %v2957
  %v2990 = vmul.f32 %v1264, %v2957
  %v2991 = vmul.f32 %v1269, %v2957
  %v2992 = vmul.f32 %v1272, %v2957
  %v2993 = vmul.f32 %v1277, %v2957
  %v2994 = vmul.f32 %v1280, %v2957
  %v2995 = vmul.f32 %v1285, %v2957
  %v2996 = vmul.f32 %v1288, %v2957
  %v2997 = vmul.f32 %v1293, %v2957
  %v2998 = vmul.f32 %v1296, %v2957
  %v2999 = vmul.f32 %v1301, %v2957
  %v3000 = vmul.f32 %v1304, %v2957
  %v3001 = vmul.f32 %v1309, %v2957
  %v3002 = vmul.f32 %v1312, %v2957
  %v3003 = vmul.f32 %v1317, %v2957
  %v3004 = vmul.f32 %v1320, %v2957
  %v3005 = vmul.f32 %v1325, %v2957
  %v3006 = vmul.f32 %v1328, %v2957
  %v3007 = vmul.f32 %v1333, %v2957
  %v3008 = vmul.f32 %v1336, %v2957
  %v3009 = vmul.f32 %v1341, %v2957
  %v3010 = vmul.f32 %v1344, %v2957
  %v3011 = vmul.f32 %v1349, %v2957
  %v3012 = vmul.f32 %v1352, %v2957
  %v3013 = vmul.f32 %v1357, %v2957
  %v3014 = vmul.f32 %v1360, %v2957
  %v3015 = vmul.f32 %v1365, %v2957
  %v3016 = vmul.f32 %v1368, %v2957
  %v3017 = vmul.f32 %v1373, %v2957
  %v3018 = vmul.f32 %v1376, %v2957
  %v3019 = vmul.f32 %v1381, %v2957
  %v3020 = vmul.f32 %v1384, %v2957
  %v3021 = vmul.f32 %v1389, %v2957
  %v3022 = vmul.f32 %v1392, %v2957
  %v3023 = vmul.f32 %v1397, %v2957
  %v3024 = vmul.f32 %v1400, %v2957
  %v3025 = vmul.f32 %v1405, %v2957
  %v3026 = vmul.f32 %v1408, %v2957
  %v3027 = vmul.f32 %v1413, %v2957
  %v3028 = vmul.f32 %v1416, %v2957
  %v3029 = vmul.f32 %v1421, %v2957
  %v3030 = vmul.f32 %v1424, %v2957
  %v3031 = vmul.f32 %v1429, %v2957
  %v3032 = vmul.f32 %v1432, %v2957
  %v3033 = vmul.f32 %v1437, %v2957
  %v3034 = vmul.f32 %v1440, %v2957
  %v3035 = vmul.f32 %v1445, %v2957
  %v3036 = vmul.f32 %v1448, %v2957
  %v3037 = vmul.f32 %v1453, %v2957
  %v3038 = vmul.f32 %v1456, %v2957
  %v3039 = vmul.f32 %v1461, %v2957
  %v3040 = vmul.f32 %v1464, %v2957
  %v3041 = vmul.f32 %v1469, %v2957
  %v3042 = vmul.f32 %v1472, %v2957
  %v3043 = vmul.f32 %v1477, %v2957
  %v3044 = vmul.f32 %v1480, %v2957
  %v3045 = vmul.f32 %v1485, %v2957
  %v3046 = vmul.f32 %v1488, %v2957
  %v3047 = vmul.f32 %v1493, %v2957
  %v3048 = vmul.f32 %v1496, %v2957
  %v3049 = vmul.f32 %v1501, %v2957
  %v3050 = vmul.f32 %v1504, %v2957
  %v3051 = vmul.f32 %v1509, %v2957
  %v3052 = vmul.f32 %v1512, %v2957
  %v3053 = vmul.f32 %v1517, %v2957
  %v3054 = vmul.f32 %v1520, %v2957
  %v3055 = vmul.f32 %v1525, %v2957
  %v3056 = vmul.f32 %v1528, %v2957
  %v3057 = vmul.f32 %v1533, %v2957
  %v3058 = vmul.f32 %v1536, %v2957
  %v3059 = vmul.f32 %v1541, %v2957
  %v3060 = vmul.f32 %v1544, %v2957
  %v3061 = vmul.f32 %v1549, %v2957
  %v3062 = vmul.f32 %v1552, %v2957
  %v3063 = vmul.f32 %v1557, %v2957
  %v3064 = vmul.f32 %v1560, %v2957
  %v3065 = vmul.f32 %v1565, %v2957
  %v3066 = vmul.f32 %v1568, %v2957
  %v3067 = vmul.f32 %v1573, %v2957
  %v3068 = vmul.f32 %v1576, %v2957
  %v3069 = vmul.f32 %v1581, %v2957
  %v3070 = vmul.f32 %v1584, %v2957
  %v3071 = vmul.f32 %v1589, %v2957
  %v3072 = vmul.f32 %v1592, %v2957
  %v3073 = vmul.f32 %v1597, %v2957
  %v3074 = vmul.f32 %v1600, %v2957
  %v3075 = vmul.f32 %v1605, %v2957
  %v3076 = vmul.f32 %v1608, %v2957
  %v3077 = vmul.f32 %v1613, %v2957
  %v3078 = vmul.f32 %v1616, %v2957
  %v3079 = vmul.f32 %v1621, %v2957
  %v3080 = vmul.f32 %v1624, %v2957
  %v3081 = vmul.f32 %v1629, %v2957
  %v3082 = vmul.f32 %v1632, %v2957
  %v3083 = vmul.f32 %v1637, %v2957
  %v3084 = vmul.f32 %v1640, %v2957
  %v3085 = vmul.f32 %v1645, %v2957
  %v3086 = vmul.f32 %v1648, %v2957
  %v3087 = vmul.f32 %v1653, %v2957
  %v3088 = vmul.f32 %v1656, %v2957
  %v3089 = vmul.f32 %v1661, %v2957
  %v3090 = vmul.f32 %v1664, %v2957
  %v3091 = vmul.f32 %v1669, %v2957
  %v3092 = vmul.f32 %v1672, %v2957
  %v3093 = vmul.f32 %v1677, %v2957
  %v3094 = vmul.f32 %v1680, %v2957
  %v3095 = vmul.f32 %v1685, %v2957
  %v3096 = vmul.f32 %v1688, %v2957
  %v3097 = vmul.f32 %v1693, %v2957
  %v3098 = vmul.f32 %v1696, %v2957
  %v3099 = vmul.f32 %v1701, %v2957
  %v3100 = vmul.f32 %v1704, %v2957
  %v3101 = vmul.f32 %v1709, %v2957
  %v3102 = vmul.f32 %v1712, %v2957
  %v3103 = vmul.f32 %v1717, %v2957
  %v3104 = vmul.f32 %v1720, %v2957
  %v3105 = vmul.f32 %v1725, %v2957
  %v3106 = vmul.f32 %v1728, %v2957
  %v3107 = vmul.f32 %v1733, %v2957
  %v3108 = vmul.f32 %v1736, %v2957
  %v3109 = vmul.f32 %v1741, %v2957
  %v3110 = vmul.f32 %v1744, %v2957
  %v3111 = vmul.f32 %v1749, %v2957
  %v3112 = vmul.f32 %v1752, %v2957
  %v3113 = vmul.f32 %v1757, %v2957
  %v3114 = vmul.f32 %v1760, %v2957
  %v3115 = vmul.f32 %v1765, %v2957
  %v3116 = vmul.f32 %v1768, %v2957
  %v3117 = vmul.f32 %v1773, %v2957
  %v3118 = vmul.f32 %v1776, %v2957
  %v3119 = vmul.f32 %v1781, %v2957
  %v3120 = vmul.f32 %v1784, %v2957
  %v3121 = vmul.f32 %v1789, %v2957
  %v3122 = vmul.f32 %v1792, %v2957
  %v3123 = vmul.f32 %v1797, %v2957
  %v3124 = vmul.f32 %v1800, %v2957
  %v3125 = vmul.f32 %v1805, %v2957
  %v3126 = vmul.f32 %v1808, %v2957
  %v3127 = vmul.f32 %v1813, %v2957
  %v3128 = vmul.f32 %v1816, %v2957
  %v3129 = vmul.f32 %v1821, %v2957
  %v3130 = vmul.f32 %v1824, %v2957
  %v3131 = vmul.f32 %v1829, %v2957
  %v3132 = vmul.f32 %v1832, %v2957
  %v3133 = vmul.f32 %v1837, %v2957
  %v3134 = vmul.f32 %v1840, %v2957
  %v3135 = vmul.f32 %v1845, %v2957
  %v3136 = vmul.f32 %v1848, %v2957
  %v3137 = vmul.f32 %v1853, %v2957
  %v3138 = vmul.f32 %v1856, %v2957
  %v3139 = vmul.f32 %v1861, %v2957
  %v3140 = vmul.f32 %v1864, %v2957
  %v3141 = vmul.f32 %v1869, %v2957
  %v3142 = vmul.f32 %v1872, %v2957
  %v3143 = vmul.f32 %v1877, %v2957
  %v3144 = vmul.f32 %v1880, %v2957
  %v3145 = vmul.f32 %v1885, %v2957
  %v3146 = vmul.f32 %v1888, %v2957
  %v3147 = vmul.f32 %v1893, %v2957
  %v3148 = vmul.f32 %v1896, %v2957
  %v3149 = vmul.f32 %v1901, %v2957
  %v3150 = vmul.f32 %v1904, %v2957
  %v3151 = vmul.f32 %v1909, %v2957
  %v3152 = vmul.f32 %v1912, %v2957
  %v3153 = vmul.f32 %v1917, %v2957
  %v3154 = vmul.f32 %v1920, %v2957
  %v3155 = vmul.f32 %v1925, %v2957
  %v3156 = vmul.f32 %v1928, %v2957
  %v3157 = vmul.f32 %v1933, %v2957
  %v3158 = vmul.f32 %v1936, %v2957
  %v3159 = vmul.f32 %v1941, %v2957
  %v3160 = vmul.f32 %v1944, %v2957
  %v3161 = vmul.f32 %v1949, %v2957
  %v3162 = vmul.f32 %v1952, %v2957
  %v3163 = vmul.f32 %v1957, %v2957
  %v3164 = vmul.f32 %v1960, %v2957
  %v3165 = vmul.f32 %v1965, %v2957
  %v3166 = vmul.f32 %v1968, %v2957
  %v3167 = vmul.f32 %v1973, %v2957
  %v3168 = vmul.f32 %v1976, %v2957
  %v3169 = vmul.f32 %v1981, %v2957
  %v3170 = vmul.f32 %v1984, %v2957
  %v3171 = vmul.f32 %v1989, %v2957
  %v3172 = vmul.f32 %v1992, %v2957
  %v3173 = vmul.f32 %v1997, %v2957
  %v3174 = vmul.f32 %v2000, %v2957
  %v3175 = vmul.f32 %v2005, %v2957
  %v3176 = vmul.f32 %v2008, %v2957
  %v3177 = vmul.f32 %v2013, %v2957
  %v3178 = vmul.f32 %v2016, %v2957
  %v3179 = vmul.f32 %v2021, %v2957
  %v3180 = vmul.f32 %v2024, %v2957
  %v3181 = vmul.f32 %v2029, %v2957
  %v3182 = vmul.f32 %v2032, %v2957
  %v3183 = vmul.f32 %v2037, %v2957
  %v3184 = vmul.f32 %v2040, %v2957
  %v3185 = vmul.f32 %v2045, %v2957
  %v3186 = vmul.f32 %v2048, %v2957
  %v3187 = vmul.f32 %v2053, %v2957
  %v3188 = vmul.f32 %v2056, %v2957
  %v3189 = vmul.f32 %v2061, %v2957
  %v3190 = vmul.f32 %v2064, %v2957
  %v3191 = vmul.f32 %v2069, %v2957
  %v3192 = vmul.f32 %v2072, %v2957
  %v3193 = vmul.f32 %v2077, %v2957
  %v3194 = vmul.f32 %v2080, %v2957
  %v3195 = vmul.f32 %v2085, %v2957
  %v3196 = vmul.f32 %v2088, %v2957
  %v3197 = vmul.f32 %v2093, %v2957
  %v3198 = vmul.f32 %v2096, %v2957
  %v3199 = vmul.f32 %v2101, %v2957
  %v3200 = vmul.f32 %v2104, %v2957
  %v3201 = vmul.f32 %v2109, %v2957
  %v3202 = vmul.f32 %v2112, %v2957
  %v3203 = vmul.f32 %v2117, %v2957
  %v3204 = vmul.f32 %v2120, %v2957
  %v3205 = vmul.f32 %v2125, %v2957
  %v3206 = vmul.f32 %v2128, %v2957
  %v3207 = vmul.f32 %v2133, %v2957
  %v3208 = vmul.f32 %v2136, %v2957
  %v3209 = vmul.f32 %v2141, %v2957
  %v3210 = vmul.f32 %v2144, %v2957
  %v3211 = vmul.f32 %v2149, %v2957
  %v3212 = vmul.f32 %v2152, %v2957
  %v3213 = vmul.f32 %v2157, %v2957
  %v3214 = vmul.f32 %v2160, %v2957
  %v3216 = vlaneseq
  %v3217 = vshrl.u32 %v3216, 7
  %v3218 = vsub.s32 0, %v3217
  %v3219 = vrot.slane %v2952, %v3218
  %v3221 = vadd.f32 %v2959, %v3219
  %v3222 = vadd.f32 %v2960, %v3219
  %v3223 = vadd.f32 %v2961, %v3219
  %v3224 = vadd.f32 %v2962, %v3219
  %v3225 = vadd.f32 %v2963, %v3219
  %v3226 = vadd.f32 %v2964, %v3219
  %v3227 = vadd.f32 %v2965, %v3219
  %v3228 = vadd.f32 %v2966, %v3219
  %v3229 = vadd.f32 %v2967, %v3219
  %v3230 = vadd.f32 %v2968, %v3219
  %v3231 = vadd.f32 %v2969, %v3219
  %v3232 = vadd.f32 %v2970, %v3219
  %v3233 = vadd.f32 %v2971, %v3219
  %v3234 = vadd.f32 %v2972, %v3219
  %v3235 = vadd.f32 %v2973, %v3219
  %v3236 = vadd.f32 %v2974, %v3219
  %v3237 = vadd.f32 %v2975, %v3219
  %v3238 = vadd.f32 %v2976, %v3219
  %v3239 = vadd.f32 %v2977, %v3219
  %v3240 = vadd.f32 %v2978, %v3219
  %v3241 = vadd.f32 %v2979, %v3219
  %v3242 = vadd.f32 %v2980, %v3219
  %v3243 = vadd.f32 %v2981, %v3219
  %v3244 = vadd.f32 %v2982, %v3219
  %v3245 = vadd.f32 %v2983, %v3219
  %v3246 = vadd.f32 %v2984, %v3219
  %v3247 = vadd.f32 %v2985, %v3219
  %v3248 = vadd.f32 %v2986, %v3219
  %v3249 = vadd.f32 %v2987, %v3219
  %v3250 = vadd.f32 %v2988, %v3219
  %v3251 = vadd.f32 %v2989, %v3219
  %v3252 = vadd.f32 %v2990, %v3219
  %v3253 = vadd.f32 %v2991, %v3219
  %v3254 = vadd.f32 %v2992, %v3219
  %v3255 = vadd.f32 %v2993, %v3219
  %v3256 = vadd.f32 %v2994, %v3219
  %v3257 = vadd.f32 %v2995, %v3219
  %v3258 = vadd.f32 %v2996, %v3219
  %v3259 = vadd.f32 %v2997, %v3219
  %v3260 = vadd.f32 %v2998, %v3219
  %v3261 = vadd.f32 %v2999, %v3219
  %v3262 = vadd.f32 %v3000, %v3219
  %v3263 = vadd.f32 %v3001, %v3219
  %v3264 = vadd.f32 %v3002, %v3219
  %v3265 = vadd.f32 %v3003, %v3219
  %v3266 = vadd.f32 %v3004, %v3219
  %v3267 = vadd.f32 %v3005, %v3219
  %v3268 = vadd.f32 %v3006, %v3219
  %v3269 = vadd.f32 %v3007, %v3219
  %v3270 = vadd.f32 %v3008, %v3219
  %v3271 = vadd.f32 %v3009, %v3219
  %v3272 = vadd.f32 %v3010, %v3219
  %v3273 = vadd.f32 %v3011, %v3219
  %v3274 = vadd.f32 %v3012, %v3219
  %v3275 = vadd.f32 %v3013, %v3219
  %v3276 = vadd.f32 %v3014, %v3219
  %v3277 = vadd.f32 %v3015, %v3219
  %v3278 = vadd.f32 %v3016, %v3219
  %v3279 = vadd.f32 %v3017, %v3219
  %v3280 = vadd.f32 %v3018, %v3219
  %v3281 = vadd.f32 %v3019, %v3219
  %v3282 = vadd.f32 %v3020, %v3219
  %v3283 = vadd.f32 %v3021, %v3219
  %v3284 = vadd.f32 %v3022, %v3219
  %v3285 = vadd.f32 %v3023, %v3219
  %v3286 = vadd.f32 %v3024, %v3219
  %v3287 = vadd.f32 %v3025, %v3219
  %v3288 = vadd.f32 %v3026, %v3219
  %v3289 = vadd.f32 %v3027, %v3219
  %v3290 = vadd.f32 %v3028, %v3219
  %v3291 = vadd.f32 %v3029, %v3219
  %v3292 = vadd.f32 %v3030, %v3219
  %v3293 = vadd.f32 %v3031, %v3219
  %v3294 = vadd.f32 %v3032, %v3219
  %v3295 = vadd.f32 %v3033, %v3219
  %v3296 = vadd.f32 %v3034, %v3219
  %v3297 = vadd.f32 %v3035, %v3219
  %v3298 = vadd.f32 %v3036, %v3219
  %v3299 = vadd.f32 %v3037, %v3219
  %v3300 = vadd.f32 %v3038, %v3219
  %v3301 = vadd.f32 %v3039, %v3219
  %v3302 = vadd.f32 %v3040, %v3219
  %v3303 = vadd.f32 %v3041, %v3219
  %v3304 = vadd.f32 %v3042, %v3219
  %v3305 = vadd.f32 %v3043, %v3219
  %v3306 = vadd.f32 %v3044, %v3219
  %v3307 = vadd.f32 %v3045, %v3219
  %v3308 = vadd.f32 %v3046, %v3219
  %v3309 = vadd.f32 %v3047, %v3219
  %v3310 = vadd.f32 %v3048, %v3219
  %v3311 = vadd.f32 %v3049, %v3219
  %v3312 = vadd.f32 %v3050, %v3219
  %v3313 = vadd.f32 %v3051, %v3219
  %v3314 = vadd.f32 %v3052, %v3219
  %v3315 = vadd.f32 %v3053, %v3219
  %v3316 = vadd.f32 %v3054, %v3219
  %v3317 = vadd.f32 %v3055, %v3219
  %v3318 = vadd.f32 %v3056, %v3219
  %v3319 = vadd.f32 %v3057, %v3219
  %v3320 = vadd.f32 %v3058, %v3219
  %v3321 = vadd.f32 %v3059, %v3219
  %v3322 = vadd.f32 %v3060, %v3219
  %v3323 = vadd.f32 %v3061, %v3219
  %v3324 = vadd.f32 %v3062, %v3219
  %v3325 = vadd.f32 %v3063, %v3219
  %v3326 = vadd.f32 %v3064, %v3219
  %v3327 = vadd.f32 %v3065, %v3219
  %v3328 = vadd.f32 %v3066, %v3219
  %v3329 = vadd.f32 %v3067, %v3219
  %v3330 = vadd.f32 %v3068, %v3219
  %v3331 = vadd.f32 %v3069, %v3219
  %v3332 = vadd.f32 %v3070, %v3219
  %v3333 = vadd.f32 %v3071, %v3219
  %v3334 = vadd.f32 %v3072, %v3219
  %v3335 = vadd.f32 %v3073, %v3219
  %v3336 = vadd.f32 %v3074, %v3219
  %v3337 = vadd.f32 %v3075, %v3219
  %v3338 = vadd.f32 %v3076, %v3219
  %v3339 = vadd.f32 %v3077, %v3219
  %v3340 = vadd.f32 %v3078, %v3219
  %v3341 = vadd.f32 %v3079, %v3219
  %v3342 = vadd.f32 %v3080, %v3219
  %v3343 = vadd.f32 %v3081, %v3219
  %v3344 = vadd.f32 %v3082, %v3219
  %v3345 = vadd.f32 %v3083, %v3219
  %v3346 = vadd.f32 %v3084, %v3219
  %v3347 = vadd.f32 %v3085, %v3219
  %v3348 = vadd.f32 %v3086, %v3219
  %v3349 = vadd.f32 %v3087, %v3219
  %v3350 = vadd.f32 %v3088, %v3219
  %v3351 = vadd.f32 %v3089, %v3219
  %v3352 = vadd.f32 %v3090, %v3219
  %v3353 = vadd.f32 %v3091, %v3219
  %v3354 = vadd.f32 %v3092, %v3219
  %v3355 = vadd.f32 %v3093, %v3219
  %v3356 = vadd.f32 %v3094, %v3219
  %v3357 = vadd.f32 %v3095, %v3219
  %v3358 = vadd.f32 %v3096, %v3219
  %v3359 = vadd.f32 %v3097, %v3219
  %v3360 = vadd.f32 %v3098, %v3219
  %v3361 = vadd.f32 %v3099, %v3219
  %v3362 = vadd.f32 %v3100, %v3219
  %v3363 = vadd.f32 %v3101, %v3219
  %v3364 = vadd.f32 %v3102, %v3219
  %v3365 = vadd.f32 %v3103, %v3219
  %v3366 = vadd.f32 %v3104, %v3219
  %v3367 = vadd.f32 %v3105, %v3219
  %v3368 = vadd.f32 %v3106, %v3219
  %v3369 = vadd.f32 %v3107, %v3219
  %v3370 = vadd.f32 %v3108, %v3219
  %v3371 = vadd.f32 %v3109, %v3219
  %v3372 = vadd.f32 %v3110, %v3219
  %v3373 = vadd.f32 %v3111, %v3219
  %v3374 = vadd.f32 %v3112, %v3219
  %v3375 = vadd.f32 %v3113, %v3219
  %v3376 = vadd.f32 %v3114, %v3219
  %v3377 = vadd.f32 %v3115, %v3219
  %v3378 = vadd.f32 %v3116, %v3219
  %v3379 = vadd.f32 %v3117, %v3219
  %v3380 = vadd.f32 %v3118, %v3219
  %v3381 = vadd.f32 %v3119, %v3219
  %v3382 = vadd.f32 %v3120, %v3219
  %v3383 = vadd.f32 %v3121, %v3219
  %v3384 = vadd.f32 %v3122, %v3219
  %v3385 = vadd.f32 %v3123, %v3219
  %v3386 = vadd.f32 %v3124, %v3219
  %v3387 = vadd.f32 %v3125, %v3219
  %v3388 = vadd.f32 %v3126, %v3219
  %v3389 = vadd.f32 %v3127, %v3219
  %v3390 = vadd.f32 %v3128, %v3219
  %v3391 = vadd.f32 %v3129, %v3219
  %v3392 = vadd.f32 %v3130, %v3219
  %v3393 = vadd.f32 %v3131, %v3219
  %v3394 = vadd.f32 %v3132, %v3219
  %v3395 = vadd.f32 %v3133, %v3219
  %v3396 = vadd.f32 %v3134, %v3219
  %v3397 = vadd.f32 %v3135, %v3219
  %v3398 = vadd.f32 %v3136, %v3219
  %v3399 = vadd.f32 %v3137, %v3219
  %v3400 = vadd.f32 %v3138, %v3219
  %v3401 = vadd.f32 %v3139, %v3219
  %v3402 = vadd.f32 %v3140, %v3219
  %v3403 = vadd.f32 %v3141, %v3219
  %v3404 = vadd.f32 %v3142, %v3219
  %v3405 = vadd.f32 %v3143, %v3219
  %v3406 = vadd.f32 %v3144, %v3219
  %v3407 = vadd.f32 %v3145, %v3219
  %v3408 = vadd.f32 %v3146, %v3219
  %v3409 = vadd.f32 %v3147, %v3219
  %v3410 = vadd.f32 %v3148, %v3219
  %v3411 = vadd.f32 %v3149, %v3219
  %v3412 = vadd.f32 %v3150, %v3219
  %v3413 = vadd.f32 %v3151, %v3219
  %v3414 = vadd.f32 %v3152, %v3219
  %v3415 = vadd.f32 %v3153, %v3219
  %v3416 = vadd.f32 %v3154, %v3219
  %v3417 = vadd.f32 %v3155, %v3219
  %v3418 = vadd.f32 %v3156, %v3219
  %v3419 = vadd.f32 %v3157, %v3219
  %v3420 = vadd.f32 %v3158, %v3219
  %v3421 = vadd.f32 %v3159, %v3219
  %v3422 = vadd.f32 %v3160, %v3219
  %v3423 = vadd.f32 %v3161, %v3219
  %v3424 = vadd.f32 %v3162, %v3219
  %v3425 = vadd.f32 %v3163, %v3219
  %v3426 = vadd.f32 %v3164, %v3219
  %v3427 = vadd.f32 %v3165, %v3219
  %v3428 = vadd.f32 %v3166, %v3219
  %v3429 = vadd.f32 %v3167, %v3219
  %v3430 = vadd.f32 %v3168, %v3219
  %v3431 = vadd.f32 %v3169, %v3219
  %v3432 = vadd.f32 %v3170, %v3219
  %v3433 = vadd.f32 %v3171, %v3219
  %v3434 = vadd.f32 %v3172, %v3219
  %v3435 = vadd.f32 %v3173, %v3219
  %v3436 = vadd.f32 %v3174, %v3219
  %v3437 = vadd.f32 %v3175, %v3219
  %v3438 = vadd.f32 %v3176, %v3219
  %v3439 = vadd.f32 %v3177, %v3219
  %v3440 = vadd.f32 %v3178, %v3219
  %v3441 = vadd.f32 %v3179, %v3219
  %v3442 = vadd.f32 %v3180, %v3219
  %v3443 = vadd.f32 %v3181, %v3219
  %v3444 = vadd.f32 %v3182, %v3219
  %v3445 = vadd.f32 %v3183, %v3219
  %v3446 = vadd.f32 %v3184, %v3219
  %v3447 = vadd.f32 %v3185, %v3219
  %v3448 = vadd.f32 %v3186, %v3219
  %v3449 = vadd.f32 %v3187, %v3219
  %v3450 = vadd.f32 %v3188, %v3219
  %v3451 = vadd.f32 %v3189, %v3219
  %v3452 = vadd.f32 %v3190, %v3219
  %v3453 = vadd.f32 %v3191, %v3219
  %v3454 = vadd.f32 %v3192, %v3219
  %v3455 = vadd.f32 %v3193, %v3219
  %v3456 = vadd.f32 %v3194, %v3219
  %v3457 = vadd.f32 %v3195, %v3219
  %v3458 = vadd.f32 %v3196, %v3219
  %v3459 = vadd.f32 %v3197, %v3219
  %v3460 = vadd.f32 %v3198, %v3219
  %v3461 = vadd.f32 %v3199, %v3219
  %v3462 = vadd.f32 %v3200, %v3219
  %v3463 = vadd.f32 %v3201, %v3219
  %v3464 = vadd.f32 %v3202, %v3219
  %v3465 = vadd.f32 %v3203, %v3219
  %v3466 = vadd.f32 %v3204, %v3219
  %v3467 = vadd.f32 %v3205, %v3219
  %v3468 = vadd.f32 %v3206, %v3219
  %v3469 = vadd.f32 %v3207, %v3219
  %v3470 = vadd.f32 %v3208, %v3219
  %v3471 = vadd.f32 %v3209, %v3219
  %v3472 = vadd.f32 %v3210, %v3219
  %v3473 = vadd.f32 %v3211, %v3219
  %v3474 = vadd.f32 %v3212, %v3219
  %v3475 = vadd.f32 %v3213, %v3219
  %v3476 = vadd.f32 %v3214, %v3219
  %vm3477 = vcmp.gt.f32.partialorder %v3221, 0.0
  %vm3478 = vcmp.gt.f32.partialorder %v3222, 0.0
  %vm3479 = vcmp.gt.f32.partialorder %v3223, 0.0
  %vm3480 = vcmp.gt.f32.partialorder %v3224, 0.0
  %vm3481 = vcmp.gt.f32.partialorder %v3225, 0.0
  %vm3482 = vcmp.gt.f32.partialorder %v3226, 0.0
  %vm3483 = vcmp.gt.f32.partialorder %v3227, 0.0
  %vm3484 = vcmp.gt.f32.partialorder %v3228, 0.0
  %vm3485 = vcmp.gt.f32.partialorder %v3229, 0.0
  %vm3486 = vcmp.gt.f32.partialorder %v3230, 0.0
  %vm3487 = vcmp.gt.f32.partialorder %v3231, 0.0
  %vm3488 = vcmp.gt.f32.partialorder %v3232, 0.0
  %vm3489 = vcmp.gt.f32.partialorder %v3233, 0.0
  %vm3490 = vcmp.gt.f32.partialorder %v3234, 0.0
  %vm3491 = vcmp.gt.f32.partialorder %v3235, 0.0
  %vm3492 = vcmp.gt.f32.partialorder %v3236, 0.0
  %vm3493 = vcmp.gt.f32.partialorder %v3237, 0.0
  %vm3494 = vcmp.gt.f32.partialorder %v3238, 0.0
  %vm3495 = vcmp.gt.f32.partialorder %v3239, 0.0
  %vm3496 = vcmp.gt.f32.partialorder %v3240, 0.0
  %vm3497 = vcmp.gt.f32.partialorder %v3241, 0.0
  %vm3498 = vcmp.gt.f32.partialorder %v3242, 0.0
  %vm3499 = vcmp.gt.f32.partialorder %v3243, 0.0
  %vm3500 = vcmp.gt.f32.partialorder %v3244, 0.0
  %vm3501 = vcmp.gt.f32.partialorder %v3245, 0.0
  %vm3502 = vcmp.gt.f32.partialorder %v3246, 0.0
  %vm3503 = vcmp.gt.f32.partialorder %v3247, 0.0
  %vm3504 = vcmp.gt.f32.partialorder %v3248, 0.0
  %vm3505 = vcmp.gt.f32.partialorder %v3249, 0.0
  %vm3506 = vcmp.gt.f32.partialorder %v3250, 0.0
  %vm3507 = vcmp.gt.f32.partialorder %v3251, 0.0
  %vm3508 = vcmp.gt.f32.partialorder %v3252, 0.0
  %vm3509 = vcmp.gt.f32.partialorder %v3253, 0.0
  %vm3510 = vcmp.gt.f32.partialorder %v3254, 0.0
  %vm3511 = vcmp.gt.f32.partialorder %v3255, 0.0
  %vm3512 = vcmp.gt.f32.partialorder %v3256, 0.0
  %vm3513 = vcmp.gt.f32.partialorder %v3257, 0.0
  %vm3514 = vcmp.gt.f32.partialorder %v3258, 0.0
  %vm3515 = vcmp.gt.f32.partialorder %v3259, 0.0
  %vm3516 = vcmp.gt.f32.partialorder %v3260, 0.0
  %vm3517 = vcmp.gt.f32.partialorder %v3261, 0.0
  %vm3518 = vcmp.gt.f32.partialorder %v3262, 0.0
  %vm3519 = vcmp.gt.f32.partialorder %v3263, 0.0
  %vm3520 = vcmp.gt.f32.partialorder %v3264, 0.0
  %vm3521 = vcmp.gt.f32.partialorder %v3265, 0.0
  %vm3522 = vcmp.gt.f32.partialorder %v3266, 0.0
  %vm3523 = vcmp.gt.f32.partialorder %v3267, 0.0
  %vm3524 = vcmp.gt.f32.partialorder %v3268, 0.0
  %vm3525 = vcmp.gt.f32.partialorder %v3269, 0.0
  %vm3526 = vcmp.gt.f32.partialorder %v3270, 0.0
  %vm3527 = vcmp.gt.f32.partialorder %v3271, 0.0
  %vm3528 = vcmp.gt.f32.partialorder %v3272, 0.0
  %vm3529 = vcmp.gt.f32.partialorder %v3273, 0.0
  %vm3530 = vcmp.gt.f32.partialorder %v3274, 0.0
  %vm3531 = vcmp.gt.f32.partialorder %v3275, 0.0
  %vm3532 = vcmp.gt.f32.partialorder %v3276, 0.0
  %vm3533 = vcmp.gt.f32.partialorder %v3277, 0.0
  %vm3534 = vcmp.gt.f32.partialorder %v3278, 0.0
  %vm3535 = vcmp.gt.f32.partialorder %v3279, 0.0
  %vm3536 = vcmp.gt.f32.partialorder %v3280, 0.0
  %vm3537 = vcmp.gt.f32.partialorder %v3281, 0.0
  %vm3538 = vcmp.gt.f32.partialorder %v3282, 0.0
  %vm3539 = vcmp.gt.f32.partialorder %v3283, 0.0
  %vm3540 = vcmp.gt.f32.partialorder %v3284, 0.0
  %vm3541 = vcmp.gt.f32.partialorder %v3285, 0.0
  %vm3542 = vcmp.gt.f32.partialorder %v3286, 0.0
  %vm3543 = vcmp.gt.f32.partialorder %v3287, 0.0
  %vm3544 = vcmp.gt.f32.partialorder %v3288, 0.0
  %vm3545 = vcmp.gt.f32.partialorder %v3289, 0.0
  %vm3546 = vcmp.gt.f32.partialorder %v3290, 0.0
  %vm3547 = vcmp.gt.f32.partialorder %v3291, 0.0
  %vm3548 = vcmp.gt.f32.partialorder %v3292, 0.0
  %vm3549 = vcmp.gt.f32.partialorder %v3293, 0.0
  %vm3550 = vcmp.gt.f32.partialorder %v3294, 0.0
  %vm3551 = vcmp.gt.f32.partialorder %v3295, 0.0
  %vm3552 = vcmp.gt.f32.partialorder %v3296, 0.0
  %vm3553 = vcmp.gt.f32.partialorder %v3297, 0.0
  %vm3554 = vcmp.gt.f32.partialorder %v3298, 0.0
  %vm3555 = vcmp.gt.f32.partialorder %v3299, 0.0
  %vm3556 = vcmp.gt.f32.partialorder %v3300, 0.0
  %vm3557 = vcmp.gt.f32.partialorder %v3301, 0.0
  %vm3558 = vcmp.gt.f32.partialorder %v3302, 0.0
  %vm3559 = vcmp.gt.f32.partialorder %v3303, 0.0
  %vm3560 = vcmp.gt.f32.partialorder %v3304, 0.0
  %vm3561 = vcmp.gt.f32.partialorder %v3305, 0.0
  %vm3562 = vcmp.gt.f32.partialorder %v3306, 0.0
  %vm3563 = vcmp.gt.f32.partialorder %v3307, 0.0
  %vm3564 = vcmp.gt.f32.partialorder %v3308, 0.0
  %vm3565 = vcmp.gt.f32.partialorder %v3309, 0.0
  %vm3566 = vcmp.gt.f32.partialorder %v3310, 0.0
  %vm3567 = vcmp.gt.f32.partialorder %v3311, 0.0
  %vm3568 = vcmp.gt.f32.partialorder %v3312, 0.0
  %vm3569 = vcmp.gt.f32.partialorder %v3313, 0.0
  %vm3570 = vcmp.gt.f32.partialorder %v3314, 0.0
  %vm3571 = vcmp.gt.f32.partialorder %v3315, 0.0
  %vm3572 = vcmp.gt.f32.partialorder %v3316, 0.0
  %vm3573 = vcmp.gt.f32.partialorder %v3317, 0.0
  %vm3574 = vcmp.gt.f32.partialorder %v3318, 0.0
  %vm3575 = vcmp.gt.f32.partialorder %v3319, 0.0
  %vm3576 = vcmp.gt.f32.partialorder %v3320, 0.0
  %vm3577 = vcmp.gt.f32.partialorder %v3321, 0.0
  %vm3578 = vcmp.gt.f32.partialorder %v3322, 0.0
  %vm3579 = vcmp.gt.f32.partialorder %v3323, 0.0
  %vm3580 = vcmp.gt.f32.partialorder %v3324, 0.0
  %vm3581 = vcmp.gt.f32.partialorder %v3325, 0.0
  %vm3582 = vcmp.gt.f32.partialorder %v3326, 0.0
  %vm3583 = vcmp.gt.f32.partialorder %v3327, 0.0
  %vm3584 = vcmp.gt.f32.partialorder %v3328, 0.0
  %vm3585 = vcmp.gt.f32.partialorder %v3329, 0.0
  %vm3586 = vcmp.gt.f32.partialorder %v3330, 0.0
  %vm3587 = vcmp.gt.f32.partialorder %v3331, 0.0
  %vm3588 = vcmp.gt.f32.partialorder %v3332, 0.0
  %vm3589 = vcmp.gt.f32.partialorder %v3333, 0.0
  %vm3590 = vcmp.gt.f32.partialorder %v3334, 0.0
  %vm3591 = vcmp.gt.f32.partialorder %v3335, 0.0
  %vm3592 = vcmp.gt.f32.partialorder %v3336, 0.0
  %vm3593 = vcmp.gt.f32.partialorder %v3337, 0.0
  %vm3594 = vcmp.gt.f32.partialorder %v3338, 0.0
  %vm3595 = vcmp.gt.f32.partialorder %v3339, 0.0
  %vm3596 = vcmp.gt.f32.partialorder %v3340, 0.0
  %vm3597 = vcmp.gt.f32.partialorder %v3341, 0.0
  %vm3598 = vcmp.gt.f32.partialorder %v3342, 0.0
  %vm3599 = vcmp.gt.f32.partialorder %v3343, 0.0
  %vm3600 = vcmp.gt.f32.partialorder %v3344, 0.0
  %vm3601 = vcmp.gt.f32.partialorder %v3345, 0.0
  %vm3602 = vcmp.gt.f32.partialorder %v3346, 0.0
  %vm3603 = vcmp.gt.f32.partialorder %v3347, 0.0
  %vm3604 = vcmp.gt.f32.partialorder %v3348, 0.0
  %vm3605 = vcmp.gt.f32.partialorder %v3349, 0.0
  %vm3606 = vcmp.gt.f32.partialorder %v3350, 0.0
  %vm3607 = vcmp.gt.f32.partialorder %v3351, 0.0
  %vm3608 = vcmp.gt.f32.partialorder %v3352, 0.0
  %vm3609 = vcmp.gt.f32.partialorder %v3353, 0.0
  %vm3610 = vcmp.gt.f32.partialorder %v3354, 0.0
  %vm3611 = vcmp.gt.f32.partialorder %v3355, 0.0
  %vm3612 = vcmp.gt.f32.partialorder %v3356, 0.0
  %vm3613 = vcmp.gt.f32.partialorder %v3357, 0.0
  %vm3614 = vcmp.gt.f32.partialorder %v3358, 0.0
  %vm3615 = vcmp.gt.f32.partialorder %v3359, 0.0
  %vm3616 = vcmp.gt.f32.partialorder %v3360, 0.0
  %vm3617 = vcmp.gt.f32.partialorder %v3361, 0.0
  %vm3618 = vcmp.gt.f32.partialorder %v3362, 0.0
  %vm3619 = vcmp.gt.f32.partialorder %v3363, 0.0
  %vm3620 = vcmp.gt.f32.partialorder %v3364, 0.0
  %vm3621 = vcmp.gt.f32.partialorder %v3365, 0.0
  %vm3622 = vcmp.gt.f32.partialorder %v3366, 0.0
  %vm3623 = vcmp.gt.f32.partialorder %v3367, 0.0
  %vm3624 = vcmp.gt.f32.partialorder %v3368, 0.0
  %vm3625 = vcmp.gt.f32.partialorder %v3369, 0.0
  %vm3626 = vcmp.gt.f32.partialorder %v3370, 0.0
  %vm3627 = vcmp.gt.f32.partialorder %v3371, 0.0
  %vm3628 = vcmp.gt.f32.partialorder %v3372, 0.0
  %vm3629 = vcmp.gt.f32.partialorder %v3373, 0.0
  %vm3630 = vcmp.gt.f32.partialorder %v3374, 0.0
  %vm3631 = vcmp.gt.f32.partialorder %v3375, 0.0
  %vm3632 = vcmp.gt.f32.partialorder %v3376, 0.0
  %vm3633 = vcmp.gt.f32.partialorder %v3377, 0.0
  %vm3634 = vcmp.gt.f32.partialorder %v3378, 0.0
  %vm3635 = vcmp.gt.f32.partialorder %v3379, 0.0
  %vm3636 = vcmp.gt.f32.partialorder %v3380, 0.0
  %vm3637 = vcmp.gt.f32.partialorder %v3381, 0.0
  %vm3638 = vcmp.gt.f32.partialorder %v3382, 0.0
  %vm3639 = vcmp.gt.f32.partialorder %v3383, 0.0
  %vm3640 = vcmp.gt.f32.partialorder %v3384, 0.0
  %vm3641 = vcmp.gt.f32.partialorder %v3385, 0.0
  %vm3642 = vcmp.gt.f32.partialorder %v3386, 0.0
  %vm3643 = vcmp.gt.f32.partialorder %v3387, 0.0
  %vm3644 = vcmp.gt.f32.partialorder %v3388, 0.0
  %vm3645 = vcmp.gt.f32.partialorder %v3389, 0.0
  %vm3646 = vcmp.gt.f32.partialorder %v3390, 0.0
  %vm3647 = vcmp.gt.f32.partialorder %v3391, 0.0
  %vm3648 = vcmp.gt.f32.partialorder %v3392, 0.0
  %vm3649 = vcmp.gt.f32.partialorder %v3393, 0.0
  %vm3650 = vcmp.gt.f32.partialorder %v3394, 0.0
  %vm3651 = vcmp.gt.f32.partialorder %v3395, 0.0
  %vm3652 = vcmp.gt.f32.partialorder %v3396, 0.0
  %vm3653 = vcmp.gt.f32.partialorder %v3397, 0.0
  %vm3654 = vcmp.gt.f32.partialorder %v3398, 0.0
  %vm3655 = vcmp.gt.f32.partialorder %v3399, 0.0
  %vm3656 = vcmp.gt.f32.partialorder %v3400, 0.0
  %vm3657 = vcmp.gt.f32.partialorder %v3401, 0.0
  %vm3658 = vcmp.gt.f32.partialorder %v3402, 0.0
  %vm3659 = vcmp.gt.f32.partialorder %v3403, 0.0
  %vm3660 = vcmp.gt.f32.partialorder %v3404, 0.0
  %vm3661 = vcmp.gt.f32.partialorder %v3405, 0.0
  %vm3662 = vcmp.gt.f32.partialorder %v3406, 0.0
  %vm3663 = vcmp.gt.f32.partialorder %v3407, 0.0
  %vm3664 = vcmp.gt.f32.partialorder %v3408, 0.0
  %vm3665 = vcmp.gt.f32.partialorder %v3409, 0.0
  %vm3666 = vcmp.gt.f32.partialorder %v3410, 0.0
  %vm3667 = vcmp.gt.f32.partialorder %v3411, 0.0
  %vm3668 = vcmp.gt.f32.partialorder %v3412, 0.0
  %vm3669 = vcmp.gt.f32.partialorder %v3413, 0.0
  %vm3670 = vcmp.gt.f32.partialorder %v3414, 0.0
  %vm3671 = vcmp.gt.f32.partialorder %v3415, 0.0
  %vm3672 = vcmp.gt.f32.partialorder %v3416, 0.0
  %vm3673 = vcmp.gt.f32.partialorder %v3417, 0.0
  %vm3674 = vcmp.gt.f32.partialorder %v3418, 0.0
  %vm3675 = vcmp.gt.f32.partialorder %v3419, 0.0
  %vm3676 = vcmp.gt.f32.partialorder %v3420, 0.0
  %vm3677 = vcmp.gt.f32.partialorder %v3421, 0.0
  %vm3678 = vcmp.gt.f32.partialorder %v3422, 0.0
  %vm3679 = vcmp.gt.f32.partialorder %v3423, 0.0
  %vm3680 = vcmp.gt.f32.partialorder %v3424, 0.0
  %vm3681 = vcmp.gt.f32.partialorder %v3425, 0.0
  %vm3682 = vcmp.gt.f32.partialorder %v3426, 0.0
  %vm3683 = vcmp.gt.f32.partialorder %v3427, 0.0
  %vm3684 = vcmp.gt.f32.partialorder %v3428, 0.0
  %vm3685 = vcmp.gt.f32.partialorder %v3429, 0.0
  %vm3686 = vcmp.gt.f32.partialorder %v3430, 0.0
  %vm3687 = vcmp.gt.f32.partialorder %v3431, 0.0
  %vm3688 = vcmp.gt.f32.partialorder %v3432, 0.0
  %vm3689 = vcmp.gt.f32.partialorder %v3433, 0.0
  %vm3690 = vcmp.gt.f32.partialorder %v3434, 0.0
  %vm3691 = vcmp.gt.f32.partialorder %v3435, 0.0
  %vm3692 = vcmp.gt.f32.partialorder %v3436, 0.0
  %vm3693 = vcmp.gt.f32.partialorder %v3437, 0.0
  %vm3694 = vcmp.gt.f32.partialorder %v3438, 0.0
  %vm3695 = vcmp.gt.f32.partialorder %v3439, 0.0
  %vm3696 = vcmp.gt.f32.partialorder %v3440, 0.0
  %vm3697 = vcmp.gt.f32.partialorder %v3441, 0.0
  %vm3698 = vcmp.gt.f32.partialorder %v3442, 0.0
  %vm3699 = vcmp.gt.f32.partialorder %v3443, 0.0
  %vm3700 = vcmp.gt.f32.partialorder %v3444, 0.0
  %vm3701 = vcmp.gt.f32.partialorder %v3445, 0.0
  %vm3702 = vcmp.gt.f32.partialorder %v3446, 0.0
  %vm3703 = vcmp.gt.f32.partialorder %v3447, 0.0
  %vm3704 = vcmp.gt.f32.partialorder %v3448, 0.0
  %vm3705 = vcmp.gt.f32.partialorder %v3449, 0.0
  %vm3706 = vcmp.gt.f32.partialorder %v3450, 0.0
  %vm3707 = vcmp.gt.f32.partialorder %v3451, 0.0
  %vm3708 = vcmp.gt.f32.partialorder %v3452, 0.0
  %vm3709 = vcmp.gt.f32.partialorder %v3453, 0.0
  %vm3710 = vcmp.gt.f32.partialorder %v3454, 0.0
  %vm3711 = vcmp.gt.f32.partialorder %v3455, 0.0
  %vm3712 = vcmp.gt.f32.partialorder %v3456, 0.0
  %vm3713 = vcmp.gt.f32.partialorder %v3457, 0.0
  %vm3714 = vcmp.gt.f32.partialorder %v3458, 0.0
  %vm3715 = vcmp.gt.f32.partialorder %v3459, 0.0
  %vm3716 = vcmp.gt.f32.partialorder %v3460, 0.0
  %vm3717 = vcmp.gt.f32.partialorder %v3461, 0.0
  %vm3718 = vcmp.gt.f32.partialorder %v3462, 0.0
  %vm3719 = vcmp.gt.f32.partialorder %v3463, 0.0
  %vm3720 = vcmp.gt.f32.partialorder %v3464, 0.0
  %vm3721 = vcmp.gt.f32.partialorder %v3465, 0.0
  %vm3722 = vcmp.gt.f32.partialorder %v3466, 0.0
  %vm3723 = vcmp.gt.f32.partialorder %v3467, 0.0
  %vm3724 = vcmp.gt.f32.partialorder %v3468, 0.0
  %vm3725 = vcmp.gt.f32.partialorder %v3469, 0.0
  %vm3726 = vcmp.gt.f32.partialorder %v3470, 0.0
  %vm3727 = vcmp.gt.f32.partialorder %v3471, 0.0
  %vm3728 = vcmp.gt.f32.partialorder %v3472, 0.0
  %vm3729 = vcmp.gt.f32.partialorder %v3473, 0.0
  %vm3730 = vcmp.gt.f32.partialorder %v3474, 0.0
  %vm3731 = vcmp.gt.f32.partialorder %v3475, 0.0
  %vm3732 = vcmp.gt.f32.partialorder %v3476, 0.0
  %v3733 = vmul.f32 %v3221, 0.1
  %v3734 = vmul.f32 %v3222, 0.1
  %v3735 = vmul.f32 %v3223, 0.1
  %v3736 = vmul.f32 %v3224, 0.1
  %v3737 = vmul.f32 %v3225, 0.1
  %v3738 = vmul.f32 %v3226, 0.1
  %v3739 = vmul.f32 %v3227, 0.1
  %v3740 = vmul.f32 %v3228, 0.1
  %v3741 = vmul.f32 %v3229, 0.1
  %v3742 = vmul.f32 %v3230, 0.1
  %v3743 = vmul.f32 %v3231, 0.1
  %v3744 = vmul.f32 %v3232, 0.1
  %v3745 = vmul.f32 %v3233, 0.1
  %v3746 = vmul.f32 %v3234, 0.1
  %v3747 = vmul.f32 %v3235, 0.1
  %v3748 = vmul.f32 %v3236, 0.1
  %v3749 = vmul.f32 %v3237, 0.1
  %v3750 = vmul.f32 %v3238, 0.1
  %v3751 = vmul.f32 %v3239, 0.1
  %v3752 = vmul.f32 %v3240, 0.1
  %v3753 = vmul.f32 %v3241, 0.1
  %v3754 = vmul.f32 %v3242, 0.1
  %v3755 = vmul.f32 %v3243, 0.1
  %v3756 = vmul.f32 %v3244, 0.1
  %v3757 = vmul.f32 %v3245, 0.1
  %v3758 = vmul.f32 %v3246, 0.1
  %v3759 = vmul.f32 %v3247, 0.1
  %v3760 = vmul.f32 %v3248, 0.1
  %v3761 = vmul.f32 %v3249, 0.1
  %v3762 = vmul.f32 %v3250, 0.1
  %v3763 = vmul.f32 %v3251, 0.1
  %v3764 = vmul.f32 %v3252, 0.1
  %v3765 = vmul.f32 %v3253, 0.1
  %v3766 = vmul.f32 %v3254, 0.1
  %v3767 = vmul.f32 %v3255, 0.1
  %v3768 = vmul.f32 %v3256, 0.1
  %v3769 = vmul.f32 %v3257, 0.1
  %v3770 = vmul.f32 %v3258, 0.1
  %v3771 = vmul.f32 %v3259, 0.1
  %v3772 = vmul.f32 %v3260, 0.1
  %v3773 = vmul.f32 %v3261, 0.1
  %v3774 = vmul.f32 %v3262, 0.1
  %v3775 = vmul.f32 %v3263, 0.1
  %v3776 = vmul.f32 %v3264, 0.1
  %v3777 = vmul.f32 %v3265, 0.1
  %v3778 = vmul.f32 %v3266, 0.1
  %v3779 = vmul.f32 %v3267, 0.1
  %v3780 = vmul.f32 %v3268, 0.1
  %v3781 = vmul.f32 %v3269, 0.1
  %v3782 = vmul.f32 %v3270, 0.1
  %v3783 = vmul.f32 %v3271, 0.1
  %v3784 = vmul.f32 %v3272, 0.1
  %v3785 = vmul.f32 %v3273, 0.1
  %v3786 = vmul.f32 %v3274, 0.1
  %v3787 = vmul.f32 %v3275, 0.1
  %v3788 = vmul.f32 %v3276, 0.1
  %v3789 = vmul.f32 %v3277, 0.1
  %v3790 = vmul.f32 %v3278, 0.1
  %v3791 = vmul.f32 %v3279, 0.1
  %v3792 = vmul.f32 %v3280, 0.1
  %v3793 = vmul.f32 %v3281, 0.1
  %v3794 = vmul.f32 %v3282, 0.1
  %v3795 = vmul.f32 %v3283, 0.1
  %v3796 = vmul.f32 %v3284, 0.1
  %v3797 = vmul.f32 %v3285, 0.1
  %v3798 = vmul.f32 %v3286, 0.1
  %v3799 = vmul.f32 %v3287, 0.1
  %v3800 = vmul.f32 %v3288, 0.1
  %v3801 = vmul.f32 %v3289, 0.1
  %v3802 = vmul.f32 %v3290, 0.1
  %v3803 = vmul.f32 %v3291, 0.1
  %v3804 = vmul.f32 %v3292, 0.1
  %v3805 = vmul.f32 %v3293, 0.1
  %v3806 = vmul.f32 %v3294, 0.1
  %v3807 = vmul.f32 %v3295, 0.1
  %v3808 = vmul.f32 %v3296, 0.1
  %v3809 = vmul.f32 %v3297, 0.1
  %v3810 = vmul.f32 %v3298, 0.1
  %v3811 = vmul.f32 %v3299, 0.1
  %v3812 = vmul.f32 %v3300, 0.1
  %v3813 = vmul.f32 %v3301, 0.1
  %v3814 = vmul.f32 %v3302, 0.1
  %v3815 = vmul.f32 %v3303, 0.1
  %v3816 = vmul.f32 %v3304, 0.1
  %v3817 = vmul.f32 %v3305, 0.1
  %v3818 = vmul.f32 %v3306, 0.1
  %v3819 = vmul.f32 %v3307, 0.1
  %v3820 = vmul.f32 %v3308, 0.1
  %v3821 = vmul.f32 %v3309, 0.1
  %v3822 = vmul.f32 %v3310, 0.1
  %v3823 = vmul.f32 %v3311, 0.1
  %v3824 = vmul.f32 %v3312, 0.1
  %v3825 = vmul.f32 %v3313, 0.1
  %v3826 = vmul.f32 %v3314, 0.1
  %v3827 = vmul.f32 %v3315, 0.1
  %v3828 = vmul.f32 %v3316, 0.1
  %v3829 = vmul.f32 %v3317, 0.1
  %v3830 = vmul.f32 %v3318, 0.1
  %v3831 = vmul.f32 %v3319, 0.1
  %v3832 = vmul.f32 %v3320, 0.1
  %v3833 = vmul.f32 %v3321, 0.1
  %v3834 = vmul.f32 %v3322, 0.1
  %v3835 = vmul.f32 %v3323, 0.1
  %v3836 = vmul.f32 %v3324, 0.1
  %v3837 = vmul.f32 %v3325, 0.1
  %v3838 = vmul.f32 %v3326, 0.1
  %v3839 = vmul.f32 %v3327, 0.1
  %v3840 = vmul.f32 %v3328, 0.1
  %v3841 = vmul.f32 %v3329, 0.1
  %v3842 = vmul.f32 %v3330, 0.1
  %v3843 = vmul.f32 %v3331, 0.1
  %v3844 = vmul.f32 %v3332, 0.1
  %v3845 = vmul.f32 %v3333, 0.1
  %v3846 = vmul.f32 %v3334, 0.1
  %v3847 = vmul.f32 %v3335, 0.1
  %v3848 = vmul.f32 %v3336, 0.1
  %v3849 = vmul.f32 %v3337, 0.1
  %v3850 = vmul.f32 %v3338, 0.1
  %v3851 = vmul.f32 %v3339, 0.1
  %v3852 = vmul.f32 %v3340, 0.1
  %v3853 = vmul.f32 %v3341, 0.1
  %v3854 = vmul.f32 %v3342, 0.1
  %v3855 = vmul.f32 %v3343, 0.1
  %v3856 = vmul.f32 %v3344, 0.1
  %v3857 = vmul.f32 %v3345, 0.1
  %v3858 = vmul.f32 %v3346, 0.1
  %v3859 = vmul.f32 %v3347, 0.1
  %v3860 = vmul.f32 %v3348, 0.1
  %v3861 = vmul.f32 %v3349, 0.1
  %v3862 = vmul.f32 %v3350, 0.1
  %v3863 = vmul.f32 %v3351, 0.1
  %v3864 = vmul.f32 %v3352, 0.1
  %v3865 = vmul.f32 %v3353, 0.1
  %v3866 = vmul.f32 %v3354, 0.1
  %v3867 = vmul.f32 %v3355, 0.1
  %v3868 = vmul.f32 %v3356, 0.1
  %v3869 = vmul.f32 %v3357, 0.1
  %v3870 = vmul.f32 %v3358, 0.1
  %v3871 = vmul.f32 %v3359, 0.1
  %v3872 = vmul.f32 %v3360, 0.1
  %v3873 = vmul.f32 %v3361, 0.1
  %v3874 = vmul.f32 %v3362, 0.1
  %v3875 = vmul.f32 %v3363, 0.1
  %v3876 = vmul.f32 %v3364, 0.1
  %v3877 = vmul.f32 %v3365, 0.1
  %v3878 = vmul.f32 %v3366, 0.1
  %v3879 = vmul.f32 %v3367, 0.1
  %v3880 = vmul.f32 %v3368, 0.1
  %v3881 = vmul.f32 %v3369, 0.1
  %v3882 = vmul.f32 %v3370, 0.1
  %v3883 = vmul.f32 %v3371, 0.1
  %v3884 = vmul.f32 %v3372, 0.1
  %v3885 = vmul.f32 %v3373, 0.1
  %v3886 = vmul.f32 %v3374, 0.1
  %v3887 = vmul.f32 %v3375, 0.1
  %v3888 = vmul.f32 %v3376, 0.1
  %v3889 = vmul.f32 %v3377, 0.1
  %v3890 = vmul.f32 %v3378, 0.1
  %v3891 = vmul.f32 %v3379, 0.1
  %v3892 = vmul.f32 %v3380, 0.1
  %v3893 = vmul.f32 %v3381, 0.1
  %v3894 = vmul.f32 %v3382, 0.1
  %v3895 = vmul.f32 %v3383, 0.1
  %v3896 = vmul.f32 %v3384, 0.1
  %v3897 = vmul.f32 %v3385, 0.1
  %v3898 = vmul.f32 %v3386, 0.1
  %v3899 = vmul.f32 %v3387, 0.1
  %v3900 = vmul.f32 %v3388, 0.1
  %v3901 = vmul.f32 %v3389, 0.1
  %v3902 = vmul.f32 %v3390, 0.1
  %v3903 = vmul.f32 %v3391, 0.1
  %v3904 = vmul.f32 %v3392, 0.1
  %v3905 = vmul.f32 %v3393, 0.1
  %v3906 = vmul.f32 %v3394, 0.1
  %v3907 = vmul.f32 %v3395, 0.1
  %v3908 = vmul.f32 %v3396, 0.1
  %v3909 = vmul.f32 %v3397, 0.1
  %v3910 = vmul.f32 %v3398, 0.1
  %v3911 = vmul.f32 %v3399, 0.1
  %v3912 = vmul.f32 %v3400, 0.1
  %v3913 = vmul.f32 %v3401, 0.1
  %v3914 = vmul.f32 %v3402, 0.1
  %v3915 = vmul.f32 %v3403, 0.1
  %v3916 = vmul.f32 %v3404, 0.1
  %v3917 = vmul.f32 %v3405, 0.1
  %v3918 = vmul.f32 %v3406, 0.1
  %v3919 = vmul.f32 %v3407, 0.1
  %v3920 = vmul.f32 %v3408, 0.1
  %v3921 = vmul.f32 %v3409, 0.1
  %v3922 = vmul.f32 %v3410, 0.1
  %v3923 = vmul.f32 %v3411, 0.1
  %v3924 = vmul.f32 %v3412, 0.1
  %v3925 = vmul.f32 %v3413, 0.1
  %v3926 = vmul.f32 %v3414, 0.1
  %v3927 = vmul.f32 %v3415, 0.1
  %v3928 = vmul.f32 %v3416, 0.1
  %v3929 = vmul.f32 %v3417, 0.1
  %v3930 = vmul.f32 %v3418, 0.1
  %v3931 = vmul.f32 %v3419, 0.1
  %v3932 = vmul.f32 %v3420, 0.1
  %v3933 = vmul.f32 %v3421, 0.1
  %v3934 = vmul.f32 %v3422, 0.1
  %v3935 = vmul.f32 %v3423, 0.1
  %v3936 = vmul.f32 %v3424, 0.1
  %v3937 = vmul.f32 %v3425, 0.1
  %v3938 = vmul.f32 %v3426, 0.1
  %v3939 = vmul.f32 %v3427, 0.1
  %v3940 = vmul.f32 %v3428, 0.1
  %v3941 = vmul.f32 %v3429, 0.1
  %v3942 = vmul.f32 %v3430, 0.1
  %v3943 = vmul.f32 %v3431, 0.1
  %v3944 = vmul.f32 %v3432, 0.1
  %v3945 = vmul.f32 %v3433, 0.1
  %v3946 = vmul.f32 %v3434, 0.1
  %v3947 = vmul.f32 %v3435, 0.1
  %v3948 = vmul.f32 %v3436, 0.1
  %v3949 = vmul.f32 %v3437, 0.1
  %v3950 = vmul.f32 %v3438, 0.1
  %v3951 = vmul.f32 %v3439, 0.1
  %v3952 = vmul.f32 %v3440, 0.1
  %v3953 = vmul.f32 %v3441, 0.1
  %v3954 = vmul.f32 %v3442, 0.1
  %v3955 = vmul.f32 %v3443, 0.1
  %v3956 = vmul.f32 %v3444, 0.1
  %v3957 = vmul.f32 %v3445, 0.1
  %v3958 = vmul.f32 %v3446, 0.1
  %v3959 = vmul.f32 %v3447, 0.1
  %v3960 = vmul.f32 %v3448, 0.1
  %v3961 = vmul.f32 %v3449, 0.1
  %v3962 = vmul.f32 %v3450, 0.1
  %v3963 = vmul.f32 %v3451, 0.1
  %v3964 = vmul.f32 %v3452, 0.1
  %v3965 = vmul.f32 %v3453, 0.1
  %v3966 = vmul.f32 %v3454, 0.1
  %v3967 = vmul.f32 %v3455, 0.1
  %v3968 = vmul.f32 %v3456, 0.1
  %v3969 = vmul.f32 %v3457, 0.1
  %v3970 = vmul.f32 %v3458, 0.1
  %v3971 = vmul.f32 %v3459, 0.1
  %v3972 = vmul.f32 %v3460, 0.1
  %v3973 = vmul.f32 %v3461, 0.1
  %v3974 = vmul.f32 %v3462, 0.1
  %v3975 = vmul.f32 %v3463, 0.1
  %v3976 = vmul.f32 %v3464, 0.1
  %v3977 = vmul.f32 %v3465, 0.1
  %v3978 = vmul.f32 %v3466, 0.1
  %v3979 = vmul.f32 %v3467, 0.1
  %v3980 = vmul.f32 %v3468, 0.1
  %v3981 = vmul.f32 %v3469, 0.1
  %v3982 = vmul.f32 %v3470, 0.1
  %v3983 = vmul.f32 %v3471, 0.1
  %v3984 = vmul.f32 %v3472, 0.1
  %v3985 = vmul.f32 %v3473, 0.1
  %v3986 = vmul.f32 %v3474, 0.1
  %v3987 = vmul.f32 %v3475, 0.1
  %v3988 = vmul.f32 %v3476, 0.1
  %v3989 = vsel %vm3477, %v3221, %v3733
  %v3990 = vsel %vm3478, %v3222, %v3734
  %v3991 = vsel %vm3479, %v3223, %v3735
  %v3992 = vsel %vm3480, %v3224, %v3736
  %v3993 = vsel %vm3481, %v3225, %v3737
  %v3994 = vsel %vm3482, %v3226, %v3738
  %v3995 = vsel %vm3483, %v3227, %v3739
  %v3996 = vsel %vm3484, %v3228, %v3740
  %v3997 = vsel %vm3485, %v3229, %v3741
  %v3998 = vsel %vm3486, %v3230, %v3742
  %v3999 = vsel %vm3487, %v3231, %v3743
  %v4000 = vsel %vm3488, %v3232, %v3744
  %v4001 = vsel %vm3489, %v3233, %v3745
  %v4002 = vsel %vm3490, %v3234, %v3746
  %v4003 = vsel %vm3491, %v3235, %v3747
  %v4004 = vsel %vm3492, %v3236, %v3748
  %v4005 = vsel %vm3493, %v3237, %v3749
  %v4006 = vsel %vm3494, %v3238, %v3750
  %v4007 = vsel %vm3495, %v3239, %v3751
  %v4008 = vsel %vm3496, %v3240, %v3752
  %v4009 = vsel %vm3497, %v3241, %v3753
  %v4010 = vsel %vm3498, %v3242, %v3754
  %v4011 = vsel %vm3499, %v3243, %v3755
  %v4012 = vsel %vm3500, %v3244, %v3756
  %v4013 = vsel %vm3501, %v3245, %v3757
  %v4014 = vsel %vm3502, %v3246, %v3758
  %v4015 = vsel %vm3503, %v3247, %v3759
  %v4016 = vsel %vm3504, %v3248, %v3760
  %v4017 = vsel %vm3505, %v3249, %v3761
  %v4018 = vsel %vm3506, %v3250, %v3762
  %v4019 = vsel %vm3507, %v3251, %v3763
  %v4020 = vsel %vm3508, %v3252, %v3764
  %v4021 = vsel %vm3509, %v3253, %v3765
  %v4022 = vsel %vm3510, %v3254, %v3766
  %v4023 = vsel %vm3511, %v3255, %v3767
  %v4024 = vsel %vm3512, %v3256, %v3768
  %v4025 = vsel %vm3513, %v3257, %v3769
  %v4026 = vsel %vm3514, %v3258, %v3770
  %v4027 = vsel %vm3515, %v3259, %v3771
  %v4028 = vsel %vm3516, %v3260, %v3772
  %v4029 = vsel %vm3517, %v3261, %v3773
  %v4030 = vsel %vm3518, %v3262, %v3774
  %v4031 = vsel %vm3519, %v3263, %v3775
  %v4032 = vsel %vm3520, %v3264, %v3776
  %v4033 = vsel %vm3521, %v3265, %v3777
  %v4034 = vsel %vm3522, %v3266, %v3778
  %v4035 = vsel %vm3523, %v3267, %v3779
  %v4036 = vsel %vm3524, %v3268, %v3780
  %v4037 = vsel %vm3525, %v3269, %v3781
  %v4038 = vsel %vm3526, %v3270, %v3782
  %v4039 = vsel %vm3527, %v3271, %v3783
  %v4040 = vsel %vm3528, %v3272, %v3784
  %v4041 = vsel %vm3529, %v3273, %v3785
  %v4042 = vsel %vm3530, %v3274, %v3786
  %v4043 = vsel %vm3531, %v3275, %v3787
  %v4044 = vsel %vm3532, %v3276, %v3788
  %v4045 = vsel %vm3533, %v3277, %v3789
  %v4046 = vsel %vm3534, %v3278, %v3790
  %v4047 = vsel %vm3535, %v3279, %v3791
  %v4048 = vsel %vm3536, %v3280, %v3792
  %v4049 = vsel %vm3537, %v3281, %v3793
  %v4050 = vsel %vm3538, %v3282, %v3794
  %v4051 = vsel %vm3539, %v3283, %v3795
  %v4052 = vsel %vm3540, %v3284, %v3796
  %v4053 = vsel %vm3541, %v3285, %v3797
  %v4054 = vsel %vm3542, %v3286, %v3798
  %v4055 = vsel %vm3543, %v3287, %v3799
  %v4056 = vsel %vm3544, %v3288, %v3800
  %v4057 = vsel %vm3545, %v3289, %v3801
  %v4058 = vsel %vm3546, %v3290, %v3802
  %v4059 = vsel %vm3547, %v3291, %v3803
  %v4060 = vsel %vm3548, %v3292, %v3804
  %v4061 = vsel %vm3549, %v3293, %v3805
  %v4062 = vsel %vm3550, %v3294, %v3806
  %v4063 = vsel %vm3551, %v3295, %v3807
  %v4064 = vsel %vm3552, %v3296, %v3808
  %v4065 = vsel %vm3553, %v3297, %v3809
  %v4066 = vsel %vm3554, %v3298, %v3810
  %v4067 = vsel %vm3555, %v3299, %v3811
  %v4068 = vsel %vm3556, %v3300, %v3812
  %v4069 = vsel %vm3557, %v3301, %v3813
  %v4070 = vsel %vm3558, %v3302, %v3814
  %v4071 = vsel %vm3559, %v3303, %v3815
  %v4072 = vsel %vm3560, %v3304, %v3816
  %v4073 = vsel %vm3561, %v3305, %v3817
  %v4074 = vsel %vm3562, %v3306, %v3818
  %v4075 = vsel %vm3563, %v3307, %v3819
  %v4076 = vsel %vm3564, %v3308, %v3820
  %v4077 = vsel %vm3565, %v3309, %v3821
  %v4078 = vsel %vm3566, %v3310, %v3822
  %v4079 = vsel %vm3567, %v3311, %v3823
  %v4080 = vsel %vm3568, %v3312, %v3824
  %v4081 = vsel %vm3569, %v3313, %v3825
  %v4082 = vsel %vm3570, %v3314, %v3826
  %v4083 = vsel %vm3571, %v3315, %v3827
  %v4084 = vsel %vm3572, %v3316, %v3828
  %v4085 = vsel %vm3573, %v3317, %v3829
  %v4086 = vsel %vm3574, %v3318, %v3830
  %v4087 = vsel %vm3575, %v3319, %v3831
  %v4088 = vsel %vm3576, %v3320, %v3832
  %v4089 = vsel %vm3577, %v3321, %v3833
  %v4090 = vsel %vm3578, %v3322, %v3834
  %v4091 = vsel %vm3579, %v3323, %v3835
  %v4092 = vsel %vm3580, %v3324, %v3836
  %v4093 = vsel %vm3581, %v3325, %v3837
  %v4094 = vsel %vm3582, %v3326, %v3838
  %v4095 = vsel %vm3583, %v3327, %v3839
  %v4096 = vsel %vm3584, %v3328, %v3840
  %v4097 = vsel %vm3585, %v3329, %v3841
  %v4098 = vsel %vm3586, %v3330, %v3842
  %v4099 = vsel %vm3587, %v3331, %v3843
  %v4100 = vsel %vm3588, %v3332, %v3844
  %v4101 = vsel %vm3589, %v3333, %v3845
  %v4102 = vsel %vm3590, %v3334, %v3846
  %v4103 = vsel %vm3591, %v3335, %v3847
  %v4104 = vsel %vm3592, %v3336, %v3848
  %v4105 = vsel %vm3593, %v3337, %v3849
  %v4106 = vsel %vm3594, %v3338, %v3850
  %v4107 = vsel %vm3595, %v3339, %v3851
  %v4108 = vsel %vm3596, %v3340, %v3852
  %v4109 = vsel %vm3597, %v3341, %v3853
  %v4110 = vsel %vm3598, %v3342, %v3854
  %v4111 = vsel %vm3599, %v3343, %v3855
  %v4112 = vsel %vm3600, %v3344, %v3856
  %v4113 = vsel %vm3601, %v3345, %v3857
  %v4114 = vsel %vm3602, %v3346, %v3858
  %v4115 = vsel %vm3603, %v3347, %v3859
  %v4116 = vsel %vm3604, %v3348, %v3860
  %v4117 = vsel %vm3605, %v3349, %v3861
  %v4118 = vsel %vm3606, %v3350, %v3862
  %v4119 = vsel %vm3607, %v3351, %v3863
  %v4120 = vsel %vm3608, %v3352, %v3864
  %v4121 = vsel %vm3609, %v3353, %v3865
  %v4122 = vsel %vm3610, %v3354, %v3866
  %v4123 = vsel %vm3611, %v3355, %v3867
  %v4124 = vsel %vm3612, %v3356, %v3868
  %v4125 = vsel %vm3613, %v3357, %v3869
  %v4126 = vsel %vm3614, %v3358, %v3870
  %v4127 = vsel %vm3615, %v3359, %v3871
  %v4128 = vsel %vm3616, %v3360, %v3872
  %v4129 = vsel %vm3617, %v3361, %v3873
  %v4130 = vsel %vm3618, %v3362, %v3874
  %v4131 = vsel %vm3619, %v3363, %v3875
  %v4132 = vsel %vm3620, %v3364, %v3876
  %v4133 = vsel %vm3621, %v3365, %v3877
  %v4134 = vsel %vm3622, %v3366, %v3878
  %v4135 = vsel %vm3623, %v3367, %v3879
  %v4136 = vsel %vm3624, %v3368, %v3880
  %v4137 = vsel %vm3625, %v3369, %v3881
  %v4138 = vsel %vm3626, %v3370, %v3882
  %v4139 = vsel %vm3627, %v3371, %v3883
  %v4140 = vsel %vm3628, %v3372, %v3884
  %v4141 = vsel %vm3629, %v3373, %v3885
  %v4142 = vsel %vm3630, %v3374, %v3886
  %v4143 = vsel %vm3631, %v3375, %v3887
  %v4144 = vsel %vm3632, %v3376, %v3888
  %v4145 = vsel %vm3633, %v3377, %v3889
  %v4146 = vsel %vm3634, %v3378, %v3890
  %v4147 = vsel %vm3635, %v3379, %v3891
  %v4148 = vsel %vm3636, %v3380, %v3892
  %v4149 = vsel %vm3637, %v3381, %v3893
  %v4150 = vsel %vm3638, %v3382, %v3894
  %v4151 = vsel %vm3639, %v3383, %v3895
  %v4152 = vsel %vm3640, %v3384, %v3896
  %v4153 = vsel %vm3641, %v3385, %v3897
  %v4154 = vsel %vm3642, %v3386, %v3898
  %v4155 = vsel %vm3643, %v3387, %v3899
  %v4156 = vsel %vm3644, %v3388, %v3900
  %v4157 = vsel %vm3645, %v3389, %v3901
  %v4158 = vsel %vm3646, %v3390, %v3902
  %v4159 = vsel %vm3647, %v3391, %v3903
  %v4160 = vsel %vm3648, %v3392, %v3904
  %v4161 = vsel %vm3649, %v3393, %v3905
  %v4162 = vsel %vm3650, %v3394, %v3906
  %v4163 = vsel %vm3651, %v3395, %v3907
  %v4164 = vsel %vm3652, %v3396, %v3908
  %v4165 = vsel %vm3653, %v3397, %v3909
  %v4166 = vsel %vm3654, %v3398, %v3910
  %v4167 = vsel %vm3655, %v3399, %v3911
  %v4168 = vsel %vm3656, %v3400, %v3912
  %v4169 = vsel %vm3657, %v3401, %v3913
  %v4170 = vsel %vm3658, %v3402, %v3914
  %v4171 = vsel %vm3659, %v3403, %v3915
  %v4172 = vsel %vm3660, %v3404, %v3916
  %v4173 = vsel %vm3661, %v3405, %v3917
  %v4174 = vsel %vm3662, %v3406, %v3918
  %v4175 = vsel %vm3663, %v3407, %v3919
  %v4176 = vsel %vm3664, %v3408, %v3920
  %v4177 = vsel %vm3665, %v3409, %v3921
  %v4178 = vsel %vm3666, %v3410, %v3922
  %v4179 = vsel %vm3667, %v3411, %v3923
  %v4180 = vsel %vm3668, %v3412, %v3924
  %v4181 = vsel %vm3669, %v3413, %v3925
  %v4182 = vsel %vm3670, %v3414, %v3926
  %v4183 = vsel %vm3671, %v3415, %v3927
  %v4184 = vsel %vm3672, %v3416, %v3928
  %v4185 = vsel %vm3673, %v3417, %v3929
  %v4186 = vsel %vm3674, %v3418, %v3930
  %v4187 = vsel %vm3675, %v3419, %v3931
  %v4188 = vsel %vm3676, %v3420, %v3932
  %v4189 = vsel %vm3677, %v3421, %v3933
  %v4190 = vsel %vm3678, %v3422, %v3934
  %v4191 = vsel %vm3679, %v3423, %v3935
  %v4192 = vsel %vm3680, %v3424, %v3936
  %v4193 = vsel %vm3681, %v3425, %v3937
  %v4194 = vsel %vm3682, %v3426, %v3938
  %v4195 = vsel %vm3683, %v3427, %v3939
  %v4196 = vsel %vm3684, %v3428, %v3940
  %v4197 = vsel %vm3685, %v3429, %v3941
  %v4198 = vsel %vm3686, %v3430, %v3942
  %v4199 = vsel %vm3687, %v3431, %v3943
  %v4200 = vsel %vm3688, %v3432, %v3944
  %v4201 = vsel %vm3689, %v3433, %v3945
  %v4202 = vsel %vm3690, %v3434, %v3946
  %v4203 = vsel %vm3691, %v3435, %v3947
  %v4204 = vsel %vm3692, %v3436, %v3948
  %v4205 = vsel %vm3693, %v3437, %v3949
  %v4206 = vsel %vm3694, %v3438, %v3950
  %v4207 = vsel %vm3695, %v3439, %v3951
  %v4208 = vsel %vm3696, %v3440, %v3952
  %v4209 = vsel %vm3697, %v3441, %v3953
  %v4210 = vsel %vm3698, %v3442, %v3954
  %v4211 = vsel %vm3699, %v3443, %v3955
  %v4212 = vsel %vm3700, %v3444, %v3956
  %v4213 = vsel %vm3701, %v3445, %v3957
  %v4214 = vsel %vm3702, %v3446, %v3958
  %v4215 = vsel %vm3703, %v3447, %v3959
  %v4216 = vsel %vm3704, %v3448, %v3960
  %v4217 = vsel %vm3705, %v3449, %v3961
  %v4218 = vsel %vm3706, %v3450, %v3962
  %v4219 = vsel %vm3707, %v3451, %v3963
  %v4220 = vsel %vm3708, %v3452, %v3964
  %v4221 = vsel %vm3709, %v3453, %v3965
  %v4222 = vsel %vm3710, %v3454, %v3966
  %v4223 = vsel %vm3711, %v3455, %v3967
  %v4224 = vsel %vm3712, %v3456, %v3968
  %v4225 = vsel %vm3713, %v3457, %v3969
  %v4226 = vsel %vm3714, %v3458, %v3970
  %v4227 = vsel %vm3715, %v3459, %v3971
  %v4228 = vsel %vm3716, %v3460, %v3972
  %v4229 = vsel %vm3717, %v3461, %v3973
  %v4230 = vsel %vm3718, %v3462, %v3974
  %v4231 = vsel %vm3719, %v3463, %v3975
  %v4232 = vsel %vm3720, %v3464, %v3976
  %v4233 = vsel %vm3721, %v3465, %v3977
  %v4234 = vsel %vm3722, %v3466, %v3978
  %v4235 = vsel %vm3723, %v3467, %v3979
  %v4236 = vsel %vm3724, %v3468, %v3980
  %v4237 = vsel %vm3725, %v3469, %v3981
  %v4238 = vsel %vm3726, %v3470, %v3982
  %v4239 = vsel %vm3727, %v3471, %v3983
  %v4240 = vsel %vm3728, %v3472, %v3984
  %v4241 = vsel %vm3729, %v3473, %v3985
  %v4242 = vsel %vm3730, %v3474, %v3986
  %v4243 = vsel %vm3731, %v3475, %v3987
  %v4244 = vsel %vm3732, %v3476, %v3988
  %4245 = vst [vmem:[%s4] sm:$0xff] %v3989
  %4246 = vst [vmem:[%s4 + $0x8] sm:$0xff] %v3990
  %4247 = vst [vmem:[%s4 + $0x10] sm:$0xff] %v3991
  %4248 = vst [vmem:[%s4 + $0x18] sm:$0xff] %v3992
  %4249 = vst [vmem:[%s4 + $0x20] sm:$0xff] %v3993
  %4250 = vst [vmem:[%s4 + $0x28] sm:$0xff] %v3994
  %4251 = vst [vmem:[%s4 + $0x30] sm:$0xff] %v3995
  %4252 = vst [vmem:[%s4 + $0x38] sm:$0xff] %v3996
  %4253 = vst [vmem:[%s4 + $0x40] sm:$0xff] %v3997
  %4254 = vst [vmem:[%s4 + $0x48] sm:$0xff] %v3998
  %4255 = vst [vmem:[%s4 + $0x50] sm:$0xff] %v3999
  %4256 = vst [vmem:[%s4 + $0x58] sm:$0xff] %v4000
  %4257 = vst [vmem:[%s4 + $0x60] sm:$0xff] %v4001
  %4258 = vst [vmem:[%s4 + $0x68] sm:$0xff] %v4002
  %4259 = vst [vmem:[%s4 + $0x70] sm:$0xff] %v4003
  %4260 = vst [vmem:[%s4 + $0x78] sm:$0xff] %v4004
  %4261 = vst [vmem:[%s4 + $0x80] sm:$0xff] %v4005
  %4262 = vst [vmem:[%s4 + $0x88] sm:$0xff] %v4006
  %4263 = vst [vmem:[%s4 + $0x90] sm:$0xff] %v4007
  %4264 = vst [vmem:[%s4 + $0x98] sm:$0xff] %v4008
  %4265 = vst [vmem:[%s4 + $0xa0] sm:$0xff] %v4009
  %4266 = vst [vmem:[%s4 + $0xa8] sm:$0xff] %v4010
  %4267 = vst [vmem:[%s4 + $0xb0] sm:$0xff] %v4011
  %4268 = vst [vmem:[%s4 + $0xb8] sm:$0xff] %v4012
  %4269 = vst [vmem:[%s4 + $0xc0] sm:$0xff] %v4013
  %4270 = vst [vmem:[%s4 + $0xc8] sm:$0xff] %v4014
  %4271 = vst [vmem:[%s4 + $0xd0] sm:$0xff] %v4015
  %4272 = vst [vmem:[%s4 + $0xd8] sm:$0xff] %v4016
  %4273 = vst [vmem:[%s4 + $0xe0] sm:$0xff] %v4017
  %4274 = vst [vmem:[%s4 + $0xe8] sm:$0xff] %v4018
  %4275 = vst [vmem:[%s4 + $0xf0] sm:$0xff] %v4019
  %4276 = vst [vmem:[%s4 + $0xf8] sm:$0xff] %v4020
  %4277 = vst [vmem:[%s4 + $0x100] sm:$0xff] %v4021
  %4278 = vst [vmem:[%s4 + $0x108] sm:$0xff] %v4022
  %4279 = vst [vmem:[%s4 + $0x110] sm:$0xff] %v4023
  %4280 = vst [vmem:[%s4 + $0x118] sm:$0xff] %v4024
  %4281 = vst [vmem:[%s4 + $0x120] sm:$0xff] %v4025
  %4282 = vst [vmem:[%s4 + $0x128] sm:$0xff] %v4026
  %4283 = vst [vmem:[%s4 + $0x130] sm:$0xff] %v4027
  %4284 = vst [vmem:[%s4 + $0x138] sm:$0xff] %v4028
  %4285 = vst [vmem:[%s4 + $0x140] sm:$0xff] %v4029
  %4286 = vst [vmem:[%s4 + $0x148] sm:$0xff] %v4030
  %4287 = vst [vmem:[%s4 + $0x150] sm:$0xff] %v4031
  %4288 = vst [vmem:[%s4 + $0x158] sm:$0xff] %v4032
  %4289 = vst [vmem:[%s4 + $0x160] sm:$0xff] %v4033
  %4290 = vst [vmem:[%s4 + $0x168] sm:$0xff] %v4034
  %4291 = vst [vmem:[%s4 + $0x170] sm:$0xff] %v4035
  %4292 = vst [vmem:[%s4 + $0x178] sm:$0xff] %v4036
  %4293 = vst [vmem:[%s4 + $0x180] sm:$0xff] %v4037
  %4294 = vst [vmem:[%s4 + $0x188] sm:$0xff] %v4038
  %4295 = vst [vmem:[%s4 + $0x190] sm:$0xff] %v4039
  %4296 = vst [vmem:[%s4 + $0x198] sm:$0xff] %v4040
  %4297 = vst [vmem:[%s4 + $0x1a0] sm:$0xff] %v4041
  %4298 = vst [vmem:[%s4 + $0x1a8] sm:$0xff] %v4042
  %4299 = vst [vmem:[%s4 + $0x1b0] sm:$0xff] %v4043
  %4300 = vst [vmem:[%s4 + $0x1b8] sm:$0xff] %v4044
  %4301 = vst [vmem:[%s4 + $0x1c0] sm:$0xff] %v4045
  %4302 = vst [vmem:[%s4 + $0x1c8] sm:$0xff] %v4046
  %4303 = vst [vmem:[%s4 + $0x1d0] sm:$0xff] %v4047
  %4304 = vst [vmem:[%s4 + $0x1d8] sm:$0xff] %v4048
  %4305 = vst [vmem:[%s4 + $0x1e0] sm:$0xff] %v4049
  %4306 = vst [vmem:[%s4 + $0x1e8] sm:$0xff] %v4050
  %4307 = vst [vmem:[%s4 + $0x1f0] sm:$0xff] %v4051
  %4308 = vst [vmem:[%s4 + $0x1f8] sm:$0xff] %v4052
  %4309 = vst [vmem:[%s4 + $0x200] sm:$0xff] %v4053
  %4310 = vst [vmem:[%s4 + $0x208] sm:$0xff] %v4054
  %4311 = vst [vmem:[%s4 + $0x210] sm:$0xff] %v4055
  %4312 = vst [vmem:[%s4 + $0x218] sm:$0xff] %v4056
  %4313 = vst [vmem:[%s4 + $0x220] sm:$0xff] %v4057
  %4314 = vst [vmem:[%s4 + $0x228] sm:$0xff] %v4058
  %4315 = vst [vmem:[%s4 + $0x230] sm:$0xff] %v4059
  %4316 = vst [vmem:[%s4 + $0x238] sm:$0xff] %v4060
  %4317 = vst [vmem:[%s4 + $0x240] sm:$0xff] %v4061
  %4318 = vst [vmem:[%s4 + $0x248] sm:$0xff] %v4062
  %4319 = vst [vmem:[%s4 + $0x250] sm:$0xff] %v4063
  %4320 = vst [vmem:[%s4 + $0x258] sm:$0xff] %v4064
  %4321 = vst [vmem:[%s4 + $0x260] sm:$0xff] %v4065
  %4322 = vst [vmem:[%s4 + $0x268] sm:$0xff] %v4066
  %4323 = vst [vmem:[%s4 + $0x270] sm:$0xff] %v4067
  %4324 = vst [vmem:[%s4 + $0x278] sm:$0xff] %v4068
  %4325 = vst [vmem:[%s4 + $0x280] sm:$0xff] %v4069
  %4326 = vst [vmem:[%s4 + $0x288] sm:$0xff] %v4070
  %4327 = vst [vmem:[%s4 + $0x290] sm:$0xff] %v4071
  %4328 = vst [vmem:[%s4 + $0x298] sm:$0xff] %v4072
  %4329 = vst [vmem:[%s4 + $0x2a0] sm:$0xff] %v4073
  %4330 = vst [vmem:[%s4 + $0x2a8] sm:$0xff] %v4074
  %4331 = vst [vmem:[%s4 + $0x2b0] sm:$0xff] %v4075
  %4332 = vst [vmem:[%s4 + $0x2b8] sm:$0xff] %v4076
  %4333 = vst [vmem:[%s4 + $0x2c0] sm:$0xff] %v4077
  %4334 = vst [vmem:[%s4 + $0x2c8] sm:$0xff] %v4078
  %4335 = vst [vmem:[%s4 + $0x2d0] sm:$0xff] %v4079
  %4336 = vst [vmem:[%s4 + $0x2d8] sm:$0xff] %v4080
  %4337 = vst [vmem:[%s4 + $0x2e0] sm:$0xff] %v4081
  %4338 = vst [vmem:[%s4 + $0x2e8] sm:$0xff] %v4082
  %4339 = vst [vmem:[%s4 + $0x2f0] sm:$0xff] %v4083
  %4340 = vst [vmem:[%s4 + $0x2f8] sm:$0xff] %v4084
  %4341 = vst [vmem:[%s4 + $0x300] sm:$0xff] %v4085
  %4342 = vst [vmem:[%s4 + $0x308] sm:$0xff] %v4086
  %4343 = vst [vmem:[%s4 + $0x310] sm:$0xff] %v4087
  %4344 = vst [vmem:[%s4 + $0x318] sm:$0xff] %v4088
  %4345 = vst [vmem:[%s4 + $0x320] sm:$0xff] %v4089
  %4346 = vst [vmem:[%s4 + $0x328] sm:$0xff] %v4090
  %4347 = vst [vmem:[%s4 + $0x330] sm:$0xff] %v4091
  %4348 = vst [vmem:[%s4 + $0x338] sm:$0xff] %v4092
  %4349 = vst [vmem:[%s4 + $0x340] sm:$0xff] %v4093
  %4350 = vst [vmem:[%s4 + $0x348] sm:$0xff] %v4094
  %4351 = vst [vmem:[%s4 + $0x350] sm:$0xff] %v4095
  %4352 = vst [vmem:[%s4 + $0x358] sm:$0xff] %v4096
  %4353 = vst [vmem:[%s4 + $0x360] sm:$0xff] %v4097
  %4354 = vst [vmem:[%s4 + $0x368] sm:$0xff] %v4098
  %4355 = vst [vmem:[%s4 + $0x370] sm:$0xff] %v4099
  %4356 = vst [vmem:[%s4 + $0x378] sm:$0xff] %v4100
  %4357 = vst [vmem:[%s4 + $0x380] sm:$0xff] %v4101
  %4358 = vst [vmem:[%s4 + $0x388] sm:$0xff] %v4102
  %4359 = vst [vmem:[%s4 + $0x390] sm:$0xff] %v4103
  %4360 = vst [vmem:[%s4 + $0x398] sm:$0xff] %v4104
  %4361 = vst [vmem:[%s4 + $0x3a0] sm:$0xff] %v4105
  %4362 = vst [vmem:[%s4 + $0x3a8] sm:$0xff] %v4106
  %4363 = vst [vmem:[%s4 + $0x3b0] sm:$0xff] %v4107
  %4364 = vst [vmem:[%s4 + $0x3b8] sm:$0xff] %v4108
  %4365 = vst [vmem:[%s4 + $0x3c0] sm:$0xff] %v4109
  %4366 = vst [vmem:[%s4 + $0x3c8] sm:$0xff] %v4110
  %4367 = vst [vmem:[%s4 + $0x3d0] sm:$0xff] %v4111
  %4368 = vst [vmem:[%s4 + $0x3d8] sm:$0xff] %v4112
  %4369 = vst [vmem:[%s4 + $0x3e0] sm:$0xff] %v4113
  %4370 = vst [vmem:[%s4 + $0x3e8] sm:$0xff] %v4114
  %4371 = vst [vmem:[%s4 + $0x3f0] sm:$0xff] %v4115
  %4372 = vst [vmem:[%s4 + $0x3f8] sm:$0xff] %v4116
  %4373 = vst [vmem:[%s4 + $0x400] sm:$0xff] %v4117
  %4374 = vst [vmem:[%s4 + $0x408] sm:$0xff] %v4118
  %4375 = vst [vmem:[%s4 + $0x410] sm:$0xff] %v4119
  %4376 = vst [vmem:[%s4 + $0x418] sm:$0xff] %v4120
  %4377 = vst [vmem:[%s4 + $0x420] sm:$0xff] %v4121
  %4378 = vst [vmem:[%s4 + $0x428] sm:$0xff] %v4122
  %4379 = vst [vmem:[%s4 + $0x430] sm:$0xff] %v4123
  %4380 = vst [vmem:[%s4 + $0x438] sm:$0xff] %v4124
  %4381 = vst [vmem:[%s4 + $0x440] sm:$0xff] %v4125
  %4382 = vst [vmem:[%s4 + $0x448] sm:$0xff] %v4126
  %4383 = vst [vmem:[%s4 + $0x450] sm:$0xff] %v4127
  %4384 = vst [vmem:[%s4 + $0x458] sm:$0xff] %v4128
  %4385 = vst [vmem:[%s4 + $0x460] sm:$0xff] %v4129
  %4386 = vst [vmem:[%s4 + $0x468] sm:$0xff] %v4130
  %4387 = vst [vmem:[%s4 + $0x470] sm:$0xff] %v4131
  %4388 = vst [vmem:[%s4 + $0x478] sm:$0xff] %v4132
  %4389 = vst [vmem:[%s4 + $0x480] sm:$0xff] %v4133
  %4390 = vst [vmem:[%s4 + $0x488] sm:$0xff] %v4134
  %4391 = vst [vmem:[%s4 + $0x490] sm:$0xff] %v4135
  %4392 = vst [vmem:[%s4 + $0x498] sm:$0xff] %v4136
  %4393 = vst [vmem:[%s4 + $0x4a0] sm:$0xff] %v4137
  %4394 = vst [vmem:[%s4 + $0x4a8] sm:$0xff] %v4138
  %4395 = vst [vmem:[%s4 + $0x4b0] sm:$0xff] %v4139
  %4396 = vst [vmem:[%s4 + $0x4b8] sm:$0xff] %v4140
  %4397 = vst [vmem:[%s4 + $0x4c0] sm:$0xff] %v4141
  %4398 = vst [vmem:[%s4 + $0x4c8] sm:$0xff] %v4142
  %4399 = vst [vmem:[%s4 + $0x4d0] sm:$0xff] %v4143
  %4400 = vst [vmem:[%s4 + $0x4d8] sm:$0xff] %v4144
  %4401 = vst [vmem:[%s4 + $0x4e0] sm:$0xff] %v4145
  %4402 = vst [vmem:[%s4 + $0x4e8] sm:$0xff] %v4146
  %4403 = vst [vmem:[%s4 + $0x4f0] sm:$0xff] %v4147
  %4404 = vst [vmem:[%s4 + $0x4f8] sm:$0xff] %v4148
  %4405 = vst [vmem:[%s4 + $0x500] sm:$0xff] %v4149
  %4406 = vst [vmem:[%s4 + $0x508] sm:$0xff] %v4150
  %4407 = vst [vmem:[%s4 + $0x510] sm:$0xff] %v4151
  %4408 = vst [vmem:[%s4 + $0x518] sm:$0xff] %v4152
  %4409 = vst [vmem:[%s4 + $0x520] sm:$0xff] %v4153
  %4410 = vst [vmem:[%s4 + $0x528] sm:$0xff] %v4154
  %4411 = vst [vmem:[%s4 + $0x530] sm:$0xff] %v4155
  %4412 = vst [vmem:[%s4 + $0x538] sm:$0xff] %v4156
  %4413 = vst [vmem:[%s4 + $0x540] sm:$0xff] %v4157
  %4414 = vst [vmem:[%s4 + $0x548] sm:$0xff] %v4158
  %4415 = vst [vmem:[%s4 + $0x550] sm:$0xff] %v4159
  %4416 = vst [vmem:[%s4 + $0x558] sm:$0xff] %v4160
  %4417 = vst [vmem:[%s4 + $0x560] sm:$0xff] %v4161
  %4418 = vst [vmem:[%s4 + $0x568] sm:$0xff] %v4162
  %4419 = vst [vmem:[%s4 + $0x570] sm:$0xff] %v4163
  %4420 = vst [vmem:[%s4 + $0x578] sm:$0xff] %v4164
  %4421 = vst [vmem:[%s4 + $0x580] sm:$0xff] %v4165
  %4422 = vst [vmem:[%s4 + $0x588] sm:$0xff] %v4166
  %4423 = vst [vmem:[%s4 + $0x590] sm:$0xff] %v4167
  %4424 = vst [vmem:[%s4 + $0x598] sm:$0xff] %v4168
  %4425 = vst [vmem:[%s4 + $0x5a0] sm:$0xff] %v4169
  %4426 = vst [vmem:[%s4 + $0x5a8] sm:$0xff] %v4170
  %4427 = vst [vmem:[%s4 + $0x5b0] sm:$0xff] %v4171
  %4428 = vst [vmem:[%s4 + $0x5b8] sm:$0xff] %v4172
  %4429 = vst [vmem:[%s4 + $0x5c0] sm:$0xff] %v4173
  %4430 = vst [vmem:[%s4 + $0x5c8] sm:$0xff] %v4174
  %4431 = vst [vmem:[%s4 + $0x5d0] sm:$0xff] %v4175
  %4432 = vst [vmem:[%s4 + $0x5d8] sm:$0xff] %v4176
  %4433 = vst [vmem:[%s4 + $0x5e0] sm:$0xff] %v4177
  %4434 = vst [vmem:[%s4 + $0x5e8] sm:$0xff] %v4178
  %4435 = vst [vmem:[%s4 + $0x5f0] sm:$0xff] %v4179
  %4436 = vst [vmem:[%s4 + $0x5f8] sm:$0xff] %v4180
  %4437 = vst [vmem:[%s4 + $0x600] sm:$0xff] %v4181
  %4438 = vst [vmem:[%s4 + $0x608] sm:$0xff] %v4182
  %4439 = vst [vmem:[%s4 + $0x610] sm:$0xff] %v4183
  %4440 = vst [vmem:[%s4 + $0x618] sm:$0xff] %v4184
  %4441 = vst [vmem:[%s4 + $0x620] sm:$0xff] %v4185
  %4442 = vst [vmem:[%s4 + $0x628] sm:$0xff] %v4186
  %4443 = vst [vmem:[%s4 + $0x630] sm:$0xff] %v4187
  %4444 = vst [vmem:[%s4 + $0x638] sm:$0xff] %v4188
  %4445 = vst [vmem:[%s4 + $0x640] sm:$0xff] %v4189
  %4446 = vst [vmem:[%s4 + $0x648] sm:$0xff] %v4190
  %4447 = vst [vmem:[%s4 + $0x650] sm:$0xff] %v4191
  %4448 = vst [vmem:[%s4 + $0x658] sm:$0xff] %v4192
  %4449 = vst [vmem:[%s4 + $0x660] sm:$0xff] %v4193
  %4450 = vst [vmem:[%s4 + $0x668] sm:$0xff] %v4194
  %4451 = vst [vmem:[%s4 + $0x670] sm:$0xff] %v4195
  %4452 = vst [vmem:[%s4 + $0x678] sm:$0xff] %v4196
  %4453 = vst [vmem:[%s4 + $0x680] sm:$0xff] %v4197
  %4454 = vst [vmem:[%s4 + $0x688] sm:$0xff] %v4198
  %4455 = vst [vmem:[%s4 + $0x690] sm:$0xff] %v4199
  %4456 = vst [vmem:[%s4 + $0x698] sm:$0xff] %v4200
  %4457 = vst [vmem:[%s4 + $0x6a0] sm:$0xff] %v4201
  %4458 = vst [vmem:[%s4 + $0x6a8] sm:$0xff] %v4202
  %4459 = vst [vmem:[%s4 + $0x6b0] sm:$0xff] %v4203
  %4460 = vst [vmem:[%s4 + $0x6b8] sm:$0xff] %v4204
  %4461 = vst [vmem:[%s4 + $0x6c0] sm:$0xff] %v4205
  %4462 = vst [vmem:[%s4 + $0x6c8] sm:$0xff] %v4206
  %4463 = vst [vmem:[%s4 + $0x6d0] sm:$0xff] %v4207
  %4464 = vst [vmem:[%s4 + $0x6d8] sm:$0xff] %v4208
  %4465 = vst [vmem:[%s4 + $0x6e0] sm:$0xff] %v4209
  %4466 = vst [vmem:[%s4 + $0x6e8] sm:$0xff] %v4210
  %4467 = vst [vmem:[%s4 + $0x6f0] sm:$0xff] %v4211
  %4468 = vst [vmem:[%s4 + $0x6f8] sm:$0xff] %v4212
  %4469 = vst [vmem:[%s4 + $0x700] sm:$0xff] %v4213
  %4470 = vst [vmem:[%s4 + $0x708] sm:$0xff] %v4214
  %4471 = vst [vmem:[%s4 + $0x710] sm:$0xff] %v4215
  %4472 = vst [vmem:[%s4 + $0x718] sm:$0xff] %v4216
  %4473 = vst [vmem:[%s4 + $0x720] sm:$0xff] %v4217
  %4474 = vst [vmem:[%s4 + $0x728] sm:$0xff] %v4218
  %4475 = vst [vmem:[%s4 + $0x730] sm:$0xff] %v4219
  %4476 = vst [vmem:[%s4 + $0x738] sm:$0xff] %v4220
  %4477 = vst [vmem:[%s4 + $0x740] sm:$0xff] %v4221
  %4478 = vst [vmem:[%s4 + $0x748] sm:$0xff] %v4222
  %4479 = vst [vmem:[%s4 + $0x750] sm:$0xff] %v4223
  %4480 = vst [vmem:[%s4 + $0x758] sm:$0xff] %v4224
  %4481 = vst [vmem:[%s4 + $0x760] sm:$0xff] %v4225
  %4482 = vst [vmem:[%s4 + $0x768] sm:$0xff] %v4226
  %4483 = vst [vmem:[%s4 + $0x770] sm:$0xff] %v4227
  %4484 = vst [vmem:[%s4 + $0x778] sm:$0xff] %v4228
  %4485 = vst [vmem:[%s4 + $0x780] sm:$0xff] %v4229
  %4486 = vst [vmem:[%s4 + $0x788] sm:$0xff] %v4230
  %4487 = vst [vmem:[%s4 + $0x790] sm:$0xff] %v4231
  %4488 = vst [vmem:[%s4 + $0x798] sm:$0xff] %v4232
  %4489 = vst [vmem:[%s4 + $0x7a0] sm:$0xff] %v4233
  %4490 = vst [vmem:[%s4 + $0x7a8] sm:$0xff] %v4234
  %4491 = vst [vmem:[%s4 + $0x7b0] sm:$0xff] %v4235
  %4492 = vst [vmem:[%s4 + $0x7b8] sm:$0xff] %v4236
  %4493 = vst [vmem:[%s4 + $0x7c0] sm:$0xff] %v4237
  %4494 = vst [vmem:[%s4 + $0x7c8] sm:$0xff] %v4238
  %4495 = vst [vmem:[%s4 + $0x7d0] sm:$0xff] %v4239
  %4496 = vst [vmem:[%s4 + $0x7d8] sm:$0xff] %v4240
  %4497 = vst [vmem:[%s4 + $0x7e0] sm:$0xff] %v4241
  %4498 = vst [vmem:[%s4 + $0x7e8] sm:$0xff] %v4242
  %4499 = vst [vmem:[%s4 + $0x7f0] sm:$0xff] %v4243
  %4500 = vst [vmem:[%s4 + $0x7f8] sm:$0xff] %v4244
  // Predicated region
  $region18: #{darknet_forward.9} parent=0 // pred_check
    _
  $region19: #{darknet_forward.9} parent=0 // pred_check_branch
    %4502 = sbr.rel (0) target = $region21
  $region20: #{darknet_forward.9} parent=0 // pred_region
    _
  $region21: #{darknet_forward.9} parent=0 // pred_fallthru
    _
  // Predicated region
  $region22: #{darknet_forward.9} parent=0 // pred_check
    _
  $region23: #{darknet_forward.9} parent=0 // pred_check_branch
    %4504 = sbr.rel (0) target = $region25
  $region24: #{darknet_forward.9} parent=0 // pred_region
    _
  $region25: #{darknet_forward.9} parent=0 // pred_fallthru
    _

// kernel: darknet_forward.10
$region0: #{darknet_forward.10}
  #allocation0 [shape = 'u32[]', space=smem, size = 0x4, offset = 0x4, fixed_abs, tag = 'smem constant byte address 0x4 - core index']
  #allocation1 [shape = 'u32[144,128]{1,0:T(1,128)}', space=vmem, size = 0x12000, scoped, tag = 'internal scratch']
  %s0 = inlined_call_operand.vmem [shape: bf16[512,128], index: 0, kind: input, shape index: {}]
  %s1 = inlined_call_operand.vmem [shape: bf16[128,128], index: 1, kind: input, shape index: {}]
  %s2 = inlined_call_operand.vmem [shape: f32[1,128], index: 2, kind: input, shape index: {}]
  %s3 = inlined_call_operand.vmem [shape: f32[1,128], index: 3, kind: input, shape index: {}]
  %s4 = inlined_call_operand.vmem [shape: f32[512,128], index: 4, kind: output, shape index: {}]
  %s5 = sld [smem:[#allocation0]]
  $region26: #{darknet_forward.10} parent=0
    _
  %s7 = ssub.s32 1, %s5
  %s8 = scalar_select 0, %s7, %s5
  // Predicated region
  $region2: #{darknet_forward.10} parent=0 // pred_check
    _
  $region3: #{darknet_forward.10} parent=0 // pred_check_branch
    %10 = sbr.rel (0) target = $region5
  $region4: #{darknet_forward.10} parent=0 // pred_region
    _
  $region5: #{darknet_forward.10} parent=0 // pred_fallthru
    _
  // Predicated region
  $region6: #{darknet_forward.10} parent=0 // pred_check
    _
  $region7: #{darknet_forward.10} parent=0 // pred_check_branch
    %12 = sbr.rel (0) target = $region9
  $region8: #{darknet_forward.10} parent=0 // pred_region
    _
  $region9: #{darknet_forward.10} parent=0 // pred_fallthru
    _
  // Predicated region
  $region10: #{darknet_forward.10} parent=0 // pred_check
    _
  $region11: #{darknet_forward.10} parent=0 // pred_check_branch
    %14 = sbr.rel (0) target = $region13
  $region12: #{darknet_forward.10} parent=0 // pred_region
    _
  $region13: #{darknet_forward.10} parent=0 // pred_fallthru
    _
  // Predicated region
  $region14: #{darknet_forward.10} parent=0 // pred_check
    _
  $region15: #{darknet_forward.10} parent=0 // pred_check_branch
    %16 = sbr.rel (0) target = $region17
  $region16: #{darknet_forward.10} parent=0 // pred_region
    _
  $region17: #{darknet_forward.10} parent=0 // pred_fallthru
    _
  %v18 = vld [vmem:[%s0] sm:$0xf]
  %v19 = vld [vmem:[%s0 + $0x4] sm:$0xf]
  %v20 = vld [vmem:[%s0 + $0x8] sm:$0xf]
  %v21 = vld [vmem:[%s0 + $0xc] sm:$0xf]
  %v22 = vld [vmem:[%s0 + $0x10] sm:$0xf]
  %v23 = vld [vmem:[%s0 + $0x14] sm:$0xf]
  %v24 = vld [vmem:[%s0 + $0x18] sm:$0xf]
  %v25 = vld [vmem:[%s0 + $0x1c] sm:$0xf]
  %v26 = vld [vmem:[%s0 + $0x20] sm:$0xf]
  %v27 = vld [vmem:[%s0 + $0x24] sm:$0xf]
  %v28 = vld [vmem:[%s0 + $0x28] sm:$0xf]
  %v29 = vld [vmem:[%s0 + $0x2c] sm:$0xf]
  %v30 = vld [vmem:[%s0 + $0x30] sm:$0xf]
  %v31 = vld [vmem:[%s0 + $0x34] sm:$0xf]
  %v32 = vld [vmem:[%s0 + $0x38] sm:$0xf]
  %v33 = vld [vmem:[%s0 + $0x3c] sm:$0xf]
  %v34 = vld [vmem:[%s0 + $0x40] sm:$0xf]
  %v35 = vld [vmem:[%s0 + $0x44] sm:$0xf]
  %v36 = vld [vmem:[%s0 + $0x48] sm:$0xf]
  %v37 = vld [vmem:[%s0 + $0x4c] sm:$0xf]
  %v38 = vld [vmem:[%s0 + $0x50] sm:$0xf]
  %v39 = vld [vmem:[%s0 + $0x54] sm:$0xf]
  %v40 = vld [vmem:[%s0 + $0x58] sm:$0xf]
  %v41 = vld [vmem:[%s0 + $0x5c] sm:$0xf]
  %v42 = vld [vmem:[%s0 + $0x60] sm:$0xf]
  %v43 = vld [vmem:[%s0 + $0x64] sm:$0xf]
  %v44 = vld [vmem:[%s0 + $0x68] sm:$0xf]
  %v45 = vld [vmem:[%s0 + $0x6c] sm:$0xf]
  %v46 = vld [vmem:[%s0 + $0x70] sm:$0xf]
  %v47 = vld [vmem:[%s0 + $0x74] sm:$0xf]
  %v48 = vld [vmem:[%s0 + $0x78] sm:$0xf]
  %v49 = vld [vmem:[%s0 + $0x7c] sm:$0xf]
  %v50 = vld [vmem:[%s0 + $0x80] sm:$0xf]
  %v51 = vld [vmem:[%s0 + $0x84] sm:$0xf]
  %v52 = vld [vmem:[%s0 + $0x88] sm:$0xf]
  %v53 = vld [vmem:[%s0 + $0x8c] sm:$0xf]
  %v54 = vld [vmem:[%s0 + $0x90] sm:$0xf]
  %v55 = vld [vmem:[%s0 + $0x94] sm:$0xf]
  %v56 = vld [vmem:[%s0 + $0x98] sm:$0xf]
  %v57 = vld [vmem:[%s0 + $0x9c] sm:$0xf]
  %v58 = vld [vmem:[%s0 + $0xa0] sm:$0xf]
  %v59 = vld [vmem:[%s0 + $0xa4] sm:$0xf]
  %v60 = vld [vmem:[%s0 + $0xa8] sm:$0xf]
  %v61 = vld [vmem:[%s0 + $0xac] sm:$0xf]
  %v62 = vld [vmem:[%s0 + $0xb0] sm:$0xf]
  %v63 = vld [vmem:[%s0 + $0xb4] sm:$0xf]
  %v64 = vld [vmem:[%s0 + $0xb8] sm:$0xf]
  %v65 = vld [vmem:[%s0 + $0xbc] sm:$0xf]
  %v66 = vld [vmem:[%s0 + $0xc0] sm:$0xf]
  %v67 = vld [vmem:[%s0 + $0xc4] sm:$0xf]
  %v68 = vld [vmem:[%s0 + $0xc8] sm:$0xf]
  %v69 = vld [vmem:[%s0 + $0xcc] sm:$0xf]
  %v70 = vld [vmem:[%s0 + $0xd0] sm:$0xf]
  %v71 = vld [vmem:[%s0 + $0xd4] sm:$0xf]
  %v72 = vld [vmem:[%s0 + $0xd8] sm:$0xf]
  %v73 = vld [vmem:[%s0 + $0xdc] sm:$0xf]
  %v74 = vld [vmem:[%s0 + $0xe0] sm:$0xf]
  %v75 = vld [vmem:[%s0 + $0xe4] sm:$0xf]
  %v76 = vld [vmem:[%s0 + $0xe8] sm:$0xf]
  %v77 = vld [vmem:[%s0 + $0xec] sm:$0xf]
  %v78 = vld [vmem:[%s0 + $0xf0] sm:$0xf]
  %v79 = vld [vmem:[%s0 + $0xf4] sm:$0xf]
  %v80 = vld [vmem:[%s0 + $0xf8] sm:$0xf]
  %v81 = vld [vmem:[%s0 + $0xfc] sm:$0xf]
  %v82 = vld [vmem:[%s1] sm:$0xf]
  %v83 = vld [vmem:[%s1 + $0x4] sm:$0xf]
  %v84 = vld [vmem:[%s1 + $0x8] sm:$0xf]
  %v85 = vld [vmem:[%s1 + $0xc] sm:$0xf]
  %v86 = vld [vmem:[%s1 + $0x10] sm:$0xf]
  %v87 = vld [vmem:[%s1 + $0x14] sm:$0xf]
  %v88 = vld [vmem:[%s1 + $0x18] sm:$0xf]
  %v89 = vld [vmem:[%s1 + $0x1c] sm:$0xf]
  %v90 = vld [vmem:[%s1 + $0x20] sm:$0xf]
  %v91 = vld [vmem:[%s1 + $0x24] sm:$0xf]
  %v92 = vld [vmem:[%s1 + $0x28] sm:$0xf]
  %v93 = vld [vmem:[%s1 + $0x2c] sm:$0xf]
  %v94 = vld [vmem:[%s1 + $0x30] sm:$0xf]
  %v95 = vld [vmem:[%s1 + $0x34] sm:$0xf]
  %v96 = vld [vmem:[%s1 + $0x38] sm:$0xf]
  %v97 = vld [vmem:[%s1 + $0x3c] sm:$0xf]
  %v162 = vunpack.c.l.b16 %v18
  %v163 = vunpack.c.l.b16 %v19
  %v164 = vunpack.c.l.b16 %v20
  %v165 = vunpack.c.l.b16 %v21
  %v166 = vunpack.c.l.b16 %v22
  %v167 = vunpack.c.l.b16 %v23
  %v168 = vunpack.c.l.b16 %v24
  %v169 = vunpack.c.l.b16 %v25
  %v170 = vunpack.c.l.b16 %v26
  %v171 = vunpack.c.l.b16 %v27
  %v172 = vunpack.c.l.b16 %v28
  %v173 = vunpack.c.l.b16 %v29
  %v174 = vunpack.c.l.b16 %v30
  %v175 = vunpack.c.l.b16 %v31
  %v176 = vunpack.c.l.b16 %v32
  %v177 = vunpack.c.l.b16 %v33
  %v178 = vunpack.c.l.b16 %v34
  %v179 = vunpack.c.l.b16 %v35
  %v180 = vunpack.c.l.b16 %v36
  %v181 = vunpack.c.l.b16 %v37
  %v182 = vunpack.c.l.b16 %v38
  %v183 = vunpack.c.l.b16 %v39
  %v184 = vunpack.c.l.b16 %v40
  %v185 = vunpack.c.l.b16 %v41
  %v186 = vunpack.c.l.b16 %v42
  %v187 = vunpack.c.l.b16 %v43
  %v188 = vunpack.c.l.b16 %v44
  %v189 = vunpack.c.l.b16 %v45
  %v190 = vunpack.c.l.b16 %v46
  %v191 = vunpack.c.l.b16 %v47
  %v192 = vunpack.c.l.b16 %v48
  %v193 = vunpack.c.l.b16 %v49
  %v194 = vunpack.c.l.b16 %v50
  %v195 = vunpack.c.l.b16 %v51
  %v196 = vunpack.c.l.b16 %v52
  %v197 = vunpack.c.l.b16 %v53
  %v198 = vunpack.c.l.b16 %v54
  %v199 = vunpack.c.l.b16 %v55
  %v200 = vunpack.c.l.b16 %v56
  %v201 = vunpack.c.l.b16 %v57
  %v202 = vunpack.c.l.b16 %v58
  %v203 = vunpack.c.l.b16 %v59
  %v204 = vunpack.c.l.b16 %v60
  %v205 = vunpack.c.l.b16 %v61
  %v206 = vunpack.c.l.b16 %v62
  %v207 = vunpack.c.l.b16 %v63
  %v208 = vunpack.c.l.b16 %v64
  %v209 = vunpack.c.l.b16 %v65
  %v210 = vunpack.c.l.b16 %v66
  %v211 = vunpack.c.l.b16 %v67
  %v212 = vunpack.c.l.b16 %v68
  %v213 = vunpack.c.l.b16 %v69
  %v214 = vunpack.c.l.b16 %v70
  %v215 = vunpack.c.l.b16 %v71
  %v216 = vunpack.c.l.b16 %v72
  %v217 = vunpack.c.l.b16 %v73
  %v218 = vunpack.c.l.b16 %v74
  %v219 = vunpack.c.l.b16 %v75
  %v220 = vunpack.c.l.b16 %v76
  %v221 = vunpack.c.l.b16 %v77
  %v222 = vunpack.c.l.b16 %v78
  %v223 = vunpack.c.l.b16 %v79
  %v224 = vunpack.c.l.b16 %v80
  %v225 = vunpack.c.l.b16 %v81
  %v226 = vpack.c.b16 %v163, %v162
  %v227 = vpack.c.b16 %v165, %v164
  %v228 = vpack.c.b16 %v167, %v166
  %v229 = vpack.c.b16 %v169, %v168
  %v230 = vpack.c.b16 %v171, %v170
  %v231 = vpack.c.b16 %v173, %v172
  %v232 = vpack.c.b16 %v175, %v174
  %v233 = vpack.c.b16 %v177, %v176
  %v234 = vpack.c.b16 %v179, %v178
  %v235 = vpack.c.b16 %v181, %v180
  %v236 = vpack.c.b16 %v183, %v182
  %v237 = vpack.c.b16 %v185, %v184
  %v238 = vpack.c.b16 %v187, %v186
  %v239 = vpack.c.b16 %v189, %v188
  %v240 = vpack.c.b16 %v191, %v190
  %v241 = vpack.c.b16 %v193, %v192
  %v242 = vpack.c.b16 %v195, %v194
  %v243 = vpack.c.b16 %v197, %v196
  %v244 = vpack.c.b16 %v199, %v198
  %v245 = vpack.c.b16 %v201, %v200
  %v246 = vpack.c.b16 %v203, %v202
  %v247 = vpack.c.b16 %v205, %v204
  %v248 = vpack.c.b16 %v207, %v206
  %v249 = vpack.c.b16 %v209, %v208
  %v250 = vpack.c.b16 %v211, %v210
  %v251 = vpack.c.b16 %v213, %v212
  %v252 = vpack.c.b16 %v215, %v214
  %v253 = vpack.c.b16 %v217, %v216
  %v254 = vpack.c.b16 %v219, %v218
  %v255 = vpack.c.b16 %v221, %v220
  %v256 = vpack.c.b16 %v223, %v222
  %v257 = vpack.c.b16 %v225, %v224
  %v306 = vunpack.c.l.b16 %v82
  %v307 = vunpack.c.l.b16 %v83
  %v308 = vunpack.c.l.b16 %v84
  %v309 = vunpack.c.l.b16 %v85
  %v310 = vunpack.c.l.b16 %v86
  %v311 = vunpack.c.l.b16 %v87
  %v312 = vunpack.c.l.b16 %v88
  %v313 = vunpack.c.l.b16 %v89
  %v314 = vunpack.c.l.b16 %v90
  %v315 = vunpack.c.l.b16 %v91
  %v316 = vunpack.c.l.b16 %v92
  %v317 = vunpack.c.l.b16 %v93
  %v318 = vunpack.c.l.b16 %v94
  %v319 = vunpack.c.l.b16 %v95
  %v320 = vunpack.c.l.b16 %v96
  %v321 = vunpack.c.l.b16 %v97
  %v322 = vpack.c.b16 %v307, %v306
  %v323 = vpack.c.b16 %v309, %v308
  %v324 = vpack.c.b16 %v311, %v310
  %v325 = vpack.c.b16 %v313, %v312
  %v326 = vpack.c.b16 %v315, %v314
  %v327 = vpack.c.b16 %v317, %v316
  %v328 = vpack.c.b16 %v319, %v318
  %v329 = vpack.c.b16 %v321, %v320
  %338 = vmatprep.subr.bf16.mxu0 0
  %339 = vmatpush1.bf16.msra.mxu0 %v322
  %340 = vmatprep.subr.bf16.mxu0 0
  %341 = vmatpush1.bf16.msra.mxu0 %v323
  %342 = vmatprep.subr.bf16.mxu0 0
  %343 = vmatpush1.bf16.msra.mxu0 %v324
  %344 = vmatprep.subr.bf16.mxu0 0
  %345 = vmatpush1.bf16.msra.mxu0 %v325
  %346 = vmatprep.subr.bf16.mxu0 0
  %347 = vmatpush1.bf16.msra.mxu0 %v326
  %348 = vmatprep.subr.bf16.mxu0 0
  %349 = vmatpush1.bf16.msra.mxu0 %v327
  %350 = vmatprep.subr.bf16.mxu0 0
  %351 = vmatpush1.bf16.msra.mxu0 %v328
  %352 = vmatprep.subr.bf16.mxu0 0
  %353 = vmatpush1.bf16.msra.mxu0 %v329
  %354 = vmatprep.subr.bf16.mxu0 0
  %355 = vmatpush1.bf16.msra.mxu0 0
  %356 = vmatprep.subr.bf16.mxu0 0
  %357 = vmatpush1.bf16.msra.mxu0 0
  %358 = vmatprep.subr.bf16.mxu0 0
  %359 = vmatpush1.bf16.msra.mxu0 0
  %360 = vmatprep.subr.bf16.mxu0 0
  %361 = vmatpush1.bf16.msra.mxu0 0
  %362 = vmatprep.subr.bf16.mxu0 0
  %363 = vmatpush1.bf16.msra.mxu0 0
  %364 = vmatprep.subr.bf16.mxu0 0
  %365 = vmatpush1.bf16.msra.mxu0 0
  %366 = vmatprep.subr.bf16.mxu0 0
  %367 = vmatpush1.bf16.msra.mxu0 0
  %368 = vmatprep.subr.bf16.mxu0 0
  %369 = vmatpush1.bf16.msra.mxu0 0
  %370 = vmatprep.mubr.bf16.mxu0 0
  %371 = vmatmul.mubr.bf16.gmra.mrb[0].mxu0 %v226
  %v372 = vpop.f32.mrb[0].mxu0
  %v373 = vadd.f32 0.0, %v372
  %v374 = vpop.f32.mrb[0].mxu0
  %v375 = vpop.f32.mrb[0].mxu0
  %v376 = vadd.f32 0.0, %v375
  %v377 = vpop.f32.mrb[0].mxu0
  %378 = vmatprep.mubr.bf16.mxu0 0
  %379 = vmatmul.mubr.bf16.gmra.mrb[0].mxu0 %v227
  %v380 = vpop.f32.mrb[0].mxu0
  %v381 = vadd.f32 0.0, %v380
  %v382 = vpop.f32.mrb[0].mxu0
  %v383 = vpop.f32.mrb[0].mxu0
  %v384 = vadd.f32 0.0, %v383
  %v385 = vpop.f32.mrb[0].mxu0
  %386 = vmatprep.mubr.bf16.mxu0 0
  %387 = vmatmul.mubr.bf16.gmra.mrb[0].mxu0 %v228
  %v388 = vpop.f32.mrb[0].mxu0
  %v389 = vadd.f32 0.0, %v388
  %v390 = vpop.f32.mrb[0].mxu0
  %v391 = vpop.f32.mrb[0].mxu0
  %v392 = vadd.f32 0.0, %v391
  %v393 = vpop.f32.mrb[0].mxu0
  %394 = vmatprep.mubr.bf16.mxu0 0
  %395 = vmatmul.mubr.bf16.gmra.mrb[0].mxu0 %v229
  %v396 = vpop.f32.mrb[0].mxu0
  %v397 = vadd.f32 0.0, %v396
  %v398 = vpop.f32.mrb[0].mxu0
  %v399 = vpop.f32.mrb[0].mxu0
  %v400 = vadd.f32 0.0, %v399
  %v401 = vpop.f32.mrb[0].mxu0
  %402 = vmatprep.mubr.bf16.mxu0 0
  %403 = vmatmul.mubr.bf16.gmra.mrb[0].mxu0 %v230
  %v404 = vpop.f32.mrb[0].mxu0
  %v405 = vadd.f32 0.0, %v404
  %v406 = vpop.f32.mrb[0].mxu0
  %v407 = vpop.f32.mrb[0].mxu0
  %v408 = vadd.f32 0.0, %v407
  %v409 = vpop.f32.mrb[0].mxu0
  %410 = vmatprep.mubr.bf16.mxu0 0
  %411 = vmatmul.mubr.bf16.gmra.mrb[0].mxu0 %v231
  %v412 = vpop.f32.mrb[0].mxu0
  %v413 = vadd.f32 0.0, %v412
  %v414 = vpop.f32.mrb[0].mxu0
  %v415 = vpop.f32.mrb[0].mxu0
  %v416 = vadd.f32 0.0, %v415
  %v417 = vpop.f32.mrb[0].mxu0
  %418 = vmatprep.mubr.bf16.mxu0 0
  %419 = vmatmul.mubr.bf16.gmra.mrb[0].mxu0 %v232
  %v420 = vpop.f32.mrb[0].mxu0
  %v421 = vadd.f32 0.0, %v420
  %v422 = vpop.f32.mrb[0].mxu0
  %v423 = vpop.f32.mrb[0].mxu0
  %v424 = vadd.f32 0.0, %v423
  %v425 = vpop.f32.mrb[0].mxu0
  %426 = vmatprep.mubr.bf16.mxu0 0
  %427 = vmatmul.mubr.bf16.gmra.mrb[0].mxu0 %v233
  %v428 = vpop.f32.mrb[0].mxu0
  %v429 = vadd.f32 0.0, %v428
  %v430 = vpop.f32.mrb[0].mxu0
  %v431 = vpop.f32.mrb[0].mxu0
  %v432 = vadd.f32 0.0, %v431
  %v433 = vpop.f32.mrb[0].mxu0
  %434 = vmatprep.mubr.bf16.mxu0 0
  %435 = vmatmul.mubr.bf16.gmra.mrb[0].mxu0 %v234
  %v436 = vpop.f32.mrb[0].mxu0
  %v437 = vadd.f32 0.0, %v436
  %v438 = vpop.f32.mrb[0].mxu0
  %v439 = vpop.f32.mrb[0].mxu0
  %v440 = vadd.f32 0.0, %v439
  %v441 = vpop.f32.mrb[0].mxu0
  %442 = vmatprep.mubr.bf16.mxu0 0
  %443 = vmatmul.mubr.bf16.gmra.mrb[0].mxu0 %v235
  %v444 = vpop.f32.mrb[0].mxu0
  %v445 = vadd.f32 0.0, %v444
  %v446 = vpop.f32.mrb[0].mxu0
  %v447 = vpop.f32.mrb[0].mxu0
  %v448 = vadd.f32 0.0, %v447
  %v449 = vpop.f32.mrb[0].mxu0
  %450 = vmatprep.mubr.bf16.mxu0 0
  %451 = vmatmul.mubr.bf16.gmra.mrb[0].mxu0 %v236
  %v452 = vpop.f32.mrb[0].mxu0
  %v453 = vadd.f32 0.0, %v452
  %v454 = vpop.f32.mrb[0].mxu0
  %v455 = vpop.f32.mrb[0].mxu0
  %v456 = vadd.f32 0.0, %v455
  %v457 = vpop.f32.mrb[0].mxu0
  %458 = vmatprep.mubr.bf16.mxu0 0
  %459 = vmatmul.mubr.bf16.gmra.mrb[0].mxu0 %v237
  %v460 = vpop.f32.mrb[0].mxu0
  %v461 = vadd.f32 0.0, %v460
  %v462 = vpop.f32.mrb[0].mxu0
  %v463 = vpop.f32.mrb[0].mxu0
  %v464 = vadd.f32 0.0, %v463
  %v465 = vpop.f32.mrb[0].mxu0
  %466 = vmatprep.mubr.bf16.mxu0 0
  %467 = vmatmul.mubr.bf16.gmra.mrb[0].mxu0 %v238
  %v468 = vpop.f32.mrb[0].mxu0
  %v469 = vadd.f32 0.0, %v468
  %v470 = vpop.f32.mrb[0].mxu0
  %v471 = vpop.f32.mrb[0].mxu0
  %v472 = vadd.f32 0.0, %v471
  %v473 = vpop.f32.mrb[0].mxu0
  %474 = vmatprep.mubr.bf16.mxu0 0
  %475 = vmatmul.mubr.bf16.gmra.mrb[0].mxu0 %v239
  %v476 = vpop.f32.mrb[0].mxu0
  %v477 = vadd.f32 0.0, %v476
  %v478 = vpop.f32.mrb[0].mxu0
  %v479 = vpop.f32.mrb[0].mxu0
  %v480 = vadd.f32 0.0, %v479
  %v481 = vpop.f32.mrb[0].mxu0
  %482 = vmatprep.mubr.bf16.mxu0 0
  %483 = vmatmul.mubr.bf16.gmra.mrb[0].mxu0 %v240
  %v484 = vpop.f32.mrb[0].mxu0
  %v485 = vadd.f32 0.0, %v484
  %v486 = vpop.f32.mrb[0].mxu0
  %v487 = vpop.f32.mrb[0].mxu0
  %v488 = vadd.f32 0.0, %v487
  %v489 = vpop.f32.mrb[0].mxu0
  %490 = vmatprep.mubr.bf16.mxu0 0
  %491 = vmatmul.mubr.bf16.gmra.mrb[0].mxu0 %v241
  %v492 = vpop.f32.mrb[0].mxu0
  %v493 = vadd.f32 0.0, %v492
  %v494 = vpop.f32.mrb[0].mxu0
  %v495 = vpop.f32.mrb[0].mxu0
  %v496 = vadd.f32 0.0, %v495
  %v497 = vpop.f32.mrb[0].mxu0
  %498 = vmatprep.mubr.bf16.mxu0 0
  %499 = vmatmul.mubr.bf16.gmra.mrb[0].mxu0 %v242
  %v500 = vpop.f32.mrb[0].mxu0
  %v501 = vadd.f32 0.0, %v500
  %v502 = vpop.f32.mrb[0].mxu0
  %v503 = vpop.f32.mrb[0].mxu0
  %v504 = vadd.f32 0.0, %v503
  %v505 = vpop.f32.mrb[0].mxu0
  %506 = vmatprep.mubr.bf16.mxu0 0
  %507 = vmatmul.mubr.bf16.gmra.mrb[0].mxu0 %v243
  %v508 = vpop.f32.mrb[0].mxu0
  %v509 = vadd.f32 0.0, %v508
  %v510 = vpop.f32.mrb[0].mxu0
  %v511 = vpop.f32.mrb[0].mxu0
  %v512 = vadd.f32 0.0, %v511
  %v513 = vpop.f32.mrb[0].mxu0
  %514 = vmatprep.mubr.bf16.mxu0 0
  %515 = vmatmul.mubr.bf16.gmra.mrb[0].mxu0 %v244
  %v516 = vpop.f32.mrb[0].mxu0
  %v517 = vadd.f32 0.0, %v516
  %v518 = vpop.f32.mrb[0].mxu0
  %v519 = vpop.f32.mrb[0].mxu0
  %v520 = vadd.f32 0.0, %v519
  %v521 = vpop.f32.mrb[0].mxu0
  %522 = vmatprep.mubr.bf16.mxu0 0
  %523 = vmatmul.mubr.bf16.gmra.mrb[0].mxu0 %v245
  %v524 = vpop.f32.mrb[0].mxu0
  %v525 = vadd.f32 0.0, %v524
  %v526 = vpop.f32.mrb[0].mxu0
  %v527 = vpop.f32.mrb[0].mxu0
  %v528 = vadd.f32 0.0, %v527
  %v529 = vpop.f32.mrb[0].mxu0
  %530 = vmatprep.mubr.bf16.mxu0 0
  %531 = vmatmul.mubr.bf16.gmra.mrb[0].mxu0 %v246
  %v532 = vpop.f32.mrb[0].mxu0
  %v533 = vadd.f32 0.0, %v532
  %v534 = vpop.f32.mrb[0].mxu0
  %v535 = vpop.f32.mrb[0].mxu0
  %v536 = vadd.f32 0.0, %v535
  %v537 = vpop.f32.mrb[0].mxu0
  %538 = vmatprep.mubr.bf16.mxu0 0
  %539 = vmatmul.mubr.bf16.gmra.mrb[0].mxu0 %v247
  %v540 = vpop.f32.mrb[0].mxu0
  %v541 = vadd.f32 0.0, %v540
  %v542 = vpop.f32.mrb[0].mxu0
  %v543 = vpop.f32.mrb[0].mxu0
  %v544 = vadd.f32 0.0, %v543
  %v545 = vpop.f32.mrb[0].mxu0
  %546 = vmatprep.mubr.bf16.mxu0 0
  %547 = vmatmul.mubr.bf16.gmra.mrb[0].mxu0 %v248
  %v548 = vpop.f32.mrb[0].mxu0
  %v549 = vadd.f32 0.0, %v548
  %v550 = vpop.f32.mrb[0].mxu0
  %v551 = vpop.f32.mrb[0].mxu0
  %v552 = vadd.f32 0.0, %v551
  %v553 = vpop.f32.mrb[0].mxu0
  %554 = vmatprep.mubr.bf16.mxu0 0
  %555 = vmatmul.mubr.bf16.gmra.mrb[0].mxu0 %v249
  %v556 = vpop.f32.mrb[0].mxu0
  %v557 = vadd.f32 0.0, %v556
  %v558 = vpop.f32.mrb[0].mxu0
  %v559 = vpop.f32.mrb[0].mxu0
  %v560 = vadd.f32 0.0, %v559
  %v561 = vpop.f32.mrb[0].mxu0
  %562 = vmatprep.mubr.bf16.mxu0 0
  %563 = vmatmul.mubr.bf16.gmra.mrb[0].mxu0 %v250
  %v564 = vpop.f32.mrb[0].mxu0
  %v565 = vadd.f32 0.0, %v564
  %v566 = vpop.f32.mrb[0].mxu0
  %v567 = vpop.f32.mrb[0].mxu0
  %v568 = vadd.f32 0.0, %v567
  %v569 = vpop.f32.mrb[0].mxu0
  %570 = vmatprep.mubr.bf16.mxu0 0
  %571 = vmatmul.mubr.bf16.gmra.mrb[0].mxu0 %v251
  %v572 = vpop.f32.mrb[0].mxu0
  %v573 = vadd.f32 0.0, %v572
  %v574 = vpop.f32.mrb[0].mxu0
  %v575 = vpop.f32.mrb[0].mxu0
  %v576 = vadd.f32 0.0, %v575
  %v577 = vpop.f32.mrb[0].mxu0
  %578 = vmatprep.mubr.bf16.mxu0 0
  %579 = vmatmul.mubr.bf16.gmra.mrb[0].mxu0 %v252
  %v580 = vpop.f32.mrb[0].mxu0
  %v581 = vadd.f32 0.0, %v580
  %v582 = vpop.f32.mrb[0].mxu0
  %v583 = vpop.f32.mrb[0].mxu0
  %v584 = vadd.f32 0.0, %v583
  %v585 = vpop.f32.mrb[0].mxu0
  %586 = vmatprep.mubr.bf16.mxu0 0
  %587 = vmatmul.mubr.bf16.gmra.mrb[0].mxu0 %v253
  %v588 = vpop.f32.mrb[0].mxu0
  %v589 = vadd.f32 0.0, %v588
  %v590 = vpop.f32.mrb[0].mxu0
  %v591 = vpop.f32.mrb[0].mxu0
  %v592 = vadd.f32 0.0, %v591
  %v593 = vpop.f32.mrb[0].mxu0
  %594 = vmatprep.mubr.bf16.mxu0 0
  %595 = vmatmul.mubr.bf16.gmra.mrb[0].mxu0 %v254
  %v596 = vpop.f32.mrb[0].mxu0
  %v597 = vadd.f32 0.0, %v596
  %v598 = vpop.f32.mrb[0].mxu0
  %v599 = vpop.f32.mrb[0].mxu0
  %v600 = vadd.f32 0.0, %v599
  %v601 = vpop.f32.mrb[0].mxu0
  %602 = vmatprep.mubr.bf16.mxu0 0
  %603 = vmatmul.mubr.bf16.gmra.mrb[0].mxu0 %v255
  %v604 = vpop.f32.mrb[0].mxu0
  %v605 = vadd.f32 0.0, %v604
  %v606 = vpop.f32.mrb[0].mxu0
  %v607 = vpop.f32.mrb[0].mxu0
  %v608 = vadd.f32 0.0, %v607
  %v609 = vpop.f32.mrb[0].mxu0
  %610 = vmatprep.mubr.bf16.mxu0 0
  %611 = vmatmul.mubr.bf16.gmra.mrb[0].mxu0 %v256
  %v612 = vpop.f32.mrb[0].mxu0
  %v613 = vadd.f32 0.0, %v612
  %v614 = vpop.f32.mrb[0].mxu0
  %v615 = vpop.f32.mrb[0].mxu0
  %v616 = vadd.f32 0.0, %v615
  %v617 = vpop.f32.mrb[0].mxu0
  %618 = vmatprep.mubr.bf16.mxu0 0
  %619 = vmatmul.mubr.bf16.gmra.mrb[0].mxu0 %v257
  %v620 = vpop.f32.mrb[0].mxu0
  %v621 = vadd.f32 0.0, %v620
  %v622 = vpop.f32.mrb[0].mxu0
  %v623 = vpop.f32.mrb[0].mxu0
  %v624 = vadd.f32 0.0, %v623
  %v625 = vpop.f32.mrb[0].mxu0
  %626 = vdwg.mxu0
  %v627 = vadd.f32 %v373, %v376
  %v628 = vadd.f32 %v627, %v381
  %v629 = vadd.f32 %v628, %v384
  %v630 = vadd.f32 %v629, %v389
  %v631 = vadd.f32 %v630, %v392
  %v632 = vadd.f32 %v631, %v397
  %v633 = vadd.f32 %v632, %v400
  %v634 = vadd.f32 %v633, %v405
  %v635 = vadd.f32 %v634, %v408
  %v636 = vadd.f32 %v635, %v413
  %v637 = vadd.f32 %v636, %v416
  %v638 = vadd.f32 %v637, %v421
  %v639 = vadd.f32 %v638, %v424
  %v640 = vadd.f32 %v639, %v429
  %v641 = vadd.f32 %v640, %v432
  %v642 = vadd.f32 %v641, %v437
  %v643 = vadd.f32 %v642, %v440
  %v644 = vadd.f32 %v643, %v445
  %v645 = vadd.f32 %v644, %v448
  %v646 = vadd.f32 %v645, %v453
  %v647 = vadd.f32 %v646, %v456
  %v648 = vadd.f32 %v647, %v461
  %v649 = vadd.f32 %v648, %v464
  %v650 = vadd.f32 %v649, %v469
  %v651 = vadd.f32 %v650, %v472
  %v652 = vadd.f32 %v651, %v477
  %v653 = vadd.f32 %v652, %v480
  %v654 = vadd.f32 %v653, %v485
  %v655 = vadd.f32 %v654, %v488
  %v656 = vadd.f32 %v655, %v493
  %v657 = vadd.f32 %v656, %v496
  %v658 = vadd.f32 %v657, %v501
  %v659 = vadd.f32 %v658, %v504
  %v660 = vadd.f32 %v659, %v509
  %v661 = vadd.f32 %v660, %v512
  %v662 = vadd.f32 %v661, %v517
  %v663 = vadd.f32 %v662, %v520
  %v664 = vadd.f32 %v663, %v525
  %v665 = vadd.f32 %v664, %v528
  %v666 = vadd.f32 %v665, %v533
  %v667 = vadd.f32 %v666, %v536
  %v668 = vadd.f32 %v667, %v541
  %v669 = vadd.f32 %v668, %v544
  %v670 = vadd.f32 %v669, %v549
  %v671 = vadd.f32 %v670, %v552
  %v672 = vadd.f32 %v671, %v557
  %v673 = vadd.f32 %v672, %v560
  %v674 = vadd.f32 %v673, %v565
  %v675 = vadd.f32 %v674, %v568
  %v676 = vadd.f32 %v675, %v573
  %v677 = vadd.f32 %v676, %v576
  %v678 = vadd.f32 %v677, %v581
  %v679 = vadd.f32 %v678, %v584
  %v680 = vadd.f32 %v679, %v589
  %v681 = vadd.f32 %v680, %v592
  %v682 = vadd.f32 %v681, %v597
  %v683 = vadd.f32 %v682, %v600
  %v684 = vadd.f32 %v683, %v605
  %v685 = vadd.f32 %v684, %v608
  %v686 = vadd.f32 %v685, %v613
  %v687 = vadd.f32 %v686, %v616
  %v688 = vadd.f32 %v687, %v621
  %v689 = vadd.f32 %v688, %v624
  %v690 = vrot.slane %v689, 4
  %v691 = vadd.f32 %v689, %v690
  %v692 = vrot.slane %v691, 2
  %v693 = vadd.f32 %v691, %v692
  %v694 = vrot.slane %v693, 1
  %v695 = vadd.f32 %v693, %v694
  %v696 = vmul.f32 %v695, 0.001953125
  %v697 = vmul.f32 %v373, %v373
  %v698 = vmul.f32 %v376, %v376
  %v699 = vmul.f32 %v381, %v381
  %v700 = vmul.f32 %v384, %v384
  %v701 = vmul.f32 %v389, %v389
  %v702 = vmul.f32 %v392, %v392
  %v703 = vmul.f32 %v397, %v397
  %v704 = vmul.f32 %v400, %v400
  %v705 = vmul.f32 %v405, %v405
  %v706 = vmul.f32 %v408, %v408
  %v707 = vmul.f32 %v413, %v413
  %v708 = vmul.f32 %v416, %v416
  %v709 = vmul.f32 %v421, %v421
  %v710 = vmul.f32 %v424, %v424
  %v711 = vmul.f32 %v429, %v429
  %v712 = vmul.f32 %v432, %v432
  %v713 = vmul.f32 %v437, %v437
  %v714 = vmul.f32 %v440, %v440
  %v715 = vmul.f32 %v445, %v445
  %v716 = vmul.f32 %v448, %v448
  %v717 = vmul.f32 %v453, %v453
  %v718 = vmul.f32 %v456, %v456
  %v719 = vmul.f32 %v461, %v461
  %v720 = vmul.f32 %v464, %v464
  %v721 = vmul.f32 %v469, %v469
  %v722 = vmul.f32 %v472, %v472
  %v723 = vmul.f32 %v477, %v477
  %v724 = vmul.f32 %v480, %v480
  %v725 = vmul.f32 %v485, %v485
  %v726 = vmul.f32 %v488, %v488
  %v727 = vmul.f32 %v493, %v493
  %v728 = vmul.f32 %v496, %v496
  %v729 = vmul.f32 %v501, %v501
  %v730 = vmul.f32 %v504, %v504
  %v731 = vmul.f32 %v509, %v509
  %v732 = vmul.f32 %v512, %v512
  %v733 = vmul.f32 %v517, %v517
  %v734 = vmul.f32 %v520, %v520
  %v735 = vmul.f32 %v525, %v525
  %v736 = vmul.f32 %v528, %v528
  %v737 = vmul.f32 %v533, %v533
  %v738 = vmul.f32 %v536, %v536
  %v739 = vmul.f32 %v541, %v541
  %v740 = vmul.f32 %v544, %v544
  %v741 = vmul.f32 %v549, %v549
  %v742 = vmul.f32 %v552, %v552
  %v743 = vmul.f32 %v557, %v557
  %v744 = vmul.f32 %v560, %v560
  %v745 = vmul.f32 %v565, %v565
  %v746 = vmul.f32 %v568, %v568
  %v747 = vmul.f32 %v573, %v573
  %v748 = vmul.f32 %v576, %v576
  %v749 = vmul.f32 %v581, %v581
  %v750 = vmul.f32 %v584, %v584
  %v751 = vmul.f32 %v589, %v589
  %v752 = vmul.f32 %v592, %v592
  %v753 = vmul.f32 %v597, %v597
  %v754 = vmul.f32 %v600, %v600
  %v755 = vmul.f32 %v605, %v605
  %v756 = vmul.f32 %v608, %v608
  %v757 = vmul.f32 %v613, %v613
  %v758 = vmul.f32 %v616, %v616
  %v759 = vmul.f32 %v621, %v621
  %v760 = vmul.f32 %v624, %v624
  %v761 = vadd.f32 %v697, %v698
  %v762 = vadd.f32 %v761, %v699
  %v763 = vadd.f32 %v762, %v700
  %v764 = vadd.f32 %v763, %v701
  %v765 = vadd.f32 %v764, %v702
  %v766 = vadd.f32 %v765, %v703
  %v767 = vadd.f32 %v766, %v704
  %v768 = vadd.f32 %v767, %v705
  %v769 = vadd.f32 %v768, %v706
  %v770 = vadd.f32 %v769, %v707
  %v771 = vadd.f32 %v770, %v708
  %v772 = vadd.f32 %v771, %v709
  %v773 = vadd.f32 %v772, %v710
  %v774 = vadd.f32 %v773, %v711
  %v775 = vadd.f32 %v774, %v712
  %v776 = vadd.f32 %v775, %v713
  %v777 = vadd.f32 %v776, %v714
  %v778 = vadd.f32 %v777, %v715
  %v779 = vadd.f32 %v778, %v716
  %v780 = vadd.f32 %v779, %v717
  %v781 = vadd.f32 %v780, %v718
  %v782 = vadd.f32 %v781, %v719
  %v783 = vadd.f32 %v782, %v720
  %v784 = vadd.f32 %v783, %v721
  %v785 = vadd.f32 %v784, %v722
  %v786 = vadd.f32 %v785, %v723
  %v787 = vadd.f32 %v786, %v724
  %v788 = vadd.f32 %v787, %v725
  %v789 = vadd.f32 %v788, %v726
  %v790 = vadd.f32 %v789, %v727
  %v791 = vadd.f32 %v790, %v728
  %v792 = vadd.f32 %v791, %v729
  %v793 = vadd.f32 %v792, %v730
  %v794 = vadd.f32 %v793, %v731
  %v795 = vadd.f32 %v794, %v732
  %v796 = vadd.f32 %v795, %v733
  %v797 = vadd.f32 %v796, %v734
  %v798 = vadd.f32 %v797, %v735
  %v799 = vadd.f32 %v798, %v736
  %v800 = vadd.f32 %v799, %v737
  %v801 = vadd.f32 %v800, %v738
  %v802 = vadd.f32 %v801, %v739
  %v803 = vadd.f32 %v802, %v740
  %v804 = vadd.f32 %v803, %v741
  %v805 = vadd.f32 %v804, %v742
  %v806 = vadd.f32 %v805, %v743
  %v807 = vadd.f32 %v806, %v744
  %v808 = vadd.f32 %v807, %v745
  %v809 = vadd.f32 %v808, %v746
  %v810 = vadd.f32 %v809, %v747
  %v811 = vadd.f32 %v810, %v748
  %v812 = vadd.f32 %v811, %v749
  %v813 = vadd.f32 %v812, %v750
  %v814 = vadd.f32 %v813, %v751
  %v815 = vadd.f32 %v814, %v752
  %v816 = vadd.f32 %v815, %v753
  %v817 = vadd.f32 %v816, %v754
  %v818 = vadd.f32 %v817, %v755
  %v819 = vadd.f32 %v818, %v756
  %v820 = vadd.f32 %v819, %v757
  %v821 = vadd.f32 %v820, %v758
  %v822 = vadd.f32 %v821, %v759
  %v823 = vadd.f32 %v822, %v760
  %v824 = vrot.slane %v823, 4
  %v825 = vadd.f32 %v823, %v824
  %v826 = vrot.slane %v825, 2
  %v827 = vadd.f32 %v825, %v826
  %v828 = vrot.slane %v827, 1
  %v829 = vadd.f32 %v827, %v828
  %v830 = vmul.f32 %v829, 0.001953125
  %v831 = vmul.f32 %v696, %v696
  %v832 = vsub.f32 %v830, %v831
  %v833 = vmax.f32 %v832, 0.0
  %v834 = vld [vmem:[%s2] sm:$0x1]
  %v835 = vadd.f32 %v833, 1e-05
  %v836 = vrsqrt.pop %v835
  %v837 = vmul.f32 %v834, %v836
  %v838 = vld [vmem:[%s3] sm:$0x1]
  %v839 = vmul.f32 %v696, %v837
  %v840 = vsub.f32 %v838, %v839
  %v842 = vlaneseq
  %v843 = vshrl.u32 %v842, 7
  %v844 = vsub.s32 0, %v843
  %v845 = vrot.slane %v837, %v844
  %v847 = vmul.f32 %v373, %v845
  %v848 = vmul.f32 %v376, %v845
  %v849 = vmul.f32 %v381, %v845
  %v850 = vmul.f32 %v384, %v845
  %v851 = vmul.f32 %v389, %v845
  %v852 = vmul.f32 %v392, %v845
  %v853 = vmul.f32 %v397, %v845
  %v854 = vmul.f32 %v400, %v845
  %v855 = vmul.f32 %v405, %v845
  %v856 = vmul.f32 %v408, %v845
  %v857 = vmul.f32 %v413, %v845
  %v858 = vmul.f32 %v416, %v845
  %v859 = vmul.f32 %v421, %v845
  %v860 = vmul.f32 %v424, %v845
  %v861 = vmul.f32 %v429, %v845
  %v862 = vmul.f32 %v432, %v845
  %v863 = vmul.f32 %v437, %v845
  %v864 = vmul.f32 %v440, %v845
  %v865 = vmul.f32 %v445, %v845
  %v866 = vmul.f32 %v448, %v845
  %v867 = vmul.f32 %v453, %v845
  %v868 = vmul.f32 %v456, %v845
  %v869 = vmul.f32 %v461, %v845
  %v870 = vmul.f32 %v464, %v845
  %v871 = vmul.f32 %v469, %v845
  %v872 = vmul.f32 %v472, %v845
  %v873 = vmul.f32 %v477, %v845
  %v874 = vmul.f32 %v480, %v845
  %v875 = vmul.f32 %v485, %v845
  %v876 = vmul.f32 %v488, %v845
  %v877 = vmul.f32 %v493, %v845
  %v878 = vmul.f32 %v496, %v845
  %v879 = vmul.f32 %v501, %v845
  %v880 = vmul.f32 %v504, %v845
  %v881 = vmul.f32 %v509, %v845
  %v882 = vmul.f32 %v512, %v845
  %v883 = vmul.f32 %v517, %v845
  %v884 = vmul.f32 %v520, %v845
  %v885 = vmul.f32 %v525, %v845
  %v886 = vmul.f32 %v528, %v845
  %v887 = vmul.f32 %v533, %v845
  %v888 = vmul.f32 %v536, %v845
  %v889 = vmul.f32 %v541, %v845
  %v890 = vmul.f32 %v544, %v845
  %v891 = vmul.f32 %v549, %v845
  %v892 = vmul.f32 %v552, %v845
  %v893 = vmul.f32 %v557, %v845
  %v894 = vmul.f32 %v560, %v845
  %v895 = vmul.f32 %v565, %v845
  %v896 = vmul.f32 %v568, %v845
  %v897 = vmul.f32 %v573, %v845
  %v898 = vmul.f32 %v576, %v845
  %v899 = vmul.f32 %v581, %v845
  %v900 = vmul.f32 %v584, %v845
  %v901 = vmul.f32 %v589, %v845
  %v902 = vmul.f32 %v592, %v845
  %v903 = vmul.f32 %v597, %v845
  %v904 = vmul.f32 %v600, %v845
  %v905 = vmul.f32 %v605, %v845
  %v906 = vmul.f32 %v608, %v845
  %v907 = vmul.f32 %v613, %v845
  %v908 = vmul.f32 %v616, %v845
  %v909 = vmul.f32 %v621, %v845
  %v910 = vmul.f32 %v624, %v845
  %v912 = vlaneseq
  %v913 = vshrl.u32 %v912, 7
  %v914 = vsub.s32 0, %v913
  %v915 = vrot.slane %v840, %v914
  %v917 = vadd.f32 %v847, %v915
  %v918 = vadd.f32 %v848, %v915
  %v919 = vadd.f32 %v849, %v915
  %v920 = vadd.f32 %v850, %v915
  %v921 = vadd.f32 %v851, %v915
  %v922 = vadd.f32 %v852, %v915
  %v923 = vadd.f32 %v853, %v915
  %v924 = vadd.f32 %v854, %v915
  %v925 = vadd.f32 %v855, %v915
  %v926 = vadd.f32 %v856, %v915
  %v927 = vadd.f32 %v857, %v915
  %v928 = vadd.f32 %v858, %v915
  %v929 = vadd.f32 %v859, %v915
  %v930 = vadd.f32 %v860, %v915
  %v931 = vadd.f32 %v861, %v915
  %v932 = vadd.f32 %v862, %v915
  %v933 = vadd.f32 %v863, %v915
  %v934 = vadd.f32 %v864, %v915
  %v935 = vadd.f32 %v865, %v915
  %v936 = vadd.f32 %v866, %v915
  %v937 = vadd.f32 %v867, %v915
  %v938 = vadd.f32 %v868, %v915
  %v939 = vadd.f32 %v869, %v915
  %v940 = vadd.f32 %v870, %v915
  %v941 = vadd.f32 %v871, %v915
  %v942 = vadd.f32 %v872, %v915
  %v943 = vadd.f32 %v873, %v915
  %v944 = vadd.f32 %v874, %v915
  %v945 = vadd.f32 %v875, %v915
  %v946 = vadd.f32 %v876, %v915
  %v947 = vadd.f32 %v877, %v915
  %v948 = vadd.f32 %v878, %v915
  %v949 = vadd.f32 %v879, %v915
  %v950 = vadd.f32 %v880, %v915
  %v951 = vadd.f32 %v881, %v915
  %v952 = vadd.f32 %v882, %v915
  %v953 = vadd.f32 %v883, %v915
  %v954 = vadd.f32 %v884, %v915
  %v955 = vadd.f32 %v885, %v915
  %v956 = vadd.f32 %v886, %v915
  %v957 = vadd.f32 %v887, %v915
  %v958 = vadd.f32 %v888, %v915
  %v959 = vadd.f32 %v889, %v915
  %v960 = vadd.f32 %v890, %v915
  %v961 = vadd.f32 %v891, %v915
  %v962 = vadd.f32 %v892, %v915
  %v963 = vadd.f32 %v893, %v915
  %v964 = vadd.f32 %v894, %v915
  %v965 = vadd.f32 %v895, %v915
  %v966 = vadd.f32 %v896, %v915
  %v967 = vadd.f32 %v897, %v915
  %v968 = vadd.f32 %v898, %v915
  %v969 = vadd.f32 %v899, %v915
  %v970 = vadd.f32 %v900, %v915
  %v971 = vadd.f32 %v901, %v915
  %v972 = vadd.f32 %v902, %v915
  %v973 = vadd.f32 %v903, %v915
  %v974 = vadd.f32 %v904, %v915
  %v975 = vadd.f32 %v905, %v915
  %v976 = vadd.f32 %v906, %v915
  %v977 = vadd.f32 %v907, %v915
  %v978 = vadd.f32 %v908, %v915
  %v979 = vadd.f32 %v909, %v915
  %v980 = vadd.f32 %v910, %v915
  %vm981 = vcmp.gt.f32.partialorder %v917, 0.0
  %vm982 = vcmp.gt.f32.partialorder %v918, 0.0
  %vm983 = vcmp.gt.f32.partialorder %v919, 0.0
  %vm984 = vcmp.gt.f32.partialorder %v920, 0.0
  %vm985 = vcmp.gt.f32.partialorder %v921, 0.0
  %vm986 = vcmp.gt.f32.partialorder %v922, 0.0
  %vm987 = vcmp.gt.f32.partialorder %v923, 0.0
  %vm988 = vcmp.gt.f32.partialorder %v924, 0.0
  %vm989 = vcmp.gt.f32.partialorder %v925, 0.0
  %vm990 = vcmp.gt.f32.partialorder %v926, 0.0
  %vm991 = vcmp.gt.f32.partialorder %v927, 0.0
  %vm992 = vcmp.gt.f32.partialorder %v928, 0.0
  %vm993 = vcmp.gt.f32.partialorder %v929, 0.0
  %vm994 = vcmp.gt.f32.partialorder %v930, 0.0
  %vm995 = vcmp.gt.f32.partialorder %v931, 0.0
  %vm996 = vcmp.gt.f32.partialorder %v932, 0.0
  %vm997 = vcmp.gt.f32.partialorder %v933, 0.0
  %vm998 = vcmp.gt.f32.partialorder %v934, 0.0
  %vm999 = vcmp.gt.f32.partialorder %v935, 0.0
  %vm1000 = vcmp.gt.f32.partialorder %v936, 0.0
  %vm1001 = vcmp.gt.f32.partialorder %v937, 0.0
  %vm1002 = vcmp.gt.f32.partialorder %v938, 0.0
  %vm1003 = vcmp.gt.f32.partialorder %v939, 0.0
  %vm1004 = vcmp.gt.f32.partialorder %v940, 0.0
  %vm1005 = vcmp.gt.f32.partialorder %v941, 0.0
  %vm1006 = vcmp.gt.f32.partialorder %v942, 0.0
  %vm1007 = vcmp.gt.f32.partialorder %v943, 0.0
  %vm1008 = vcmp.gt.f32.partialorder %v944, 0.0
  %vm1009 = vcmp.gt.f32.partialorder %v945, 0.0
  %vm1010 = vcmp.gt.f32.partialorder %v946, 0.0
  %vm1011 = vcmp.gt.f32.partialorder %v947, 0.0
  %vm1012 = vcmp.gt.f32.partialorder %v948, 0.0
  %vm1013 = vcmp.gt.f32.partialorder %v949, 0.0
  %vm1014 = vcmp.gt.f32.partialorder %v950, 0.0
  %vm1015 = vcmp.gt.f32.partialorder %v951, 0.0
  %vm1016 = vcmp.gt.f32.partialorder %v952, 0.0
  %vm1017 = vcmp.gt.f32.partialorder %v953, 0.0
  %vm1018 = vcmp.gt.f32.partialorder %v954, 0.0
  %vm1019 = vcmp.gt.f32.partialorder %v955, 0.0
  %vm1020 = vcmp.gt.f32.partialorder %v956, 0.0
  %vm1021 = vcmp.gt.f32.partialorder %v957, 0.0
  %vm1022 = vcmp.gt.f32.partialorder %v958, 0.0
  %vm1023 = vcmp.gt.f32.partialorder %v959, 0.0
  %vm1024 = vcmp.gt.f32.partialorder %v960, 0.0
  %vm1025 = vcmp.gt.f32.partialorder %v961, 0.0
  %vm1026 = vcmp.gt.f32.partialorder %v962, 0.0
  %vm1027 = vcmp.gt.f32.partialorder %v963, 0.0
  %vm1028 = vcmp.gt.f32.partialorder %v964, 0.0
  %vm1029 = vcmp.gt.f32.partialorder %v965, 0.0
  %vm1030 = vcmp.gt.f32.partialorder %v966, 0.0
  %vm1031 = vcmp.gt.f32.partialorder %v967, 0.0
  %vm1032 = vcmp.gt.f32.partialorder %v968, 0.0
  %vm1033 = vcmp.gt.f32.partialorder %v969, 0.0
  %vm1034 = vcmp.gt.f32.partialorder %v970, 0.0
  %vm1035 = vcmp.gt.f32.partialorder %v971, 0.0
  %vm1036 = vcmp.gt.f32.partialorder %v972, 0.0
  %vm1037 = vcmp.gt.f32.partialorder %v973, 0.0
  %vm1038 = vcmp.gt.f32.partialorder %v974, 0.0
  %vm1039 = vcmp.gt.f32.partialorder %v975, 0.0
  %vm1040 = vcmp.gt.f32.partialorder %v976, 0.0
  %vm1041 = vcmp.gt.f32.partialorder %v977, 0.0
  %vm1042 = vcmp.gt.f32.partialorder %v978, 0.0
  %vm1043 = vcmp.gt.f32.partialorder %v979, 0.0
  %vm1044 = vcmp.gt.f32.partialorder %v980, 0.0
  %v1045 = vmul.f32 %v917, 0.1
  %v1046 = vmul.f32 %v918, 0.1
  %v1047 = vmul.f32 %v919, 0.1
  %v1048 = vmul.f32 %v920, 0.1
  %v1049 = vmul.f32 %v921, 0.1
  %v1050 = vmul.f32 %v922, 0.1
  %v1051 = vmul.f32 %v923, 0.1
  %v1052 = vmul.f32 %v924, 0.1
  %v1053 = vmul.f32 %v925, 0.1
  %v1054 = vmul.f32 %v926, 0.1
  %v1055 = vmul.f32 %v927, 0.1
  %v1056 = vmul.f32 %v928, 0.1
  %v1057 = vmul.f32 %v929, 0.1
  %v1058 = vmul.f32 %v930, 0.1
  %v1059 = vmul.f32 %v931, 0.1
  %v1060 = vmul.f32 %v932, 0.1
  %v1061 = vmul.f32 %v933, 0.1
  %v1062 = vmul.f32 %v934, 0.1
  %v1063 = vmul.f32 %v935, 0.1
  %v1064 = vmul.f32 %v936, 0.1
  %v1065 = vmul.f32 %v937, 0.1
  %v1066 = vmul.f32 %v938, 0.1
  %v1067 = vmul.f32 %v939, 0.1
  %v1068 = vmul.f32 %v940, 0.1
  %v1069 = vmul.f32 %v941, 0.1
  %v1070 = vmul.f32 %v942, 0.1
  %v1071 = vmul.f32 %v943, 0.1
  %v1072 = vmul.f32 %v944, 0.1
  %v1073 = vmul.f32 %v945, 0.1
  %v1074 = vmul.f32 %v946, 0.1
  %v1075 = vmul.f32 %v947, 0.1
  %v1076 = vmul.f32 %v948, 0.1
  %v1077 = vmul.f32 %v949, 0.1
  %v1078 = vmul.f32 %v950, 0.1
  %v1079 = vmul.f32 %v951, 0.1
  %v1080 = vmul.f32 %v952, 0.1
  %v1081 = vmul.f32 %v953, 0.1
  %v1082 = vmul.f32 %v954, 0.1
  %v1083 = vmul.f32 %v955, 0.1
  %v1084 = vmul.f32 %v956, 0.1
  %v1085 = vmul.f32 %v957, 0.1
  %v1086 = vmul.f32 %v958, 0.1
  %v1087 = vmul.f32 %v959, 0.1
  %v1088 = vmul.f32 %v960, 0.1
  %v1089 = vmul.f32 %v961, 0.1
  %v1090 = vmul.f32 %v962, 0.1
  %v1091 = vmul.f32 %v963, 0.1
  %v1092 = vmul.f32 %v964, 0.1
  %v1093 = vmul.f32 %v965, 0.1
  %v1094 = vmul.f32 %v966, 0.1
  %v1095 = vmul.f32 %v967, 0.1
  %v1096 = vmul.f32 %v968, 0.1
  %v1097 = vmul.f32 %v969, 0.1
  %v1098 = vmul.f32 %v970, 0.1
  %v1099 = vmul.f32 %v971, 0.1
  %v1100 = vmul.f32 %v972, 0.1
  %v1101 = vmul.f32 %v973, 0.1
  %v1102 = vmul.f32 %v974, 0.1
  %v1103 = vmul.f32 %v975, 0.1
  %v1104 = vmul.f32 %v976, 0.1
  %v1105 = vmul.f32 %v977, 0.1
  %v1106 = vmul.f32 %v978, 0.1
  %v1107 = vmul.f32 %v979, 0.1
  %v1108 = vmul.f32 %v980, 0.1
  %v1109 = vsel %vm981, %v917, %v1045
  %v1110 = vsel %vm982, %v918, %v1046
  %v1111 = vsel %vm983, %v919, %v1047
  %v1112 = vsel %vm984, %v920, %v1048
  %v1113 = vsel %vm985, %v921, %v1049
  %v1114 = vsel %vm986, %v922, %v1050
  %v1115 = vsel %vm987, %v923, %v1051
  %v1116 = vsel %vm988, %v924, %v1052
  %v1117 = vsel %vm989, %v925, %v1053
  %v1118 = vsel %vm990, %v926, %v1054
  %v1119 = vsel %vm991, %v927, %v1055
  %v1120 = vsel %vm992, %v928, %v1056
  %v1121 = vsel %vm993, %v929, %v1057
  %v1122 = vsel %vm994, %v930, %v1058
  %v1123 = vsel %vm995, %v931, %v1059
  %v1124 = vsel %vm996, %v932, %v1060
  %v1125 = vsel %vm997, %v933, %v1061
  %v1126 = vsel %vm998, %v934, %v1062
  %v1127 = vsel %vm999, %v935, %v1063
  %v1128 = vsel %vm1000, %v936, %v1064
  %v1129 = vsel %vm1001, %v937, %v1065
  %v1130 = vsel %vm1002, %v938, %v1066
  %v1131 = vsel %vm1003, %v939, %v1067
  %v1132 = vsel %vm1004, %v940, %v1068
  %v1133 = vsel %vm1005, %v941, %v1069
  %v1134 = vsel %vm1006, %v942, %v1070
  %v1135 = vsel %vm1007, %v943, %v1071
  %v1136 = vsel %vm1008, %v944, %v1072
  %v1137 = vsel %vm1009, %v945, %v1073
  %v1138 = vsel %vm1010, %v946, %v1074
  %v1139 = vsel %vm1011, %v947, %v1075
  %v1140 = vsel %vm1012, %v948, %v1076
  %v1141 = vsel %vm1013, %v949, %v1077
  %v1142 = vsel %vm1014, %v950, %v1078
  %v1143 = vsel %vm1015, %v951, %v1079
  %v1144 = vsel %vm1016, %v952, %v1080
  %v1145 = vsel %vm1017, %v953, %v1081
  %v1146 = vsel %vm1018, %v954, %v1082
  %v1147 = vsel %vm1019, %v955, %v1083
  %v1148 = vsel %vm1020, %v956, %v1084
  %v1149 = vsel %vm1021, %v957, %v1085
  %v1150 = vsel %vm1022, %v958, %v1086
  %v1151 = vsel %vm1023, %v959, %v1087
  %v1152 = vsel %vm1024, %v960, %v1088
  %v1153 = vsel %vm1025, %v961, %v1089
  %v1154 = vsel %vm1026, %v962, %v1090
  %v1155 = vsel %vm1027, %v963, %v1091
  %v1156 = vsel %vm1028, %v964, %v1092
  %v1157 = vsel %vm1029, %v965, %v1093
  %v1158 = vsel %vm1030, %v966, %v1094
  %v1159 = vsel %vm1031, %v967, %v1095
  %v1160 = vsel %vm1032, %v968, %v1096
  %v1161 = vsel %vm1033, %v969, %v1097
  %v1162 = vsel %vm1034, %v970, %v1098
  %v1163 = vsel %vm1035, %v971, %v1099
  %v1164 = vsel %vm1036, %v972, %v1100
  %v1165 = vsel %vm1037, %v973, %v1101
  %v1166 = vsel %vm1038, %v974, %v1102
  %v1167 = vsel %vm1039, %v975, %v1103
  %v1168 = vsel %vm1040, %v976, %v1104
  %v1169 = vsel %vm1041, %v977, %v1105
  %v1170 = vsel %vm1042, %v978, %v1106
  %v1171 = vsel %vm1043, %v979, %v1107
  %v1172 = vsel %vm1044, %v980, %v1108
  %1173 = vst [vmem:[%s4] sm:$0xff] %v1109
  %1174 = vst [vmem:[%s4 + $0x8] sm:$0xff] %v1110
  %1175 = vst [vmem:[%s4 + $0x10] sm:$0xff] %v1111
  %1176 = vst [vmem:[%s4 + $0x18] sm:$0xff] %v1112
  %1177 = vst [vmem:[%s4 + $0x20] sm:$0xff] %v1113
  %1178 = vst [vmem:[%s4 + $0x28] sm:$0xff] %v1114
  %1179 = vst [vmem:[%s4 + $0x30] sm:$0xff] %v1115
  %1180 = vst [vmem:[%s4 + $0x38] sm:$0xff] %v1116
  %1181 = vst [vmem:[%s4 + $0x40] sm:$0xff] %v1117
  %1182 = vst [vmem:[%s4 + $0x48] sm:$0xff] %v1118
  %1183 = vst [vmem:[%s4 + $0x50] sm:$0xff] %v1119
  %1184 = vst [vmem:[%s4 + $0x58] sm:$0xff] %v1120
  %1185 = vst [vmem:[%s4 + $0x60] sm:$0xff] %v1121
  %1186 = vst [vmem:[%s4 + $0x68] sm:$0xff] %v1122
  %1187 = vst [vmem:[%s4 + $0x70] sm:$0xff] %v1123
  %1188 = vst [vmem:[%s4 + $0x78] sm:$0xff] %v1124
  %1189 = vst [vmem:[%s4 + $0x80] sm:$0xff] %v1125
  %1190 = vst [vmem:[%s4 + $0x88] sm:$0xff] %v1126
  %1191 = vst [vmem:[%s4 + $0x90] sm:$0xff] %v1127
  %1192 = vst [vmem:[%s4 + $0x98] sm:$0xff] %v1128
  %1193 = vst [vmem:[%s4 + $0xa0] sm:$0xff] %v1129
  %1194 = vst [vmem:[%s4 + $0xa8] sm:$0xff] %v1130
  %1195 = vst [vmem:[%s4 + $0xb0] sm:$0xff] %v1131
  %1196 = vst [vmem:[%s4 + $0xb8] sm:$0xff] %v1132
  %1197 = vst [vmem:[%s4 + $0xc0] sm:$0xff] %v1133
  %1198 = vst [vmem:[%s4 + $0xc8] sm:$0xff] %v1134
  %1199 = vst [vmem:[%s4 + $0xd0] sm:$0xff] %v1135
  %1200 = vst [vmem:[%s4 + $0xd8] sm:$0xff] %v1136
  %1201 = vst [vmem:[%s4 + $0xe0] sm:$0xff] %v1137
  %1202 = vst [vmem:[%s4 + $0xe8] sm:$0xff] %v1138
  %1203 = vst [vmem:[%s4 + $0xf0] sm:$0xff] %v1139
  %1204 = vst [vmem:[%s4 + $0xf8] sm:$0xff] %v1140
  %1205 = vst [vmem:[%s4 + $0x100] sm:$0xff] %v1141
  %1206 = vst [vmem:[%s4 + $0x108] sm:$0xff] %v1142
  %1207 = vst [vmem:[%s4 + $0x110] sm:$0xff] %v1143
  %1208 = vst [vmem:[%s4 + $0x118] sm:$0xff] %v1144
  %1209 = vst [vmem:[%s4 + $0x120] sm:$0xff] %v1145
  %1210 = vst [vmem:[%s4 + $0x128] sm:$0xff] %v1146
  %1211 = vst [vmem:[%s4 + $0x130] sm:$0xff] %v1147
  %1212 = vst [vmem:[%s4 + $0x138] sm:$0xff] %v1148
  %1213 = vst [vmem:[%s4 + $0x140] sm:$0xff] %v1149
  %1214 = vst [vmem:[%s4 + $0x148] sm:$0xff] %v1150
  %1215 = vst [vmem:[%s4 + $0x150] sm:$0xff] %v1151
  %1216 = vst [vmem:[%s4 + $0x158] sm:$0xff] %v1152
  %1217 = vst [vmem:[%s4 + $0x160] sm:$0xff] %v1153
  %1218 = vst [vmem:[%s4 + $0x168] sm:$0xff] %v1154
  %1219 = vst [vmem:[%s4 + $0x170] sm:$0xff] %v1155
  %1220 = vst [vmem:[%s4 + $0x178] sm:$0xff] %v1156
  %1221 = vst [vmem:[%s4 + $0x180] sm:$0xff] %v1157
  %1222 = vst [vmem:[%s4 + $0x188] sm:$0xff] %v1158
  %1223 = vst [vmem:[%s4 + $0x190] sm:$0xff] %v1159
  %1224 = vst [vmem:[%s4 + $0x198] sm:$0xff] %v1160
  %1225 = vst [vmem:[%s4 + $0x1a0] sm:$0xff] %v1161
  %1226 = vst [vmem:[%s4 + $0x1a8] sm:$0xff] %v1162
  %1227 = vst [vmem:[%s4 + $0x1b0] sm:$0xff] %v1163
  %1228 = vst [vmem:[%s4 + $0x1b8] sm:$0xff] %v1164
  %1229 = vst [vmem:[%s4 + $0x1c0] sm:$0xff] %v1165
  %1230 = vst [vmem:[%s4 + $0x1c8] sm:$0xff] %v1166
  %1231 = vst [vmem:[%s4 + $0x1d0] sm:$0xff] %v1167
  %1232 = vst [vmem:[%s4 + $0x1d8] sm:$0xff] %v1168
  %1233 = vst [vmem:[%s4 + $0x1e0] sm:$0xff] %v1169
  %1234 = vst [vmem:[%s4 + $0x1e8] sm:$0xff] %v1170
  %1235 = vst [vmem:[%s4 + $0x1f0] sm:$0xff] %v1171
  %1236 = vst [vmem:[%s4 + $0x1f8] sm:$0xff] %v1172
  // Predicated region
  $region18: #{darknet_forward.10} parent=0 // pred_check
    _
  $region19: #{darknet_forward.10} parent=0 // pred_check_branch
    %1238 = sbr.rel (0) target = $region21
  $region20: #{darknet_forward.10} parent=0 // pred_region
    _
  $region21: #{darknet_forward.10} parent=0 // pred_fallthru
    _
  // Predicated region
  $region22: #{darknet_forward.10} parent=0 // pred_check
    _
  $region23: #{darknet_forward.10} parent=0 // pred_check_branch
    %1240 = sbr.rel (0) target = $region25
  $region24: #{darknet_forward.10} parent=0 // pred_region
    _
  $region25: #{darknet_forward.10} parent=0 // pred_fallthru
    _

// kernel: darknet_forward.12
$region0: #{darknet_forward.12}
  #allocation0 [shape = 'u32[]', space=smem, size = 0x4, offset = 0x4, fixed_abs, tag = 'smem constant byte address 0x4 - core index']
  #allocation1 [shape = 'u32[144,128]{1,0:T(1,128)}', space=vmem, size = 0x12000, scoped, tag = 'internal scratch']
  %s0 = inlined_call_operand.vmem [shape: bf16[512,128], index: 0, kind: input, shape index: {}]
  %s1 = inlined_call_operand.vmem [shape: bf16[128,128], index: 1, kind: input, shape index: {}]
  %s2 = inlined_call_operand.vmem [shape: f32[1,128], index: 2, kind: input, shape index: {}]
  %s3 = inlined_call_operand.vmem [shape: f32[1,128], index: 3, kind: input, shape index: {}]
  %s4 = inlined_call_operand.vmem [shape: f32[512,128], index: 4, kind: input, shape index: {}]
  %s5 = inlined_call_operand.vmem [shape: f32[512,128], index: 5, kind: output, shape index: {}]
  %s6 = sld [smem:[#allocation0]]
  $region30: #{darknet_forward.12} parent=0
    _
  %s8 = ssub.s32 1, %s6
  %s9 = scalar_select 0, %s8, %s6
  // Predicated region
  $region2: #{darknet_forward.12} parent=0 // pred_check
    _
  $region3: #{darknet_forward.12} parent=0 // pred_check_branch
    %11 = sbr.rel (0) target = $region5
  $region4: #{darknet_forward.12} parent=0 // pred_region
    _
  $region5: #{darknet_forward.12} parent=0 // pred_fallthru
    _
  // Predicated region
  $region6: #{darknet_forward.12} parent=0 // pred_check
    _
  $region7: #{darknet_forward.12} parent=0 // pred_check_branch
    %13 = sbr.rel (0) target = $region9
  $region8: #{darknet_forward.12} parent=0 // pred_region
    _
  $region9: #{darknet_forward.12} parent=0 // pred_fallthru
    _
  // Predicated region
  $region10: #{darknet_forward.12} parent=0 // pred_check
    _
  $region11: #{darknet_forward.12} parent=0 // pred_check_branch
    %15 = sbr.rel (0) target = $region13
  $region12: #{darknet_forward.12} parent=0 // pred_region
    _
  $region13: #{darknet_forward.12} parent=0 // pred_fallthru
    _
  // Predicated region
  $region14: #{darknet_forward.12} parent=0 // pred_check
    _
  $region15: #{darknet_forward.12} parent=0 // pred_check_branch
    %17 = sbr.rel (0) target = $region17
  $region16: #{darknet_forward.12} parent=0 // pred_region
    _
  $region17: #{darknet_forward.12} parent=0 // pred_fallthru
    _
  // Predicated region
  $region18: #{darknet_forward.12} parent=0 // pred_check
    _
  $region19: #{darknet_forward.12} parent=0 // pred_check_branch
    %19 = sbr.rel (0) target = $region21
  $region20: #{darknet_forward.12} parent=0 // pred_region
    _
  $region21: #{darknet_forward.12} parent=0 // pred_fallthru
    _
  %v21 = vld [vmem:[%s0] sm:$0xf]
  %v22 = vld [vmem:[%s0 + $0x4] sm:$0xf]
  %v23 = vld [vmem:[%s0 + $0x8] sm:$0xf]
  %v24 = vld [vmem:[%s0 + $0xc] sm:$0xf]
  %v25 = vld [vmem:[%s0 + $0x10] sm:$0xf]
  %v26 = vld [vmem:[%s0 + $0x14] sm:$0xf]
  %v27 = vld [vmem:[%s0 + $0x18] sm:$0xf]
  %v28 = vld [vmem:[%s0 + $0x1c] sm:$0xf]
  %v29 = vld [vmem:[%s0 + $0x20] sm:$0xf]
  %v30 = vld [vmem:[%s0 + $0x24] sm:$0xf]
  %v31 = vld [vmem:[%s0 + $0x28] sm:$0xf]
  %v32 = vld [vmem:[%s0 + $0x2c] sm:$0xf]
  %v33 = vld [vmem:[%s0 + $0x30] sm:$0xf]
  %v34 = vld [vmem:[%s0 + $0x34] sm:$0xf]
  %v35 = vld [vmem:[%s0 + $0x38] sm:$0xf]
  %v36 = vld [vmem:[%s0 + $0x3c] sm:$0xf]
  %v37 = vld [vmem:[%s0 + $0x40] sm:$0xf]
  %v38 = vld [vmem:[%s0 + $0x44] sm:$0xf]
  %v39 = vld [vmem:[%s0 + $0x48] sm:$0xf]
  %v40 = vld [vmem:[%s0 + $0x4c] sm:$0xf]
  %v41 = vld [vmem:[%s0 + $0x50] sm:$0xf]
  %v42 = vld [vmem:[%s0 + $0x54] sm:$0xf]
  %v43 = vld [vmem:[%s0 + $0x58] sm:$0xf]
  %v44 = vld [vmem:[%s0 + $0x5c] sm:$0xf]
  %v45 = vld [vmem:[%s0 + $0x60] sm:$0xf]
  %v46 = vld [vmem:[%s0 + $0x64] sm:$0xf]
  %v47 = vld [vmem:[%s0 + $0x68] sm:$0xf]
  %v48 = vld [vmem:[%s0 + $0x6c] sm:$0xf]
  %v49 = vld [vmem:[%s0 + $0x70] sm:$0xf]
  %v50 = vld [vmem:[%s0 + $0x74] sm:$0xf]
  %v51 = vld [vmem:[%s0 + $0x78] sm:$0xf]
  %v52 = vld [vmem:[%s0 + $0x7c] sm:$0xf]
  %v53 = vld [vmem:[%s0 + $0x80] sm:$0xf]
  %v54 = vld [vmem:[%s0 + $0x84] sm:$0xf]
  %v55 = vld [vmem:[%s0 + $0x88] sm:$0xf]
  %v56 = vld [vmem:[%s0 + $0x8c] sm:$0xf]
  %v57 = vld [vmem:[%s0 + $0x90] sm:$0xf]
  %v58 = vld [vmem:[%s0 + $0x94] sm:$0xf]
  %v59 = vld [vmem:[%s0 + $0x98] sm:$0xf]
  %v60 = vld [vmem:[%s0 + $0x9c] sm:$0xf]
  %v61 = vld [vmem:[%s0 + $0xa0] sm:$0xf]
  %v62 = vld [vmem:[%s0 + $0xa4] sm:$0xf]
  %v63 = vld [vmem:[%s0 + $0xa8] sm:$0xf]
  %v64 = vld [vmem:[%s0 + $0xac] sm:$0xf]
  %v65 = vld [vmem:[%s0 + $0xb0] sm:$0xf]
  %v66 = vld [vmem:[%s0 + $0xb4] sm:$0xf]
  %v67 = vld [vmem:[%s0 + $0xb8] sm:$0xf]
  %v68 = vld [vmem:[%s0 + $0xbc] sm:$0xf]
  %v69 = vld [vmem:[%s0 + $0xc0] sm:$0xf]
  %v70 = vld [vmem:[%s0 + $0xc4] sm:$0xf]
  %v71 = vld [vmem:[%s0 + $0xc8] sm:$0xf]
  %v72 = vld [vmem:[%s0 + $0xcc] sm:$0xf]
  %v73 = vld [vmem:[%s0 + $0xd0] sm:$0xf]
  %v74 = vld [vmem:[%s0 + $0xd4] sm:$0xf]
  %v75 = vld [vmem:[%s0 + $0xd8] sm:$0xf]
  %v76 = vld [vmem:[%s0 + $0xdc] sm:$0xf]
  %v77 = vld [vmem:[%s0 + $0xe0] sm:$0xf]
  %v78 = vld [vmem:[%s0 + $0xe4] sm:$0xf]
  %v79 = vld [vmem:[%s0 + $0xe8] sm:$0xf]
  %v80 = vld [vmem:[%s0 + $0xec] sm:$0xf]
  %v81 = vld [vmem:[%s0 + $0xf0] sm:$0xf]
  %v82 = vld [vmem:[%s0 + $0xf4] sm:$0xf]
  %v83 = vld [vmem:[%s0 + $0xf8] sm:$0xf]
  %v84 = vld [vmem:[%s0 + $0xfc] sm:$0xf]
  %v85 = vld [vmem:[%s1] sm:$0xf]
  %v86 = vld [vmem:[%s1 + $0x4] sm:$0xf]
  %v87 = vld [vmem:[%s1 + $0x8] sm:$0xf]
  %v88 = vld [vmem:[%s1 + $0xc] sm:$0xf]
  %v89 = vld [vmem:[%s1 + $0x10] sm:$0xf]
  %v90 = vld [vmem:[%s1 + $0x14] sm:$0xf]
  %v91 = vld [vmem:[%s1 + $0x18] sm:$0xf]
  %v92 = vld [vmem:[%s1 + $0x1c] sm:$0xf]
  %v93 = vld [vmem:[%s1 + $0x20] sm:$0xf]
  %v94 = vld [vmem:[%s1 + $0x24] sm:$0xf]
  %v95 = vld [vmem:[%s1 + $0x28] sm:$0xf]
  %v96 = vld [vmem:[%s1 + $0x2c] sm:$0xf]
  %v97 = vld [vmem:[%s1 + $0x30] sm:$0xf]
  %v98 = vld [vmem:[%s1 + $0x34] sm:$0xf]
  %v99 = vld [vmem:[%s1 + $0x38] sm:$0xf]
  %v100 = vld [vmem:[%s1 + $0x3c] sm:$0xf]
  %v165 = vunpack.c.l.b16 %v21
  %v166 = vunpack.c.l.b16 %v22
  %v167 = vunpack.c.l.b16 %v23
  %v168 = vunpack.c.l.b16 %v24
  %v169 = vunpack.c.l.b16 %v25
  %v170 = vunpack.c.l.b16 %v26
  %v171 = vunpack.c.l.b16 %v27
  %v172 = vunpack.c.l.b16 %v28
  %v173 = vunpack.c.l.b16 %v29
  %v174 = vunpack.c.l.b16 %v30
  %v175 = vunpack.c.l.b16 %v31
  %v176 = vunpack.c.l.b16 %v32
  %v177 = vunpack.c.l.b16 %v33
  %v178 = vunpack.c.l.b16 %v34
  %v179 = vunpack.c.l.b16 %v35
  %v180 = vunpack.c.l.b16 %v36
  %v181 = vunpack.c.l.b16 %v37
  %v182 = vunpack.c.l.b16 %v38
  %v183 = vunpack.c.l.b16 %v39
  %v184 = vunpack.c.l.b16 %v40
  %v185 = vunpack.c.l.b16 %v41
  %v186 = vunpack.c.l.b16 %v42
  %v187 = vunpack.c.l.b16 %v43
  %v188 = vunpack.c.l.b16 %v44
  %v189 = vunpack.c.l.b16 %v45
  %v190 = vunpack.c.l.b16 %v46
  %v191 = vunpack.c.l.b16 %v47
  %v192 = vunpack.c.l.b16 %v48
  %v193 = vunpack.c.l.b16 %v49
  %v194 = vunpack.c.l.b16 %v50
  %v195 = vunpack.c.l.b16 %v51
  %v196 = vunpack.c.l.b16 %v52
  %v197 = vunpack.c.l.b16 %v53
  %v198 = vunpack.c.l.b16 %v54
  %v199 = vunpack.c.l.b16 %v55
  %v200 = vunpack.c.l.b16 %v56
  %v201 = vunpack.c.l.b16 %v57
  %v202 = vunpack.c.l.b16 %v58
  %v203 = vunpack.c.l.b16 %v59
  %v204 = vunpack.c.l.b16 %v60
  %v205 = vunpack.c.l.b16 %v61
  %v206 = vunpack.c.l.b16 %v62
  %v207 = vunpack.c.l.b16 %v63
  %v208 = vunpack.c.l.b16 %v64
  %v209 = vunpack.c.l.b16 %v65
  %v210 = vunpack.c.l.b16 %v66
  %v211 = vunpack.c.l.b16 %v67
  %v212 = vunpack.c.l.b16 %v68
  %v213 = vunpack.c.l.b16 %v69
  %v214 = vunpack.c.l.b16 %v70
  %v215 = vunpack.c.l.b16 %v71
  %v216 = vunpack.c.l.b16 %v72
  %v217 = vunpack.c.l.b16 %v73
  %v218 = vunpack.c.l.b16 %v74
  %v219 = vunpack.c.l.b16 %v75
  %v220 = vunpack.c.l.b16 %v76
  %v221 = vunpack.c.l.b16 %v77
  %v222 = vunpack.c.l.b16 %v78
  %v223 = vunpack.c.l.b16 %v79
  %v224 = vunpack.c.l.b16 %v80
  %v225 = vunpack.c.l.b16 %v81
  %v226 = vunpack.c.l.b16 %v82
  %v227 = vunpack.c.l.b16 %v83
  %v228 = vunpack.c.l.b16 %v84
  %v229 = vpack.c.b16 %v166, %v165
  %v230 = vpack.c.b16 %v168, %v167
  %v231 = vpack.c.b16 %v170, %v169
  %v232 = vpack.c.b16 %v172, %v171
  %v233 = vpack.c.b16 %v174, %v173
  %v234 = vpack.c.b16 %v176, %v175
  %v235 = vpack.c.b16 %v178, %v177
  %v236 = vpack.c.b16 %v180, %v179
  %v237 = vpack.c.b16 %v182, %v181
  %v238 = vpack.c.b16 %v184, %v183
  %v239 = vpack.c.b16 %v186, %v185
  %v240 = vpack.c.b16 %v188, %v187
  %v241 = vpack.c.b16 %v190, %v189
  %v242 = vpack.c.b16 %v192, %v191
  %v243 = vpack.c.b16 %v194, %v193
  %v244 = vpack.c.b16 %v196, %v195
  %v245 = vpack.c.b16 %v198, %v197
  %v246 = vpack.c.b16 %v200, %v199
  %v247 = vpack.c.b16 %v202, %v201
  %v248 = vpack.c.b16 %v204, %v203
  %v249 = vpack.c.b16 %v206, %v205
  %v250 = vpack.c.b16 %v208, %v207
  %v251 = vpack.c.b16 %v210, %v209
  %v252 = vpack.c.b16 %v212, %v211
  %v253 = vpack.c.b16 %v214, %v213
  %v254 = vpack.c.b16 %v216, %v215
  %v255 = vpack.c.b16 %v218, %v217
  %v256 = vpack.c.b16 %v220, %v219
  %v257 = vpack.c.b16 %v222, %v221
  %v258 = vpack.c.b16 %v224, %v223
  %v259 = vpack.c.b16 %v226, %v225
  %v260 = vpack.c.b16 %v228, %v227
  %v309 = vunpack.c.l.b16 %v85
  %v310 = vunpack.c.l.b16 %v86
  %v311 = vunpack.c.l.b16 %v87
  %v312 = vunpack.c.l.b16 %v88
  %v313 = vunpack.c.l.b16 %v89
  %v314 = vunpack.c.l.b16 %v90
  %v315 = vunpack.c.l.b16 %v91
  %v316 = vunpack.c.l.b16 %v92
  %v317 = vunpack.c.l.b16 %v93
  %v318 = vunpack.c.l.b16 %v94
  %v319 = vunpack.c.l.b16 %v95
  %v320 = vunpack.c.l.b16 %v96
  %v321 = vunpack.c.l.b16 %v97
  %v322 = vunpack.c.l.b16 %v98
  %v323 = vunpack.c.l.b16 %v99
  %v324 = vunpack.c.l.b16 %v100
  %v325 = vpack.c.b16 %v310, %v309
  %v326 = vpack.c.b16 %v312, %v311
  %v327 = vpack.c.b16 %v314, %v313
  %v328 = vpack.c.b16 %v316, %v315
  %v329 = vpack.c.b16 %v318, %v317
  %v330 = vpack.c.b16 %v320, %v319
  %v331 = vpack.c.b16 %v322, %v321
  %v332 = vpack.c.b16 %v324, %v323
  %341 = vmatprep.subr.bf16.mxu0 0
  %342 = vmatpush1.bf16.msra.mxu0 %v325
  %343 = vmatprep.subr.bf16.mxu0 0
  %344 = vmatpush1.bf16.msra.mxu0 %v326
  %345 = vmatprep.subr.bf16.mxu0 0
  %346 = vmatpush1.bf16.msra.mxu0 %v327
  %347 = vmatprep.subr.bf16.mxu0 0
  %348 = vmatpush1.bf16.msra.mxu0 %v328
  %349 = vmatprep.subr.bf16.mxu0 0
  %350 = vmatpush1.bf16.msra.mxu0 %v329
  %351 = vmatprep.subr.bf16.mxu0 0
  %352 = vmatpush1.bf16.msra.mxu0 %v330
  %353 = vmatprep.subr.bf16.mxu0 0
  %354 = vmatpush1.bf16.msra.mxu0 %v331
  %355 = vmatprep.subr.bf16.mxu0 0
  %356 = vmatpush1.bf16.msra.mxu0 %v332
  %357 = vmatprep.subr.bf16.mxu0 0
  %358 = vmatpush1.bf16.msra.mxu0 0
  %359 = vmatprep.subr.bf16.mxu0 0
  %360 = vmatpush1.bf16.msra.mxu0 0
  %361 = vmatprep.subr.bf16.mxu0 0
  %362 = vmatpush1.bf16.msra.mxu0 0
  %363 = vmatprep.subr.bf16.mxu0 0
  %364 = vmatpush1.bf16.msra.mxu0 0
  %365 = vmatprep.subr.bf16.mxu0 0
  %366 = vmatpush1.bf16.msra.mxu0 0
  %367 = vmatprep.subr.bf16.mxu0 0
  %368 = vmatpush1.bf16.msra.mxu0 0
  %369 = vmatprep.subr.bf16.mxu0 0
  %370 = vmatpush1.bf16.msra.mxu0 0
  %371 = vmatprep.subr.bf16.mxu0 0
  %372 = vmatpush1.bf16.msra.mxu0 0
  %373 = vmatprep.mubr.bf16.mxu0 0
  %374 = vmatmul.mubr.bf16.gmra.mrb[0].mxu0 %v229
  %v375 = vpop.f32.mrb[0].mxu0
  %v376 = vadd.f32 0.0, %v375
  %v377 = vpop.f32.mrb[0].mxu0
  %v378 = vpop.f32.mrb[0].mxu0
  %v379 = vadd.f32 0.0, %v378
  %v380 = vpop.f32.mrb[0].mxu0
  %381 = vmatprep.mubr.bf16.mxu0 0
  %382 = vmatmul.mubr.bf16.gmra.mrb[0].mxu0 %v230
  %v383 = vpop.f32.mrb[0].mxu0
  %v384 = vadd.f32 0.0, %v383
  %v385 = vpop.f32.mrb[0].mxu0
  %v386 = vpop.f32.mrb[0].mxu0
  %v387 = vadd.f32 0.0, %v386
  %v388 = vpop.f32.mrb[0].mxu0
  %389 = vmatprep.mubr.bf16.mxu0 0
  %390 = vmatmul.mubr.bf16.gmra.mrb[0].mxu0 %v231
  %v391 = vpop.f32.mrb[0].mxu0
  %v392 = vadd.f32 0.0, %v391
  %v393 = vpop.f32.mrb[0].mxu0
  %v394 = vpop.f32.mrb[0].mxu0
  %v395 = vadd.f32 0.0, %v394
  %v396 = vpop.f32.mrb[0].mxu0
  %397 = vmatprep.mubr.bf16.mxu0 0
  %398 = vmatmul.mubr.bf16.gmra.mrb[0].mxu0 %v232
  %v399 = vpop.f32.mrb[0].mxu0
  %v400 = vadd.f32 0.0, %v399
  %v401 = vpop.f32.mrb[0].mxu0
  %v402 = vpop.f32.mrb[0].mxu0
  %v403 = vadd.f32 0.0, %v402
  %v404 = vpop.f32.mrb[0].mxu0
  %405 = vmatprep.mubr.bf16.mxu0 0
  %406 = vmatmul.mubr.bf16.gmra.mrb[0].mxu0 %v233
  %v407 = vpop.f32.mrb[0].mxu0
  %v408 = vadd.f32 0.0, %v407
  %v409 = vpop.f32.mrb[0].mxu0
  %v410 = vpop.f32.mrb[0].mxu0
  %v411 = vadd.f32 0.0, %v410
  %v412 = vpop.f32.mrb[0].mxu0
  %413 = vmatprep.mubr.bf16.mxu0 0
  %414 = vmatmul.mubr.bf16.gmra.mrb[0].mxu0 %v234
  %v415 = vpop.f32.mrb[0].mxu0
  %v416 = vadd.f32 0.0, %v415
  %v417 = vpop.f32.mrb[0].mxu0
  %v418 = vpop.f32.mrb[0].mxu0
  %v419 = vadd.f32 0.0, %v418
  %v420 = vpop.f32.mrb[0].mxu0
  %421 = vmatprep.mubr.bf16.mxu0 0
  %422 = vmatmul.mubr.bf16.gmra.mrb[0].mxu0 %v235
  %v423 = vpop.f32.mrb[0].mxu0
  %v424 = vadd.f32 0.0, %v423
  %v425 = vpop.f32.mrb[0].mxu0
  %v426 = vpop.f32.mrb[0].mxu0
  %v427 = vadd.f32 0.0, %v426
  %v428 = vpop.f32.mrb[0].mxu0
  %429 = vmatprep.mubr.bf16.mxu0 0
  %430 = vmatmul.mubr.bf16.gmra.mrb[0].mxu0 %v236
  %v431 = vpop.f32.mrb[0].mxu0
  %v432 = vadd.f32 0.0, %v431
  %v433 = vpop.f32.mrb[0].mxu0
  %v434 = vpop.f32.mrb[0].mxu0
  %v435 = vadd.f32 0.0, %v434
  %v436 = vpop.f32.mrb[0].mxu0
  %437 = vmatprep.mubr.bf16.mxu0 0
  %438 = vmatmul.mubr.bf16.gmra.mrb[0].mxu0 %v237
  %v439 = vpop.f32.mrb[0].mxu0
  %v440 = vadd.f32 0.0, %v439
  %v441 = vpop.f32.mrb[0].mxu0
  %v442 = vpop.f32.mrb[0].mxu0
  %v443 = vadd.f32 0.0, %v442
  %v444 = vpop.f32.mrb[0].mxu0
  %445 = vmatprep.mubr.bf16.mxu0 0
  %446 = vmatmul.mubr.bf16.gmra.mrb[0].mxu0 %v238
  %v447 = vpop.f32.mrb[0].mxu0
  %v448 = vadd.f32 0.0, %v447
  %v449 = vpop.f32.mrb[0].mxu0
  %v450 = vpop.f32.mrb[0].mxu0
  %v451 = vadd.f32 0.0, %v450
  %v452 = vpop.f32.mrb[0].mxu0
  %453 = vmatprep.mubr.bf16.mxu0 0
  %454 = vmatmul.mubr.bf16.gmra.mrb[0].mxu0 %v239
  %v455 = vpop.f32.mrb[0].mxu0
  %v456 = vadd.f32 0.0, %v455
  %v457 = vpop.f32.mrb[0].mxu0
  %v458 = vpop.f32.mrb[0].mxu0
  %v459 = vadd.f32 0.0, %v458
  %v460 = vpop.f32.mrb[0].mxu0
  %461 = vmatprep.mubr.bf16.mxu0 0
  %462 = vmatmul.mubr.bf16.gmra.mrb[0].mxu0 %v240
  %v463 = vpop.f32.mrb[0].mxu0
  %v464 = vadd.f32 0.0, %v463
  %v465 = vpop.f32.mrb[0].mxu0
  %v466 = vpop.f32.mrb[0].mxu0
  %v467 = vadd.f32 0.0, %v466
  %v468 = vpop.f32.mrb[0].mxu0
  %469 = vmatprep.mubr.bf16.mxu0 0
  %470 = vmatmul.mubr.bf16.gmra.mrb[0].mxu0 %v241
  %v471 = vpop.f32.mrb[0].mxu0
  %v472 = vadd.f32 0.0, %v471
  %v473 = vpop.f32.mrb[0].mxu0
  %v474 = vpop.f32.mrb[0].mxu0
  %v475 = vadd.f32 0.0, %v474
  %v476 = vpop.f32.mrb[0].mxu0
  %477 = vmatprep.mubr.bf16.mxu0 0
  %478 = vmatmul.mubr.bf16.gmra.mrb[0].mxu0 %v242
  %v479 = vpop.f32.mrb[0].mxu0
  %v480 = vadd.f32 0.0, %v479
  %v481 = vpop.f32.mrb[0].mxu0
  %v482 = vpop.f32.mrb[0].mxu0
  %v483 = vadd.f32 0.0, %v482
  %v484 = vpop.f32.mrb[0].mxu0
  %485 = vmatprep.mubr.bf16.mxu0 0
  %486 = vmatmul.mubr.bf16.gmra.mrb[0].mxu0 %v243
  %v487 = vpop.f32.mrb[0].mxu0
  %v488 = vadd.f32 0.0, %v487
  %v489 = vpop.f32.mrb[0].mxu0
  %v490 = vpop.f32.mrb[0].mxu0
  %v491 = vadd.f32 0.0, %v490
  %v492 = vpop.f32.mrb[0].mxu0
  %493 = vmatprep.mubr.bf16.mxu0 0
  %494 = vmatmul.mubr.bf16.gmra.mrb[0].mxu0 %v244
  %v495 = vpop.f32.mrb[0].mxu0
  %v496 = vadd.f32 0.0, %v495
  %v497 = vpop.f32.mrb[0].mxu0
  %v498 = vpop.f32.mrb[0].mxu0
  %v499 = vadd.f32 0.0, %v498
  %v500 = vpop.f32.mrb[0].mxu0
  %501 = vmatprep.mubr.bf16.mxu0 0
  %502 = vmatmul.mubr.bf16.gmra.mrb[0].mxu0 %v245
  %v503 = vpop.f32.mrb[0].mxu0
  %v504 = vadd.f32 0.0, %v503
  %v505 = vpop.f32.mrb[0].mxu0
  %v506 = vpop.f32.mrb[0].mxu0
  %v507 = vadd.f32 0.0, %v506
  %v508 = vpop.f32.mrb[0].mxu0
  %509 = vmatprep.mubr.bf16.mxu0 0
  %510 = vmatmul.mubr.bf16.gmra.mrb[0].mxu0 %v246
  %v511 = vpop.f32.mrb[0].mxu0
  %v512 = vadd.f32 0.0, %v511
  %v513 = vpop.f32.mrb[0].mxu0
  %v514 = vpop.f32.mrb[0].mxu0
  %v515 = vadd.f32 0.0, %v514
  %v516 = vpop.f32.mrb[0].mxu0
  %517 = vmatprep.mubr.bf16.mxu0 0
  %518 = vmatmul.mubr.bf16.gmra.mrb[0].mxu0 %v247
  %v519 = vpop.f32.mrb[0].mxu0
  %v520 = vadd.f32 0.0, %v519
  %v521 = vpop.f32.mrb[0].mxu0
  %v522 = vpop.f32.mrb[0].mxu0
  %v523 = vadd.f32 0.0, %v522
  %v524 = vpop.f32.mrb[0].mxu0
  %525 = vmatprep.mubr.bf16.mxu0 0
  %526 = vmatmul.mubr.bf16.gmra.mrb[0].mxu0 %v248
  %v527 = vpop.f32.mrb[0].mxu0
  %v528 = vadd.f32 0.0, %v527
  %v529 = vpop.f32.mrb[0].mxu0
  %v530 = vpop.f32.mrb[0].mxu0
  %v531 = vadd.f32 0.0, %v530
  %v532 = vpop.f32.mrb[0].mxu0
  %533 = vmatprep.mubr.bf16.mxu0 0
  %534 = vmatmul.mubr.bf16.gmra.mrb[0].mxu0 %v249
  %v535 = vpop.f32.mrb[0].mxu0
  %v536 = vadd.f32 0.0, %v535
  %v537 = vpop.f32.mrb[0].mxu0
  %v538 = vpop.f32.mrb[0].mxu0
  %v539 = vadd.f32 0.0, %v538
  %v540 = vpop.f32.mrb[0].mxu0
  %541 = vmatprep.mubr.bf16.mxu0 0
  %542 = vmatmul.mubr.bf16.gmra.mrb[0].mxu0 %v250
  %v543 = vpop.f32.mrb[0].mxu0
  %v544 = vadd.f32 0.0, %v543
  %v545 = vpop.f32.mrb[0].mxu0
  %v546 = vpop.f32.mrb[0].mxu0
  %v547 = vadd.f32 0.0, %v546
  %v548 = vpop.f32.mrb[0].mxu0
  %549 = vmatprep.mubr.bf16.mxu0 0
  %550 = vmatmul.mubr.bf16.gmra.mrb[0].mxu0 %v251
  %v551 = vpop.f32.mrb[0].mxu0
  %v552 = vadd.f32 0.0, %v551
  %v553 = vpop.f32.mrb[0].mxu0
  %v554 = vpop.f32.mrb[0].mxu0
  %v555 = vadd.f32 0.0, %v554
  %v556 = vpop.f32.mrb[0].mxu0
  %557 = vmatprep.mubr.bf16.mxu0 0
  %558 = vmatmul.mubr.bf16.gmra.mrb[0].mxu0 %v252
  %v559 = vpop.f32.mrb[0].mxu0
  %v560 = vadd.f32 0.0, %v559
  %v561 = vpop.f32.mrb[0].mxu0
  %v562 = vpop.f32.mrb[0].mxu0
  %v563 = vadd.f32 0.0, %v562
  %v564 = vpop.f32.mrb[0].mxu0
  %565 = vmatprep.mubr.bf16.mxu0 0
  %566 = vmatmul.mubr.bf16.gmra.mrb[0].mxu0 %v253
  %v567 = vpop.f32.mrb[0].mxu0
  %v568 = vadd.f32 0.0, %v567
  %v569 = vpop.f32.mrb[0].mxu0
  %v570 = vpop.f32.mrb[0].mxu0
  %v571 = vadd.f32 0.0, %v570
  %v572 = vpop.f32.mrb[0].mxu0
  %573 = vmatprep.mubr.bf16.mxu0 0
  %574 = vmatmul.mubr.bf16.gmra.mrb[0].mxu0 %v254
  %v575 = vpop.f32.mrb[0].mxu0
  %v576 = vadd.f32 0.0, %v575
  %v577 = vpop.f32.mrb[0].mxu0
  %v578 = vpop.f32.mrb[0].mxu0
  %v579 = vadd.f32 0.0, %v578
  %v580 = vpop.f32.mrb[0].mxu0
  %581 = vmatprep.mubr.bf16.mxu0 0
  %582 = vmatmul.mubr.bf16.gmra.mrb[0].mxu0 %v255
  %v583 = vpop.f32.mrb[0].mxu0
  %v584 = vadd.f32 0.0, %v583
  %v585 = vpop.f32.mrb[0].mxu0
  %v586 = vpop.f32.mrb[0].mxu0
  %v587 = vadd.f32 0.0, %v586
  %v588 = vpop.f32.mrb[0].mxu0
  %589 = vmatprep.mubr.bf16.mxu0 0
  %590 = vmatmul.mubr.bf16.gmra.mrb[0].mxu0 %v256
  %v591 = vpop.f32.mrb[0].mxu0
  %v592 = vadd.f32 0.0, %v591
  %v593 = vpop.f32.mrb[0].mxu0
  %v594 = vpop.f32.mrb[0].mxu0
  %v595 = vadd.f32 0.0, %v594
  %v596 = vpop.f32.mrb[0].mxu0
  %597 = vmatprep.mubr.bf16.mxu0 0
  %598 = vmatmul.mubr.bf16.gmra.mrb[0].mxu0 %v257
  %v599 = vpop.f32.mrb[0].mxu0
  %v600 = vadd.f32 0.0, %v599
  %v601 = vpop.f32.mrb[0].mxu0
  %v602 = vpop.f32.mrb[0].mxu0
  %v603 = vadd.f32 0.0, %v602
  %v604 = vpop.f32.mrb[0].mxu0
  %605 = vmatprep.mubr.bf16.mxu0 0
  %606 = vmatmul.mubr.bf16.gmra.mrb[0].mxu0 %v258
  %v607 = vpop.f32.mrb[0].mxu0
  %v608 = vadd.f32 0.0, %v607
  %v609 = vpop.f32.mrb[0].mxu0
  %v610 = vpop.f32.mrb[0].mxu0
  %v611 = vadd.f32 0.0, %v610
  %v612 = vpop.f32.mrb[0].mxu0
  %613 = vmatprep.mubr.bf16.mxu0 0
  %614 = vmatmul.mubr.bf16.gmra.mrb[0].mxu0 %v259
  %v615 = vpop.f32.mrb[0].mxu0
  %v616 = vadd.f32 0.0, %v615
  %v617 = vpop.f32.mrb[0].mxu0
  %v618 = vpop.f32.mrb[0].mxu0
  %v619 = vadd.f32 0.0, %v618
  %v620 = vpop.f32.mrb[0].mxu0
  %621 = vmatprep.mubr.bf16.mxu0 0
  %622 = vmatmul.mubr.bf16.gmra.mrb[0].mxu0 %v260
  %v623 = vpop.f32.mrb[0].mxu0
  %v624 = vadd.f32 0.0, %v623
  %v625 = vpop.f32.mrb[0].mxu0
  %v626 = vpop.f32.mrb[0].mxu0
  %v627 = vadd.f32 0.0, %v626
  %v628 = vpop.f32.mrb[0].mxu0
  %629 = vdwg.mxu0
  %v630 = vadd.f32 %v376, %v379
  %v631 = vadd.f32 %v630, %v384
  %v632 = vadd.f32 %v631, %v387
  %v633 = vadd.f32 %v632, %v392
  %v634 = vadd.f32 %v633, %v395
  %v635 = vadd.f32 %v634, %v400
  %v636 = vadd.f32 %v635, %v403
  %v637 = vadd.f32 %v636, %v408
  %v638 = vadd.f32 %v637, %v411
  %v639 = vadd.f32 %v638, %v416
  %v640 = vadd.f32 %v639, %v419
  %v641 = vadd.f32 %v640, %v424
  %v642 = vadd.f32 %v641, %v427
  %v643 = vadd.f32 %v642, %v432
  %v644 = vadd.f32 %v643, %v435
  %v645 = vadd.f32 %v644, %v440
  %v646 = vadd.f32 %v645, %v443
  %v647 = vadd.f32 %v646, %v448
  %v648 = vadd.f32 %v647, %v451
  %v649 = vadd.f32 %v648, %v456
  %v650 = vadd.f32 %v649, %v459
  %v651 = vadd.f32 %v650, %v464
  %v652 = vadd.f32 %v651, %v467
  %v653 = vadd.f32 %v652, %v472
  %v654 = vadd.f32 %v653, %v475
  %v655 = vadd.f32 %v654, %v480
  %v656 = vadd.f32 %v655, %v483
  %v657 = vadd.f32 %v656, %v488
  %v658 = vadd.f32 %v657, %v491
  %v659 = vadd.f32 %v658, %v496
  %v660 = vadd.f32 %v659, %v499
  %v661 = vadd.f32 %v660, %v504
  %v662 = vadd.f32 %v661, %v507
  %v663 = vadd.f32 %v662, %v512
  %v664 = vadd.f32 %v663, %v515
  %v665 = vadd.f32 %v664, %v520
  %v666 = vadd.f32 %v665, %v523
  %v667 = vadd.f32 %v666, %v528
  %v668 = vadd.f32 %v667, %v531
  %v669 = vadd.f32 %v668, %v536
  %v670 = vadd.f32 %v669, %v539
  %v671 = vadd.f32 %v670, %v544
  %v672 = vadd.f32 %v671, %v547
  %v673 = vadd.f32 %v672, %v552
  %v674 = vadd.f32 %v673, %v555
  %v675 = vadd.f32 %v674, %v560
  %v676 = vadd.f32 %v675, %v563
  %v677 = vadd.f32 %v676, %v568
  %v678 = vadd.f32 %v677, %v571
  %v679 = vadd.f32 %v678, %v576
  %v680 = vadd.f32 %v679, %v579
  %v681 = vadd.f32 %v680, %v584
  %v682 = vadd.f32 %v681, %v587
  %v683 = vadd.f32 %v682, %v592
  %v684 = vadd.f32 %v683, %v595
  %v685 = vadd.f32 %v684, %v600
  %v686 = vadd.f32 %v685, %v603
  %v687 = vadd.f32 %v686, %v608
  %v688 = vadd.f32 %v687, %v611
  %v689 = vadd.f32 %v688, %v616
  %v690 = vadd.f32 %v689, %v619
  %v691 = vadd.f32 %v690, %v624
  %v692 = vadd.f32 %v691, %v627
  %v693 = vrot.slane %v692, 4
  %v694 = vadd.f32 %v692, %v693
  %v695 = vrot.slane %v694, 2
  %v696 = vadd.f32 %v694, %v695
  %v697 = vrot.slane %v696, 1
  %v698 = vadd.f32 %v696, %v697
  %v699 = vmul.f32 %v698, 0.001953125
  %v700 = vmul.f32 %v376, %v376
  %v701 = vmul.f32 %v379, %v379
  %v702 = vmul.f32 %v384, %v384
  %v703 = vmul.f32 %v387, %v387
  %v704 = vmul.f32 %v392, %v392
  %v705 = vmul.f32 %v395, %v395
  %v706 = vmul.f32 %v400, %v400
  %v707 = vmul.f32 %v403, %v403
  %v708 = vmul.f32 %v408, %v408
  %v709 = vmul.f32 %v411, %v411
  %v710 = vmul.f32 %v416, %v416
  %v711 = vmul.f32 %v419, %v419
  %v712 = vmul.f32 %v424, %v424
  %v713 = vmul.f32 %v427, %v427
  %v714 = vmul.f32 %v432, %v432
  %v715 = vmul.f32 %v435, %v435
  %v716 = vmul.f32 %v440, %v440
  %v717 = vmul.f32 %v443, %v443
  %v718 = vmul.f32 %v448, %v448
  %v719 = vmul.f32 %v451, %v451
  %v720 = vmul.f32 %v456, %v456
  %v721 = vmul.f32 %v459, %v459
  %v722 = vmul.f32 %v464, %v464
  %v723 = vmul.f32 %v467, %v467
  %v724 = vmul.f32 %v472, %v472
  %v725 = vmul.f32 %v475, %v475
  %v726 = vmul.f32 %v480, %v480
  %v727 = vmul.f32 %v483, %v483
  %v728 = vmul.f32 %v488, %v488
  %v729 = vmul.f32 %v491, %v491
  %v730 = vmul.f32 %v496, %v496
  %v731 = vmul.f32 %v499, %v499
  %v732 = vmul.f32 %v504, %v504
  %v733 = vmul.f32 %v507, %v507
  %v734 = vmul.f32 %v512, %v512
  %v735 = vmul.f32 %v515, %v515
  %v736 = vmul.f32 %v520, %v520
  %v737 = vmul.f32 %v523, %v523
  %v738 = vmul.f32 %v528, %v528
  %v739 = vmul.f32 %v531, %v531
  %v740 = vmul.f32 %v536, %v536
  %v741 = vmul.f32 %v539, %v539
  %v742 = vmul.f32 %v544, %v544
  %v743 = vmul.f32 %v547, %v547
  %v744 = vmul.f32 %v552, %v552
  %v745 = vmul.f32 %v555, %v555
  %v746 = vmul.f32 %v560, %v560
  %v747 = vmul.f32 %v563, %v563
  %v748 = vmul.f32 %v568, %v568
  %v749 = vmul.f32 %v571, %v571
  %v750 = vmul.f32 %v576, %v576
  %v751 = vmul.f32 %v579, %v579
  %v752 = vmul.f32 %v584, %v584
  %v753 = vmul.f32 %v587, %v587
  %v754 = vmul.f32 %v592, %v592
  %v755 = vmul.f32 %v595, %v595
  %v756 = vmul.f32 %v600, %v600
  %v757 = vmul.f32 %v603, %v603
  %v758 = vmul.f32 %v608, %v608
  %v759 = vmul.f32 %v611, %v611
  %v760 = vmul.f32 %v616, %v616
  %v761 = vmul.f32 %v619, %v619
  %v762 = vmul.f32 %v624, %v624
  %v763 = vmul.f32 %v627, %v627
  %v764 = vadd.f32 %v700, %v701
  %v765 = vadd.f32 %v764, %v702
  %v766 = vadd.f32 %v765, %v703
  %v767 = vadd.f32 %v766, %v704
  %v768 = vadd.f32 %v767, %v705
  %v769 = vadd.f32 %v768, %v706
  %v770 = vadd.f32 %v769, %v707
  %v771 = vadd.f32 %v770, %v708
  %v772 = vadd.f32 %v771, %v709
  %v773 = vadd.f32 %v772, %v710
  %v774 = vadd.f32 %v773, %v711
  %v775 = vadd.f32 %v774, %v712
  %v776 = vadd.f32 %v775, %v713
  %v777 = vadd.f32 %v776, %v714
  %v778 = vadd.f32 %v777, %v715
  %v779 = vadd.f32 %v778, %v716
  %v780 = vadd.f32 %v779, %v717
  %v781 = vadd.f32 %v780, %v718
  %v782 = vadd.f32 %v781, %v719
  %v783 = vadd.f32 %v782, %v720
  %v784 = vadd.f32 %v783, %v721
  %v785 = vadd.f32 %v784, %v722
  %v786 = vadd.f32 %v785, %v723
  %v787 = vadd.f32 %v786, %v724
  %v788 = vadd.f32 %v787, %v725
  %v789 = vadd.f32 %v788, %v726
  %v790 = vadd.f32 %v789, %v727
  %v791 = vadd.f32 %v790, %v728
  %v792 = vadd.f32 %v791, %v729
  %v793 = vadd.f32 %v792, %v730
  %v794 = vadd.f32 %v793, %v731
  %v795 = vadd.f32 %v794, %v732
  %v796 = vadd.f32 %v795, %v733
  %v797 = vadd.f32 %v796, %v734
  %v798 = vadd.f32 %v797, %v735
  %v799 = vadd.f32 %v798, %v736
  %v800 = vadd.f32 %v799, %v737
  %v801 = vadd.f32 %v800, %v738
  %v802 = vadd.f32 %v801, %v739
  %v803 = vadd.f32 %v802, %v740
  %v804 = vadd.f32 %v803, %v741
  %v805 = vadd.f32 %v804, %v742
  %v806 = vadd.f32 %v805, %v743
  %v807 = vadd.f32 %v806, %v744
  %v808 = vadd.f32 %v807, %v745
  %v809 = vadd.f32 %v808, %v746
  %v810 = vadd.f32 %v809, %v747
  %v811 = vadd.f32 %v810, %v748
  %v812 = vadd.f32 %v811, %v749
  %v813 = vadd.f32 %v812, %v750
  %v814 = vadd.f32 %v813, %v751
  %v815 = vadd.f32 %v814, %v752
  %v816 = vadd.f32 %v815, %v753
  %v817 = vadd.f32 %v816, %v754
  %v818 = vadd.f32 %v817, %v755
  %v819 = vadd.f32 %v818, %v756
  %v820 = vadd.f32 %v819, %v757
  %v821 = vadd.f32 %v820, %v758
  %v822 = vadd.f32 %v821, %v759
  %v823 = vadd.f32 %v822, %v760
  %v824 = vadd.f32 %v823, %v761
  %v825 = vadd.f32 %v824, %v762
  %v826 = vadd.f32 %v825, %v763
  %v827 = vrot.slane %v826, 4
  %v828 = vadd.f32 %v826, %v827
  %v829 = vrot.slane %v828, 2
  %v830 = vadd.f32 %v828, %v829
  %v831 = vrot.slane %v830, 1
  %v832 = vadd.f32 %v830, %v831
  %v833 = vmul.f32 %v832, 0.001953125
  %v834 = vmul.f32 %v699, %v699
  %v835 = vsub.f32 %v833, %v834
  %v836 = vmax.f32 %v835, 0.0
  %v837 = vld [vmem:[%s2] sm:$0x1]
  %v838 = vadd.f32 %v836, 1e-05
  %v839 = vrsqrt.pop %v838
  %v840 = vmul.f32 %v837, %v839
  %v841 = vld [vmem:[%s3] sm:$0x1]
  %v842 = vmul.f32 %v699, %v840
  %v843 = vsub.f32 %v841, %v842
  %v845 = vlaneseq
  %v846 = vshrl.u32 %v845, 7
  %v847 = vsub.s32 0, %v846
  %v848 = vrot.slane %v840, %v847
  %v850 = vmul.f32 %v376, %v848
  %v851 = vmul.f32 %v379, %v848
  %v852 = vmul.f32 %v384, %v848
  %v853 = vmul.f32 %v387, %v848
  %v854 = vmul.f32 %v392, %v848
  %v855 = vmul.f32 %v395, %v848
  %v856 = vmul.f32 %v400, %v848
  %v857 = vmul.f32 %v403, %v848
  %v858 = vmul.f32 %v408, %v848
  %v859 = vmul.f32 %v411, %v848
  %v860 = vmul.f32 %v416, %v848
  %v861 = vmul.f32 %v419, %v848
  %v862 = vmul.f32 %v424, %v848
  %v863 = vmul.f32 %v427, %v848
  %v864 = vmul.f32 %v432, %v848
  %v865 = vmul.f32 %v435, %v848
  %v866 = vmul.f32 %v440, %v848
  %v867 = vmul.f32 %v443, %v848
  %v868 = vmul.f32 %v448, %v848
  %v869 = vmul.f32 %v451, %v848
  %v870 = vmul.f32 %v456, %v848
  %v871 = vmul.f32 %v459, %v848
  %v872 = vmul.f32 %v464, %v848
  %v873 = vmul.f32 %v467, %v848
  %v874 = vmul.f32 %v472, %v848
  %v875 = vmul.f32 %v475, %v848
  %v876 = vmul.f32 %v480, %v848
  %v877 = vmul.f32 %v483, %v848
  %v878 = vmul.f32 %v488, %v848
  %v879 = vmul.f32 %v491, %v848
  %v880 = vmul.f32 %v496, %v848
  %v881 = vmul.f32 %v499, %v848
  %v882 = vmul.f32 %v504, %v848
  %v883 = vmul.f32 %v507, %v848
  %v884 = vmul.f32 %v512, %v848
  %v885 = vmul.f32 %v515, %v848
  %v886 = vmul.f32 %v520, %v848
  %v887 = vmul.f32 %v523, %v848
  %v888 = vmul.f32 %v528, %v848
  %v889 = vmul.f32 %v531, %v848
  %v890 = vmul.f32 %v536, %v848
  %v891 = vmul.f32 %v539, %v848
  %v892 = vmul.f32 %v544, %v848
  %v893 = vmul.f32 %v547, %v848
  %v894 = vmul.f32 %v552, %v848
  %v895 = vmul.f32 %v555, %v848
  %v896 = vmul.f32 %v560, %v848
  %v897 = vmul.f32 %v563, %v848
  %v898 = vmul.f32 %v568, %v848
  %v899 = vmul.f32 %v571, %v848
  %v900 = vmul.f32 %v576, %v848
  %v901 = vmul.f32 %v579, %v848
  %v902 = vmul.f32 %v584, %v848
  %v903 = vmul.f32 %v587, %v848
  %v904 = vmul.f32 %v592, %v848
  %v905 = vmul.f32 %v595, %v848
  %v906 = vmul.f32 %v600, %v848
  %v907 = vmul.f32 %v603, %v848
  %v908 = vmul.f32 %v608, %v848
  %v909 = vmul.f32 %v611, %v848
  %v910 = vmul.f32 %v616, %v848
  %v911 = vmul.f32 %v619, %v848
  %v912 = vmul.f32 %v624, %v848
  %v913 = vmul.f32 %v627, %v848
  %v915 = vlaneseq
  %v916 = vshrl.u32 %v915, 7
  %v917 = vsub.s32 0, %v916
  %v918 = vrot.slane %v843, %v917
  %v920 = vadd.f32 %v850, %v918
  %v921 = vadd.f32 %v851, %v918
  %v922 = vadd.f32 %v852, %v918
  %v923 = vadd.f32 %v853, %v918
  %v924 = vadd.f32 %v854, %v918
  %v925 = vadd.f32 %v855, %v918
  %v926 = vadd.f32 %v856, %v918
  %v927 = vadd.f32 %v857, %v918
  %v928 = vadd.f32 %v858, %v918
  %v929 = vadd.f32 %v859, %v918
  %v930 = vadd.f32 %v860, %v918
  %v931 = vadd.f32 %v861, %v918
  %v932 = vadd.f32 %v862, %v918
  %v933 = vadd.f32 %v863, %v918
  %v934 = vadd.f32 %v864, %v918
  %v935 = vadd.f32 %v865, %v918
  %v936 = vadd.f32 %v866, %v918
  %v937 = vadd.f32 %v867, %v918
  %v938 = vadd.f32 %v868, %v918
  %v939 = vadd.f32 %v869, %v918
  %v940 = vadd.f32 %v870, %v918
  %v941 = vadd.f32 %v871, %v918
  %v942 = vadd.f32 %v872, %v918
  %v943 = vadd.f32 %v873, %v918
  %v944 = vadd.f32 %v874, %v918
  %v945 = vadd.f32 %v875, %v918
  %v946 = vadd.f32 %v876, %v918
  %v947 = vadd.f32 %v877, %v918
  %v948 = vadd.f32 %v878, %v918
  %v949 = vadd.f32 %v879, %v918
  %v950 = vadd.f32 %v880, %v918
  %v951 = vadd.f32 %v881, %v918
  %v952 = vadd.f32 %v882, %v918
  %v953 = vadd.f32 %v883, %v918
  %v954 = vadd.f32 %v884, %v918
  %v955 = vadd.f32 %v885, %v918
  %v956 = vadd.f32 %v886, %v918
  %v957 = vadd.f32 %v887, %v918
  %v958 = vadd.f32 %v888, %v918
  %v959 = vadd.f32 %v889, %v918
  %v960 = vadd.f32 %v890, %v918
  %v961 = vadd.f32 %v891, %v918
  %v962 = vadd.f32 %v892, %v918
  %v963 = vadd.f32 %v893, %v918
  %v964 = vadd.f32 %v894, %v918
  %v965 = vadd.f32 %v895, %v918
  %v966 = vadd.f32 %v896, %v918
  %v967 = vadd.f32 %v897, %v918
  %v968 = vadd.f32 %v898, %v918
  %v969 = vadd.f32 %v899, %v918
  %v970 = vadd.f32 %v900, %v918
  %v971 = vadd.f32 %v901, %v918
  %v972 = vadd.f32 %v902, %v918
  %v973 = vadd.f32 %v903, %v918
  %v974 = vadd.f32 %v904, %v918
  %v975 = vadd.f32 %v905, %v918
  %v976 = vadd.f32 %v906, %v918
  %v977 = vadd.f32 %v907, %v918
  %v978 = vadd.f32 %v908, %v918
  %v979 = vadd.f32 %v909, %v918
  %v980 = vadd.f32 %v910, %v918
  %v981 = vadd.f32 %v911, %v918
  %v982 = vadd.f32 %v912, %v918
  %v983 = vadd.f32 %v913, %v918
  %vm984 = vcmp.gt.f32.partialorder %v920, 0.0
  %vm985 = vcmp.gt.f32.partialorder %v921, 0.0
  %vm986 = vcmp.gt.f32.partialorder %v922, 0.0
  %vm987 = vcmp.gt.f32.partialorder %v923, 0.0
  %vm988 = vcmp.gt.f32.partialorder %v924, 0.0
  %vm989 = vcmp.gt.f32.partialorder %v925, 0.0
  %vm990 = vcmp.gt.f32.partialorder %v926, 0.0
  %vm991 = vcmp.gt.f32.partialorder %v927, 0.0
  %vm992 = vcmp.gt.f32.partialorder %v928, 0.0
  %vm993 = vcmp.gt.f32.partialorder %v929, 0.0
  %vm994 = vcmp.gt.f32.partialorder %v930, 0.0
  %vm995 = vcmp.gt.f32.partialorder %v931, 0.0
  %vm996 = vcmp.gt.f32.partialorder %v932, 0.0
  %vm997 = vcmp.gt.f32.partialorder %v933, 0.0
  %vm998 = vcmp.gt.f32.partialorder %v934, 0.0
  %vm999 = vcmp.gt.f32.partialorder %v935, 0.0
  %vm1000 = vcmp.gt.f32.partialorder %v936, 0.0
  %vm1001 = vcmp.gt.f32.partialorder %v937, 0.0
  %vm1002 = vcmp.gt.f32.partialorder %v938, 0.0
  %vm1003 = vcmp.gt.f32.partialorder %v939, 0.0
  %vm1004 = vcmp.gt.f32.partialorder %v940, 0.0
  %vm1005 = vcmp.gt.f32.partialorder %v941, 0.0
  %vm1006 = vcmp.gt.f32.partialorder %v942, 0.0
  %vm1007 = vcmp.gt.f32.partialorder %v943, 0.0
  %vm1008 = vcmp.gt.f32.partialorder %v944, 0.0
  %vm1009 = vcmp.gt.f32.partialorder %v945, 0.0
  %vm1010 = vcmp.gt.f32.partialorder %v946, 0.0
  %vm1011 = vcmp.gt.f32.partialorder %v947, 0.0
  %vm1012 = vcmp.gt.f32.partialorder %v948, 0.0
  %vm1013 = vcmp.gt.f32.partialorder %v949, 0.0
  %vm1014 = vcmp.gt.f32.partialorder %v950, 0.0
  %vm1015 = vcmp.gt.f32.partialorder %v951, 0.0
  %vm1016 = vcmp.gt.f32.partialorder %v952, 0.0
  %vm1017 = vcmp.gt.f32.partialorder %v953, 0.0
  %vm1018 = vcmp.gt.f32.partialorder %v954, 0.0
  %vm1019 = vcmp.gt.f32.partialorder %v955, 0.0
  %vm1020 = vcmp.gt.f32.partialorder %v956, 0.0
  %vm1021 = vcmp.gt.f32.partialorder %v957, 0.0
  %vm1022 = vcmp.gt.f32.partialorder %v958, 0.0
  %vm1023 = vcmp.gt.f32.partialorder %v959, 0.0
  %vm1024 = vcmp.gt.f32.partialorder %v960, 0.0
  %vm1025 = vcmp.gt.f32.partialorder %v961, 0.0
  %vm1026 = vcmp.gt.f32.partialorder %v962, 0.0
  %vm1027 = vcmp.gt.f32.partialorder %v963, 0.0
  %vm1028 = vcmp.gt.f32.partialorder %v964, 0.0
  %vm1029 = vcmp.gt.f32.partialorder %v965, 0.0
  %vm1030 = vcmp.gt.f32.partialorder %v966, 0.0
  %vm1031 = vcmp.gt.f32.partialorder %v967, 0.0
  %vm1032 = vcmp.gt.f32.partialorder %v968, 0.0
  %vm1033 = vcmp.gt.f32.partialorder %v969, 0.0
  %vm1034 = vcmp.gt.f32.partialorder %v970, 0.0
  %vm1035 = vcmp.gt.f32.partialorder %v971, 0.0
  %vm1036 = vcmp.gt.f32.partialorder %v972, 0.0
  %vm1037 = vcmp.gt.f32.partialorder %v973, 0.0
  %vm1038 = vcmp.gt.f32.partialorder %v974, 0.0
  %vm1039 = vcmp.gt.f32.partialorder %v975, 0.0
  %vm1040 = vcmp.gt.f32.partialorder %v976, 0.0
  %vm1041 = vcmp.gt.f32.partialorder %v977, 0.0
  %vm1042 = vcmp.gt.f32.partialorder %v978, 0.0
  %vm1043 = vcmp.gt.f32.partialorder %v979, 0.0
  %vm1044 = vcmp.gt.f32.partialorder %v980, 0.0
  %vm1045 = vcmp.gt.f32.partialorder %v981, 0.0
  %vm1046 = vcmp.gt.f32.partialorder %v982, 0.0
  %vm1047 = vcmp.gt.f32.partialorder %v983, 0.0
  %v1048 = vmul.f32 %v920, 0.1
  %v1049 = vmul.f32 %v921, 0.1
  %v1050 = vmul.f32 %v922, 0.1
  %v1051 = vmul.f32 %v923, 0.1
  %v1052 = vmul.f32 %v924, 0.1
  %v1053 = vmul.f32 %v925, 0.1
  %v1054 = vmul.f32 %v926, 0.1
  %v1055 = vmul.f32 %v927, 0.1
  %v1056 = vmul.f32 %v928, 0.1
  %v1057 = vmul.f32 %v929, 0.1
  %v1058 = vmul.f32 %v930, 0.1
  %v1059 = vmul.f32 %v931, 0.1
  %v1060 = vmul.f32 %v932, 0.1
  %v1061 = vmul.f32 %v933, 0.1
  %v1062 = vmul.f32 %v934, 0.1
  %v1063 = vmul.f32 %v935, 0.1
  %v1064 = vmul.f32 %v936, 0.1
  %v1065 = vmul.f32 %v937, 0.1
  %v1066 = vmul.f32 %v938, 0.1
  %v1067 = vmul.f32 %v939, 0.1
  %v1068 = vmul.f32 %v940, 0.1
  %v1069 = vmul.f32 %v941, 0.1
  %v1070 = vmul.f32 %v942, 0.1
  %v1071 = vmul.f32 %v943, 0.1
  %v1072 = vmul.f32 %v944, 0.1
  %v1073 = vmul.f32 %v945, 0.1
  %v1074 = vmul.f32 %v946, 0.1
  %v1075 = vmul.f32 %v947, 0.1
  %v1076 = vmul.f32 %v948, 0.1
  %v1077 = vmul.f32 %v949, 0.1
  %v1078 = vmul.f32 %v950, 0.1
  %v1079 = vmul.f32 %v951, 0.1
  %v1080 = vmul.f32 %v952, 0.1
  %v1081 = vmul.f32 %v953, 0.1
  %v1082 = vmul.f32 %v954, 0.1
  %v1083 = vmul.f32 %v955, 0.1
  %v1084 = vmul.f32 %v956, 0.1
  %v1085 = vmul.f32 %v957, 0.1
  %v1086 = vmul.f32 %v958, 0.1
  %v1087 = vmul.f32 %v959, 0.1
  %v1088 = vmul.f32 %v960, 0.1
  %v1089 = vmul.f32 %v961, 0.1
  %v1090 = vmul.f32 %v962, 0.1
  %v1091 = vmul.f32 %v963, 0.1
  %v1092 = vmul.f32 %v964, 0.1
  %v1093 = vmul.f32 %v965, 0.1
  %v1094 = vmul.f32 %v966, 0.1
  %v1095 = vmul.f32 %v967, 0.1
  %v1096 = vmul.f32 %v968, 0.1
  %v1097 = vmul.f32 %v969, 0.1
  %v1098 = vmul.f32 %v970, 0.1
  %v1099 = vmul.f32 %v971, 0.1
  %v1100 = vmul.f32 %v972, 0.1
  %v1101 = vmul.f32 %v973, 0.1
  %v1102 = vmul.f32 %v974, 0.1
  %v1103 = vmul.f32 %v975, 0.1
  %v1104 = vmul.f32 %v976, 0.1
  %v1105 = vmul.f32 %v977, 0.1
  %v1106 = vmul.f32 %v978, 0.1
  %v1107 = vmul.f32 %v979, 0.1
  %v1108 = vmul.f32 %v980, 0.1
  %v1109 = vmul.f32 %v981, 0.1
  %v1110 = vmul.f32 %v982, 0.1
  %v1111 = vmul.f32 %v983, 0.1
  %v1112 = vsel %vm984, %v920, %v1048
  %v1113 = vsel %vm985, %v921, %v1049
  %v1114 = vsel %vm986, %v922, %v1050
  %v1115 = vsel %vm987, %v923, %v1051
  %v1116 = vsel %vm988, %v924, %v1052
  %v1117 = vsel %vm989, %v925, %v1053
  %v1118 = vsel %vm990, %v926, %v1054
  %v1119 = vsel %vm991, %v927, %v1055
  %v1120 = vsel %vm992, %v928, %v1056
  %v1121 = vsel %vm993, %v929, %v1057
  %v1122 = vsel %vm994, %v930, %v1058
  %v1123 = vsel %vm995, %v931, %v1059
  %v1124 = vsel %vm996, %v932, %v1060
  %v1125 = vsel %vm997, %v933, %v1061
  %v1126 = vsel %vm998, %v934, %v1062
  %v1127 = vsel %vm999, %v935, %v1063
  %v1128 = vsel %vm1000, %v936, %v1064
  %v1129 = vsel %vm1001, %v937, %v1065
  %v1130 = vsel %vm1002, %v938, %v1066
  %v1131 = vsel %vm1003, %v939, %v1067
  %v1132 = vsel %vm1004, %v940, %v1068
  %v1133 = vsel %vm1005, %v941, %v1069
  %v1134 = vsel %vm1006, %v942, %v1070
  %v1135 = vsel %vm1007, %v943, %v1071
  %v1136 = vsel %vm1008, %v944, %v1072
  %v1137 = vsel %vm1009, %v945, %v1073
  %v1138 = vsel %vm1010, %v946, %v1074
  %v1139 = vsel %vm1011, %v947, %v1075
  %v1140 = vsel %vm1012, %v948, %v1076
  %v1141 = vsel %vm1013, %v949, %v1077
  %v1142 = vsel %vm1014, %v950, %v1078
  %v1143 = vsel %vm1015, %v951, %v1079
  %v1144 = vsel %vm1016, %v952, %v1080
  %v1145 = vsel %vm1017, %v953, %v1081
  %v1146 = vsel %vm1018, %v954, %v1082
  %v1147 = vsel %vm1019, %v955, %v1083
  %v1148 = vsel %vm1020, %v956, %v1084
  %v1149 = vsel %vm1021, %v957, %v1085
  %v1150 = vsel %vm1022, %v958, %v1086
  %v1151 = vsel %vm1023, %v959, %v1087
  %v1152 = vsel %vm1024, %v960, %v1088
  %v1153 = vsel %vm1025, %v961, %v1089
  %v1154 = vsel %vm1026, %v962, %v1090
  %v1155 = vsel %vm1027, %v963, %v1091
  %v1156 = vsel %vm1028, %v964, %v1092
  %v1157 = vsel %vm1029, %v965, %v1093
  %v1158 = vsel %vm1030, %v966, %v1094
  %v1159 = vsel %vm1031, %v967, %v1095
  %v1160 = vsel %vm1032, %v968, %v1096
  %v1161 = vsel %vm1033, %v969, %v1097
  %v1162 = vsel %vm1034, %v970, %v1098
  %v1163 = vsel %vm1035, %v971, %v1099
  %v1164 = vsel %vm1036, %v972, %v1100
  %v1165 = vsel %vm1037, %v973, %v1101
  %v1166 = vsel %vm1038, %v974, %v1102
  %v1167 = vsel %vm1039, %v975, %v1103
  %v1168 = vsel %vm1040, %v976, %v1104
  %v1169 = vsel %vm1041, %v977, %v1105
  %v1170 = vsel %vm1042, %v978, %v1106
  %v1171 = vsel %vm1043, %v979, %v1107
  %v1172 = vsel %vm1044, %v980, %v1108
  %v1173 = vsel %vm1045, %v981, %v1109
  %v1174 = vsel %vm1046, %v982, %v1110
  %v1175 = vsel %vm1047, %v983, %v1111
  %v1176 = vld [vmem:[%s4] sm:$0xff]
  %v1177 = vld [vmem:[%s4 + $0x8] sm:$0xff]
  %v1178 = vld [vmem:[%s4 + $0x10] sm:$0xff]
  %v1179 = vld [vmem:[%s4 + $0x18] sm:$0xff]
  %v1180 = vld [vmem:[%s4 + $0x20] sm:$0xff]
  %v1181 = vld [vmem:[%s4 + $0x28] sm:$0xff]
  %v1182 = vld [vmem:[%s4 + $0x30] sm:$0xff]
  %v1183 = vld [vmem:[%s4 + $0x38] sm:$0xff]
  %v1184 = vld [vmem:[%s4 + $0x40] sm:$0xff]
  %v1185 = vld [vmem:[%s4 + $0x48] sm:$0xff]
  %v1186 = vld [vmem:[%s4 + $0x50] sm:$0xff]
  %v1187 = vld [vmem:[%s4 + $0x58] sm:$0xff]
  %v1188 = vld [vmem:[%s4 + $0x60] sm:$0xff]
  %v1189 = vld [vmem:[%s4 + $0x68] sm:$0xff]
  %v1190 = vld [vmem:[%s4 + $0x70] sm:$0xff]
  %v1191 = vld [vmem:[%s4 + $0x78] sm:$0xff]
  %v1192 = vld [vmem:[%s4 + $0x80] sm:$0xff]
  %v1193 = vld [vmem:[%s4 + $0x88] sm:$0xff]
  %v1194 = vld [vmem:[%s4 + $0x90] sm:$0xff]
  %v1195 = vld [vmem:[%s4 + $0x98] sm:$0xff]
  %v1196 = vld [vmem:[%s4 + $0xa0] sm:$0xff]
  %v1197 = vld [vmem:[%s4 + $0xa8] sm:$0xff]
  %v1198 = vld [vmem:[%s4 + $0xb0] sm:$0xff]
  %v1199 = vld [vmem:[%s4 + $0xb8] sm:$0xff]
  %v1200 = vld [vmem:[%s4 + $0xc0] sm:$0xff]
  %v1201 = vld [vmem:[%s4 + $0xc8] sm:$0xff]
  %v1202 = vld [vmem:[%s4 + $0xd0] sm:$0xff]
  %v1203 = vld [vmem:[%s4 + $0xd8] sm:$0xff]
  %v1204 = vld [vmem:[%s4 + $0xe0] sm:$0xff]
  %v1205 = vld [vmem:[%s4 + $0xe8] sm:$0xff]
  %v1206 = vld [vmem:[%s4 + $0xf0] sm:$0xff]
  %v1207 = vld [vmem:[%s4 + $0xf8] sm:$0xff]
  %v1208 = vld [vmem:[%s4 + $0x100] sm:$0xff]
  %v1209 = vld [vmem:[%s4 + $0x108] sm:$0xff]
  %v1210 = vld [vmem:[%s4 + $0x110] sm:$0xff]
  %v1211 = vld [vmem:[%s4 + $0x118] sm:$0xff]
  %v1212 = vld [vmem:[%s4 + $0x120] sm:$0xff]
  %v1213 = vld [vmem:[%s4 + $0x128] sm:$0xff]
  %v1214 = vld [vmem:[%s4 + $0x130] sm:$0xff]
  %v1215 = vld [vmem:[%s4 + $0x138] sm:$0xff]
  %v1216 = vld [vmem:[%s4 + $0x140] sm:$0xff]
  %v1217 = vld [vmem:[%s4 + $0x148] sm:$0xff]
  %v1218 = vld [vmem:[%s4 + $0x150] sm:$0xff]
  %v1219 = vld [vmem:[%s4 + $0x158] sm:$0xff]
  %v1220 = vld [vmem:[%s4 + $0x160] sm:$0xff]
  %v1221 = vld [vmem:[%s4 + $0x168] sm:$0xff]
  %v1222 = vld [vmem:[%s4 + $0x170] sm:$0xff]
  %v1223 = vld [vmem:[%s4 + $0x178] sm:$0xff]
  %v1224 = vld [vmem:[%s4 + $0x180] sm:$0xff]
  %v1225 = vld [vmem:[%s4 + $0x188] sm:$0xff]
  %v1226 = vld [vmem:[%s4 + $0x190] sm:$0xff]
  %v1227 = vld [vmem:[%s4 + $0x198] sm:$0xff]
  %v1228 = vld [vmem:[%s4 + $0x1a0] sm:$0xff]
  %v1229 = vld [vmem:[%s4 + $0x1a8] sm:$0xff]
  %v1230 = vld [vmem:[%s4 + $0x1b0] sm:$0xff]
  %v1231 = vld [vmem:[%s4 + $0x1b8] sm:$0xff]
  %v1232 = vld [vmem:[%s4 + $0x1c0] sm:$0xff]
  %v1233 = vld [vmem:[%s4 + $0x1c8] sm:$0xff]
  %v1234 = vld [vmem:[%s4 + $0x1d0] sm:$0xff]
  %v1235 = vld [vmem:[%s4 + $0x1d8] sm:$0xff]
  %v1236 = vld [vmem:[%s4 + $0x1e0] sm:$0xff]
  %v1237 = vld [vmem:[%s4 + $0x1e8] sm:$0xff]
  %v1238 = vld [vmem:[%s4 + $0x1f0] sm:$0xff]
  %v1239 = vld [vmem:[%s4 + $0x1f8] sm:$0xff]
  %v1240 = vadd.f32 %v1112, %v1176
  %v1241 = vadd.f32 %v1113, %v1177
  %v1242 = vadd.f32 %v1114, %v1178
  %v1243 = vadd.f32 %v1115, %v1179
  %v1244 = vadd.f32 %v1116, %v1180
  %v1245 = vadd.f32 %v1117, %v1181
  %v1246 = vadd.f32 %v1118, %v1182
  %v1247 = vadd.f32 %v1119, %v1183
  %v1248 = vadd.f32 %v1120, %v1184
  %v1249 = vadd.f32 %v1121, %v1185
  %v1250 = vadd.f32 %v1122, %v1186
  %v1251 = vadd.f32 %v1123, %v1187
  %v1252 = vadd.f32 %v1124, %v1188
  %v1253 = vadd.f32 %v1125, %v1189
  %v1254 = vadd.f32 %v1126, %v1190
  %v1255 = vadd.f32 %v1127, %v1191
  %v1256 = vadd.f32 %v1128, %v1192
  %v1257 = vadd.f32 %v1129, %v1193
  %v1258 = vadd.f32 %v1130, %v1194
  %v1259 = vadd.f32 %v1131, %v1195
  %v1260 = vadd.f32 %v1132, %v1196
  %v1261 = vadd.f32 %v1133, %v1197
  %v1262 = vadd.f32 %v1134, %v1198
  %v1263 = vadd.f32 %v1135, %v1199
  %v1264 = vadd.f32 %v1136, %v1200
  %v1265 = vadd.f32 %v1137, %v1201
  %v1266 = vadd.f32 %v1138, %v1202
  %v1267 = vadd.f32 %v1139, %v1203
  %v1268 = vadd.f32 %v1140, %v1204
  %v1269 = vadd.f32 %v1141, %v1205
  %v1270 = vadd.f32 %v1142, %v1206
  %v1271 = vadd.f32 %v1143, %v1207
  %v1272 = vadd.f32 %v1144, %v1208
  %v1273 = vadd.f32 %v1145, %v1209
  %v1274 = vadd.f32 %v1146, %v1210
  %v1275 = vadd.f32 %v1147, %v1211
  %v1276 = vadd.f32 %v1148, %v1212
  %v1277 = vadd.f32 %v1149, %v1213
  %v1278 = vadd.f32 %v1150, %v1214
  %v1279 = vadd.f32 %v1151, %v1215
  %v1280 = vadd.f32 %v1152, %v1216
  %v1281 = vadd.f32 %v1153, %v1217
  %v1282 = vadd.f32 %v1154, %v1218
  %v1283 = vadd.f32 %v1155, %v1219
  %v1284 = vadd.f32 %v1156, %v1220
  %v1285 = vadd.f32 %v1157, %v1221
  %v1286 = vadd.f32 %v1158, %v1222
  %v1287 = vadd.f32 %v1159, %v1223
  %v1288 = vadd.f32 %v1160, %v1224
  %v1289 = vadd.f32 %v1161, %v1225
  %v1290 = vadd.f32 %v1162, %v1226
  %v1291 = vadd.f32 %v1163, %v1227
  %v1292 = vadd.f32 %v1164, %v1228
  %v1293 = vadd.f32 %v1165, %v1229
  %v1294 = vadd.f32 %v1166, %v1230
  %v1295 = vadd.f32 %v1167, %v1231
  %v1296 = vadd.f32 %v1168, %v1232
  %v1297 = vadd.f32 %v1169, %v1233
  %v1298 = vadd.f32 %v1170, %v1234
  %v1299 = vadd.f32 %v1171, %v1235
  %v1300 = vadd.f32 %v1172, %v1236
  %v1301 = vadd.f32 %v1173, %v1237
  %v1302 = vadd.f32 %v1174, %v1238
  %v1303 = vadd.f32 %v1175, %v1239
  %1304 = vst [vmem:[%s5] sm:$0xff] %v1240
  %1305 = vst [vmem:[%s5 + $0x8] sm:$0xff] %v1241
  %1306 = vst [vmem:[%s5 + $0x10] sm:$0xff] %v1242
  %1307 = vst [vmem:[%s5 + $0x18] sm:$0xff] %v1243
  %1308 = vst [vmem:[%s5 + $0x20] sm:$0xff] %v1244
  %1309 = vst [vmem:[%s5 + $0x28] sm:$0xff] %v1245
  %1310 = vst [vmem:[%s5 + $0x30] sm:$0xff] %v1246
  %1311 = vst [vmem:[%s5 + $0x38] sm:$0xff] %v1247
  %1312 = vst [vmem:[%s5 + $0x40] sm:$0xff] %v1248
  %1313 = vst [vmem:[%s5 + $0x48] sm:$0xff] %v1249
  %1314 = vst [vmem:[%s5 + $0x50] sm:$0xff] %v1250
  %1315 = vst [vmem:[%s5 + $0x58] sm:$0xff] %v1251
  %1316 = vst [vmem:[%s5 + $0x60] sm:$0xff] %v1252
  %1317 = vst [vmem:[%s5 + $0x68] sm:$0xff] %v1253
  %1318 = vst [vmem:[%s5 + $0x70] sm:$0xff] %v1254
  %1319 = vst [vmem:[%s5 + $0x78] sm:$0xff] %v1255
  %1320 = vst [vmem:[%s5 + $0x80] sm:$0xff] %v1256
  %1321 = vst [vmem:[%s5 + $0x88] sm:$0xff] %v1257
  %1322 = vst [vmem:[%s5 + $0x90] sm:$0xff] %v1258
  %1323 = vst [vmem:[%s5 + $0x98] sm:$0xff] %v1259
  %1324 = vst [vmem:[%s5 + $0xa0] sm:$0xff] %v1260
  %1325 = vst [vmem:[%s5 + $0xa8] sm:$0xff] %v1261
  %1326 = vst [vmem:[%s5 + $0xb0] sm:$0xff] %v1262
  %1327 = vst [vmem:[%s5 + $0xb8] sm:$0xff] %v1263
  %1328 = vst [vmem:[%s5 + $0xc0] sm:$0xff] %v1264
  %1329 = vst [vmem:[%s5 + $0xc8] sm:$0xff] %v1265
  %1330 = vst [vmem:[%s5 + $0xd0] sm:$0xff] %v1266
  %1331 = vst [vmem:[%s5 + $0xd8] sm:$0xff] %v1267
  %1332 = vst [vmem:[%s5 + $0xe0] sm:$0xff] %v1268
  %1333 = vst [vmem:[%s5 + $0xe8] sm:$0xff] %v1269
  %1334 = vst [vmem:[%s5 + $0xf0] sm:$0xff] %v1270
  %1335 = vst [vmem:[%s5 + $0xf8] sm:$0xff] %v1271
  %1336 = vst [vmem:[%s5 + $0x100] sm:$0xff] %v1272
  %1337 = vst [vmem:[%s5 + $0x108] sm:$0xff] %v1273
  %1338 = vst [vmem:[%s5 + $0x110] sm:$0xff] %v1274
  %1339 = vst [vmem:[%s5 + $0x118] sm:$0xff] %v1275
  %1340 = vst [vmem:[%s5 + $0x120] sm:$0xff] %v1276
  %1341 = vst [vmem:[%s5 + $0x128] sm:$0xff] %v1277
  %1342 = vst [vmem:[%s5 + $0x130] sm:$0xff] %v1278
  %1343 = vst [vmem:[%s5 + $0x138] sm:$0xff] %v1279
  %1344 = vst [vmem:[%s5 + $0x140] sm:$0xff] %v1280
  %1345 = vst [vmem:[%s5 + $0x148] sm:$0xff] %v1281
  %1346 = vst [vmem:[%s5 + $0x150] sm:$0xff] %v1282
  %1347 = vst [vmem:[%s5 + $0x158] sm:$0xff] %v1283
  %1348 = vst [vmem:[%s5 + $0x160] sm:$0xff] %v1284
  %1349 = vst [vmem:[%s5 + $0x168] sm:$0xff] %v1285
  %1350 = vst [vmem:[%s5 + $0x170] sm:$0xff] %v1286
  %1351 = vst [vmem:[%s5 + $0x178] sm:$0xff] %v1287
  %1352 = vst [vmem:[%s5 + $0x180] sm:$0xff] %v1288
  %1353 = vst [vmem:[%s5 + $0x188] sm:$0xff] %v1289
  %1354 = vst [vmem:[%s5 + $0x190] sm:$0xff] %v1290
  %1355 = vst [vmem:[%s5 + $0x198] sm:$0xff] %v1291
  %1356 = vst [vmem:[%s5 + $0x1a0] sm:$0xff] %v1292
  %1357 = vst [vmem:[%s5 + $0x1a8] sm:$0xff] %v1293
  %1358 = vst [vmem:[%s5 + $0x1b0] sm:$0xff] %v1294
  %1359 = vst [vmem:[%s5 + $0x1b8] sm:$0xff] %v1295
  %1360 = vst [vmem:[%s5 + $0x1c0] sm:$0xff] %v1296
  %1361 = vst [vmem:[%s5 + $0x1c8] sm:$0xff] %v1297
  %1362 = vst [vmem:[%s5 + $0x1d0] sm:$0xff] %v1298
  %1363 = vst [vmem:[%s5 + $0x1d8] sm:$0xff] %v1299
  %1364 = vst [vmem:[%s5 + $0x1e0] sm:$0xff] %v1300
  %1365 = vst [vmem:[%s5 + $0x1e8] sm:$0xff] %v1301
  %1366 = vst [vmem:[%s5 + $0x1f0] sm:$0xff] %v1302
  %1367 = vst [vmem:[%s5 + $0x1f8] sm:$0xff] %v1303
  // Predicated region
  $region22: #{darknet_forward.12} parent=0 // pred_check
    _
  $region23: #{darknet_forward.12} parent=0 // pred_check_branch
    %1369 = sbr.rel (0) target = $region25
  $region24: #{darknet_forward.12} parent=0 // pred_region
    _
  $region25: #{darknet_forward.12} parent=0 // pred_fallthru
    _
  // Predicated region
  $region26: #{darknet_forward.12} parent=0 // pred_check
    _
  $region27: #{darknet_forward.12} parent=0 // pred_check_branch
    %1371 = sbr.rel (0) target = $region29
  $region28: #{darknet_forward.12} parent=0 // pred_region
    _
  $region29: #{darknet_forward.12} parent=0 // pred_fallthru
    _

// kernel: darknet_forward.13
$region0: #{darknet_forward.13}
  #allocation0 [shape = 'u32[]', space=smem, size = 0x4, offset = 0x4, fixed_abs, tag = 'smem constant byte address 0x4 - core index']
  #allocation1 [shape = 'u32[144,128]{1,0:T(1,128)}', space=vmem, size = 0x12000, scoped, tag = 'internal scratch']
  %s0 = inlined_call_operand.vmem [shape: bf16[128,256], index: 0, kind: input, shape index: {}]
  %s1 = inlined_call_operand.vmem [shape: bf16[256,128], index: 1, kind: input, shape index: {}]
  %s2 = inlined_call_operand.vmem [shape: f32[1,128], index: 2, kind: input, shape index: {}]
  %s3 = inlined_call_operand.vmem [shape: f32[1,128], index: 3, kind: input, shape index: {}]
  %s4 = inlined_call_operand.vmem [shape: f32[128,128], index: 4, kind: output, shape index: {}]
  %s5 = sld [smem:[#allocation0]]
  $region26: #{darknet_forward.13} parent=0
    _
  %s7 = ssub.s32 1, %s5
  %s8 = scalar_select 0, %s7, %s5
  // Predicated region
  $region2: #{darknet_forward.13} parent=0 // pred_check
    _
  $region3: #{darknet_forward.13} parent=0 // pred_check_branch
    %10 = sbr.rel (0) target = $region5
  $region4: #{darknet_forward.13} parent=0 // pred_region
    _
  $region5: #{darknet_forward.13} parent=0 // pred_fallthru
    _
  // Predicated region
  $region6: #{darknet_forward.13} parent=0 // pred_check
    _
  $region7: #{darknet_forward.13} parent=0 // pred_check_branch
    %12 = sbr.rel (0) target = $region9
  $region8: #{darknet_forward.13} parent=0 // pred_region
    _
  $region9: #{darknet_forward.13} parent=0 // pred_fallthru
    _
  // Predicated region
  $region10: #{darknet_forward.13} parent=0 // pred_check
    _
  $region11: #{darknet_forward.13} parent=0 // pred_check_branch
    %14 = sbr.rel (0) target = $region13
  $region12: #{darknet_forward.13} parent=0 // pred_region
    _
  $region13: #{darknet_forward.13} parent=0 // pred_fallthru
    _
  // Predicated region
  $region14: #{darknet_forward.13} parent=0 // pred_check
    _
  $region15: #{darknet_forward.13} parent=0 // pred_check_branch
    %16 = sbr.rel (0) target = $region17
  $region16: #{darknet_forward.13} parent=0 // pred_region
    _
  $region17: #{darknet_forward.13} parent=0 // pred_fallthru
    _
  %v18 = vld [vmem:[%s0] sm:$0xff]
  %v19 = vld [vmem:[%s0 + $0x8] sm:$0xff]
  %v20 = vld [vmem:[%s0 + $0x10] sm:$0xff]
  %v21 = vld [vmem:[%s0 + $0x18] sm:$0xff]
  %v22 = vld [vmem:[%s0 + $0x20] sm:$0xff]
  %v23 = vld [vmem:[%s0 + $0x28] sm:$0xff]
  %v24 = vld [vmem:[%s0 + $0x30] sm:$0xff]
  %v25 = vld [vmem:[%s0 + $0x38] sm:$0xff]
  %v26 = vld [vmem:[%s0 + $0x40] sm:$0xff]
  %v27 = vld [vmem:[%s0 + $0x48] sm:$0xff]
  %v28 = vld [vmem:[%s0 + $0x50] sm:$0xff]
  %v29 = vld [vmem:[%s0 + $0x58] sm:$0xff]
  %v30 = vld [vmem:[%s0 + $0x60] sm:$0xff]
  %v31 = vld [vmem:[%s0 + $0x68] sm:$0xff]
  %v32 = vld [vmem:[%s0 + $0x70] sm:$0xff]
  %v33 = vld [vmem:[%s0 + $0x78] sm:$0xff]
  %v34 = vld [vmem:[%s1] sm:$0xf]
  %v35 = vld [vmem:[%s1 + $0x4] sm:$0xf]
  %v36 = vld [vmem:[%s1 + $0x8] sm:$0xf]
  %v37 = vld [vmem:[%s1 + $0xc] sm:$0xf]
  %v38 = vld [vmem:[%s1 + $0x10] sm:$0xf]
  %v39 = vld [vmem:[%s1 + $0x14] sm:$0xf]
  %v40 = vld [vmem:[%s1 + $0x18] sm:$0xf]
  %v41 = vld [vmem:[%s1 + $0x1c] sm:$0xf]
  %v42 = vld [vmem:[%s1 + $0x20] sm:$0xf]
  %v43 = vld [vmem:[%s1 + $0x24] sm:$0xf]
  %v44 = vld [vmem:[%s1 + $0x28] sm:$0xf]
  %v45 = vld [vmem:[%s1 + $0x2c] sm:$0xf]
  %v46 = vld [vmem:[%s1 + $0x30] sm:$0xf]
  %v47 = vld [vmem:[%s1 + $0x34] sm:$0xf]
  %v48 = vld [vmem:[%s1 + $0x38] sm:$0xf]
  %v49 = vld [vmem:[%s1 + $0x3c] sm:$0xf]
  %v50 = vld [vmem:[%s1 + $0x40] sm:$0xf]
  %v51 = vld [vmem:[%s1 + $0x44] sm:$0xf]
  %v52 = vld [vmem:[%s1 + $0x48] sm:$0xf]
  %v53 = vld [vmem:[%s1 + $0x4c] sm:$0xf]
  %v54 = vld [vmem:[%s1 + $0x50] sm:$0xf]
  %v55 = vld [vmem:[%s1 + $0x54] sm:$0xf]
  %v56 = vld [vmem:[%s1 + $0x58] sm:$0xf]
  %v57 = vld [vmem:[%s1 + $0x5c] sm:$0xf]
  %v58 = vld [vmem:[%s1 + $0x60] sm:$0xf]
  %v59 = vld [vmem:[%s1 + $0x64] sm:$0xf]
  %v60 = vld [vmem:[%s1 + $0x68] sm:$0xf]
  %v61 = vld [vmem:[%s1 + $0x6c] sm:$0xf]
  %v62 = vld [vmem:[%s1 + $0x70] sm:$0xf]
  %v63 = vld [vmem:[%s1 + $0x74] sm:$0xf]
  %v64 = vld [vmem:[%s1 + $0x78] sm:$0xf]
  %v65 = vld [vmem:[%s1 + $0x7c] sm:$0xf]
  %v82 = vunpack.c.l.b16 %v18
  %v83 = vunpack.c.h.b16 %v18
  %v84 = vunpack.c.l.b16 %v19
  %v85 = vunpack.c.h.b16 %v19
  %v86 = vunpack.c.l.b16 %v20
  %v87 = vunpack.c.h.b16 %v20
  %v88 = vunpack.c.l.b16 %v21
  %v89 = vunpack.c.h.b16 %v21
  %v90 = vunpack.c.l.b16 %v22
  %v91 = vunpack.c.h.b16 %v22
  %v92 = vunpack.c.l.b16 %v23
  %v93 = vunpack.c.h.b16 %v23
  %v94 = vunpack.c.l.b16 %v24
  %v95 = vunpack.c.h.b16 %v24
  %v96 = vunpack.c.l.b16 %v25
  %v97 = vunpack.c.h.b16 %v25
  %v98 = vunpack.c.l.b16 %v26
  %v99 = vunpack.c.h.b16 %v26
  %v100 = vunpack.c.l.b16 %v27
  %v101 = vunpack.c.h.b16 %v27
  %v102 = vunpack.c.l.b16 %v28
  %v103 = vunpack.c.h.b16 %v28
  %v104 = vunpack.c.l.b16 %v29
  %v105 = vunpack.c.h.b16 %v29
  %v106 = vunpack.c.l.b16 %v30
  %v107 = vunpack.c.h.b16 %v30
  %v108 = vunpack.c.l.b16 %v31
  %v109 = vunpack.c.h.b16 %v31
  %v110 = vunpack.c.l.b16 %v32
  %v111 = vunpack.c.h.b16 %v32
  %v112 = vunpack.c.l.b16 %v33
  %v113 = vunpack.c.h.b16 %v33
  %v114 = vpack.c.b16 %v84, %v82
  %v115 = vpack.c.b16 %v85, %v83
  %v116 = vpack.c.b16 %v88, %v86
  %v117 = vpack.c.b16 %v89, %v87
  %v118 = vpack.c.b16 %v92, %v90
  %v119 = vpack.c.b16 %v93, %v91
  %v120 = vpack.c.b16 %v96, %v94
  %v121 = vpack.c.b16 %v97, %v95
  %v122 = vpack.c.b16 %v100, %v98
  %v123 = vpack.c.b16 %v101, %v99
  %v124 = vpack.c.b16 %v104, %v102
  %v125 = vpack.c.b16 %v105, %v103
  %v126 = vpack.c.b16 %v108, %v106
  %v127 = vpack.c.b16 %v109, %v107
  %v128 = vpack.c.b16 %v112, %v110
  %v129 = vpack.c.b16 %v113, %v111
  %v178 = vunpack.c.l.b16 %v34
  %v179 = vunpack.c.l.b16 %v35
  %v180 = vunpack.c.l.b16 %v36
  %v181 = vunpack.c.l.b16 %v37
  %v182 = vunpack.c.l.b16 %v38
  %v183 = vunpack.c.l.b16 %v39
  %v184 = vunpack.c.l.b16 %v40
  %v185 = vunpack.c.l.b16 %v41
  %v186 = vunpack.c.l.b16 %v42
  %v187 = vunpack.c.l.b16 %v43
  %v188 = vunpack.c.l.b16 %v44
  %v189 = vunpack.c.l.b16 %v45
  %v190 = vunpack.c.l.b16 %v46
  %v191 = vunpack.c.l.b16 %v47
  %v192 = vunpack.c.l.b16 %v48
  %v193 = vunpack.c.l.b16 %v49
  %v194 = vunpack.c.l.b16 %v50
  %v195 = vunpack.c.l.b16 %v51
  %v196 = vunpack.c.l.b16 %v52
  %v197 = vunpack.c.l.b16 %v53
  %v198 = vunpack.c.l.b16 %v54
  %v199 = vunpack.c.l.b16 %v55
  %v200 = vunpack.c.l.b16 %v56
  %v201 = vunpack.c.l.b16 %v57
  %v202 = vunpack.c.l.b16 %v58
  %v203 = vunpack.c.l.b16 %v59
  %v204 = vunpack.c.l.b16 %v60
  %v205 = vunpack.c.l.b16 %v61
  %v206 = vunpack.c.l.b16 %v62
  %v207 = vunpack.c.l.b16 %v63
  %v208 = vunpack.c.l.b16 %v64
  %v209 = vunpack.c.l.b16 %v65
  %v210 = vpack.c.b16 %v179, %v178
  %v211 = vpack.c.b16 %v181, %v180
  %v212 = vpack.c.b16 %v183, %v182
  %v213 = vpack.c.b16 %v185, %v184
  %v214 = vpack.c.b16 %v187, %v186
  %v215 = vpack.c.b16 %v189, %v188
  %v216 = vpack.c.b16 %v191, %v190
  %v217 = vpack.c.b16 %v193, %v192
  %v218 = vpack.c.b16 %v195, %v194
  %v219 = vpack.c.b16 %v197, %v196
  %v220 = vpack.c.b16 %v199, %v198
  %v221 = vpack.c.b16 %v201, %v200
  %v222 = vpack.c.b16 %v203, %v202
  %v223 = vpack.c.b16 %v205, %v204
  %v224 = vpack.c.b16 %v207, %v206
  %v225 = vpack.c.b16 %v209, %v208
  %242 = vmatprep.subr.bf16.mxu0 0
  %243 = vmatpush1.bf16.msra.mxu0 %v210
  %244 = vmatprep.subr.bf16.mxu0 0
  %245 = vmatpush1.bf16.msra.mxu0 %v211
  %246 = vmatprep.subr.bf16.mxu0 0
  %247 = vmatpush1.bf16.msra.mxu0 %v212
  %248 = vmatprep.subr.bf16.mxu0 0
  %249 = vmatpush1.bf16.msra.mxu0 %v213
  %250 = vmatprep.subr.bf16.mxu0 0
  %251 = vmatpush1.bf16.msra.mxu0 %v214
  %252 = vmatprep.subr.bf16.mxu0 0
  %253 = vmatpush1.bf16.msra.mxu0 %v215
  %254 = vmatprep.subr.bf16.mxu0 0
  %255 = vmatpush1.bf16.msra.mxu0 %v216
  %256 = vmatprep.subr.bf16.mxu0 0
  %257 = vmatpush1.bf16.msra.mxu0 %v217
  %258 = vmatprep.subr.bf16.mxu0 0
  %259 = vmatpush1.bf16.msra.mxu0 %v218
  %260 = vmatprep.subr.bf16.mxu0 0
  %261 = vmatpush1.bf16.msra.mxu0 %v219
  %262 = vmatprep.subr.bf16.mxu0 0
  %263 = vmatpush1.bf16.msra.mxu0 %v220
  %264 = vmatprep.subr.bf16.mxu0 0
  %265 = vmatpush1.bf16.msra.mxu0 %v221
  %266 = vmatprep.subr.bf16.mxu0 0
  %267 = vmatpush1.bf16.msra.mxu0 %v222
  %268 = vmatprep.subr.bf16.mxu0 0
  %269 = vmatpush1.bf16.msra.mxu0 %v223
  %270 = vmatprep.subr.bf16.mxu0 0
  %271 = vmatpush1.bf16.msra.mxu0 %v224
  %272 = vmatprep.subr.bf16.mxu0 0
  %273 = vmatpush1.bf16.msra.mxu0 %v225
  %274 = vmatprep.mubr.bf16.mxu0 %v115
  %275 = vmatmul.mubr.bf16.gmra.mrb[0].mxu0 %v114
  %v276 = vpop.f32.mrb[0].mxu0
  %v277 = vadd.f32 0.0, %v276
  %v278 = vpop.f32.mrb[0].mxu0
  %v279 = vpop.f32.mrb[0].mxu0
  %v280 = vadd.f32 0.0, %v279
  %v281 = vpop.f32.mrb[0].mxu0
  %282 = vmatprep.mubr.bf16.mxu0 %v117
  %283 = vmatmul.mubr.bf16.gmra.mrb[0].mxu0 %v116
  %v284 = vpop.f32.mrb[0].mxu0
  %v285 = vadd.f32 0.0, %v284
  %v286 = vpop.f32.mrb[0].mxu0
  %v287 = vpop.f32.mrb[0].mxu0
  %v288 = vadd.f32 0.0, %v287
  %v289 = vpop.f32.mrb[0].mxu0
  %290 = vmatprep.mubr.bf16.mxu0 %v119
  %291 = vmatmul.mubr.bf16.gmra.mrb[0].mxu0 %v118
  %v292 = vpop.f32.mrb[0].mxu0
  %v293 = vadd.f32 0.0, %v292
  %v294 = vpop.f32.mrb[0].mxu0
  %v295 = vpop.f32.mrb[0].mxu0
  %v296 = vadd.f32 0.0, %v295
  %v297 = vpop.f32.mrb[0].mxu0
  %298 = vmatprep.mubr.bf16.mxu0 %v121
  %299 = vmatmul.mubr.bf16.gmra.mrb[0].mxu0 %v120
  %v300 = vpop.f32.mrb[0].mxu0
  %v301 = vadd.f32 0.0, %v300
  %v302 = vpop.f32.mrb[0].mxu0
  %v303 = vpop.f32.mrb[0].mxu0
  %v304 = vadd.f32 0.0, %v303
  %v305 = vpop.f32.mrb[0].mxu0
  %306 = vmatprep.mubr.bf16.mxu0 %v123
  %307 = vmatmul.mubr.bf16.gmra.mrb[0].mxu0 %v122
  %v308 = vpop.f32.mrb[0].mxu0
  %v309 = vadd.f32 0.0, %v308
  %v310 = vpop.f32.mrb[0].mxu0
  %v311 = vpop.f32.mrb[0].mxu0
  %v312 = vadd.f32 0.0, %v311
  %v313 = vpop.f32.mrb[0].mxu0
  %314 = vmatprep.mubr.bf16.mxu0 %v125
  %315 = vmatmul.mubr.bf16.gmra.mrb[0].mxu0 %v124
  %v316 = vpop.f32.mrb[0].mxu0
  %v317 = vadd.f32 0.0, %v316
  %v318 = vpop.f32.mrb[0].mxu0
  %v319 = vpop.f32.mrb[0].mxu0
  %v320 = vadd.f32 0.0, %v319
  %v321 = vpop.f32.mrb[0].mxu0
  %322 = vmatprep.mubr.bf16.mxu0 %v127
  %323 = vmatmul.mubr.bf16.gmra.mrb[0].mxu0 %v126
  %v324 = vpop.f32.mrb[0].mxu0
  %v325 = vadd.f32 0.0, %v324
  %v326 = vpop.f32.mrb[0].mxu0
  %v327 = vpop.f32.mrb[0].mxu0
  %v328 = vadd.f32 0.0, %v327
  %v329 = vpop.f32.mrb[0].mxu0
  %330 = vmatprep.mubr.bf16.mxu0 %v129
  %331 = vmatmul.mubr.bf16.gmra.mrb[0].mxu0 %v128
  %v332 = vpop.f32.mrb[0].mxu0
  %v333 = vadd.f32 0.0, %v332
  %v334 = vpop.f32.mrb[0].mxu0
  %v335 = vpop.f32.mrb[0].mxu0
  %v336 = vadd.f32 0.0, %v335
  %v337 = vpop.f32.mrb[0].mxu0
  %338 = vdwg.mxu0
  %v339 = vadd.f32 %v277, %v280
  %v340 = vadd.f32 %v339, %v285
  %v341 = vadd.f32 %v340, %v288
  %v342 = vadd.f32 %v341, %v293
  %v343 = vadd.f32 %v342, %v296
  %v344 = vadd.f32 %v343, %v301
  %v345 = vadd.f32 %v344, %v304
  %v346 = vadd.f32 %v345, %v309
  %v347 = vadd.f32 %v346, %v312
  %v348 = vadd.f32 %v347, %v317
  %v349 = vadd.f32 %v348, %v320
  %v350 = vadd.f32 %v349, %v325
  %v351 = vadd.f32 %v350, %v328
  %v352 = vadd.f32 %v351, %v333
  %v353 = vadd.f32 %v352, %v336
  %v354 = vrot.slane %v353, 4
  %v355 = vadd.f32 %v353, %v354
  %v356 = vrot.slane %v355, 2
  %v357 = vadd.f32 %v355, %v356
  %v358 = vrot.slane %v357, 1
  %v359 = vadd.f32 %v357, %v358
  %v360 = vmul.f32 %v359, 0.0078125
  %v361 = vmul.f32 %v277, %v277
  %v362 = vmul.f32 %v280, %v280
  %v363 = vmul.f32 %v285, %v285
  %v364 = vmul.f32 %v288, %v288
  %v365 = vmul.f32 %v293, %v293
  %v366 = vmul.f32 %v296, %v296
  %v367 = vmul.f32 %v301, %v301
  %v368 = vmul.f32 %v304, %v304
  %v369 = vmul.f32 %v309, %v309
  %v370 = vmul.f32 %v312, %v312
  %v371 = vmul.f32 %v317, %v317
  %v372 = vmul.f32 %v320, %v320
  %v373 = vmul.f32 %v325, %v325
  %v374 = vmul.f32 %v328, %v328
  %v375 = vmul.f32 %v333, %v333
  %v376 = vmul.f32 %v336, %v336
  %v377 = vadd.f32 %v361, %v362
  %v378 = vadd.f32 %v377, %v363
  %v379 = vadd.f32 %v378, %v364
  %v380 = vadd.f32 %v379, %v365
  %v381 = vadd.f32 %v380, %v366
  %v382 = vadd.f32 %v381, %v367
  %v383 = vadd.f32 %v382, %v368
  %v384 = vadd.f32 %v383, %v369
  %v385 = vadd.f32 %v384, %v370
  %v386 = vadd.f32 %v385, %v371
  %v387 = vadd.f32 %v386, %v372
  %v388 = vadd.f32 %v387, %v373
  %v389 = vadd.f32 %v388, %v374
  %v390 = vadd.f32 %v389, %v375
  %v391 = vadd.f32 %v390, %v376
  %v392 = vrot.slane %v391, 4
  %v393 = vadd.f32 %v391, %v392
  %v394 = vrot.slane %v393, 2
  %v395 = vadd.f32 %v393, %v394
  %v396 = vrot.slane %v395, 1
  %v397 = vadd.f32 %v395, %v396
  %v398 = vmul.f32 %v397, 0.0078125
  %v399 = vmul.f32 %v360, %v360
  %v400 = vsub.f32 %v398, %v399
  %v401 = vmax.f32 %v400, 0.0
  %v402 = vld [vmem:[%s2] sm:$0x1]
  %v403 = vadd.f32 %v401, 1e-05
  %v404 = vrsqrt.pop %v403
  %v405 = vmul.f32 %v402, %v404
  %v406 = vld [vmem:[%s3] sm:$0x1]
  %v407 = vmul.f32 %v360, %v405
  %v408 = vsub.f32 %v406, %v407
  %v410 = vlaneseq
  %v411 = vshrl.u32 %v410, 7
  %v412 = vsub.s32 0, %v411
  %v413 = vrot.slane %v405, %v412
  %v415 = vmul.f32 %v277, %v413
  %v416 = vmul.f32 %v280, %v413
  %v417 = vmul.f32 %v285, %v413
  %v418 = vmul.f32 %v288, %v413
  %v419 = vmul.f32 %v293, %v413
  %v420 = vmul.f32 %v296, %v413
  %v421 = vmul.f32 %v301, %v413
  %v422 = vmul.f32 %v304, %v413
  %v423 = vmul.f32 %v309, %v413
  %v424 = vmul.f32 %v312, %v413
  %v425 = vmul.f32 %v317, %v413
  %v426 = vmul.f32 %v320, %v413
  %v427 = vmul.f32 %v325, %v413
  %v428 = vmul.f32 %v328, %v413
  %v429 = vmul.f32 %v333, %v413
  %v430 = vmul.f32 %v336, %v413
  %v432 = vlaneseq
  %v433 = vshrl.u32 %v432, 7
  %v434 = vsub.s32 0, %v433
  %v435 = vrot.slane %v408, %v434
  %v437 = vadd.f32 %v415, %v435
  %v438 = vadd.f32 %v416, %v435
  %v439 = vadd.f32 %v417, %v435
  %v440 = vadd.f32 %v418, %v435
  %v441 = vadd.f32 %v419, %v435
  %v442 = vadd.f32 %v420, %v435
  %v443 = vadd.f32 %v421, %v435
  %v444 = vadd.f32 %v422, %v435
  %v445 = vadd.f32 %v423, %v435
  %v446 = vadd.f32 %v424, %v435
  %v447 = vadd.f32 %v425, %v435
  %v448 = vadd.f32 %v426, %v435
  %v449 = vadd.f32 %v427, %v435
  %v450 = vadd.f32 %v428, %v435
  %v451 = vadd.f32 %v429, %v435
  %v452 = vadd.f32 %v430, %v435
  %vm453 = vcmp.gt.f32.partialorder %v437, 0.0
  %vm454 = vcmp.gt.f32.partialorder %v438, 0.0
  %vm455 = vcmp.gt.f32.partialorder %v439, 0.0
  %vm456 = vcmp.gt.f32.partialorder %v440, 0.0
  %vm457 = vcmp.gt.f32.partialorder %v441, 0.0
  %vm458 = vcmp.gt.f32.partialorder %v442, 0.0
  %vm459 = vcmp.gt.f32.partialorder %v443, 0.0
  %vm460 = vcmp.gt.f32.partialorder %v444, 0.0
  %vm461 = vcmp.gt.f32.partialorder %v445, 0.0
  %vm462 = vcmp.gt.f32.partialorder %v446, 0.0
  %vm463 = vcmp.gt.f32.partialorder %v447, 0.0
  %vm464 = vcmp.gt.f32.partialorder %v448, 0.0
  %vm465 = vcmp.gt.f32.partialorder %v449, 0.0
  %vm466 = vcmp.gt.f32.partialorder %v450, 0.0
  %vm467 = vcmp.gt.f32.partialorder %v451, 0.0
  %vm468 = vcmp.gt.f32.partialorder %v452, 0.0
  %v469 = vmul.f32 %v437, 0.1
  %v470 = vmul.f32 %v438, 0.1
  %v471 = vmul.f32 %v439, 0.1
  %v472 = vmul.f32 %v440, 0.1
  %v473 = vmul.f32 %v441, 0.1
  %v474 = vmul.f32 %v442, 0.1
  %v475 = vmul.f32 %v443, 0.1
  %v476 = vmul.f32 %v444, 0.1
  %v477 = vmul.f32 %v445, 0.1
  %v478 = vmul.f32 %v446, 0.1
  %v479 = vmul.f32 %v447, 0.1
  %v480 = vmul.f32 %v448, 0.1
  %v481 = vmul.f32 %v449, 0.1
  %v482 = vmul.f32 %v450, 0.1
  %v483 = vmul.f32 %v451, 0.1
  %v484 = vmul.f32 %v452, 0.1
  %v485 = vsel %vm453, %v437, %v469
  %v486 = vsel %vm454, %v438, %v470
  %v487 = vsel %vm455, %v439, %v471
  %v488 = vsel %vm456, %v440, %v472
  %v489 = vsel %vm457, %v441, %v473
  %v490 = vsel %vm458, %v442, %v474
  %v491 = vsel %vm459, %v443, %v475
  %v492 = vsel %vm460, %v444, %v476
  %v493 = vsel %vm461, %v445, %v477
  %v494 = vsel %vm462, %v446, %v478
  %v495 = vsel %vm463, %v447, %v479
  %v496 = vsel %vm464, %v448, %v480
  %v497 = vsel %vm465, %v449, %v481
  %v498 = vsel %vm466, %v450, %v482
  %v499 = vsel %vm467, %v451, %v483
  %v500 = vsel %vm468, %v452, %v484
  %501 = vst [vmem:[%s4] sm:$0xff] %v485
  %502 = vst [vmem:[%s4 + $0x8] sm:$0xff] %v486
  %503 = vst [vmem:[%s4 + $0x10] sm:$0xff] %v487
  %504 = vst [vmem:[%s4 + $0x18] sm:$0xff] %v488
  %505 = vst [vmem:[%s4 + $0x20] sm:$0xff] %v489
  %506 = vst [vmem:[%s4 + $0x28] sm:$0xff] %v490
  %507 = vst [vmem:[%s4 + $0x30] sm:$0xff] %v491
  %508 = vst [vmem:[%s4 + $0x38] sm:$0xff] %v492
  %509 = vst [vmem:[%s4 + $0x40] sm:$0xff] %v493
  %510 = vst [vmem:[%s4 + $0x48] sm:$0xff] %v494
  %511 = vst [vmem:[%s4 + $0x50] sm:$0xff] %v495
  %512 = vst [vmem:[%s4 + $0x58] sm:$0xff] %v496
  %513 = vst [vmem:[%s4 + $0x60] sm:$0xff] %v497
  %514 = vst [vmem:[%s4 + $0x68] sm:$0xff] %v498
  %515 = vst [vmem:[%s4 + $0x70] sm:$0xff] %v499
  %516 = vst [vmem:[%s4 + $0x78] sm:$0xff] %v500
  // Predicated region
  $region18: #{darknet_forward.13} parent=0 // pred_check
    _
  $region19: #{darknet_forward.13} parent=0 // pred_check_branch
    %518 = sbr.rel (0) target = $region21
  $region20: #{darknet_forward.13} parent=0 // pred_region
    _
  $region21: #{darknet_forward.13} parent=0 // pred_fallthru
    _
  // Predicated region
  $region22: #{darknet_forward.13} parent=0 // pred_check
    _
  $region23: #{darknet_forward.13} parent=0 // pred_check_branch
    %520 = sbr.rel (0) target = $region25
  $region24: #{darknet_forward.13} parent=0 // pred_region
    _
  $region25: #{darknet_forward.13} parent=0 // pred_fallthru
    _

// kernel: darknet_forward.15
$region0: #{darknet_forward.15}
  #allocation0 [shape = 'u32[]', space=smem, size = 0x4, offset = 0x4, fixed_abs, tag = 'smem constant byte address 0x4 - core index']
  #allocation1 [shape = 'u32[144,128]{1,0:T(1,128)}', space=vmem, size = 0x12000, scoped, tag = 'internal scratch']
  %s0 = inlined_call_operand.vmem [shape: bf16[128,128], index: 0, kind: input, shape index: {}]
  %s1 = inlined_call_operand.vmem [shape: bf16[128,128], index: 1, kind: input, shape index: {}]
  %s2 = inlined_call_operand.vmem [shape: f32[1,128], index: 2, kind: input, shape index: {}]
  %s3 = inlined_call_operand.vmem [shape: f32[1,128], index: 3, kind: input, shape index: {}]
  %s4 = inlined_call_operand.vmem [shape: f32[128,128], index: 4, kind: output, shape index: {}]
  %s5 = sld [smem:[#allocation0]]
  $region26: #{darknet_forward.15} parent=0
    _
  %s7 = ssub.s32 1, %s5
  %s8 = scalar_select 0, %s7, %s5
  // Predicated region
  $region2: #{darknet_forward.15} parent=0 // pred_check
    _
  $region3: #{darknet_forward.15} parent=0 // pred_check_branch
    %10 = sbr.rel (0) target = $region5
  $region4: #{darknet_forward.15} parent=0 // pred_region
    _
  $region5: #{darknet_forward.15} parent=0 // pred_fallthru
    _
  // Predicated region
  $region6: #{darknet_forward.15} parent=0 // pred_check
    _
  $region7: #{darknet_forward.15} parent=0 // pred_check_branch
    %12 = sbr.rel (0) target = $region9
  $region8: #{darknet_forward.15} parent=0 // pred_region
    _
  $region9: #{darknet_forward.15} parent=0 // pred_fallthru
    _
  // Predicated region
  $region10: #{darknet_forward.15} parent=0 // pred_check
    _
  $region11: #{darknet_forward.15} parent=0 // pred_check_branch
    %14 = sbr.rel (0) target = $region13
  $region12: #{darknet_forward.15} parent=0 // pred_region
    _
  $region13: #{darknet_forward.15} parent=0 // pred_fallthru
    _
  // Predicated region
  $region14: #{darknet_forward.15} parent=0 // pred_check
    _
  $region15: #{darknet_forward.15} parent=0 // pred_check_branch
    %16 = sbr.rel (0) target = $region17
  $region16: #{darknet_forward.15} parent=0 // pred_region
    _
  $region17: #{darknet_forward.15} parent=0 // pred_fallthru
    _
  %v18 = vld [vmem:[%s0] sm:$0xf]
  %v19 = vld [vmem:[%s0 + $0x4] sm:$0xf]
  %v20 = vld [vmem:[%s0 + $0x8] sm:$0xf]
  %v21 = vld [vmem:[%s0 + $0xc] sm:$0xf]
  %v22 = vld [vmem:[%s0 + $0x10] sm:$0xf]
  %v23 = vld [vmem:[%s0 + $0x14] sm:$0xf]
  %v24 = vld [vmem:[%s0 + $0x18] sm:$0xf]
  %v25 = vld [vmem:[%s0 + $0x1c] sm:$0xf]
  %v26 = vld [vmem:[%s0 + $0x20] sm:$0xf]
  %v27 = vld [vmem:[%s0 + $0x24] sm:$0xf]
  %v28 = vld [vmem:[%s0 + $0x28] sm:$0xf]
  %v29 = vld [vmem:[%s0 + $0x2c] sm:$0xf]
  %v30 = vld [vmem:[%s0 + $0x30] sm:$0xf]
  %v31 = vld [vmem:[%s0 + $0x34] sm:$0xf]
  %v32 = vld [vmem:[%s0 + $0x38] sm:$0xf]
  %v33 = vld [vmem:[%s0 + $0x3c] sm:$0xf]
  %v34 = vld [vmem:[%s1] sm:$0xf]
  %v35 = vld [vmem:[%s1 + $0x4] sm:$0xf]
  %v36 = vld [vmem:[%s1 + $0x8] sm:$0xf]
  %v37 = vld [vmem:[%s1 + $0xc] sm:$0xf]
  %v38 = vld [vmem:[%s1 + $0x10] sm:$0xf]
  %v39 = vld [vmem:[%s1 + $0x14] sm:$0xf]
  %v40 = vld [vmem:[%s1 + $0x18] sm:$0xf]
  %v41 = vld [vmem:[%s1 + $0x1c] sm:$0xf]
  %v42 = vld [vmem:[%s1 + $0x20] sm:$0xf]
  %v43 = vld [vmem:[%s1 + $0x24] sm:$0xf]
  %v44 = vld [vmem:[%s1 + $0x28] sm:$0xf]
  %v45 = vld [vmem:[%s1 + $0x2c] sm:$0xf]
  %v46 = vld [vmem:[%s1 + $0x30] sm:$0xf]
  %v47 = vld [vmem:[%s1 + $0x34] sm:$0xf]
  %v48 = vld [vmem:[%s1 + $0x38] sm:$0xf]
  %v49 = vld [vmem:[%s1 + $0x3c] sm:$0xf]
  %v66 = vunpack.c.l.b16 %v18
  %v67 = vunpack.c.l.b16 %v19
  %v68 = vunpack.c.l.b16 %v20
  %v69 = vunpack.c.l.b16 %v21
  %v70 = vunpack.c.l.b16 %v22
  %v71 = vunpack.c.l.b16 %v23
  %v72 = vunpack.c.l.b16 %v24
  %v73 = vunpack.c.l.b16 %v25
  %v74 = vunpack.c.l.b16 %v26
  %v75 = vunpack.c.l.b16 %v27
  %v76 = vunpack.c.l.b16 %v28
  %v77 = vunpack.c.l.b16 %v29
  %v78 = vunpack.c.l.b16 %v30
  %v79 = vunpack.c.l.b16 %v31
  %v80 = vunpack.c.l.b16 %v32
  %v81 = vunpack.c.l.b16 %v33
  %v82 = vpack.c.b16 %v67, %v66
  %v83 = vpack.c.b16 %v69, %v68
  %v84 = vpack.c.b16 %v71, %v70
  %v85 = vpack.c.b16 %v73, %v72
  %v86 = vpack.c.b16 %v75, %v74
  %v87 = vpack.c.b16 %v77, %v76
  %v88 = vpack.c.b16 %v79, %v78
  %v89 = vpack.c.b16 %v81, %v80
  %v114 = vunpack.c.l.b16 %v34
  %v115 = vunpack.c.l.b16 %v35
  %v116 = vunpack.c.l.b16 %v36
  %v117 = vunpack.c.l.b16 %v37
  %v118 = vunpack.c.l.b16 %v38
  %v119 = vunpack.c.l.b16 %v39
  %v120 = vunpack.c.l.b16 %v40
  %v121 = vunpack.c.l.b16 %v41
  %v122 = vunpack.c.l.b16 %v42
  %v123 = vunpack.c.l.b16 %v43
  %v124 = vunpack.c.l.b16 %v44
  %v125 = vunpack.c.l.b16 %v45
  %v126 = vunpack.c.l.b16 %v46
  %v127 = vunpack.c.l.b16 %v47
  %v128 = vunpack.c.l.b16 %v48
  %v129 = vunpack.c.l.b16 %v49
  %v130 = vpack.c.b16 %v115, %v114
  %v131 = vpack.c.b16 %v117, %v116
  %v132 = vpack.c.b16 %v119, %v118
  %v133 = vpack.c.b16 %v121, %v120
  %v134 = vpack.c.b16 %v123, %v122
  %v135 = vpack.c.b16 %v125, %v124
  %v136 = vpack.c.b16 %v127, %v126
  %v137 = vpack.c.b16 %v129, %v128
  %146 = vmatprep.subr.bf16.mxu0 0
  %147 = vmatpush1.bf16.msra.mxu0 %v130
  %148 = vmatprep.subr.bf16.mxu0 0
  %149 = vmatpush1.bf16.msra.mxu0 %v131
  %150 = vmatprep.subr.bf16.mxu0 0
  %151 = vmatpush1.bf16.msra.mxu0 %v132
  %152 = vmatprep.subr.bf16.mxu0 0
  %153 = vmatpush1.bf16.msra.mxu0 %v133
  %154 = vmatprep.subr.bf16.mxu0 0
  %155 = vmatpush1.bf16.msra.mxu0 %v134
  %156 = vmatprep.subr.bf16.mxu0 0
  %157 = vmatpush1.bf16.msra.mxu0 %v135
  %158 = vmatprep.subr.bf16.mxu0 0
  %159 = vmatpush1.bf16.msra.mxu0 %v136
  %160 = vmatprep.subr.bf16.mxu0 0
  %161 = vmatpush1.bf16.msra.mxu0 %v137
  %162 = vmatprep.subr.bf16.mxu0 0
  %163 = vmatpush1.bf16.msra.mxu0 0
  %164 = vmatprep.subr.bf16.mxu0 0
  %165 = vmatpush1.bf16.msra.mxu0 0
  %166 = vmatprep.subr.bf16.mxu0 0
  %167 = vmatpush1.bf16.msra.mxu0 0
  %168 = vmatprep.subr.bf16.mxu0 0
  %169 = vmatpush1.bf16.msra.mxu0 0
  %170 = vmatprep.subr.bf16.mxu0 0
  %171 = vmatpush1.bf16.msra.mxu0 0
  %172 = vmatprep.subr.bf16.mxu0 0
  %173 = vmatpush1.bf16.msra.mxu0 0
  %174 = vmatprep.subr.bf16.mxu0 0
  %175 = vmatpush1.bf16.msra.mxu0 0
  %176 = vmatprep.subr.bf16.mxu0 0
  %177 = vmatpush1.bf16.msra.mxu0 0
  %178 = vmatprep.mubr.bf16.mxu0 0
  %179 = vmatmul.mubr.bf16.gmra.mrb[0].mxu0 %v82
  %v180 = vpop.f32.mrb[0].mxu0
  %v181 = vadd.f32 0.0, %v180
  %v182 = vpop.f32.mrb[0].mxu0
  %v183 = vpop.f32.mrb[0].mxu0
  %v184 = vadd.f32 0.0, %v183
  %v185 = vpop.f32.mrb[0].mxu0
  %186 = vmatprep.mubr.bf16.mxu0 0
  %187 = vmatmul.mubr.bf16.gmra.mrb[0].mxu0 %v83
  %v188 = vpop.f32.mrb[0].mxu0
  %v189 = vadd.f32 0.0, %v188
  %v190 = vpop.f32.mrb[0].mxu0
  %v191 = vpop.f32.mrb[0].mxu0
  %v192 = vadd.f32 0.0, %v191
  %v193 = vpop.f32.mrb[0].mxu0
  %194 = vmatprep.mubr.bf16.mxu0 0
  %195 = vmatmul.mubr.bf16.gmra.mrb[0].mxu0 %v84
  %v196 = vpop.f32.mrb[0].mxu0
  %v197 = vadd.f32 0.0, %v196
  %v198 = vpop.f32.mrb[0].mxu0
  %v199 = vpop.f32.mrb[0].mxu0
  %v200 = vadd.f32 0.0, %v199
  %v201 = vpop.f32.mrb[0].mxu0
  %202 = vmatprep.mubr.bf16.mxu0 0
  %203 = vmatmul.mubr.bf16.gmra.mrb[0].mxu0 %v85
  %v204 = vpop.f32.mrb[0].mxu0
  %v205 = vadd.f32 0.0, %v204
  %v206 = vpop.f32.mrb[0].mxu0
  %v207 = vpop.f32.mrb[0].mxu0
  %v208 = vadd.f32 0.0, %v207
  %v209 = vpop.f32.mrb[0].mxu0
  %210 = vmatprep.mubr.bf16.mxu0 0
  %211 = vmatmul.mubr.bf16.gmra.mrb[0].mxu0 %v86
  %v212 = vpop.f32.mrb[0].mxu0
  %v213 = vadd.f32 0.0, %v212
  %v214 = vpop.f32.mrb[0].mxu0
  %v215 = vpop.f32.mrb[0].mxu0
  %v216 = vadd.f32 0.0, %v215
  %v217 = vpop.f32.mrb[0].mxu0
  %218 = vmatprep.mubr.bf16.mxu0 0
  %219 = vmatmul.mubr.bf16.gmra.mrb[0].mxu0 %v87
  %v220 = vpop.f32.mrb[0].mxu0
  %v221 = vadd.f32 0.0, %v220
  %v222 = vpop.f32.mrb[0].mxu0
  %v223 = vpop.f32.mrb[0].mxu0
  %v224 = vadd.f32 0.0, %v223
  %v225 = vpop.f32.mrb[0].mxu0
  %226 = vmatprep.mubr.bf16.mxu0 0
  %227 = vmatmul.mubr.bf16.gmra.mrb[0].mxu0 %v88
  %v228 = vpop.f32.mrb[0].mxu0
  %v229 = vadd.f32 0.0, %v228
  %v230 = vpop.f32.mrb[0].mxu0
  %v231 = vpop.f32.mrb[0].mxu0
  %v232 = vadd.f32 0.0, %v231
  %v233 = vpop.f32.mrb[0].mxu0
  %234 = vmatprep.mubr.bf16.mxu0 0
  %235 = vmatmul.mubr.bf16.gmra.mrb[0].mxu0 %v89
  %v236 = vpop.f32.mrb[0].mxu0
  %v237 = vadd.f32 0.0, %v236
  %v238 = vpop.f32.mrb[0].mxu0
  %v239 = vpop.f32.mrb[0].mxu0
  %v240 = vadd.f32 0.0, %v239
  %v241 = vpop.f32.mrb[0].mxu0
  %242 = vdwg.mxu0
  %v243 = vadd.f32 %v181, %v184
  %v244 = vadd.f32 %v243, %v189
  %v245 = vadd.f32 %v244, %v192
  %v246 = vadd.f32 %v245, %v197
  %v247 = vadd.f32 %v246, %v200
  %v248 = vadd.f32 %v247, %v205
  %v249 = vadd.f32 %v248, %v208
  %v250 = vadd.f32 %v249, %v213
  %v251 = vadd.f32 %v250, %v216
  %v252 = vadd.f32 %v251, %v221
  %v253 = vadd.f32 %v252, %v224
  %v254 = vadd.f32 %v253, %v229
  %v255 = vadd.f32 %v254, %v232
  %v256 = vadd.f32 %v255, %v237
  %v257 = vadd.f32 %v256, %v240
  %v258 = vrot.slane %v257, 4
  %v259 = vadd.f32 %v257, %v258
  %v260 = vrot.slane %v259, 2
  %v261 = vadd.f32 %v259, %v260
  %v262 = vrot.slane %v261, 1
  %v263 = vadd.f32 %v261, %v262
  %v264 = vmul.f32 %v263, 0.0078125
  %v265 = vmul.f32 %v181, %v181
  %v266 = vmul.f32 %v184, %v184
  %v267 = vmul.f32 %v189, %v189
  %v268 = vmul.f32 %v192, %v192
  %v269 = vmul.f32 %v197, %v197
  %v270 = vmul.f32 %v200, %v200
  %v271 = vmul.f32 %v205, %v205
  %v272 = vmul.f32 %v208, %v208
  %v273 = vmul.f32 %v213, %v213
  %v274 = vmul.f32 %v216, %v216
  %v275 = vmul.f32 %v221, %v221
  %v276 = vmul.f32 %v224, %v224
  %v277 = vmul.f32 %v229, %v229
  %v278 = vmul.f32 %v232, %v232
  %v279 = vmul.f32 %v237, %v237
  %v280 = vmul.f32 %v240, %v240
  %v281 = vadd.f32 %v265, %v266
  %v282 = vadd.f32 %v281, %v267
  %v283 = vadd.f32 %v282, %v268
  %v284 = vadd.f32 %v283, %v269
  %v285 = vadd.f32 %v284, %v270
  %v286 = vadd.f32 %v285, %v271
  %v287 = vadd.f32 %v286, %v272
  %v288 = vadd.f32 %v287, %v273
  %v289 = vadd.f32 %v288, %v274
  %v290 = vadd.f32 %v289, %v275
  %v291 = vadd.f32 %v290, %v276
  %v292 = vadd.f32 %v291, %v277
  %v293 = vadd.f32 %v292, %v278
  %v294 = vadd.f32 %v293, %v279
  %v295 = vadd.f32 %v294, %v280
  %v296 = vrot.slane %v295, 4
  %v297 = vadd.f32 %v295, %v296
  %v298 = vrot.slane %v297, 2
  %v299 = vadd.f32 %v297, %v298
  %v300 = vrot.slane %v299, 1
  %v301 = vadd.f32 %v299, %v300
  %v302 = vmul.f32 %v301, 0.0078125
  %v303 = vmul.f32 %v264, %v264
  %v304 = vsub.f32 %v302, %v303
  %v305 = vmax.f32 %v304, 0.0
  %v306 = vld [vmem:[%s2] sm:$0x1]
  %v307 = vadd.f32 %v305, 1e-05
  %v308 = vrsqrt.pop %v307
  %v309 = vmul.f32 %v306, %v308
  %v310 = vld [vmem:[%s3] sm:$0x1]
  %v311 = vmul.f32 %v264, %v309
  %v312 = vsub.f32 %v310, %v311
  %v314 = vlaneseq
  %v315 = vshrl.u32 %v314, 7
  %v316 = vsub.s32 0, %v315
  %v317 = vrot.slane %v309, %v316
  %v319 = vmul.f32 %v181, %v317
  %v320 = vmul.f32 %v184, %v317
  %v321 = vmul.f32 %v189, %v317
  %v322 = vmul.f32 %v192, %v317
  %v323 = vmul.f32 %v197, %v317
  %v324 = vmul.f32 %v200, %v317
  %v325 = vmul.f32 %v205, %v317
  %v326 = vmul.f32 %v208, %v317
  %v327 = vmul.f32 %v213, %v317
  %v328 = vmul.f32 %v216, %v317
  %v329 = vmul.f32 %v221, %v317
  %v330 = vmul.f32 %v224, %v317
  %v331 = vmul.f32 %v229, %v317
  %v332 = vmul.f32 %v232, %v317
  %v333 = vmul.f32 %v237, %v317
  %v334 = vmul.f32 %v240, %v317
  %v336 = vlaneseq
  %v337 = vshrl.u32 %v336, 7
  %v338 = vsub.s32 0, %v337
  %v339 = vrot.slane %v312, %v338
  %v341 = vadd.f32 %v319, %v339
  %v342 = vadd.f32 %v320, %v339
  %v343 = vadd.f32 %v321, %v339
  %v344 = vadd.f32 %v322, %v339
  %v345 = vadd.f32 %v323, %v339
  %v346 = vadd.f32 %v324, %v339
  %v347 = vadd.f32 %v325, %v339
  %v348 = vadd.f32 %v326, %v339
  %v349 = vadd.f32 %v327, %v339
  %v350 = vadd.f32 %v328, %v339
  %v351 = vadd.f32 %v329, %v339
  %v352 = vadd.f32 %v330, %v339
  %v353 = vadd.f32 %v331, %v339
  %v354 = vadd.f32 %v332, %v339
  %v355 = vadd.f32 %v333, %v339
  %v356 = vadd.f32 %v334, %v339
  %vm357 = vcmp.gt.f32.partialorder %v341, 0.0
  %vm358 = vcmp.gt.f32.partialorder %v342, 0.0
  %vm359 = vcmp.gt.f32.partialorder %v343, 0.0
  %vm360 = vcmp.gt.f32.partialorder %v344, 0.0
  %vm361 = vcmp.gt.f32.partialorder %v345, 0.0
  %vm362 = vcmp.gt.f32.partialorder %v346, 0.0
  %vm363 = vcmp.gt.f32.partialorder %v347, 0.0
  %vm364 = vcmp.gt.f32.partialorder %v348, 0.0
  %vm365 = vcmp.gt.f32.partialorder %v349, 0.0
  %vm366 = vcmp.gt.f32.partialorder %v350, 0.0
  %vm367 = vcmp.gt.f32.partialorder %v351, 0.0
  %vm368 = vcmp.gt.f32.partialorder %v352, 0.0
  %vm369 = vcmp.gt.f32.partialorder %v353, 0.0
  %vm370 = vcmp.gt.f32.partialorder %v354, 0.0
  %vm371 = vcmp.gt.f32.partialorder %v355, 0.0
  %vm372 = vcmp.gt.f32.partialorder %v356, 0.0
  %v373 = vmul.f32 %v341, 0.1
  %v374 = vmul.f32 %v342, 0.1
  %v375 = vmul.f32 %v343, 0.1
  %v376 = vmul.f32 %v344, 0.1
  %v377 = vmul.f32 %v345, 0.1
  %v378 = vmul.f32 %v346, 0.1
  %v379 = vmul.f32 %v347, 0.1
  %v380 = vmul.f32 %v348, 0.1
  %v381 = vmul.f32 %v349, 0.1
  %v382 = vmul.f32 %v350, 0.1
  %v383 = vmul.f32 %v351, 0.1
  %v384 = vmul.f32 %v352, 0.1
  %v385 = vmul.f32 %v353, 0.1
  %v386 = vmul.f32 %v354, 0.1
  %v387 = vmul.f32 %v355, 0.1
  %v388 = vmul.f32 %v356, 0.1
  %v389 = vsel %vm357, %v341, %v373
  %v390 = vsel %vm358, %v342, %v374
  %v391 = vsel %vm359, %v343, %v375
  %v392 = vsel %vm360, %v344, %v376
  %v393 = vsel %vm361, %v345, %v377
  %v394 = vsel %vm362, %v346, %v378
  %v395 = vsel %vm363, %v347, %v379
  %v396 = vsel %vm364, %v348, %v380
  %v397 = vsel %vm365, %v349, %v381
  %v398 = vsel %vm366, %v350, %v382
  %v399 = vsel %vm367, %v351, %v383
  %v400 = vsel %vm368, %v352, %v384
  %v401 = vsel %vm369, %v353, %v385
  %v402 = vsel %vm370, %v354, %v386
  %v403 = vsel %vm371, %v355, %v387
  %v404 = vsel %vm372, %v356, %v388
  %405 = vst [vmem:[%s4] sm:$0xff] %v389
  %406 = vst [vmem:[%s4 + $0x8] sm:$0xff] %v390
  %407 = vst [vmem:[%s4 + $0x10] sm:$0xff] %v391
  %408 = vst [vmem:[%s4 + $0x18] sm:$0xff] %v392
  %409 = vst [vmem:[%s4 + $0x20] sm:$0xff] %v393
  %410 = vst [vmem:[%s4 + $0x28] sm:$0xff] %v394
  %411 = vst [vmem:[%s4 + $0x30] sm:$0xff] %v395
  %412 = vst [vmem:[%s4 + $0x38] sm:$0xff] %v396
  %413 = vst [vmem:[%s4 + $0x40] sm:$0xff] %v397
  %414 = vst [vmem:[%s4 + $0x48] sm:$0xff] %v398
  %415 = vst [vmem:[%s4 + $0x50] sm:$0xff] %v399
  %416 = vst [vmem:[%s4 + $0x58] sm:$0xff] %v400
  %417 = vst [vmem:[%s4 + $0x60] sm:$0xff] %v401
  %418 = vst [vmem:[%s4 + $0x68] sm:$0xff] %v402
  %419 = vst [vmem:[%s4 + $0x70] sm:$0xff] %v403
  %420 = vst [vmem:[%s4 + $0x78] sm:$0xff] %v404
  // Predicated region
  $region18: #{darknet_forward.15} parent=0 // pred_check
    _
  $region19: #{darknet_forward.15} parent=0 // pred_check_branch
    %422 = sbr.rel (0) target = $region21
  $region20: #{darknet_forward.15} parent=0 // pred_region
    _
  $region21: #{darknet_forward.15} parent=0 // pred_fallthru
    _
  // Predicated region
  $region22: #{darknet_forward.15} parent=0 // pred_check
    _
  $region23: #{darknet_forward.15} parent=0 // pred_check_branch
    %424 = sbr.rel (0) target = $region25
  $region24: #{darknet_forward.15} parent=0 // pred_region
    _
  $region25: #{darknet_forward.15} parent=0 // pred_fallthru
    _

// kernel: darknet_forward.14
$region0: #{darknet_forward.14}
  #allocation0 [shape = 'u32[]', space=smem, size = 0x4, offset = 0x4, fixed_abs, tag = 'smem constant byte address 0x4 - core index']
  #allocation1 [shape = 'u32[144,128]{1,0:T(1,128)}', space=vmem, size = 0x12000, scoped, tag = 'internal scratch']
  %s0 = inlined_call_operand.vmem [shape: bf16[128,128], index: 0, kind: input, shape index: {}]
  %s1 = inlined_call_operand.vmem [shape: bf16[128,128], index: 1, kind: input, shape index: {}]
  %s2 = inlined_call_operand.vmem [shape: f32[1,128], index: 2, kind: input, shape index: {}]
  %s3 = inlined_call_operand.vmem [shape: f32[128,128], index: 3, kind: output, shape index: {}]
  %s4 = sld [smem:[#allocation0]]
  $region22: #{darknet_forward.14} parent=0
    _
  %s6 = ssub.s32 1, %s4
  %s7 = scalar_select 0, %s6, %s4
  // Predicated region
  $region2: #{darknet_forward.14} parent=0 // pred_check
    _
  $region3: #{darknet_forward.14} parent=0 // pred_check_branch
    %9 = sbr.rel (0) target = $region5
  $region4: #{darknet_forward.14} parent=0 // pred_region
    _
  $region5: #{darknet_forward.14} parent=0 // pred_fallthru
    _
  // Predicated region
  $region6: #{darknet_forward.14} parent=0 // pred_check
    _
  $region7: #{darknet_forward.14} parent=0 // pred_check_branch
    %11 = sbr.rel (0) target = $region9
  $region8: #{darknet_forward.14} parent=0 // pred_region
    _
  $region9: #{darknet_forward.14} parent=0 // pred_fallthru
    _
  // Predicated region
  $region10: #{darknet_forward.14} parent=0 // pred_check
    _
  $region11: #{darknet_forward.14} parent=0 // pred_check_branch
    %13 = sbr.rel (0) target = $region13
  $region12: #{darknet_forward.14} parent=0 // pred_region
    _
  $region13: #{darknet_forward.14} parent=0 // pred_fallthru
    _
  %v15 = vld [vmem:[%s0] sm:$0xf]
  %v16 = vld [vmem:[%s0 + $0x4] sm:$0xf]
  %v17 = vld [vmem:[%s0 + $0x8] sm:$0xf]
  %v18 = vld [vmem:[%s0 + $0xc] sm:$0xf]
  %v19 = vld [vmem:[%s0 + $0x10] sm:$0xf]
  %v20 = vld [vmem:[%s0 + $0x14] sm:$0xf]
  %v21 = vld [vmem:[%s0 + $0x18] sm:$0xf]
  %v22 = vld [vmem:[%s0 + $0x1c] sm:$0xf]
  %v23 = vld [vmem:[%s0 + $0x20] sm:$0xf]
  %v24 = vld [vmem:[%s0 + $0x24] sm:$0xf]
  %v25 = vld [vmem:[%s0 + $0x28] sm:$0xf]
  %v26 = vld [vmem:[%s0 + $0x2c] sm:$0xf]
  %v27 = vld [vmem:[%s0 + $0x30] sm:$0xf]
  %v28 = vld [vmem:[%s0 + $0x34] sm:$0xf]
  %v29 = vld [vmem:[%s0 + $0x38] sm:$0xf]
  %v30 = vld [vmem:[%s0 + $0x3c] sm:$0xf]
  %v31 = vld [vmem:[%s1] sm:$0xf]
  %v32 = vld [vmem:[%s1 + $0x4] sm:$0xf]
  %v33 = vld [vmem:[%s1 + $0x8] sm:$0xf]
  %v34 = vld [vmem:[%s1 + $0xc] sm:$0xf]
  %v35 = vld [vmem:[%s1 + $0x10] sm:$0xf]
  %v36 = vld [vmem:[%s1 + $0x14] sm:$0xf]
  %v37 = vld [vmem:[%s1 + $0x18] sm:$0xf]
  %v38 = vld [vmem:[%s1 + $0x1c] sm:$0xf]
  %v39 = vld [vmem:[%s1 + $0x20] sm:$0xf]
  %v40 = vld [vmem:[%s1 + $0x24] sm:$0xf]
  %v41 = vld [vmem:[%s1 + $0x28] sm:$0xf]
  %v42 = vld [vmem:[%s1 + $0x2c] sm:$0xf]
  %v43 = vld [vmem:[%s1 + $0x30] sm:$0xf]
  %v44 = vld [vmem:[%s1 + $0x34] sm:$0xf]
  %v45 = vld [vmem:[%s1 + $0x38] sm:$0xf]
  %v46 = vld [vmem:[%s1 + $0x3c] sm:$0xf]
  %v47 = vld [vmem:[%s2] sm:$0x1]
  %v49 = vlaneseq
  %v50 = vshrl.u32 %v49, 7
  %v51 = vsub.s32 0, %v50
  %v52 = vrot.slane %v47, %v51
  %v70 = vunpack.c.l.b16 %v15
  %v71 = vunpack.c.l.b16 %v16
  %v72 = vunpack.c.l.b16 %v17
  %v73 = vunpack.c.l.b16 %v18
  %v74 = vunpack.c.l.b16 %v19
  %v75 = vunpack.c.l.b16 %v20
  %v76 = vunpack.c.l.b16 %v21
  %v77 = vunpack.c.l.b16 %v22
  %v78 = vunpack.c.l.b16 %v23
  %v79 = vunpack.c.l.b16 %v24
  %v80 = vunpack.c.l.b16 %v25
  %v81 = vunpack.c.l.b16 %v26
  %v82 = vunpack.c.l.b16 %v27
  %v83 = vunpack.c.l.b16 %v28
  %v84 = vunpack.c.l.b16 %v29
  %v85 = vunpack.c.l.b16 %v30
  %v86 = vpack.c.b16 %v71, %v70
  %v87 = vpack.c.b16 %v73, %v72
  %v88 = vpack.c.b16 %v75, %v74
  %v89 = vpack.c.b16 %v77, %v76
  %v90 = vpack.c.b16 %v79, %v78
  %v91 = vpack.c.b16 %v81, %v80
  %v92 = vpack.c.b16 %v83, %v82
  %v93 = vpack.c.b16 %v85, %v84
  %v118 = vunpack.c.l.b16 %v31
  %v119 = vunpack.c.l.b16 %v32
  %v120 = vunpack.c.l.b16 %v33
  %v121 = vunpack.c.l.b16 %v34
  %v122 = vunpack.c.l.b16 %v35
  %v123 = vunpack.c.l.b16 %v36
  %v124 = vunpack.c.l.b16 %v37
  %v125 = vunpack.c.l.b16 %v38
  %v126 = vunpack.c.l.b16 %v39
  %v127 = vunpack.c.l.b16 %v40
  %v128 = vunpack.c.l.b16 %v41
  %v129 = vunpack.c.l.b16 %v42
  %v130 = vunpack.c.l.b16 %v43
  %v131 = vunpack.c.l.b16 %v44
  %v132 = vunpack.c.l.b16 %v45
  %v133 = vunpack.c.l.b16 %v46
  %v134 = vpack.c.b16 %v119, %v118
  %v135 = vpack.c.b16 %v121, %v120
  %v136 = vpack.c.b16 %v123, %v122
  %v137 = vpack.c.b16 %v125, %v124
  %v138 = vpack.c.b16 %v127, %v126
  %v139 = vpack.c.b16 %v129, %v128
  %v140 = vpack.c.b16 %v131, %v130
  %v141 = vpack.c.b16 %v133, %v132
  %150 = vmatprep.subr.bf16.mxu0 0
  %151 = vmatpush1.bf16.msra.mxu0 %v134
  %152 = vmatprep.subr.bf16.mxu0 0
  %153 = vmatpush1.bf16.msra.mxu0 %v135
  %154 = vmatprep.subr.bf16.mxu0 0
  %155 = vmatpush1.bf16.msra.mxu0 %v136
  %156 = vmatprep.subr.bf16.mxu0 0
  %157 = vmatpush1.bf16.msra.mxu0 %v137
  %158 = vmatprep.subr.bf16.mxu0 0
  %159 = vmatpush1.bf16.msra.mxu0 %v138
  %160 = vmatprep.subr.bf16.mxu0 0
  %161 = vmatpush1.bf16.msra.mxu0 %v139
  %162 = vmatprep.subr.bf16.mxu0 0
  %163 = vmatpush1.bf16.msra.mxu0 %v140
  %164 = vmatprep.subr.bf16.mxu0 0
  %165 = vmatpush1.bf16.msra.mxu0 %v141
  %166 = vmatprep.subr.bf16.mxu0 0
  %167 = vmatpush1.bf16.msra.mxu0 0
  %168 = vmatprep.subr.bf16.mxu0 0
  %169 = vmatpush1.bf16.msra.mxu0 0
  %170 = vmatprep.subr.bf16.mxu0 0
  %171 = vmatpush1.bf16.msra.mxu0 0
  %172 = vmatprep.subr.bf16.mxu0 0
  %173 = vmatpush1.bf16.msra.mxu0 0
  %174 = vmatprep.subr.bf16.mxu0 0
  %175 = vmatpush1.bf16.msra.mxu0 0
  %176 = vmatprep.subr.bf16.mxu0 0
  %177 = vmatpush1.bf16.msra.mxu0 0
  %178 = vmatprep.subr.bf16.mxu0 0
  %179 = vmatpush1.bf16.msra.mxu0 0
  %180 = vmatprep.subr.bf16.mxu0 0
  %181 = vmatpush1.bf16.msra.mxu0 0
  %182 = vmatprep.mubr.bf16.mxu0 0
  %183 = vmatmul.mubr.bf16.gmra.mrb[0].mxu0 %v86
  %v184 = vpop.f32.mrb[0].mxu0
  %v185 = vadd.f32 %v52, %v184
  %v186 = vpop.f32.mrb[0].mxu0
  %v187 = vpop.f32.mrb[0].mxu0
  %v188 = vadd.f32 %v52, %v187
  %v189 = vpop.f32.mrb[0].mxu0
  %190 = vmatprep.mubr.bf16.mxu0 0
  %191 = vmatmul.mubr.bf16.gmra.mrb[0].mxu0 %v87
  %v192 = vpop.f32.mrb[0].mxu0
  %v193 = vadd.f32 %v52, %v192
  %v194 = vpop.f32.mrb[0].mxu0
  %v195 = vpop.f32.mrb[0].mxu0
  %v196 = vadd.f32 %v52, %v195
  %v197 = vpop.f32.mrb[0].mxu0
  %198 = vmatprep.mubr.bf16.mxu0 0
  %199 = vmatmul.mubr.bf16.gmra.mrb[0].mxu0 %v88
  %v200 = vpop.f32.mrb[0].mxu0
  %v201 = vadd.f32 %v52, %v200
  %v202 = vpop.f32.mrb[0].mxu0
  %v203 = vpop.f32.mrb[0].mxu0
  %v204 = vadd.f32 %v52, %v203
  %v205 = vpop.f32.mrb[0].mxu0
  %206 = vmatprep.mubr.bf16.mxu0 0
  %207 = vmatmul.mubr.bf16.gmra.mrb[0].mxu0 %v89
  %v208 = vpop.f32.mrb[0].mxu0
  %v209 = vadd.f32 %v52, %v208
  %v210 = vpop.f32.mrb[0].mxu0
  %v211 = vpop.f32.mrb[0].mxu0
  %v212 = vadd.f32 %v52, %v211
  %v213 = vpop.f32.mrb[0].mxu0
  %214 = vmatprep.mubr.bf16.mxu0 0
  %215 = vmatmul.mubr.bf16.gmra.mrb[0].mxu0 %v90
  %v216 = vpop.f32.mrb[0].mxu0
  %v217 = vadd.f32 %v52, %v216
  %v218 = vpop.f32.mrb[0].mxu0
  %v219 = vpop.f32.mrb[0].mxu0
  %v220 = vadd.f32 %v52, %v219
  %v221 = vpop.f32.mrb[0].mxu0
  %222 = vmatprep.mubr.bf16.mxu0 0
  %223 = vmatmul.mubr.bf16.gmra.mrb[0].mxu0 %v91
  %v224 = vpop.f32.mrb[0].mxu0
  %v225 = vadd.f32 %v52, %v224
  %v226 = vpop.f32.mrb[0].mxu0
  %v227 = vpop.f32.mrb[0].mxu0
  %v228 = vadd.f32 %v52, %v227
  %v229 = vpop.f32.mrb[0].mxu0
  %230 = vmatprep.mubr.bf16.mxu0 0
  %231 = vmatmul.mubr.bf16.gmra.mrb[0].mxu0 %v92
  %v232 = vpop.f32.mrb[0].mxu0
  %v233 = vadd.f32 %v52, %v232
  %v234 = vpop.f32.mrb[0].mxu0
  %v235 = vpop.f32.mrb[0].mxu0
  %v236 = vadd.f32 %v52, %v235
  %v237 = vpop.f32.mrb[0].mxu0
  %238 = vmatprep.mubr.bf16.mxu0 0
  %239 = vmatmul.mubr.bf16.gmra.mrb[0].mxu0 %v93
  %v240 = vpop.f32.mrb[0].mxu0
  %v241 = vadd.f32 %v52, %v240
  %v242 = vpop.f32.mrb[0].mxu0
  %v243 = vpop.f32.mrb[0].mxu0
  %v244 = vadd.f32 %v52, %v243
  %v245 = vpop.f32.mrb[0].mxu0
  %246 = vdwg.mxu0
  %247 = vst [vmem:[%s3] sm:$0xff] %v185
  %248 = vst [vmem:[%s3 + $0x8] sm:$0xff] %v188
  %249 = vst [vmem:[%s3 + $0x10] sm:$0xff] %v193
  %250 = vst [vmem:[%s3 + $0x18] sm:$0xff] %v196
  %251 = vst [vmem:[%s3 + $0x20] sm:$0xff] %v201
  %252 = vst [vmem:[%s3 + $0x28] sm:$0xff] %v204
  %253 = vst [vmem:[%s3 + $0x30] sm:$0xff] %v209
  %254 = vst [vmem:[%s3 + $0x38] sm:$0xff] %v212
  %255 = vst [vmem:[%s3 + $0x40] sm:$0xff] %v217
  %256 = vst [vmem:[%s3 + $0x48] sm:$0xff] %v220
  %257 = vst [vmem:[%s3 + $0x50] sm:$0xff] %v225
  %258 = vst [vmem:[%s3 + $0x58] sm:$0xff] %v228
  %259 = vst [vmem:[%s3 + $0x60] sm:$0xff] %v233
  %260 = vst [vmem:[%s3 + $0x68] sm:$0xff] %v236
  %261 = vst [vmem:[%s3 + $0x70] sm:$0xff] %v241
  %262 = vst [vmem:[%s3 + $0x78] sm:$0xff] %v244
  // Predicated region
  $region14: #{darknet_forward.14} parent=0 // pred_check
    _
  $region15: #{darknet_forward.14} parent=0 // pred_check_branch
    %264 = sbr.rel (0) target = $region17
  $region16: #{darknet_forward.14} parent=0 // pred_region
    _
  $region17: #{darknet_forward.14} parent=0 // pred_fallthru
    _
  // Predicated region
  $region18: #{darknet_forward.14} parent=0 // pred_check
    _
  $region19: #{darknet_forward.14} parent=0 // pred_check_branch
    %266 = sbr.rel (0) target = $region21
  $region20: #{darknet_forward.14} parent=0 // pred_region
    _
  $region21: #{darknet_forward.14} parent=0 // pred_fallthru
    _

// kernel: darknet_forward.17
$region0: #{darknet_forward.17}
  #allocation0 [shape = 'u32[]', space=smem, size = 0x4, offset = 0x4, fixed_abs, tag = 'smem constant byte address 0x4 - core index']
  #allocation1 [shape = 'u32[144,128]{1,0:T(1,128)}', space=vmem, size = 0x12000, scoped, tag = 'internal scratch']
  %s0 = inlined_call_operand.vmem [shape: bf16[512,128], index: 0, kind: input, shape index: {}]
  %s1 = inlined_call_operand.vmem [shape: bf16[128,128], index: 1, kind: input, shape index: {}]
  %s2 = inlined_call_operand.vmem [shape: f32[1,128], index: 2, kind: input, shape index: {}]
  %s3 = inlined_call_operand.vmem [shape: f32[512,128], index: 3, kind: output, shape index: {}]
  %s4 = sld [smem:[#allocation0]]
  $region22: #{darknet_forward.17} parent=0
    _
  %s6 = ssub.s32 1, %s4
  %s7 = scalar_select 0, %s6, %s4
  // Predicated region
  $region2: #{darknet_forward.17} parent=0 // pred_check
    _
  $region3: #{darknet_forward.17} parent=0 // pred_check_branch
    %9 = sbr.rel (0) target = $region5
  $region4: #{darknet_forward.17} parent=0 // pred_region
    _
  $region5: #{darknet_forward.17} parent=0 // pred_fallthru
    _
  // Predicated region
  $region6: #{darknet_forward.17} parent=0 // pred_check
    _
  $region7: #{darknet_forward.17} parent=0 // pred_check_branch
    %11 = sbr.rel (0) target = $region9
  $region8: #{darknet_forward.17} parent=0 // pred_region
    _
  $region9: #{darknet_forward.17} parent=0 // pred_fallthru
    _
  // Predicated region
  $region10: #{darknet_forward.17} parent=0 // pred_check
    _
  $region11: #{darknet_forward.17} parent=0 // pred_check_branch
    %13 = sbr.rel (0) target = $region13
  $region12: #{darknet_forward.17} parent=0 // pred_region
    _
  $region13: #{darknet_forward.17} parent=0 // pred_fallthru
    _
  %v15 = vld [vmem:[%s0] sm:$0xf]
  %v16 = vld [vmem:[%s0 + $0x4] sm:$0xf]
  %v17 = vld [vmem:[%s0 + $0x8] sm:$0xf]
  %v18 = vld [vmem:[%s0 + $0xc] sm:$0xf]
  %v19 = vld [vmem:[%s0 + $0x10] sm:$0xf]
  %v20 = vld [vmem:[%s0 + $0x14] sm:$0xf]
  %v21 = vld [vmem:[%s0 + $0x18] sm:$0xf]
  %v22 = vld [vmem:[%s0 + $0x1c] sm:$0xf]
  %v23 = vld [vmem:[%s0 + $0x20] sm:$0xf]
  %v24 = vld [vmem:[%s0 + $0x24] sm:$0xf]
  %v25 = vld [vmem:[%s0 + $0x28] sm:$0xf]
  %v26 = vld [vmem:[%s0 + $0x2c] sm:$0xf]
  %v27 = vld [vmem:[%s0 + $0x30] sm:$0xf]
  %v28 = vld [vmem:[%s0 + $0x34] sm:$0xf]
  %v29 = vld [vmem:[%s0 + $0x38] sm:$0xf]
  %v30 = vld [vmem:[%s0 + $0x3c] sm:$0xf]
  %v31 = vld [vmem:[%s0 + $0x40] sm:$0xf]
  %v32 = vld [vmem:[%s0 + $0x44] sm:$0xf]
  %v33 = vld [vmem:[%s0 + $0x48] sm:$0xf]
  %v34 = vld [vmem:[%s0 + $0x4c] sm:$0xf]
  %v35 = vld [vmem:[%s0 + $0x50] sm:$0xf]
  %v36 = vld [vmem:[%s0 + $0x54] sm:$0xf]
  %v37 = vld [vmem:[%s0 + $0x58] sm:$0xf]
  %v38 = vld [vmem:[%s0 + $0x5c] sm:$0xf]
  %v39 = vld [vmem:[%s0 + $0x60] sm:$0xf]
  %v40 = vld [vmem:[%s0 + $0x64] sm:$0xf]
  %v41 = vld [vmem:[%s0 + $0x68] sm:$0xf]
  %v42 = vld [vmem:[%s0 + $0x6c] sm:$0xf]
  %v43 = vld [vmem:[%s0 + $0x70] sm:$0xf]
  %v44 = vld [vmem:[%s0 + $0x74] sm:$0xf]
  %v45 = vld [vmem:[%s0 + $0x78] sm:$0xf]
  %v46 = vld [vmem:[%s0 + $0x7c] sm:$0xf]
  %v47 = vld [vmem:[%s0 + $0x80] sm:$0xf]
  %v48 = vld [vmem:[%s0 + $0x84] sm:$0xf]
  %v49 = vld [vmem:[%s0 + $0x88] sm:$0xf]
  %v50 = vld [vmem:[%s0 + $0x8c] sm:$0xf]
  %v51 = vld [vmem:[%s0 + $0x90] sm:$0xf]
  %v52 = vld [vmem:[%s0 + $0x94] sm:$0xf]
  %v53 = vld [vmem:[%s0 + $0x98] sm:$0xf]
  %v54 = vld [vmem:[%s0 + $0x9c] sm:$0xf]
  %v55 = vld [vmem:[%s0 + $0xa0] sm:$0xf]
  %v56 = vld [vmem:[%s0 + $0xa4] sm:$0xf]
  %v57 = vld [vmem:[%s0 + $0xa8] sm:$0xf]
  %v58 = vld [vmem:[%s0 + $0xac] sm:$0xf]
  %v59 = vld [vmem:[%s0 + $0xb0] sm:$0xf]
  %v60 = vld [vmem:[%s0 + $0xb4] sm:$0xf]
  %v61 = vld [vmem:[%s0 + $0xb8] sm:$0xf]
  %v62 = vld [vmem:[%s0 + $0xbc] sm:$0xf]
  %v63 = vld [vmem:[%s0 + $0xc0] sm:$0xf]
  %v64 = vld [vmem:[%s0 + $0xc4] sm:$0xf]
  %v65 = vld [vmem:[%s0 + $0xc8] sm:$0xf]
  %v66 = vld [vmem:[%s0 + $0xcc] sm:$0xf]
  %v67 = vld [vmem:[%s0 + $0xd0] sm:$0xf]
  %v68 = vld [vmem:[%s0 + $0xd4] sm:$0xf]
  %v69 = vld [vmem:[%s0 + $0xd8] sm:$0xf]
  %v70 = vld [vmem:[%s0 + $0xdc] sm:$0xf]
  %v71 = vld [vmem:[%s0 + $0xe0] sm:$0xf]
  %v72 = vld [vmem:[%s0 + $0xe4] sm:$0xf]
  %v73 = vld [vmem:[%s0 + $0xe8] sm:$0xf]
  %v74 = vld [vmem:[%s0 + $0xec] sm:$0xf]
  %v75 = vld [vmem:[%s0 + $0xf0] sm:$0xf]
  %v76 = vld [vmem:[%s0 + $0xf4] sm:$0xf]
  %v77 = vld [vmem:[%s0 + $0xf8] sm:$0xf]
  %v78 = vld [vmem:[%s0 + $0xfc] sm:$0xf]
  %v79 = vld [vmem:[%s1] sm:$0xf]
  %v80 = vld [vmem:[%s1 + $0x4] sm:$0xf]
  %v81 = vld [vmem:[%s1 + $0x8] sm:$0xf]
  %v82 = vld [vmem:[%s1 + $0xc] sm:$0xf]
  %v83 = vld [vmem:[%s1 + $0x10] sm:$0xf]
  %v84 = vld [vmem:[%s1 + $0x14] sm:$0xf]
  %v85 = vld [vmem:[%s1 + $0x18] sm:$0xf]
  %v86 = vld [vmem:[%s1 + $0x1c] sm:$0xf]
  %v87 = vld [vmem:[%s1 + $0x20] sm:$0xf]
  %v88 = vld [vmem:[%s1 + $0x24] sm:$0xf]
  %v89 = vld [vmem:[%s1 + $0x28] sm:$0xf]
  %v90 = vld [vmem:[%s1 + $0x2c] sm:$0xf]
  %v91 = vld [vmem:[%s1 + $0x30] sm:$0xf]
  %v92 = vld [vmem:[%s1 + $0x34] sm:$0xf]
  %v93 = vld [vmem:[%s1 + $0x38] sm:$0xf]
  %v94 = vld [vmem:[%s1 + $0x3c] sm:$0xf]
  %v95 = vld [vmem:[%s2] sm:$0x1]
  %v97 = vlaneseq
  %v98 = vshrl.u32 %v97, 7
  %v99 = vsub.s32 0, %v98
  %v100 = vrot.slane %v95, %v99
  %v166 = vunpack.c.l.b16 %v15
  %v167 = vunpack.c.l.b16 %v16
  %v168 = vunpack.c.l.b16 %v17
  %v169 = vunpack.c.l.b16 %v18
  %v170 = vunpack.c.l.b16 %v19
  %v171 = vunpack.c.l.b16 %v20
  %v172 = vunpack.c.l.b16 %v21
  %v173 = vunpack.c.l.b16 %v22
  %v174 = vunpack.c.l.b16 %v23
  %v175 = vunpack.c.l.b16 %v24
  %v176 = vunpack.c.l.b16 %v25
  %v177 = vunpack.c.l.b16 %v26
  %v178 = vunpack.c.l.b16 %v27
  %v179 = vunpack.c.l.b16 %v28
  %v180 = vunpack.c.l.b16 %v29
  %v181 = vunpack.c.l.b16 %v30
  %v182 = vunpack.c.l.b16 %v31
  %v183 = vunpack.c.l.b16 %v32
  %v184 = vunpack.c.l.b16 %v33
  %v185 = vunpack.c.l.b16 %v34
  %v186 = vunpack.c.l.b16 %v35
  %v187 = vunpack.c.l.b16 %v36
  %v188 = vunpack.c.l.b16 %v37
  %v189 = vunpack.c.l.b16 %v38
  %v190 = vunpack.c.l.b16 %v39
  %v191 = vunpack.c.l.b16 %v40
  %v192 = vunpack.c.l.b16 %v41
  %v193 = vunpack.c.l.b16 %v42
  %v194 = vunpack.c.l.b16 %v43
  %v195 = vunpack.c.l.b16 %v44
  %v196 = vunpack.c.l.b16 %v45
  %v197 = vunpack.c.l.b16 %v46
  %v198 = vunpack.c.l.b16 %v47
  %v199 = vunpack.c.l.b16 %v48
  %v200 = vunpack.c.l.b16 %v49
  %v201 = vunpack.c.l.b16 %v50
  %v202 = vunpack.c.l.b16 %v51
  %v203 = vunpack.c.l.b16 %v52
  %v204 = vunpack.c.l.b16 %v53
  %v205 = vunpack.c.l.b16 %v54
  %v206 = vunpack.c.l.b16 %v55
  %v207 = vunpack.c.l.b16 %v56
  %v208 = vunpack.c.l.b16 %v57
  %v209 = vunpack.c.l.b16 %v58
  %v210 = vunpack.c.l.b16 %v59
  %v211 = vunpack.c.l.b16 %v60
  %v212 = vunpack.c.l.b16 %v61
  %v213 = vunpack.c.l.b16 %v62
  %v214 = vunpack.c.l.b16 %v63
  %v215 = vunpack.c.l.b16 %v64
  %v216 = vunpack.c.l.b16 %v65
  %v217 = vunpack.c.l.b16 %v66
  %v218 = vunpack.c.l.b16 %v67
  %v219 = vunpack.c.l.b16 %v68
  %v220 = vunpack.c.l.b16 %v69
  %v221 = vunpack.c.l.b16 %v70
  %v222 = vunpack.c.l.b16 %v71
  %v223 = vunpack.c.l.b16 %v72
  %v224 = vunpack.c.l.b16 %v73
  %v225 = vunpack.c.l.b16 %v74
  %v226 = vunpack.c.l.b16 %v75
  %v227 = vunpack.c.l.b16 %v76
  %v228 = vunpack.c.l.b16 %v77
  %v229 = vunpack.c.l.b16 %v78
  %v230 = vpack.c.b16 %v167, %v166
  %v231 = vpack.c.b16 %v169, %v168
  %v232 = vpack.c.b16 %v171, %v170
  %v233 = vpack.c.b16 %v173, %v172
  %v234 = vpack.c.b16 %v175, %v174
  %v235 = vpack.c.b16 %v177, %v176
  %v236 = vpack.c.b16 %v179, %v178
  %v237 = vpack.c.b16 %v181, %v180
  %v238 = vpack.c.b16 %v183, %v182
  %v239 = vpack.c.b16 %v185, %v184
  %v240 = vpack.c.b16 %v187, %v186
  %v241 = vpack.c.b16 %v189, %v188
  %v242 = vpack.c.b16 %v191, %v190
  %v243 = vpack.c.b16 %v193, %v192
  %v244 = vpack.c.b16 %v195, %v194
  %v245 = vpack.c.b16 %v197, %v196
  %v246 = vpack.c.b16 %v199, %v198
  %v247 = vpack.c.b16 %v201, %v200
  %v248 = vpack.c.b16 %v203, %v202
  %v249 = vpack.c.b16 %v205, %v204
  %v250 = vpack.c.b16 %v207, %v206
  %v251 = vpack.c.b16 %v209, %v208
  %v252 = vpack.c.b16 %v211, %v210
  %v253 = vpack.c.b16 %v213, %v212
  %v254 = vpack.c.b16 %v215, %v214
  %v255 = vpack.c.b16 %v217, %v216
  %v256 = vpack.c.b16 %v219, %v218
  %v257 = vpack.c.b16 %v221, %v220
  %v258 = vpack.c.b16 %v223, %v222
  %v259 = vpack.c.b16 %v225, %v224
  %v260 = vpack.c.b16 %v227, %v226
  %v261 = vpack.c.b16 %v229, %v228
  %v310 = vunpack.c.l.b16 %v79
  %v311 = vunpack.c.l.b16 %v80
  %v312 = vunpack.c.l.b16 %v81
  %v313 = vunpack.c.l.b16 %v82
  %v314 = vunpack.c.l.b16 %v83
  %v315 = vunpack.c.l.b16 %v84
  %v316 = vunpack.c.l.b16 %v85
  %v317 = vunpack.c.l.b16 %v86
  %v318 = vunpack.c.l.b16 %v87
  %v319 = vunpack.c.l.b16 %v88
  %v320 = vunpack.c.l.b16 %v89
  %v321 = vunpack.c.l.b16 %v90
  %v322 = vunpack.c.l.b16 %v91
  %v323 = vunpack.c.l.b16 %v92
  %v324 = vunpack.c.l.b16 %v93
  %v325 = vunpack.c.l.b16 %v94
  %v326 = vpack.c.b16 %v311, %v310
  %v327 = vpack.c.b16 %v313, %v312
  %v328 = vpack.c.b16 %v315, %v314
  %v329 = vpack.c.b16 %v317, %v316
  %v330 = vpack.c.b16 %v319, %v318
  %v331 = vpack.c.b16 %v321, %v320
  %v332 = vpack.c.b16 %v323, %v322
  %v333 = vpack.c.b16 %v325, %v324
  %342 = vmatprep.subr.bf16.mxu0 0
  %343 = vmatpush1.bf16.msra.mxu0 %v326
  %344 = vmatprep.subr.bf16.mxu0 0
  %345 = vmatpush1.bf16.msra.mxu0 %v327
  %346 = vmatprep.subr.bf16.mxu0 0
  %347 = vmatpush1.bf16.msra.mxu0 %v328
  %348 = vmatprep.subr.bf16.mxu0 0
  %349 = vmatpush1.bf16.msra.mxu0 %v329
  %350 = vmatprep.subr.bf16.mxu0 0
  %351 = vmatpush1.bf16.msra.mxu0 %v330
  %352 = vmatprep.subr.bf16.mxu0 0
  %353 = vmatpush1.bf16.msra.mxu0 %v331
  %354 = vmatprep.subr.bf16.mxu0 0
  %355 = vmatpush1.bf16.msra.mxu0 %v332
  %356 = vmatprep.subr.bf16.mxu0 0
  %357 = vmatpush1.bf16.msra.mxu0 %v333
  %358 = vmatprep.subr.bf16.mxu0 0
  %359 = vmatpush1.bf16.msra.mxu0 0
  %360 = vmatprep.subr.bf16.mxu0 0
  %361 = vmatpush1.bf16.msra.mxu0 0
  %362 = vmatprep.subr.bf16.mxu0 0
  %363 = vmatpush1.bf16.msra.mxu0 0
  %364 = vmatprep.subr.bf16.mxu0 0
  %365 = vmatpush1.bf16.msra.mxu0 0
  %366 = vmatprep.subr.bf16.mxu0 0
  %367 = vmatpush1.bf16.msra.mxu0 0
  %368 = vmatprep.subr.bf16.mxu0 0
  %369 = vmatpush1.bf16.msra.mxu0 0
  %370 = vmatprep.subr.bf16.mxu0 0
  %371 = vmatpush1.bf16.msra.mxu0 0
  %372 = vmatprep.subr.bf16.mxu0 0
  %373 = vmatpush1.bf16.msra.mxu0 0
  %374 = vmatprep.mubr.bf16.mxu0 0
  %375 = vmatmul.mubr.bf16.gmra.mrb[0].mxu0 %v230
  %v376 = vpop.f32.mrb[0].mxu0
  %v377 = vadd.f32 %v100, %v376
  %v378 = vpop.f32.mrb[0].mxu0
  %v379 = vpop.f32.mrb[0].mxu0
  %v380 = vadd.f32 %v100, %v379
  %v381 = vpop.f32.mrb[0].mxu0
  %382 = vmatprep.mubr.bf16.mxu0 0
  %383 = vmatmul.mubr.bf16.gmra.mrb[0].mxu0 %v231
  %v384 = vpop.f32.mrb[0].mxu0
  %v385 = vadd.f32 %v100, %v384
  %v386 = vpop.f32.mrb[0].mxu0
  %v387 = vpop.f32.mrb[0].mxu0
  %v388 = vadd.f32 %v100, %v387
  %v389 = vpop.f32.mrb[0].mxu0
  %390 = vmatprep.mubr.bf16.mxu0 0
  %391 = vmatmul.mubr.bf16.gmra.mrb[0].mxu0 %v232
  %v392 = vpop.f32.mrb[0].mxu0
  %v393 = vadd.f32 %v100, %v392
  %v394 = vpop.f32.mrb[0].mxu0
  %v395 = vpop.f32.mrb[0].mxu0
  %v396 = vadd.f32 %v100, %v395
  %v397 = vpop.f32.mrb[0].mxu0
  %398 = vmatprep.mubr.bf16.mxu0 0
  %399 = vmatmul.mubr.bf16.gmra.mrb[0].mxu0 %v233
  %v400 = vpop.f32.mrb[0].mxu0
  %v401 = vadd.f32 %v100, %v400
  %v402 = vpop.f32.mrb[0].mxu0
  %v403 = vpop.f32.mrb[0].mxu0
  %v404 = vadd.f32 %v100, %v403
  %v405 = vpop.f32.mrb[0].mxu0
  %406 = vmatprep.mubr.bf16.mxu0 0
  %407 = vmatmul.mubr.bf16.gmra.mrb[0].mxu0 %v234
  %v408 = vpop.f32.mrb[0].mxu0
  %v409 = vadd.f32 %v100, %v408
  %v410 = vpop.f32.mrb[0].mxu0
  %v411 = vpop.f32.mrb[0].mxu0
  %v412 = vadd.f32 %v100, %v411
  %v413 = vpop.f32.mrb[0].mxu0
  %414 = vmatprep.mubr.bf16.mxu0 0
  %415 = vmatmul.mubr.bf16.gmra.mrb[0].mxu0 %v235
  %v416 = vpop.f32.mrb[0].mxu0
  %v417 = vadd.f32 %v100, %v416
  %v418 = vpop.f32.mrb[0].mxu0
  %v419 = vpop.f32.mrb[0].mxu0
  %v420 = vadd.f32 %v100, %v419
  %v421 = vpop.f32.mrb[0].mxu0
  %422 = vmatprep.mubr.bf16.mxu0 0
  %423 = vmatmul.mubr.bf16.gmra.mrb[0].mxu0 %v236
  %v424 = vpop.f32.mrb[0].mxu0
  %v425 = vadd.f32 %v100, %v424
  %v426 = vpop.f32.mrb[0].mxu0
  %v427 = vpop.f32.mrb[0].mxu0
  %v428 = vadd.f32 %v100, %v427
  %v429 = vpop.f32.mrb[0].mxu0
  %430 = vmatprep.mubr.bf16.mxu0 0
  %431 = vmatmul.mubr.bf16.gmra.mrb[0].mxu0 %v237
  %v432 = vpop.f32.mrb[0].mxu0
  %v433 = vadd.f32 %v100, %v432
  %v434 = vpop.f32.mrb[0].mxu0
  %v435 = vpop.f32.mrb[0].mxu0
  %v436 = vadd.f32 %v100, %v435
  %v437 = vpop.f32.mrb[0].mxu0
  %438 = vmatprep.mubr.bf16.mxu0 0
  %439 = vmatmul.mubr.bf16.gmra.mrb[0].mxu0 %v238
  %v440 = vpop.f32.mrb[0].mxu0
  %v441 = vadd.f32 %v100, %v440
  %v442 = vpop.f32.mrb[0].mxu0
  %v443 = vpop.f32.mrb[0].mxu0
  %v444 = vadd.f32 %v100, %v443
  %v445 = vpop.f32.mrb[0].mxu0
  %446 = vmatprep.mubr.bf16.mxu0 0
  %447 = vmatmul.mubr.bf16.gmra.mrb[0].mxu0 %v239
  %v448 = vpop.f32.mrb[0].mxu0
  %v449 = vadd.f32 %v100, %v448
  %v450 = vpop.f32.mrb[0].mxu0
  %v451 = vpop.f32.mrb[0].mxu0
  %v452 = vadd.f32 %v100, %v451
  %v453 = vpop.f32.mrb[0].mxu0
  %454 = vmatprep.mubr.bf16.mxu0 0
  %455 = vmatmul.mubr.bf16.gmra.mrb[0].mxu0 %v240
  %v456 = vpop.f32.mrb[0].mxu0
  %v457 = vadd.f32 %v100, %v456
  %v458 = vpop.f32.mrb[0].mxu0
  %v459 = vpop.f32.mrb[0].mxu0
  %v460 = vadd.f32 %v100, %v459
  %v461 = vpop.f32.mrb[0].mxu0
  %462 = vmatprep.mubr.bf16.mxu0 0
  %463 = vmatmul.mubr.bf16.gmra.mrb[0].mxu0 %v241
  %v464 = vpop.f32.mrb[0].mxu0
  %v465 = vadd.f32 %v100, %v464
  %v466 = vpop.f32.mrb[0].mxu0
  %v467 = vpop.f32.mrb[0].mxu0
  %v468 = vadd.f32 %v100, %v467
  %v469 = vpop.f32.mrb[0].mxu0
  %470 = vmatprep.mubr.bf16.mxu0 0
  %471 = vmatmul.mubr.bf16.gmra.mrb[0].mxu0 %v242
  %v472 = vpop.f32.mrb[0].mxu0
  %v473 = vadd.f32 %v100, %v472
  %v474 = vpop.f32.mrb[0].mxu0
  %v475 = vpop.f32.mrb[0].mxu0
  %v476 = vadd.f32 %v100, %v475
  %v477 = vpop.f32.mrb[0].mxu0
  %478 = vmatprep.mubr.bf16.mxu0 0
  %479 = vmatmul.mubr.bf16.gmra.mrb[0].mxu0 %v243
  %v480 = vpop.f32.mrb[0].mxu0
  %v481 = vadd.f32 %v100, %v480
  %v482 = vpop.f32.mrb[0].mxu0
  %v483 = vpop.f32.mrb[0].mxu0
  %v484 = vadd.f32 %v100, %v483
  %v485 = vpop.f32.mrb[0].mxu0
  %486 = vmatprep.mubr.bf16.mxu0 0
  %487 = vmatmul.mubr.bf16.gmra.mrb[0].mxu0 %v244
  %v488 = vpop.f32.mrb[0].mxu0
  %v489 = vadd.f32 %v100, %v488
  %v490 = vpop.f32.mrb[0].mxu0
  %v491 = vpop.f32.mrb[0].mxu0
  %v492 = vadd.f32 %v100, %v491
  %v493 = vpop.f32.mrb[0].mxu0
  %494 = vmatprep.mubr.bf16.mxu0 0
  %495 = vmatmul.mubr.bf16.gmra.mrb[0].mxu0 %v245
  %v496 = vpop.f32.mrb[0].mxu0
  %v497 = vadd.f32 %v100, %v496
  %v498 = vpop.f32.mrb[0].mxu0
  %v499 = vpop.f32.mrb[0].mxu0
  %v500 = vadd.f32 %v100, %v499
  %v501 = vpop.f32.mrb[0].mxu0
  %502 = vmatprep.mubr.bf16.mxu0 0
  %503 = vmatmul.mubr.bf16.gmra.mrb[0].mxu0 %v246
  %v504 = vpop.f32.mrb[0].mxu0
  %v505 = vadd.f32 %v100, %v504
  %v506 = vpop.f32.mrb[0].mxu0
  %v507 = vpop.f32.mrb[0].mxu0
  %v508 = vadd.f32 %v100, %v507
  %v509 = vpop.f32.mrb[0].mxu0
  %510 = vmatprep.mubr.bf16.mxu0 0
  %511 = vmatmul.mubr.bf16.gmra.mrb[0].mxu0 %v247
  %v512 = vpop.f32.mrb[0].mxu0
  %v513 = vadd.f32 %v100, %v512
  %v514 = vpop.f32.mrb[0].mxu0
  %v515 = vpop.f32.mrb[0].mxu0
  %v516 = vadd.f32 %v100, %v515
  %v517 = vpop.f32.mrb[0].mxu0
  %518 = vmatprep.mubr.bf16.mxu0 0
  %519 = vmatmul.mubr.bf16.gmra.mrb[0].mxu0 %v248
  %v520 = vpop.f32.mrb[0].mxu0
  %v521 = vadd.f32 %v100, %v520
  %v522 = vpop.f32.mrb[0].mxu0
  %v523 = vpop.f32.mrb[0].mxu0
  %v524 = vadd.f32 %v100, %v523
  %v525 = vpop.f32.mrb[0].mxu0
  %526 = vmatprep.mubr.bf16.mxu0 0
  %527 = vmatmul.mubr.bf16.gmra.mrb[0].mxu0 %v249
  %v528 = vpop.f32.mrb[0].mxu0
  %v529 = vadd.f32 %v100, %v528
  %v530 = vpop.f32.mrb[0].mxu0
  %v531 = vpop.f32.mrb[0].mxu0
  %v532 = vadd.f32 %v100, %v531
  %v533 = vpop.f32.mrb[0].mxu0
  %534 = vmatprep.mubr.bf16.mxu0 0
  %535 = vmatmul.mubr.bf16.gmra.mrb[0].mxu0 %v250
  %v536 = vpop.f32.mrb[0].mxu0
  %v537 = vadd.f32 %v100, %v536
  %v538 = vpop.f32.mrb[0].mxu0
  %v539 = vpop.f32.mrb[0].mxu0
  %v540 = vadd.f32 %v100, %v539
  %v541 = vpop.f32.mrb[0].mxu0
  %542 = vmatprep.mubr.bf16.mxu0 0
  %543 = vmatmul.mubr.bf16.gmra.mrb[0].mxu0 %v251
  %v544 = vpop.f32.mrb[0].mxu0
  %v545 = vadd.f32 %v100, %v544
  %v546 = vpop.f32.mrb[0].mxu0
  %v547 = vpop.f32.mrb[0].mxu0
  %v548 = vadd.f32 %v100, %v547
  %v549 = vpop.f32.mrb[0].mxu0
  %550 = vmatprep.mubr.bf16.mxu0 0
  %551 = vmatmul.mubr.bf16.gmra.mrb[0].mxu0 %v252
  %v552 = vpop.f32.mrb[0].mxu0
  %v553 = vadd.f32 %v100, %v552
  %v554 = vpop.f32.mrb[0].mxu0
  %v555 = vpop.f32.mrb[0].mxu0
  %v556 = vadd.f32 %v100, %v555
  %v557 = vpop.f32.mrb[0].mxu0
  %558 = vmatprep.mubr.bf16.mxu0 0
  %559 = vmatmul.mubr.bf16.gmra.mrb[0].mxu0 %v253
  %v560 = vpop.f32.mrb[0].mxu0
  %v561 = vadd.f32 %v100, %v560
  %v562 = vpop.f32.mrb[0].mxu0
  %v563 = vpop.f32.mrb[0].mxu0
  %v564 = vadd.f32 %v100, %v563
  %v565 = vpop.f32.mrb[0].mxu0
  %566 = vmatprep.mubr.bf16.mxu0 0
  %567 = vmatmul.mubr.bf16.gmra.mrb[0].mxu0 %v254
  %v568 = vpop.f32.mrb[0].mxu0
  %v569 = vadd.f32 %v100, %v568
  %v570 = vpop.f32.mrb[0].mxu0
  %v571 = vpop.f32.mrb[0].mxu0
  %v572 = vadd.f32 %v100, %v571
  %v573 = vpop.f32.mrb[0].mxu0
  %574 = vmatprep.mubr.bf16.mxu0 0
  %575 = vmatmul.mubr.bf16.gmra.mrb[0].mxu0 %v255
  %v576 = vpop.f32.mrb[0].mxu0
  %v577 = vadd.f32 %v100, %v576
  %v578 = vpop.f32.mrb[0].mxu0
  %v579 = vpop.f32.mrb[0].mxu0
  %v580 = vadd.f32 %v100, %v579
  %v581 = vpop.f32.mrb[0].mxu0
  %582 = vmatprep.mubr.bf16.mxu0 0
  %583 = vmatmul.mubr.bf16.gmra.mrb[0].mxu0 %v256
  %v584 = vpop.f32.mrb[0].mxu0
  %v585 = vadd.f32 %v100, %v584
  %v586 = vpop.f32.mrb[0].mxu0
  %v587 = vpop.f32.mrb[0].mxu0
  %v588 = vadd.f32 %v100, %v587
  %v589 = vpop.f32.mrb[0].mxu0
  %590 = vmatprep.mubr.bf16.mxu0 0
  %591 = vmatmul.mubr.bf16.gmra.mrb[0].mxu0 %v257
  %v592 = vpop.f32.mrb[0].mxu0
  %v593 = vadd.f32 %v100, %v592
  %v594 = vpop.f32.mrb[0].mxu0
  %v595 = vpop.f32.mrb[0].mxu0
  %v596 = vadd.f32 %v100, %v595
  %v597 = vpop.f32.mrb[0].mxu0
  %598 = vmatprep.mubr.bf16.mxu0 0
  %599 = vmatmul.mubr.bf16.gmra.mrb[0].mxu0 %v258
  %v600 = vpop.f32.mrb[0].mxu0
  %v601 = vadd.f32 %v100, %v600
  %v602 = vpop.f32.mrb[0].mxu0
  %v603 = vpop.f32.mrb[0].mxu0
  %v604 = vadd.f32 %v100, %v603
  %v605 = vpop.f32.mrb[0].mxu0
  %606 = vmatprep.mubr.bf16.mxu0 0
  %607 = vmatmul.mubr.bf16.gmra.mrb[0].mxu0 %v259
  %v608 = vpop.f32.mrb[0].mxu0
  %v609 = vadd.f32 %v100, %v608
  %v610 = vpop.f32.mrb[0].mxu0
  %v611 = vpop.f32.mrb[0].mxu0
  %v612 = vadd.f32 %v100, %v611
  %v613 = vpop.f32.mrb[0].mxu0
  %614 = vmatprep.mubr.bf16.mxu0 0
  %615 = vmatmul.mubr.bf16.gmra.mrb[0].mxu0 %v260
  %v616 = vpop.f32.mrb[0].mxu0
  %v617 = vadd.f32 %v100, %v616
  %v618 = vpop.f32.mrb[0].mxu0
  %v619 = vpop.f32.mrb[0].mxu0
  %v620 = vadd.f32 %v100, %v619
  %v621 = vpop.f32.mrb[0].mxu0
  %622 = vmatprep.mubr.bf16.mxu0 0
  %623 = vmatmul.mubr.bf16.gmra.mrb[0].mxu0 %v261
  %v624 = vpop.f32.mrb[0].mxu0
  %v625 = vadd.f32 %v100, %v624
  %v626 = vpop.f32.mrb[0].mxu0
  %v627 = vpop.f32.mrb[0].mxu0
  %v628 = vadd.f32 %v100, %v627
  %v629 = vpop.f32.mrb[0].mxu0
  %630 = vdwg.mxu0
  %631 = vst [vmem:[%s3] sm:$0xff] %v377
  %632 = vst [vmem:[%s3 + $0x8] sm:$0xff] %v380
  %633 = vst [vmem:[%s3 + $0x10] sm:$0xff] %v385
  %634 = vst [vmem:[%s3 + $0x18] sm:$0xff] %v388
  %635 = vst [vmem:[%s3 + $0x20] sm:$0xff] %v393
  %636 = vst [vmem:[%s3 + $0x28] sm:$0xff] %v396
  %637 = vst [vmem:[%s3 + $0x30] sm:$0xff] %v401
  %638 = vst [vmem:[%s3 + $0x38] sm:$0xff] %v404
  %639 = vst [vmem:[%s3 + $0x40] sm:$0xff] %v409
  %640 = vst [vmem:[%s3 + $0x48] sm:$0xff] %v412
  %641 = vst [vmem:[%s3 + $0x50] sm:$0xff] %v417
  %642 = vst [vmem:[%s3 + $0x58] sm:$0xff] %v420
  %643 = vst [vmem:[%s3 + $0x60] sm:$0xff] %v425
  %644 = vst [vmem:[%s3 + $0x68] sm:$0xff] %v428
  %645 = vst [vmem:[%s3 + $0x70] sm:$0xff] %v433
  %646 = vst [vmem:[%s3 + $0x78] sm:$0xff] %v436
  %647 = vst [vmem:[%s3 + $0x80] sm:$0xff] %v441
  %648 = vst [vmem:[%s3 + $0x88] sm:$0xff] %v444
  %649 = vst [vmem:[%s3 + $0x90] sm:$0xff] %v449
  %650 = vst [vmem:[%s3 + $0x98] sm:$0xff] %v452
  %651 = vst [vmem:[%s3 + $0xa0] sm:$0xff] %v457
  %652 = vst [vmem:[%s3 + $0xa8] sm:$0xff] %v460
  %653 = vst [vmem:[%s3 + $0xb0] sm:$0xff] %v465
  %654 = vst [vmem:[%s3 + $0xb8] sm:$0xff] %v468
  %655 = vst [vmem:[%s3 + $0xc0] sm:$0xff] %v473
  %656 = vst [vmem:[%s3 + $0xc8] sm:$0xff] %v476
  %657 = vst [vmem:[%s3 + $0xd0] sm:$0xff] %v481
  %658 = vst [vmem:[%s3 + $0xd8] sm:$0xff] %v484
  %659 = vst [vmem:[%s3 + $0xe0] sm:$0xff] %v489
  %660 = vst [vmem:[%s3 + $0xe8] sm:$0xff] %v492
  %661 = vst [vmem:[%s3 + $0xf0] sm:$0xff] %v497
  %662 = vst [vmem:[%s3 + $0xf8] sm:$0xff] %v500
  %663 = vst [vmem:[%s3 + $0x100] sm:$0xff] %v505
  %664 = vst [vmem:[%s3 + $0x108] sm:$0xff] %v508
  %665 = vst [vmem:[%s3 + $0x110] sm:$0xff] %v513
  %666 = vst [vmem:[%s3 + $0x118] sm:$0xff] %v516
  %667 = vst [vmem:[%s3 + $0x120] sm:$0xff] %v521
  %668 = vst [vmem:[%s3 + $0x128] sm:$0xff] %v524
  %669 = vst [vmem:[%s3 + $0x130] sm:$0xff] %v529
  %670 = vst [vmem:[%s3 + $0x138] sm:$0xff] %v532
  %671 = vst [vmem:[%s3 + $0x140] sm:$0xff] %v537
  %672 = vst [vmem:[%s3 + $0x148] sm:$0xff] %v540
  %673 = vst [vmem:[%s3 + $0x150] sm:$0xff] %v545
  %674 = vst [vmem:[%s3 + $0x158] sm:$0xff] %v548
  %675 = vst [vmem:[%s3 + $0x160] sm:$0xff] %v553
  %676 = vst [vmem:[%s3 + $0x168] sm:$0xff] %v556
  %677 = vst [vmem:[%s3 + $0x170] sm:$0xff] %v561
  %678 = vst [vmem:[%s3 + $0x178] sm:$0xff] %v564
  %679 = vst [vmem:[%s3 + $0x180] sm:$0xff] %v569
  %680 = vst [vmem:[%s3 + $0x188] sm:$0xff] %v572
  %681 = vst [vmem:[%s3 + $0x190] sm:$0xff] %v577
  %682 = vst [vmem:[%s3 + $0x198] sm:$0xff] %v580
  %683 = vst [vmem:[%s3 + $0x1a0] sm:$0xff] %v585
  %684 = vst [vmem:[%s3 + $0x1a8] sm:$0xff] %v588
  %685 = vst [vmem:[%s3 + $0x1b0] sm:$0xff] %v593
  %686 = vst [vmem:[%s3 + $0x1b8] sm:$0xff] %v596
  %687 = vst [vmem:[%s3 + $0x1c0] sm:$0xff] %v601
  %688 = vst [vmem:[%s3 + $0x1c8] sm:$0xff] %v604
  %689 = vst [vmem:[%s3 + $0x1d0] sm:$0xff] %v609
  %690 = vst [vmem:[%s3 + $0x1d8] sm:$0xff] %v612
  %691 = vst [vmem:[%s3 + $0x1e0] sm:$0xff] %v617
  %692 = vst [vmem:[%s3 + $0x1e8] sm:$0xff] %v620
  %693 = vst [vmem:[%s3 + $0x1f0] sm:$0xff] %v625
  %694 = vst [vmem:[%s3 + $0x1f8] sm:$0xff] %v628
  // Predicated region
  $region14: #{darknet_forward.17} parent=0 // pred_check
    _
  $region15: #{darknet_forward.17} parent=0 // pred_check_branch
    %696 = sbr.rel (0) target = $region17
  $region16: #{darknet_forward.17} parent=0 // pred_region
    _
  $region17: #{darknet_forward.17} parent=0 // pred_fallthru
    _
  // Predicated region
  $region18: #{darknet_forward.17} parent=0 // pred_check
    _
  $region19: #{darknet_forward.17} parent=0 // pred_check_branch
    %698 = sbr.rel (0) target = $region21
  $region20: #{darknet_forward.17} parent=0 // pred_region
    _
  $region21: #{darknet_forward.17} parent=0 // pred_fallthru
    _

// kernel: darknet_forward.16
$region0: #{darknet_forward.16}
  #allocation0 [shape = 'u32[]', space=smem, size = 0x4, offset = 0x4, fixed_abs, tag = 'smem constant byte address 0x4 - core index']
  #allocation1 [shape = 'u32[144,128]{1,0:T(1,128)}', space=vmem, size = 0x12000, scoped, tag = 'internal scratch']
  %s0 = inlined_call_operand.vmem [shape: bf16[512,384], index: 0, kind: input, shape index: {}]
  %s1 = inlined_call_operand.vmem [shape: bf16[384,128], index: 1, kind: input, shape index: {}]
  %s2 = inlined_call_operand.vmem [shape: f32[1,128], index: 2, kind: input, shape index: {}]
  %s3 = inlined_call_operand.vmem [shape: f32[1,128], index: 3, kind: input, shape index: {}]
  %s4 = inlined_call_operand.vmem [shape: f32[512,128], index: 4, kind: output, shape index: {}]
  %s5 = sld [smem:[#allocation0]]
  $region26: #{darknet_forward.16} parent=0
    _
  %s7 = ssub.s32 1, %s5
  %s8 = scalar_select 0, %s7, %s5
  // Predicated region
  $region2: #{darknet_forward.16} parent=0 // pred_check
    _
  $region3: #{darknet_forward.16} parent=0 // pred_check_branch
    %10 = sbr.rel (0) target = $region5
  $region4: #{darknet_forward.16} parent=0 // pred_region
    _
  $region5: #{darknet_forward.16} parent=0 // pred_fallthru
    _
  // Predicated region
  $region6: #{darknet_forward.16} parent=0 // pred_check
    _
  $region7: #{darknet_forward.16} parent=0 // pred_check_branch
    %12 = sbr.rel (0) target = $region9
  $region8: #{darknet_forward.16} parent=0 // pred_region
    _
  $region9: #{darknet_forward.16} parent=0 // pred_fallthru
    _
  // Predicated region
  $region10: #{darknet_forward.16} parent=0 // pred_check
    _
  $region11: #{darknet_forward.16} parent=0 // pred_check_branch
    %14 = sbr.rel (0) target = $region13
  $region12: #{darknet_forward.16} parent=0 // pred_region
    _
  $region13: #{darknet_forward.16} parent=0 // pred_fallthru
    _
  // Predicated region
  $region14: #{darknet_forward.16} parent=0 // pred_check
    _
  $region15: #{darknet_forward.16} parent=0 // pred_check_branch
    %16 = sbr.rel (0) target = $region17
  $region16: #{darknet_forward.16} parent=0 // pred_region
    _
  $region17: #{darknet_forward.16} parent=0 // pred_fallthru
    _
  %v18 = vld [vmem:[%s0] sm:$0xff]
  %v19 = vld [vmem:[%s0 + $0x8] sm:$0xf]
  %v20 = vld [vmem:[%s0 + $0xc] sm:$0xff]
  %v21 = vld [vmem:[%s0 + $0x14] sm:$0xf]
  %v22 = vld [vmem:[%s0 + $0x18] sm:$0xff]
  %v23 = vld [vmem:[%s0 + $0x20] sm:$0xf]
  %v24 = vld [vmem:[%s0 + $0x24] sm:$0xff]
  %v25 = vld [vmem:[%s0 + $0x2c] sm:$0xf]
  %v26 = vld [vmem:[%s0 + $0x30] sm:$0xff]
  %v27 = vld [vmem:[%s0 + $0x38] sm:$0xf]
  %v28 = vld [vmem:[%s0 + $0x3c] sm:$0xff]
  %v29 = vld [vmem:[%s0 + $0x44] sm:$0xf]
  %v30 = vld [vmem:[%s0 + $0x48] sm:$0xff]
  %v31 = vld [vmem:[%s0 + $0x50] sm:$0xf]
  %v32 = vld [vmem:[%s0 + $0x54] sm:$0xff]
  %v33 = vld [vmem:[%s0 + $0x5c] sm:$0xf]
  %v34 = vld [vmem:[%s0 + $0x60] sm:$0xff]
  %v35 = vld [vmem:[%s0 + $0x68] sm:$0xf]
  %v36 = vld [vmem:[%s0 + $0x6c] sm:$0xff]
  %v37 = vld [vmem:[%s0 + $0x74] sm:$0xf]
  %v38 = vld [vmem:[%s0 + $0x78] sm:$0xff]
  %v39 = vld [vmem:[%s0 + $0x80] sm:$0xf]
  %v40 = vld [vmem:[%s0 + $0x84] sm:$0xff]
  %v41 = vld [vmem:[%s0 + $0x8c] sm:$0xf]
  %v42 = vld [vmem:[%s0 + $0x90] sm:$0xff]
  %v43 = vld [vmem:[%s0 + $0x98] sm:$0xf]
  %v44 = vld [vmem:[%s0 + $0x9c] sm:$0xff]
  %v45 = vld [vmem:[%s0 + $0xa4] sm:$0xf]
  %v46 = vld [vmem:[%s0 + $0xa8] sm:$0xff]
  %v47 = vld [vmem:[%s0 + $0xb0] sm:$0xf]
  %v48 = vld [vmem:[%s0 + $0xb4] sm:$0xff]
  %v49 = vld [vmem:[%s0 + $0xbc] sm:$0xf]
  %v50 = vld [vmem:[%s0 + $0xc0] sm:$0xff]
  %v51 = vld [vmem:[%s0 + $0xc8] sm:$0xf]
  %v52 = vld [vmem:[%s0 + $0xcc] sm:$0xff]
  %v53 = vld [vmem:[%s0 + $0xd4] sm:$0xf]
  %v54 = vld [vmem:[%s0 + $0xd8] sm:$0xff]
  %v55 = vld [vmem:[%s0 + $0xe0] sm:$0xf]
  %v56 = vld [vmem:[%s0 + $0xe4] sm:$0xff]
  %v57 = vld [vmem:[%s0 + $0xec] sm:$0xf]
  %v58 = vld [vmem:[%s0 + $0xf0] sm:$0xff]
  %v59 = vld [vmem:[%s0 + $0xf8] sm:$0xf]
  %v60 = vld [vmem:[%s0 + $0xfc] sm:$0xff]
  %v61 = vld [vmem:[%s0 + $0x104] sm:$0xf]
  %v62 = vld [vmem:[%s0 + $0x108] sm:$0xff]
  %v63 = vld [vmem:[%s0 + $0x110] sm:$0xf]
  %v64 = vld [vmem:[%s0 + $0x114] sm:$0xff]
  %v65 = vld [vmem:[%s0 + $0x11c] sm:$0xf]
  %v66 = vld [vmem:[%s0 + $0x120] sm:$0xff]
  %v67 = vld [vmem:[%s0 + $0x128] sm:$0xf]
  %v68 = vld [vmem:[%s0 + $0x12c] sm:$0xff]
  %v69 = vld [vmem:[%s0 + $0x134] sm:$0xf]
  %v70 = vld [vmem:[%s0 + $0x138] sm:$0xff]
  %v71 = vld [vmem:[%s0 + $0x140] sm:$0xf]
  %v72 = vld [vmem:[%s0 + $0x144] sm:$0xff]
  %v73 = vld [vmem:[%s0 + $0x14c] sm:$0xf]
  %v74 = vld [vmem:[%s0 + $0x150] sm:$0xff]
  %v75 = vld [vmem:[%s0 + $0x158] sm:$0xf]
  %v76 = vld [vmem:[%s0 + $0x15c] sm:$0xff]
  %v77 = vld [vmem:[%s0 + $0x164] sm:$0xf]
  %v78 = vld [vmem:[%s0 + $0x168] sm:$0xff]
  %v79 = vld [vmem:[%s0 + $0x170] sm:$0xf]
  %v80 = vld [vmem:[%s0 + $0x174] sm:$0xff]
  %v81 = vld [vmem:[%s0 + $0x17c] sm:$0xf]
  %v82 = vld [vmem:[%s0 + $0x180] sm:$0xff]
  %v83 = vld [vmem:[%s0 + $0x188] sm:$0xf]
  %v84 = vld [vmem:[%s0 + $0x18c] sm:$0xff]
  %v85 = vld [vmem:[%s0 + $0x194] sm:$0xf]
  %v86 = vld [vmem:[%s0 + $0x198] sm:$0xff]
  %v87 = vld [vmem:[%s0 + $0x1a0] sm:$0xf]
  %v88 = vld [vmem:[%s0 + $0x1a4] sm:$0xff]
  %v89 = vld [vmem:[%s0 + $0x1ac] sm:$0xf]
  %v90 = vld [vmem:[%s0 + $0x1b0] sm:$0xff]
  %v91 = vld [vmem:[%s0 + $0x1b8] sm:$0xf]
  %v92 = vld [vmem:[%s0 + $0x1bc] sm:$0xff]
  %v93 = vld [vmem:[%s0 + $0x1c4] sm:$0xf]
  %v94 = vld [vmem:[%s0 + $0x1c8] sm:$0xff]
  %v95 = vld [vmem:[%s0 + $0x1d0] sm:$0xf]
  %v96 = vld [vmem:[%s0 + $0x1d4] sm:$0xff]
  %v97 = vld [vmem:[%s0 + $0x1dc] sm:$0xf]
  %v98 = vld [vmem:[%s0 + $0x1e0] sm:$0xff]
  %v99 = vld [vmem:[%s0 + $0x1e8] sm:$0xf]
  %v100 = vld [vmem:[%s0 + $0x1ec] sm:$0xff]
  %v101 = vld [vmem:[%s0 + $0x1f4] sm:$0xf]
  %v102 = vld [vmem:[%s0 + $0x1f8] sm:$0xff]
  %v103 = vld [vmem:[%s0 + $0x200] sm:$0xf]
  %v104 = vld [vmem:[%s0 + $0x204] sm:$0xff]
  %v105 = vld [vmem:[%s0 + $0x20c] sm:$0xf]
  %v106 = vld [vmem:[%s0 + $0x210] sm:$0xff]
  %v107 = vld [vmem:[%s0 + $0x218] sm:$0xf]
  %v108 = vld [vmem:[%s0 + $0x21c] sm:$0xff]
  %v109 = vld [vmem:[%s0 + $0x224] sm:$0xf]
  %v110 = vld [vmem:[%s0 + $0x228] sm:$0xff]
  %v111 = vld [vmem:[%s0 + $0x230] sm:$0xf]
  %v112 = vld [vmem:[%s0 + $0x234] sm:$0xff]
  %v113 = vld [vmem:[%s0 + $0x23c] sm:$0xf]
  %v114 = vld [vmem:[%s0 + $0x240] sm:$0xff]
  %v115 = vld [vmem:[%s0 + $0x248] sm:$0xf]
  %v116 = vld [vmem:[%s0 + $0x24c] sm:$0xff]
  %v117 = vld [vmem:[%s0 + $0x254] sm:$0xf]
  %v118 = vld [vmem:[%s0 + $0x258] sm:$0xff]
  %v119 = vld [vmem:[%s0 + $0x260] sm:$0xf]
  %v120 = vld [vmem:[%s0 + $0x264] sm:$0xff]
  %v121 = vld [vmem:[%s0 + $0x26c] sm:$0xf]
  %v122 = vld [vmem:[%s0 + $0x270] sm:$0xff]
  %v123 = vld [vmem:[%s0 + $0x278] sm:$0xf]
  %v124 = vld [vmem:[%s0 + $0x27c] sm:$0xff]
  %v125 = vld [vmem:[%s0 + $0x284] sm:$0xf]
  %v126 = vld [vmem:[%s0 + $0x288] sm:$0xff]
  %v127 = vld [vmem:[%s0 + $0x290] sm:$0xf]
  %v128 = vld [vmem:[%s0 + $0x294] sm:$0xff]
  %v129 = vld [vmem:[%s0 + $0x29c] sm:$0xf]
  %v130 = vld [vmem:[%s0 + $0x2a0] sm:$0xff]
  %v131 = vld [vmem:[%s0 + $0x2a8] sm:$0xf]
  %v132 = vld [vmem:[%s0 + $0x2ac] sm:$0xff]
  %v133 = vld [vmem:[%s0 + $0x2b4] sm:$0xf]
  %v134 = vld [vmem:[%s0 + $0x2b8] sm:$0xff]
  %v135 = vld [vmem:[%s0 + $0x2c0] sm:$0xf]
  %v136 = vld [vmem:[%s0 + $0x2c4] sm:$0xff]
  %v137 = vld [vmem:[%s0 + $0x2cc] sm:$0xf]
  %v138 = vld [vmem:[%s0 + $0x2d0] sm:$0xff]
  %v139 = vld [vmem:[%s0 + $0x2d8] sm:$0xf]
  %v140 = vld [vmem:[%s0 + $0x2dc] sm:$0xff]
  %v141 = vld [vmem:[%s0 + $0x2e4] sm:$0xf]
  %v142 = vld [vmem:[%s0 + $0x2e8] sm:$0xff]
  %v143 = vld [vmem:[%s0 + $0x2f0] sm:$0xf]
  %v144 = vld [vmem:[%s0 + $0x2f4] sm:$0xff]
  %v145 = vld [vmem:[%s0 + $0x2fc] sm:$0xf]
  %v146 = vld [vmem:[%s1] sm:$0xf]
  %v147 = vld [vmem:[%s1 + $0x4] sm:$0xf]
  %v148 = vld [vmem:[%s1 + $0x8] sm:$0xf]
  %v149 = vld [vmem:[%s1 + $0xc] sm:$0xf]
  %v150 = vld [vmem:[%s1 + $0x10] sm:$0xf]
  %v151 = vld [vmem:[%s1 + $0x14] sm:$0xf]
  %v152 = vld [vmem:[%s1 + $0x18] sm:$0xf]
  %v153 = vld [vmem:[%s1 + $0x1c] sm:$0xf]
  %v154 = vld [vmem:[%s1 + $0x20] sm:$0xf]
  %v155 = vld [vmem:[%s1 + $0x24] sm:$0xf]
  %v156 = vld [vmem:[%s1 + $0x28] sm:$0xf]
  %v157 = vld [vmem:[%s1 + $0x2c] sm:$0xf]
  %v158 = vld [vmem:[%s1 + $0x30] sm:$0xf]
  %v159 = vld [vmem:[%s1 + $0x34] sm:$0xf]
  %v160 = vld [vmem:[%s1 + $0x38] sm:$0xf]
  %v161 = vld [vmem:[%s1 + $0x3c] sm:$0xf]
  %v162 = vld [vmem:[%s1 + $0x40] sm:$0xf]
  %v163 = vld [vmem:[%s1 + $0x44] sm:$0xf]
  %v164 = vld [vmem:[%s1 + $0x48] sm:$0xf]
  %v165 = vld [vmem:[%s1 + $0x4c] sm:$0xf]
  %v166 = vld [vmem:[%s1 + $0x50] sm:$0xf]
  %v167 = vld [vmem:[%s1 + $0x54] sm:$0xf]
  %v168 = vld [vmem:[%s1 + $0x58] sm:$0xf]
  %v169 = vld [vmem:[%s1 + $0x5c] sm:$0xf]
  %v170 = vld [vmem:[%s1 + $0x60] sm:$0xf]
  %v171 = vld [vmem:[%s1 + $0x64] sm:$0xf]
  %v172 = vld [vmem:[%s1 + $0x68] sm:$0xf]
  %v173 = vld [vmem:[%s1 + $0x6c] sm:$0xf]
  %v174 = vld [vmem:[%s1 + $0x70] sm:$0xf]
  %v175 = vld [vmem:[%s1 + $0x74] sm:$0xf]
  %v176 = vld [vmem:[%s1 + $0x78] sm:$0xf]
  %v177 = vld [vmem:[%s1 + $0x7c] sm:$0xf]
  %v178 = vld [vmem:[%s1 + $0x80] sm:$0xf]
  %v179 = vld [vmem:[%s1 + $0x84] sm:$0xf]
  %v180 = vld [vmem:[%s1 + $0x88] sm:$0xf]
  %v181 = vld [vmem:[%s1 + $0x8c] sm:$0xf]
  %v182 = vld [vmem:[%s1 + $0x90] sm:$0xf]
  %v183 = vld [vmem:[%s1 + $0x94] sm:$0xf]
  %v184 = vld [vmem:[%s1 + $0x98] sm:$0xf]
  %v185 = vld [vmem:[%s1 + $0x9c] sm:$0xf]
  %v186 = vld [vmem:[%s1 + $0xa0] sm:$0xf]
  %v187 = vld [vmem:[%s1 + $0xa4] sm:$0xf]
  %v188 = vld [vmem:[%s1 + $0xa8] sm:$0xf]
  %v189 = vld [vmem:[%s1 + $0xac] sm:$0xf]
  %v190 = vld [vmem:[%s1 + $0xb0] sm:$0xf]
  %v191 = vld [vmem:[%s1 + $0xb4] sm:$0xf]
  %v192 = vld [vmem:[%s1 + $0xb8] sm:$0xf]
  %v193 = vld [vmem:[%s1 + $0xbc] sm:$0xf]
  %v322 = vunpack.c.l.b16 %v18
  %v323 = vunpack.c.h.b16 %v18
  %v324 = vunpack.c.l.b16 %v19
  %v325 = vunpack.c.l.b16 %v20
  %v326 = vunpack.c.h.b16 %v20
  %v327 = vunpack.c.l.b16 %v21
  %v328 = vunpack.c.l.b16 %v22
  %v329 = vunpack.c.h.b16 %v22
  %v330 = vunpack.c.l.b16 %v23
  %v331 = vunpack.c.l.b16 %v24
  %v332 = vunpack.c.h.b16 %v24
  %v333 = vunpack.c.l.b16 %v25
  %v334 = vunpack.c.l.b16 %v26
  %v335 = vunpack.c.h.b16 %v26
  %v336 = vunpack.c.l.b16 %v27
  %v337 = vunpack.c.l.b16 %v28
  %v338 = vunpack.c.h.b16 %v28
  %v339 = vunpack.c.l.b16 %v29
  %v340 = vunpack.c.l.b16 %v30
  %v341 = vunpack.c.h.b16 %v30
  %v342 = vunpack.c.l.b16 %v31
  %v343 = vunpack.c.l.b16 %v32
  %v344 = vunpack.c.h.b16 %v32
  %v345 = vunpack.c.l.b16 %v33
  %v346 = vunpack.c.l.b16 %v34
  %v347 = vunpack.c.h.b16 %v34
  %v348 = vunpack.c.l.b16 %v35
  %v349 = vunpack.c.l.b16 %v36
  %v350 = vunpack.c.h.b16 %v36
  %v351 = vunpack.c.l.b16 %v37
  %v352 = vunpack.c.l.b16 %v38
  %v353 = vunpack.c.h.b16 %v38
  %v354 = vunpack.c.l.b16 %v39
  %v355 = vunpack.c.l.b16 %v40
  %v356 = vunpack.c.h.b16 %v40
  %v357 = vunpack.c.l.b16 %v41
  %v358 = vunpack.c.l.b16 %v42
  %v359 = vunpack.c.h.b16 %v42
  %v360 = vunpack.c.l.b16 %v43
  %v361 = vunpack.c.l.b16 %v44
  %v362 = vunpack.c.h.b16 %v44
  %v363 = vunpack.c.l.b16 %v45
  %v364 = vunpack.c.l.b16 %v46
  %v365 = vunpack.c.h.b16 %v46
  %v366 = vunpack.c.l.b16 %v47
  %v367 = vunpack.c.l.b16 %v48
  %v368 = vunpack.c.h.b16 %v48
  %v369 = vunpack.c.l.b16 %v49
  %v370 = vunpack.c.l.b16 %v50
  %v371 = vunpack.c.h.b16 %v50
  %v372 = vunpack.c.l.b16 %v51
  %v373 = vunpack.c.l.b16 %v52
  %v374 = vunpack.c.h.b16 %v52
  %v375 = vunpack.c.l.b16 %v53
  %v376 = vunpack.c.l.b16 %v54
  %v377 = vunpack.c.h.b16 %v54
  %v378 = vunpack.c.l.b16 %v55
  %v379 = vunpack.c.l.b16 %v56
  %v380 = vunpack.c.h.b16 %v56
  %v381 = vunpack.c.l.b16 %v57
  %v382 = vunpack.c.l.b16 %v58
  %v383 = vunpack.c.h.b16 %v58
  %v384 = vunpack.c.l.b16 %v59
  %v385 = vunpack.c.l.b16 %v60
  %v386 = vunpack.c.h.b16 %v60
  %v387 = vunpack.c.l.b16 %v61
  %v388 = vunpack.c.l.b16 %v62
  %v389 = vunpack.c.h.b16 %v62
  %v390 = vunpack.c.l.b16 %v63
  %v391 = vunpack.c.l.b16 %v64
  %v392 = vunpack.c.h.b16 %v64
  %v393 = vunpack.c.l.b16 %v65
  %v394 = vunpack.c.l.b16 %v66
  %v395 = vunpack.c.h.b16 %v66
  %v396 = vunpack.c.l.b16 %v67
  %v397 = vunpack.c.l.b16 %v68
  %v398 = vunpack.c.h.b16 %v68
  %v399 = vunpack.c.l.b16 %v69
  %v400 = vunpack.c.l.b16 %v70
  %v401 = vunpack.c.h.b16 %v70
  %v402 = vunpack.c.l.b16 %v71
  %v403 = vunpack.c.l.b16 %v72
  %v404 = vunpack.c.h.b16 %v72
  %v405 = vunpack.c.l.b16 %v73
  %v406 = vunpack.c.l.b16 %v74
  %v407 = vunpack.c.h.b16 %v74
  %v408 = vunpack.c.l.b16 %v75
  %v409 = vunpack.c.l.b16 %v76
  %v410 = vunpack.c.h.b16 %v76
  %v411 = vunpack.c.l.b16 %v77
  %v412 = vunpack.c.l.b16 %v78
  %v413 = vunpack.c.h.b16 %v78
  %v414 = vunpack.c.l.b16 %v79
  %v415 = vunpack.c.l.b16 %v80
  %v416 = vunpack.c.h.b16 %v80
  %v417 = vunpack.c.l.b16 %v81
  %v418 = vunpack.c.l.b16 %v82
  %v419 = vunpack.c.h.b16 %v82
  %v420 = vunpack.c.l.b16 %v83
  %v421 = vunpack.c.l.b16 %v84
  %v422 = vunpack.c.h.b16 %v84
  %v423 = vunpack.c.l.b16 %v85
  %v424 = vunpack.c.l.b16 %v86
  %v425 = vunpack.c.h.b16 %v86
  %v426 = vunpack.c.l.b16 %v87
  %v427 = vunpack.c.l.b16 %v88
  %v428 = vunpack.c.h.b16 %v88
  %v429 = vunpack.c.l.b16 %v89
  %v430 = vunpack.c.l.b16 %v90
  %v431 = vunpack.c.h.b16 %v90
  %v432 = vunpack.c.l.b16 %v91
  %v433 = vunpack.c.l.b16 %v92
  %v434 = vunpack.c.h.b16 %v92
  %v435 = vunpack.c.l.b16 %v93
  %v436 = vunpack.c.l.b16 %v94
  %v437 = vunpack.c.h.b16 %v94
  %v438 = vunpack.c.l.b16 %v95
  %v439 = vunpack.c.l.b16 %v96
  %v440 = vunpack.c.h.b16 %v96
  %v441 = vunpack.c.l.b16 %v97
  %v442 = vunpack.c.l.b16 %v98
  %v443 = vunpack.c.h.b16 %v98
  %v444 = vunpack.c.l.b16 %v99
  %v445 = vunpack.c.l.b16 %v100
  %v446 = vunpack.c.h.b16 %v100
  %v447 = vunpack.c.l.b16 %v101
  %v448 = vunpack.c.l.b16 %v102
  %v449 = vunpack.c.h.b16 %v102
  %v450 = vunpack.c.l.b16 %v103
  %v451 = vunpack.c.l.b16 %v104
  %v452 = vunpack.c.h.b16 %v104
  %v453 = vunpack.c.l.b16 %v105
  %v454 = vunpack.c.l.b16 %v106
  %v455 = vunpack.c.h.b16 %v106
  %v456 = vunpack.c.l.b16 %v107
  %v457 = vunpack.c.l.b16 %v108
  %v458 = vunpack.c.h.b16 %v108
  %v459 = vunpack.c.l.b16 %v109
  %v460 = vunpack.c.l.b16 %v110
  %v461 = vunpack.c.h.b16 %v110
  %v462 = vunpack.c.l.b16 %v111
  %v463 = vunpack.c.l.b16 %v112
  %v464 = vunpack.c.h.b16 %v112
  %v465 = vunpack.c.l.b16 %v113
  %v466 = vunpack.c.l.b16 %v114
  %v467 = vunpack.c.h.b16 %v114
  %v468 = vunpack.c.l.b16 %v115
  %v469 = vunpack.c.l.b16 %v116
  %v470 = vunpack.c.h.b16 %v116
  %v471 = vunpack.c.l.b16 %v117
  %v472 = vunpack.c.l.b16 %v118
  %v473 = vunpack.c.h.b16 %v118
  %v474 = vunpack.c.l.b16 %v119
  %v475 = vunpack.c.l.b16 %v120
  %v476 = vunpack.c.h.b16 %v120
  %v477 = vunpack.c.l.b16 %v121
  %v478 = vunpack.c.l.b16 %v122
  %v479 = vunpack.c.h.b16 %v122
  %v480 = vunpack.c.l.b16 %v123
  %v481 = vunpack.c.l.b16 %v124
  %v482 = vunpack.c.h.b16 %v124
  %v483 = vunpack.c.l.b16 %v125
  %v484 = vunpack.c.l.b16 %v126
  %v485 = vunpack.c.h.b16 %v126
  %v486 = vunpack.c.l.b16 %v127
  %v487 = vunpack.c.l.b16 %v128
  %v488 = vunpack.c.h.b16 %v128
  %v489 = vunpack.c.l.b16 %v129
  %v490 = vunpack.c.l.b16 %v130
  %v491 = vunpack.c.h.b16 %v130
  %v492 = vunpack.c.l.b16 %v131
  %v493 = vunpack.c.l.b16 %v132
  %v494 = vunpack.c.h.b16 %v132
  %v495 = vunpack.c.l.b16 %v133
  %v496 = vunpack.c.l.b16 %v134
  %v497 = vunpack.c.h.b16 %v134
  %v498 = vunpack.c.l.b16 %v135
  %v499 = vunpack.c.l.b16 %v136
  %v500 = vunpack.c.h.b16 %v136
  %v501 = vunpack.c.l.b16 %v137
  %v502 = vunpack.c.l.b16 %v138
  %v503 = vunpack.c.h.b16 %v138
  %v504 = vunpack.c.l.b16 %v139
  %v505 = vunpack.c.l.b16 %v140
  %v506 = vunpack.c.h.b16 %v140
  %v507 = vunpack.c.l.b16 %v141
  %v508 = vunpack.c.l.b16 %v142
  %v509 = vunpack.c.h.b16 %v142
  %v510 = vunpack.c.l.b16 %v143
  %v511 = vunpack.c.l.b16 %v144
  %v512 = vunpack.c.h.b16 %v144
  %v513 = vunpack.c.l.b16 %v145
  %v514 = vpack.c.b16 %v325, %v322
  %v515 = vpack.c.b16 %v326, %v323
  %v516 = vpack.c.b16 %v327, %v324
  %v517 = vpack.c.b16 %v331, %v328
  %v518 = vpack.c.b16 %v332, %v329
  %v519 = vpack.c.b16 %v333, %v330
  %v520 = vpack.c.b16 %v337, %v334
  %v521 = vpack.c.b16 %v338, %v335
  %v522 = vpack.c.b16 %v339, %v336
  %v523 = vpack.c.b16 %v343, %v340
  %v524 = vpack.c.b16 %v344, %v341
  %v525 = vpack.c.b16 %v345, %v342
  %v526 = vpack.c.b16 %v349, %v346
  %v527 = vpack.c.b16 %v350, %v347
  %v528 = vpack.c.b16 %v351, %v348
  %v529 = vpack.c.b16 %v355, %v352
  %v530 = vpack.c.b16 %v356, %v353
  %v531 = vpack.c.b16 %v357, %v354
  %v532 = vpack.c.b16 %v361, %v358
  %v533 = vpack.c.b16 %v362, %v359
  %v534 = vpack.c.b16 %v363, %v360
  %v535 = vpack.c.b16 %v367, %v364
  %v536 = vpack.c.b16 %v368, %v365
  %v537 = vpack.c.b16 %v369, %v366
  %v538 = vpack.c.b16 %v373, %v370
  %v539 = vpack.c.b16 %v374, %v371
  %v540 = vpack.c.b16 %v375, %v372
  %v541 = vpack.c.b16 %v379, %v376
  %v542 = vpack.c.b16 %v380, %v377
  %v543 = vpack.c.b16 %v381, %v378
  %v544 = vpack.c.b16 %v385, %v382
  %v545 = vpack.c.b16 %v386, %v383
  %v546 = vpack.c.b16 %v387, %v384
  %v547 = vpack.c.b16 %v391, %v388
  %v548 = vpack.c.b16 %v392, %v389
  %v549 = vpack.c.b16 %v393, %v390
  %v550 = vpack.c.b16 %v397, %v394
  %v551 = vpack.c.b16 %v398, %v395
  %v552 = vpack.c.b16 %v399, %v396
  %v553 = vpack.c.b16 %v403, %v400
  %v554 = vpack.c.b16 %v404, %v401
  %v555 = vpack.c.b16 %v405, %v402
  %v556 = vpack.c.b16 %v409, %v406
  %v557 = vpack.c.b16 %v410, %v407
  %v558 = vpack.c.b16 %v411, %v408
  %v559 = vpack.c.b16 %v415, %v412
  %v560 = vpack.c.b16 %v416, %v413
  %v561 = vpack.c.b16 %v417, %v414
  %v562 = vpack.c.b16 %v421, %v418
  %v563 = vpack.c.b16 %v422, %v419
  %v564 = vpack.c.b16 %v423, %v420
  %v565 = vpack.c.b16 %v427, %v424
  %v566 = vpack.c.b16 %v428, %v425
  %v567 = vpack.c.b16 %v429, %v426
  %v568 = vpack.c.b16 %v433, %v430
  %v569 = vpack.c.b16 %v434, %v431
  %v570 = vpack.c.b16 %v435, %v432
  %v571 = vpack.c.b16 %v439, %v436
  %v572 = vpack.c.b16 %v440, %v437
  %v573 = vpack.c.b16 %v441, %v438
  %v574 = vpack.c.b16 %v445, %v442
  %v575 = vpack.c.b16 %v446, %v443
  %v576 = vpack.c.b16 %v447, %v444
  %v577 = vpack.c.b16 %v451, %v448
  %v578 = vpack.c.b16 %v452, %v449
  %v579 = vpack.c.b16 %v453, %v450
  %v580 = vpack.c.b16 %v457, %v454
  %v581 = vpack.c.b16 %v458, %v455
  %v582 = vpack.c.b16 %v459, %v456
  %v583 = vpack.c.b16 %v463, %v460
  %v584 = vpack.c.b16 %v464, %v461
  %v585 = vpack.c.b16 %v465, %v462
  %v586 = vpack.c.b16 %v469, %v466
  %v587 = vpack.c.b16 %v470, %v467
  %v588 = vpack.c.b16 %v471, %v468
  %v589 = vpack.c.b16 %v475, %v472
  %v590 = vpack.c.b16 %v476, %v473
  %v591 = vpack.c.b16 %v477, %v474
  %v592 = vpack.c.b16 %v481, %v478
  %v593 = vpack.c.b16 %v482, %v479
  %v594 = vpack.c.b16 %v483, %v480
  %v595 = vpack.c.b16 %v487, %v484
  %v596 = vpack.c.b16 %v488, %v485
  %v597 = vpack.c.b16 %v489, %v486
  %v598 = vpack.c.b16 %v493, %v490
  %v599 = vpack.c.b16 %v494, %v491
  %v600 = vpack.c.b16 %v495, %v492
  %v601 = vpack.c.b16 %v499, %v496
  %v602 = vpack.c.b16 %v500, %v497
  %v603 = vpack.c.b16 %v501, %v498
  %v604 = vpack.c.b16 %v505, %v502
  %v605 = vpack.c.b16 %v506, %v503
  %v606 = vpack.c.b16 %v507, %v504
  %v607 = vpack.c.b16 %v511, %v508
  %v608 = vpack.c.b16 %v512, %v509
  %v609 = vpack.c.b16 %v513, %v510
  %v754 = vunpack.c.l.b16 %v146
  %v755 = vunpack.c.l.b16 %v147
  %v756 = vunpack.c.l.b16 %v148
  %v757 = vunpack.c.l.b16 %v149
  %v758 = vunpack.c.l.b16 %v150
  %v759 = vunpack.c.l.b16 %v151
  %v760 = vunpack.c.l.b16 %v152
  %v761 = vunpack.c.l.b16 %v153
  %v762 = vunpack.c.l.b16 %v154
  %v763 = vunpack.c.l.b16 %v155
  %v764 = vunpack.c.l.b16 %v156
  %v765 = vunpack.c.l.b16 %v157
  %v766 = vunpack.c.l.b16 %v158
  %v767 = vunpack.c.l.b16 %v159
  %v768 = vunpack.c.l.b16 %v160
  %v769 = vunpack.c.l.b16 %v161
  %v770 = vunpack.c.l.b16 %v162
  %v771 = vunpack.c.l.b16 %v163
  %v772 = vunpack.c.l.b16 %v164
  %v773 = vunpack.c.l.b16 %v165
  %v774 = vunpack.c.l.b16 %v166
  %v775 = vunpack.c.l.b16 %v167
  %v776 = vunpack.c.l.b16 %v168
  %v777 = vunpack.c.l.b16 %v169
  %v778 = vunpack.c.l.b16 %v170
  %v779 = vunpack.c.l.b16 %v171
  %v780 = vunpack.c.l.b16 %v172
  %v781 = vunpack.c.l.b16 %v173
  %v782 = vunpack.c.l.b16 %v174
  %v783 = vunpack.c.l.b16 %v175
  %v784 = vunpack.c.l.b16 %v176
  %v785 = vunpack.c.l.b16 %v177
  %v786 = vunpack.c.l.b16 %v178
  %v787 = vunpack.c.l.b16 %v179
  %v788 = vunpack.c.l.b16 %v180
  %v789 = vunpack.c.l.b16 %v181
  %v790 = vunpack.c.l.b16 %v182
  %v791 = vunpack.c.l.b16 %v183
  %v792 = vunpack.c.l.b16 %v184
  %v793 = vunpack.c.l.b16 %v185
  %v794 = vunpack.c.l.b16 %v186
  %v795 = vunpack.c.l.b16 %v187
  %v796 = vunpack.c.l.b16 %v188
  %v797 = vunpack.c.l.b16 %v189
  %v798 = vunpack.c.l.b16 %v190
  %v799 = vunpack.c.l.b16 %v191
  %v800 = vunpack.c.l.b16 %v192
  %v801 = vunpack.c.l.b16 %v193
  %v802 = vpack.c.b16 %v755, %v754
  %v803 = vpack.c.b16 %v757, %v756
  %v804 = vpack.c.b16 %v759, %v758
  %v805 = vpack.c.b16 %v761, %v760
  %v806 = vpack.c.b16 %v763, %v762
  %v807 = vpack.c.b16 %v765, %v764
  %v808 = vpack.c.b16 %v767, %v766
  %v809 = vpack.c.b16 %v769, %v768
  %v810 = vpack.c.b16 %v771, %v770
  %v811 = vpack.c.b16 %v773, %v772
  %v812 = vpack.c.b16 %v775, %v774
  %v813 = vpack.c.b16 %v777, %v776
  %v814 = vpack.c.b16 %v779, %v778
  %v815 = vpack.c.b16 %v781, %v780
  %v816 = vpack.c.b16 %v783, %v782
  %v817 = vpack.c.b16 %v785, %v784
  %v818 = vpack.c.b16 %v787, %v786
  %v819 = vpack.c.b16 %v789, %v788
  %v820 = vpack.c.b16 %v791, %v790
  %v821 = vpack.c.b16 %v793, %v792
  %v822 = vpack.c.b16 %v795, %v794
  %v823 = vpack.c.b16 %v797, %v796
  %v824 = vpack.c.b16 %v799, %v798
  %v825 = vpack.c.b16 %v801, %v800
  %850 = vmatprep.subr.bf16.mxu0 0
  %851 = vmatpush1.bf16.msra.mxu0 %v802
  %852 = vmatprep.subr.bf16.mxu0 0
  %853 = vmatpush1.bf16.msra.mxu0 %v803
  %854 = vmatprep.subr.bf16.mxu0 0
  %855 = vmatpush1.bf16.msra.mxu0 %v804
  %856 = vmatprep.subr.bf16.mxu0 0
  %857 = vmatpush1.bf16.msra.mxu0 %v805
  %858 = vmatprep.subr.bf16.mxu0 0
  %859 = vmatpush1.bf16.msra.mxu0 %v806
  %860 = vmatprep.subr.bf16.mxu0 0
  %861 = vmatpush1.bf16.msra.mxu0 %v807
  %862 = vmatprep.subr.bf16.mxu0 0
  %863 = vmatpush1.bf16.msra.mxu0 %v808
  %864 = vmatprep.subr.bf16.mxu0 0
  %865 = vmatpush1.bf16.msra.mxu0 %v809
  %866 = vmatprep.subr.bf16.mxu0 0
  %867 = vmatpush1.bf16.msra.mxu0 %v810
  %868 = vmatprep.subr.bf16.mxu0 0
  %869 = vmatpush1.bf16.msra.mxu0 %v811
  %870 = vmatprep.subr.bf16.mxu0 0
  %871 = vmatpush1.bf16.msra.mxu0 %v812
  %872 = vmatprep.subr.bf16.mxu0 0
  %873 = vmatpush1.bf16.msra.mxu0 %v813
  %874 = vmatprep.subr.bf16.mxu0 0
  %875 = vmatpush1.bf16.msra.mxu0 %v814
  %876 = vmatprep.subr.bf16.mxu0 0
  %877 = vmatpush1.bf16.msra.mxu0 %v815
  %878 = vmatprep.subr.bf16.mxu0 0
  %879 = vmatpush1.bf16.msra.mxu0 %v816
  %880 = vmatprep.subr.bf16.mxu0 0
  %881 = vmatpush1.bf16.msra.mxu0 %v817
  %882 = vmatprep.mubr.bf16.mxu0 %v515
  %883 = vmatmul.mubr.bf16.gmra.mrb[0].mxu0 %v514
  %v884 = vpop.f32.mrb[0].mxu0
  %v885 = vadd.f32 0.0, %v884
  %v886 = vpop.f32.mrb[0].mxu0
  %v887 = vpop.f32.mrb[0].mxu0
  %v888 = vadd.f32 0.0, %v887
  %v889 = vpop.f32.mrb[0].mxu0
  %890 = vmatprep.mubr.bf16.mxu0 %v518
  %891 = vmatmul.mubr.bf16.gmra.mrb[0].mxu0 %v517
  %v892 = vpop.f32.mrb[0].mxu0
  %v893 = vadd.f32 0.0, %v892
  %v894 = vpop.f32.mrb[0].mxu0
  %v895 = vpop.f32.mrb[0].mxu0
  %v896 = vadd.f32 0.0, %v895
  %v897 = vpop.f32.mrb[0].mxu0
  %898 = vmatprep.mubr.bf16.mxu0 %v521
  %899 = vmatmul.mubr.bf16.gmra.mrb[0].mxu0 %v520
  %v900 = vpop.f32.mrb[0].mxu0
  %v901 = vadd.f32 0.0, %v900
  %v902 = vpop.f32.mrb[0].mxu0
  %v903 = vpop.f32.mrb[0].mxu0
  %v904 = vadd.f32 0.0, %v903
  %v905 = vpop.f32.mrb[0].mxu0
  %906 = vmatprep.mubr.bf16.mxu0 %v524
  %907 = vmatmul.mubr.bf16.gmra.mrb[0].mxu0 %v523
  %v908 = vpop.f32.mrb[0].mxu0
  %v909 = vadd.f32 0.0, %v908
  %v910 = vpop.f32.mrb[0].mxu0
  %v911 = vpop.f32.mrb[0].mxu0
  %v912 = vadd.f32 0.0, %v911
  %v913 = vpop.f32.mrb[0].mxu0
  %914 = vmatprep.mubr.bf16.mxu0 %v527
  %915 = vmatmul.mubr.bf16.gmra.mrb[0].mxu0 %v526
  %v916 = vpop.f32.mrb[0].mxu0
  %v917 = vadd.f32 0.0, %v916
  %v918 = vpop.f32.mrb[0].mxu0
  %v919 = vpop.f32.mrb[0].mxu0
  %v920 = vadd.f32 0.0, %v919
  %v921 = vpop.f32.mrb[0].mxu0
  %922 = vmatprep.mubr.bf16.mxu0 %v530
  %923 = vmatmul.mubr.bf16.gmra.mrb[0].mxu0 %v529
  %v924 = vpop.f32.mrb[0].mxu0
  %v925 = vadd.f32 0.0, %v924
  %v926 = vpop.f32.mrb[0].mxu0
  %v927 = vpop.f32.mrb[0].mxu0
  %v928 = vadd.f32 0.0, %v927
  %v929 = vpop.f32.mrb[0].mxu0
  %930 = vmatprep.mubr.bf16.mxu0 %v533
  %931 = vmatmul.mubr.bf16.gmra.mrb[0].mxu0 %v532
  %v932 = vpop.f32.mrb[0].mxu0
  %v933 = vadd.f32 0.0, %v932
  %v934 = vpop.f32.mrb[0].mxu0
  %v935 = vpop.f32.mrb[0].mxu0
  %v936 = vadd.f32 0.0, %v935
  %v937 = vpop.f32.mrb[0].mxu0
  %938 = vmatprep.mubr.bf16.mxu0 %v536
  %939 = vmatmul.mubr.bf16.gmra.mrb[0].mxu0 %v535
  %v940 = vpop.f32.mrb[0].mxu0
  %v941 = vadd.f32 0.0, %v940
  %v942 = vpop.f32.mrb[0].mxu0
  %v943 = vpop.f32.mrb[0].mxu0
  %v944 = vadd.f32 0.0, %v943
  %v945 = vpop.f32.mrb[0].mxu0
  %946 = vmatprep.mubr.bf16.mxu0 %v539
  %947 = vmatmul.mubr.bf16.gmra.mrb[0].mxu0 %v538
  %v948 = vpop.f32.mrb[0].mxu0
  %v949 = vadd.f32 0.0, %v948
  %v950 = vpop.f32.mrb[0].mxu0
  %v951 = vpop.f32.mrb[0].mxu0
  %v952 = vadd.f32 0.0, %v951
  %v953 = vpop.f32.mrb[0].mxu0
  %954 = vmatprep.mubr.bf16.mxu0 %v542
  %955 = vmatmul.mubr.bf16.gmra.mrb[0].mxu0 %v541
  %v956 = vpop.f32.mrb[0].mxu0
  %v957 = vadd.f32 0.0, %v956
  %v958 = vpop.f32.mrb[0].mxu0
  %v959 = vpop.f32.mrb[0].mxu0
  %v960 = vadd.f32 0.0, %v959
  %v961 = vpop.f32.mrb[0].mxu0
  %962 = vmatprep.mubr.bf16.mxu0 %v545
  %963 = vmatmul.mubr.bf16.gmra.mrb[0].mxu0 %v544
  %v964 = vpop.f32.mrb[0].mxu0
  %v965 = vadd.f32 0.0, %v964
  %v966 = vpop.f32.mrb[0].mxu0
  %v967 = vpop.f32.mrb[0].mxu0
  %v968 = vadd.f32 0.0, %v967
  %v969 = vpop.f32.mrb[0].mxu0
  %970 = vmatprep.mubr.bf16.mxu0 %v548
  %971 = vmatmul.mubr.bf16.gmra.mrb[0].mxu0 %v547
  %v972 = vpop.f32.mrb[0].mxu0
  %v973 = vadd.f32 0.0, %v972
  %v974 = vpop.f32.mrb[0].mxu0
  %v975 = vpop.f32.mrb[0].mxu0
  %v976 = vadd.f32 0.0, %v975
  %v977 = vpop.f32.mrb[0].mxu0
  %978 = vmatprep.mubr.bf16.mxu0 %v551
  %979 = vmatmul.mubr.bf16.gmra.mrb[0].mxu0 %v550
  %v980 = vpop.f32.mrb[0].mxu0
  %v981 = vadd.f32 0.0, %v980
  %v982 = vpop.f32.mrb[0].mxu0
  %v983 = vpop.f32.mrb[0].mxu0
  %v984 = vadd.f32 0.0, %v983
  %v985 = vpop.f32.mrb[0].mxu0
  %986 = vmatprep.mubr.bf16.mxu0 %v554
  %987 = vmatmul.mubr.bf16.gmra.mrb[0].mxu0 %v553
  %v988 = vpop.f32.mrb[0].mxu0
  %v989 = vadd.f32 0.0, %v988
  %v990 = vpop.f32.mrb[0].mxu0
  %v991 = vpop.f32.mrb[0].mxu0
  %v992 = vadd.f32 0.0, %v991
  %v993 = vpop.f32.mrb[0].mxu0
  %994 = vmatprep.mubr.bf16.mxu0 %v557
  %995 = vmatmul.mubr.bf16.gmra.mrb[0].mxu0 %v556
  %v996 = vpop.f32.mrb[0].mxu0
  %v997 = vadd.f32 0.0, %v996
  %v998 = vpop.f32.mrb[0].mxu0
  %v999 = vpop.f32.mrb[0].mxu0
  %v1000 = vadd.f32 0.0, %v999
  %v1001 = vpop.f32.mrb[0].mxu0
  %1002 = vmatprep.mubr.bf16.mxu0 %v560
  %1003 = vmatmul.mubr.bf16.gmra.mrb[0].mxu0 %v559
  %v1004 = vpop.f32.mrb[0].mxu0
  %v1005 = vadd.f32 0.0, %v1004
  %v1006 = vpop.f32.mrb[0].mxu0
  %v1007 = vpop.f32.mrb[0].mxu0
  %v1008 = vadd.f32 0.0, %v1007
  %v1009 = vpop.f32.mrb[0].mxu0
  %1010 = vmatprep.mubr.bf16.mxu0 %v563
  %1011 = vmatmul.mubr.bf16.gmra.mrb[0].mxu0 %v562
  %v1012 = vpop.f32.mrb[0].mxu0
  %v1013 = vadd.f32 0.0, %v1012
  %v1014 = vpop.f32.mrb[0].mxu0
  %v1015 = vpop.f32.mrb[0].mxu0
  %v1016 = vadd.f32 0.0, %v1015
  %v1017 = vpop.f32.mrb[0].mxu0
  %1018 = vmatprep.mubr.bf16.mxu0 %v566
  %1019 = vmatmul.mubr.bf16.gmra.mrb[0].mxu0 %v565
  %v1020 = vpop.f32.mrb[0].mxu0
  %v1021 = vadd.f32 0.0, %v1020
  %v1022 = vpop.f32.mrb[0].mxu0
  %v1023 = vpop.f32.mrb[0].mxu0
  %v1024 = vadd.f32 0.0, %v1023
  %v1025 = vpop.f32.mrb[0].mxu0
  %1026 = vmatprep.mubr.bf16.mxu0 %v569
  %1027 = vmatmul.mubr.bf16.gmra.mrb[0].mxu0 %v568
  %v1028 = vpop.f32.mrb[0].mxu0
  %v1029 = vadd.f32 0.0, %v1028
  %v1030 = vpop.f32.mrb[0].mxu0
  %v1031 = vpop.f32.mrb[0].mxu0
  %v1032 = vadd.f32 0.0, %v1031
  %v1033 = vpop.f32.mrb[0].mxu0
  %1034 = vmatprep.mubr.bf16.mxu0 %v572
  %1035 = vmatmul.mubr.bf16.gmra.mrb[0].mxu0 %v571
  %v1036 = vpop.f32.mrb[0].mxu0
  %v1037 = vadd.f32 0.0, %v1036
  %v1038 = vpop.f32.mrb[0].mxu0
  %v1039 = vpop.f32.mrb[0].mxu0
  %v1040 = vadd.f32 0.0, %v1039
  %v1041 = vpop.f32.mrb[0].mxu0
  %1042 = vmatprep.mubr.bf16.mxu0 %v575
  %1043 = vmatmul.mubr.bf16.gmra.mrb[0].mxu0 %v574
  %v1044 = vpop.f32.mrb[0].mxu0
  %v1045 = vadd.f32 0.0, %v1044
  %v1046 = vpop.f32.mrb[0].mxu0
  %v1047 = vpop.f32.mrb[0].mxu0
  %v1048 = vadd.f32 0.0, %v1047
  %v1049 = vpop.f32.mrb[0].mxu0
  %1050 = vmatprep.mubr.bf16.mxu0 %v578
  %1051 = vmatmul.mubr.bf16.gmra.mrb[0].mxu0 %v577
  %v1052 = vpop.f32.mrb[0].mxu0
  %v1053 = vadd.f32 0.0, %v1052
  %v1054 = vpop.f32.mrb[0].mxu0
  %v1055 = vpop.f32.mrb[0].mxu0
  %v1056 = vadd.f32 0.0, %v1055
  %v1057 = vpop.f32.mrb[0].mxu0
  %1058 = vmatprep.mubr.bf16.mxu0 %v581
  %1059 = vmatmul.mubr.bf16.gmra.mrb[0].mxu0 %v580
  %v1060 = vpop.f32.mrb[0].mxu0
  %v1061 = vadd.f32 0.0, %v1060
  %v1062 = vpop.f32.mrb[0].mxu0
  %v1063 = vpop.f32.mrb[0].mxu0
  %v1064 = vadd.f32 0.0, %v1063
  %v1065 = vpop.f32.mrb[0].mxu0
  %1066 = vmatprep.mubr.bf16.mxu0 %v584
  %1067 = vmatmul.mubr.bf16.gmra.mrb[0].mxu0 %v583
  %v1068 = vpop.f32.mrb[0].mxu0
  %v1069 = vadd.f32 0.0, %v1068
  %v1070 = vpop.f32.mrb[0].mxu0
  %v1071 = vpop.f32.mrb[0].mxu0
  %v1072 = vadd.f32 0.0, %v1071
  %v1073 = vpop.f32.mrb[0].mxu0
  %1074 = vmatprep.mubr.bf16.mxu0 %v587
  %1075 = vmatmul.mubr.bf16.gmra.mrb[0].mxu0 %v586
  %v1076 = vpop.f32.mrb[0].mxu0
  %v1077 = vadd.f32 0.0, %v1076
  %v1078 = vpop.f32.mrb[0].mxu0
  %v1079 = vpop.f32.mrb[0].mxu0
  %v1080 = vadd.f32 0.0, %v1079
  %v1081 = vpop.f32.mrb[0].mxu0
  %1082 = vmatprep.mubr.bf16.mxu0 %v590
  %1083 = vmatmul.mubr.bf16.gmra.mrb[0].mxu0 %v589
  %v1084 = vpop.f32.mrb[0].mxu0
  %v1085 = vadd.f32 0.0, %v1084
  %v1086 = vpop.f32.mrb[0].mxu0
  %v1087 = vpop.f32.mrb[0].mxu0
  %v1088 = vadd.f32 0.0, %v1087
  %v1089 = vpop.f32.mrb[0].mxu0
  %1090 = vmatprep.mubr.bf16.mxu0 %v593
  %1091 = vmatmul.mubr.bf16.gmra.mrb[0].mxu0 %v592
  %v1092 = vpop.f32.mrb[0].mxu0
  %v1093 = vadd.f32 0.0, %v1092
  %v1094 = vpop.f32.mrb[0].mxu0
  %v1095 = vpop.f32.mrb[0].mxu0
  %v1096 = vadd.f32 0.0, %v1095
  %v1097 = vpop.f32.mrb[0].mxu0
  %1098 = vmatprep.mubr.bf16.mxu0 %v596
  %1099 = vmatmul.mubr.bf16.gmra.mrb[0].mxu0 %v595
  %v1100 = vpop.f32.mrb[0].mxu0
  %v1101 = vadd.f32 0.0, %v1100
  %v1102 = vpop.f32.mrb[0].mxu0
  %v1103 = vpop.f32.mrb[0].mxu0
  %v1104 = vadd.f32 0.0, %v1103
  %v1105 = vpop.f32.mrb[0].mxu0
  %1106 = vmatprep.mubr.bf16.mxu0 %v599
  %1107 = vmatmul.mubr.bf16.gmra.mrb[0].mxu0 %v598
  %v1108 = vpop.f32.mrb[0].mxu0
  %v1109 = vadd.f32 0.0, %v1108
  %v1110 = vpop.f32.mrb[0].mxu0
  %v1111 = vpop.f32.mrb[0].mxu0
  %v1112 = vadd.f32 0.0, %v1111
  %v1113 = vpop.f32.mrb[0].mxu0
  %1114 = vmatprep.mubr.bf16.mxu0 %v602
  %1115 = vmatmul.mubr.bf16.gmra.mrb[0].mxu0 %v601
  %v1116 = vpop.f32.mrb[0].mxu0
  %v1117 = vadd.f32 0.0, %v1116
  %v1118 = vpop.f32.mrb[0].mxu0
  %v1119 = vpop.f32.mrb[0].mxu0
  %v1120 = vadd.f32 0.0, %v1119
  %v1121 = vpop.f32.mrb[0].mxu0
  %1122 = vmatprep.mubr.bf16.mxu0 %v605
  %1123 = vmatmul.mubr.bf16.gmra.mrb[0].mxu0 %v604
  %v1124 = vpop.f32.mrb[0].mxu0
  %v1125 = vadd.f32 0.0, %v1124
  %v1126 = vpop.f32.mrb[0].mxu0
  %v1127 = vpop.f32.mrb[0].mxu0
  %v1128 = vadd.f32 0.0, %v1127
  %v1129 = vpop.f32.mrb[0].mxu0
  %1130 = vmatprep.mubr.bf16.mxu0 %v608
  %1131 = vmatmul.mubr.bf16.gmra.mrb[0].mxu0 %v607
  %v1132 = vpop.f32.mrb[0].mxu0
  %v1133 = vadd.f32 0.0, %v1132
  %v1134 = vpop.f32.mrb[0].mxu0
  %v1135 = vpop.f32.mrb[0].mxu0
  %v1136 = vadd.f32 0.0, %v1135
  %v1137 = vpop.f32.mrb[0].mxu0
  %1138 = vdwg.mxu0
  %1139 = vmatprep.subr.bf16.mxu0 0
  %1140 = vmatpush1.bf16.msra.mxu0 %v818
  %1141 = vmatprep.subr.bf16.mxu0 0
  %1142 = vmatpush1.bf16.msra.mxu0 %v819
  %1143 = vmatprep.subr.bf16.mxu0 0
  %1144 = vmatpush1.bf16.msra.mxu0 %v820
  %1145 = vmatprep.subr.bf16.mxu0 0
  %1146 = vmatpush1.bf16.msra.mxu0 %v821
  %1147 = vmatprep.subr.bf16.mxu0 0
  %1148 = vmatpush1.bf16.msra.mxu0 %v822
  %1149 = vmatprep.subr.bf16.mxu0 0
  %1150 = vmatpush1.bf16.msra.mxu0 %v823
  %1151 = vmatprep.subr.bf16.mxu0 0
  %1152 = vmatpush1.bf16.msra.mxu0 %v824
  %1153 = vmatprep.subr.bf16.mxu0 0
  %1154 = vmatpush1.bf16.msra.mxu0 %v825
  %1155 = vmatprep.subr.bf16.mxu0 0
  %1156 = vmatpush1.bf16.msra.mxu0 0
  %1157 = vmatprep.subr.bf16.mxu0 0
  %1158 = vmatpush1.bf16.msra.mxu0 0
  %1159 = vmatprep.subr.bf16.mxu0 0
  %1160 = vmatpush1.bf16.msra.mxu0 0
  %1161 = vmatprep.subr.bf16.mxu0 0
  %1162 = vmatpush1.bf16.msra.mxu0 0
  %1163 = vmatprep.subr.bf16.mxu0 0
  %1164 = vmatpush1.bf16.msra.mxu0 0
  %1165 = vmatprep.subr.bf16.mxu0 0
  %1166 = vmatpush1.bf16.msra.mxu0 0
  %1167 = vmatprep.subr.bf16.mxu0 0
  %1168 = vmatpush1.bf16.msra.mxu0 0
  %1169 = vmatprep.subr.bf16.mxu0 0
  %1170 = vmatpush1.bf16.msra.mxu0 0
  %1171 = vmatprep.mubr.bf16.mxu0 0
  %1172 = vmatmul.mubr.bf16.gmra.mrb[0].mxu0 %v516
  %v1173 = vpop.f32.mrb[0].mxu0
  %v1174 = vadd.f32 %v885, %v1173
  %v1175 = vpop.f32.mrb[0].mxu0
  %v1176 = vpop.f32.mrb[0].mxu0
  %v1177 = vadd.f32 %v888, %v1176
  %v1178 = vpop.f32.mrb[0].mxu0
  %1179 = vmatprep.mubr.bf16.mxu0 0
  %1180 = vmatmul.mubr.bf16.gmra.mrb[0].mxu0 %v519
  %v1181 = vpop.f32.mrb[0].mxu0
  %v1182 = vadd.f32 %v893, %v1181
  %v1183 = vpop.f32.mrb[0].mxu0
  %v1184 = vpop.f32.mrb[0].mxu0
  %v1185 = vadd.f32 %v896, %v1184
  %v1186 = vpop.f32.mrb[0].mxu0
  %1187 = vmatprep.mubr.bf16.mxu0 0
  %1188 = vmatmul.mubr.bf16.gmra.mrb[0].mxu0 %v522
  %v1189 = vpop.f32.mrb[0].mxu0
  %v1190 = vadd.f32 %v901, %v1189
  %v1191 = vpop.f32.mrb[0].mxu0
  %v1192 = vpop.f32.mrb[0].mxu0
  %v1193 = vadd.f32 %v904, %v1192
  %v1194 = vpop.f32.mrb[0].mxu0
  %1195 = vmatprep.mubr.bf16.mxu0 0
  %1196 = vmatmul.mubr.bf16.gmra.mrb[0].mxu0 %v525
  %v1197 = vpop.f32.mrb[0].mxu0
  %v1198 = vadd.f32 %v909, %v1197
  %v1199 = vpop.f32.mrb[0].mxu0
  %v1200 = vpop.f32.mrb[0].mxu0
  %v1201 = vadd.f32 %v912, %v1200
  %v1202 = vpop.f32.mrb[0].mxu0
  %1203 = vmatprep.mubr.bf16.mxu0 0
  %1204 = vmatmul.mubr.bf16.gmra.mrb[0].mxu0 %v528
  %v1205 = vpop.f32.mrb[0].mxu0
  %v1206 = vadd.f32 %v917, %v1205
  %v1207 = vpop.f32.mrb[0].mxu0
  %v1208 = vpop.f32.mrb[0].mxu0
  %v1209 = vadd.f32 %v920, %v1208
  %v1210 = vpop.f32.mrb[0].mxu0
  %1211 = vmatprep.mubr.bf16.mxu0 0
  %1212 = vmatmul.mubr.bf16.gmra.mrb[0].mxu0 %v531
  %v1213 = vpop.f32.mrb[0].mxu0
  %v1214 = vadd.f32 %v925, %v1213
  %v1215 = vpop.f32.mrb[0].mxu0
  %v1216 = vpop.f32.mrb[0].mxu0
  %v1217 = vadd.f32 %v928, %v1216
  %v1218 = vpop.f32.mrb[0].mxu0
  %1219 = vmatprep.mubr.bf16.mxu0 0
  %1220 = vmatmul.mubr.bf16.gmra.mrb[0].mxu0 %v534
  %v1221 = vpop.f32.mrb[0].mxu0
  %v1222 = vadd.f32 %v933, %v1221
  %v1223 = vpop.f32.mrb[0].mxu0
  %v1224 = vpop.f32.mrb[0].mxu0
  %v1225 = vadd.f32 %v936, %v1224
  %v1226 = vpop.f32.mrb[0].mxu0
  %1227 = vmatprep.mubr.bf16.mxu0 0
  %1228 = vmatmul.mubr.bf16.gmra.mrb[0].mxu0 %v537
  %v1229 = vpop.f32.mrb[0].mxu0
  %v1230 = vadd.f32 %v941, %v1229
  %v1231 = vpop.f32.mrb[0].mxu0
  %v1232 = vpop.f32.mrb[0].mxu0
  %v1233 = vadd.f32 %v944, %v1232
  %v1234 = vpop.f32.mrb[0].mxu0
  %1235 = vmatprep.mubr.bf16.mxu0 0
  %1236 = vmatmul.mubr.bf16.gmra.mrb[0].mxu0 %v540
  %v1237 = vpop.f32.mrb[0].mxu0
  %v1238 = vadd.f32 %v949, %v1237
  %v1239 = vpop.f32.mrb[0].mxu0
  %v1240 = vpop.f32.mrb[0].mxu0
  %v1241 = vadd.f32 %v952, %v1240
  %v1242 = vpop.f32.mrb[0].mxu0
  %1243 = vmatprep.mubr.bf16.mxu0 0
  %1244 = vmatmul.mubr.bf16.gmra.mrb[0].mxu0 %v543
  %v1245 = vpop.f32.mrb[0].mxu0
  %v1246 = vadd.f32 %v957, %v1245
  %v1247 = vpop.f32.mrb[0].mxu0
  %v1248 = vpop.f32.mrb[0].mxu0
  %v1249 = vadd.f32 %v960, %v1248
  %v1250 = vpop.f32.mrb[0].mxu0
  %1251 = vmatprep.mubr.bf16.mxu0 0
  %1252 = vmatmul.mubr.bf16.gmra.mrb[0].mxu0 %v546
  %v1253 = vpop.f32.mrb[0].mxu0
  %v1254 = vadd.f32 %v965, %v1253
  %v1255 = vpop.f32.mrb[0].mxu0
  %v1256 = vpop.f32.mrb[0].mxu0
  %v1257 = vadd.f32 %v968, %v1256
  %v1258 = vpop.f32.mrb[0].mxu0
  %1259 = vmatprep.mubr.bf16.mxu0 0
  %1260 = vmatmul.mubr.bf16.gmra.mrb[0].mxu0 %v549
  %v1261 = vpop.f32.mrb[0].mxu0
  %v1262 = vadd.f32 %v973, %v1261
  %v1263 = vpop.f32.mrb[0].mxu0
  %v1264 = vpop.f32.mrb[0].mxu0
  %v1265 = vadd.f32 %v976, %v1264
  %v1266 = vpop.f32.mrb[0].mxu0
  %1267 = vmatprep.mubr.bf16.mxu0 0
  %1268 = vmatmul.mubr.bf16.gmra.mrb[0].mxu0 %v552
  %v1269 = vpop.f32.mrb[0].mxu0
  %v1270 = vadd.f32 %v981, %v1269
  %v1271 = vpop.f32.mrb[0].mxu0
  %v1272 = vpop.f32.mrb[0].mxu0
  %v1273 = vadd.f32 %v984, %v1272
  %v1274 = vpop.f32.mrb[0].mxu0
  %1275 = vmatprep.mubr.bf16.mxu0 0
  %1276 = vmatmul.mubr.bf16.gmra.mrb[0].mxu0 %v555
  %v1277 = vpop.f32.mrb[0].mxu0
  %v1278 = vadd.f32 %v989, %v1277
  %v1279 = vpop.f32.mrb[0].mxu0
  %v1280 = vpop.f32.mrb[0].mxu0
  %v1281 = vadd.f32 %v992, %v1280
  %v1282 = vpop.f32.mrb[0].mxu0
  %1283 = vmatprep.mubr.bf16.mxu0 0
  %1284 = vmatmul.mubr.bf16.gmra.mrb[0].mxu0 %v558
  %v1285 = vpop.f32.mrb[0].mxu0
  %v1286 = vadd.f32 %v997, %v1285
  %v1287 = vpop.f32.mrb[0].mxu0
  %v1288 = vpop.f32.mrb[0].mxu0
  %v1289 = vadd.f32 %v1000, %v1288
  %v1290 = vpop.f32.mrb[0].mxu0
  %1291 = vmatprep.mubr.bf16.mxu0 0
  %1292 = vmatmul.mubr.bf16.gmra.mrb[0].mxu0 %v561
  %v1293 = vpop.f32.mrb[0].mxu0
  %v1294 = vadd.f32 %v1005, %v1293
  %v1295 = vpop.f32.mrb[0].mxu0
  %v1296 = vpop.f32.mrb[0].mxu0
  %v1297 = vadd.f32 %v1008, %v1296
  %v1298 = vpop.f32.mrb[0].mxu0
  %1299 = vmatprep.mubr.bf16.mxu0 0
  %1300 = vmatmul.mubr.bf16.gmra.mrb[0].mxu0 %v564
  %v1301 = vpop.f32.mrb[0].mxu0
  %v1302 = vadd.f32 %v1013, %v1301
  %v1303 = vpop.f32.mrb[0].mxu0
  %v1304 = vpop.f32.mrb[0].mxu0
  %v1305 = vadd.f32 %v1016, %v1304
  %v1306 = vpop.f32.mrb[0].mxu0
  %1307 = vmatprep.mubr.bf16.mxu0 0
  %1308 = vmatmul.mubr.bf16.gmra.mrb[0].mxu0 %v567
  %v1309 = vpop.f32.mrb[0].mxu0
  %v1310 = vadd.f32 %v1021, %v1309
  %v1311 = vpop.f32.mrb[0].mxu0
  %v1312 = vpop.f32.mrb[0].mxu0
  %v1313 = vadd.f32 %v1024, %v1312
  %v1314 = vpop.f32.mrb[0].mxu0
  %1315 = vmatprep.mubr.bf16.mxu0 0
  %1316 = vmatmul.mubr.bf16.gmra.mrb[0].mxu0 %v570
  %v1317 = vpop.f32.mrb[0].mxu0
  %v1318 = vadd.f32 %v1029, %v1317
  %v1319 = vpop.f32.mrb[0].mxu0
  %v1320 = vpop.f32.mrb[0].mxu0
  %v1321 = vadd.f32 %v1032, %v1320
  %v1322 = vpop.f32.mrb[0].mxu0
  %1323 = vmatprep.mubr.bf16.mxu0 0
  %1324 = vmatmul.mubr.bf16.gmra.mrb[0].mxu0 %v573
  %v1325 = vpop.f32.mrb[0].mxu0
  %v1326 = vadd.f32 %v1037, %v1325
  %v1327 = vpop.f32.mrb[0].mxu0
  %v1328 = vpop.f32.mrb[0].mxu0
  %v1329 = vadd.f32 %v1040, %v1328
  %v1330 = vpop.f32.mrb[0].mxu0
  %1331 = vmatprep.mubr.bf16.mxu0 0
  %1332 = vmatmul.mubr.bf16.gmra.mrb[0].mxu0 %v576
  %v1333 = vpop.f32.mrb[0].mxu0
  %v1334 = vadd.f32 %v1045, %v1333
  %v1335 = vpop.f32.mrb[0].mxu0
  %v1336 = vpop.f32.mrb[0].mxu0
  %v1337 = vadd.f32 %v1048, %v1336
  %v1338 = vpop.f32.mrb[0].mxu0
  %1339 = vmatprep.mubr.bf16.mxu0 0
  %1340 = vmatmul.mubr.bf16.gmra.mrb[0].mxu0 %v579
  %v1341 = vpop.f32.mrb[0].mxu0
  %v1342 = vadd.f32 %v1053, %v1341
  %v1343 = vpop.f32.mrb[0].mxu0
  %v1344 = vpop.f32.mrb[0].mxu0
  %v1345 = vadd.f32 %v1056, %v1344
  %v1346 = vpop.f32.mrb[0].mxu0
  %1347 = vmatprep.mubr.bf16.mxu0 0
  %1348 = vmatmul.mubr.bf16.gmra.mrb[0].mxu0 %v582
  %v1349 = vpop.f32.mrb[0].mxu0
  %v1350 = vadd.f32 %v1061, %v1349
  %v1351 = vpop.f32.mrb[0].mxu0
  %v1352 = vpop.f32.mrb[0].mxu0
  %v1353 = vadd.f32 %v1064, %v1352
  %v1354 = vpop.f32.mrb[0].mxu0
  %1355 = vmatprep.mubr.bf16.mxu0 0
  %1356 = vmatmul.mubr.bf16.gmra.mrb[0].mxu0 %v585
  %v1357 = vpop.f32.mrb[0].mxu0
  %v1358 = vadd.f32 %v1069, %v1357
  %v1359 = vpop.f32.mrb[0].mxu0
  %v1360 = vpop.f32.mrb[0].mxu0
  %v1361 = vadd.f32 %v1072, %v1360
  %v1362 = vpop.f32.mrb[0].mxu0
  %1363 = vmatprep.mubr.bf16.mxu0 0
  %1364 = vmatmul.mubr.bf16.gmra.mrb[0].mxu0 %v588
  %v1365 = vpop.f32.mrb[0].mxu0
  %v1366 = vadd.f32 %v1077, %v1365
  %v1367 = vpop.f32.mrb[0].mxu0
  %v1368 = vpop.f32.mrb[0].mxu0
  %v1369 = vadd.f32 %v1080, %v1368
  %v1370 = vpop.f32.mrb[0].mxu0
  %1371 = vmatprep.mubr.bf16.mxu0 0
  %1372 = vmatmul.mubr.bf16.gmra.mrb[0].mxu0 %v591
  %v1373 = vpop.f32.mrb[0].mxu0
  %v1374 = vadd.f32 %v1085, %v1373
  %v1375 = vpop.f32.mrb[0].mxu0
  %v1376 = vpop.f32.mrb[0].mxu0
  %v1377 = vadd.f32 %v1088, %v1376
  %v1378 = vpop.f32.mrb[0].mxu0
  %1379 = vmatprep.mubr.bf16.mxu0 0
  %1380 = vmatmul.mubr.bf16.gmra.mrb[0].mxu0 %v594
  %v1381 = vpop.f32.mrb[0].mxu0
  %v1382 = vadd.f32 %v1093, %v1381
  %v1383 = vpop.f32.mrb[0].mxu0
  %v1384 = vpop.f32.mrb[0].mxu0
  %v1385 = vadd.f32 %v1096, %v1384
  %v1386 = vpop.f32.mrb[0].mxu0
  %1387 = vmatprep.mubr.bf16.mxu0 0
  %1388 = vmatmul.mubr.bf16.gmra.mrb[0].mxu0 %v597
  %v1389 = vpop.f32.mrb[0].mxu0
  %v1390 = vadd.f32 %v1101, %v1389
  %v1391 = vpop.f32.mrb[0].mxu0
  %v1392 = vpop.f32.mrb[0].mxu0
  %v1393 = vadd.f32 %v1104, %v1392
  %v1394 = vpop.f32.mrb[0].mxu0
  %1395 = vmatprep.mubr.bf16.mxu0 0
  %1396 = vmatmul.mubr.bf16.gmra.mrb[0].mxu0 %v600
  %v1397 = vpop.f32.mrb[0].mxu0
  %v1398 = vadd.f32 %v1109, %v1397
  %v1399 = vpop.f32.mrb[0].mxu0
  %v1400 = vpop.f32.mrb[0].mxu0
  %v1401 = vadd.f32 %v1112, %v1400
  %v1402 = vpop.f32.mrb[0].mxu0
  %1403 = vmatprep.mubr.bf16.mxu0 0
  %1404 = vmatmul.mubr.bf16.gmra.mrb[0].mxu0 %v603
  %v1405 = vpop.f32.mrb[0].mxu0
  %v1406 = vadd.f32 %v1117, %v1405
  %v1407 = vpop.f32.mrb[0].mxu0
  %v1408 = vpop.f32.mrb[0].mxu0
  %v1409 = vadd.f32 %v1120, %v1408
  %v1410 = vpop.f32.mrb[0].mxu0
  %1411 = vmatprep.mubr.bf16.mxu0 0
  %1412 = vmatmul.mubr.bf16.gmra.mrb[0].mxu0 %v606
  %v1413 = vpop.f32.mrb[0].mxu0
  %v1414 = vadd.f32 %v1125, %v1413
  %v1415 = vpop.f32.mrb[0].mxu0
  %v1416 = vpop.f32.mrb[0].mxu0
  %v1417 = vadd.f32 %v1128, %v1416
  %v1418 = vpop.f32.mrb[0].mxu0
  %1419 = vmatprep.mubr.bf16.mxu0 0
  %1420 = vmatmul.mubr.bf16.gmra.mrb[0].mxu0 %v609
  %v1421 = vpop.f32.mrb[0].mxu0
  %v1422 = vadd.f32 %v1133, %v1421
  %v1423 = vpop.f32.mrb[0].mxu0
  %v1424 = vpop.f32.mrb[0].mxu0
  %v1425 = vadd.f32 %v1136, %v1424
  %v1426 = vpop.f32.mrb[0].mxu0
  %1427 = vdwg.mxu0
  %v1428 = vadd.f32 %v1174, %v1177
  %v1429 = vadd.f32 %v1428, %v1182
  %v1430 = vadd.f32 %v1429, %v1185
  %v1431 = vadd.f32 %v1430, %v1190
  %v1432 = vadd.f32 %v1431, %v1193
  %v1433 = vadd.f32 %v1432, %v1198
  %v1434 = vadd.f32 %v1433, %v1201
  %v1435 = vadd.f32 %v1434, %v1206
  %v1436 = vadd.f32 %v1435, %v1209
  %v1437 = vadd.f32 %v1436, %v1214
  %v1438 = vadd.f32 %v1437, %v1217
  %v1439 = vadd.f32 %v1438, %v1222
  %v1440 = vadd.f32 %v1439, %v1225
  %v1441 = vadd.f32 %v1440, %v1230
  %v1442 = vadd.f32 %v1441, %v1233
  %v1443 = vadd.f32 %v1442, %v1238
  %v1444 = vadd.f32 %v1443, %v1241
  %v1445 = vadd.f32 %v1444, %v1246
  %v1446 = vadd.f32 %v1445, %v1249
  %v1447 = vadd.f32 %v1446, %v1254
  %v1448 = vadd.f32 %v1447, %v1257
  %v1449 = vadd.f32 %v1448, %v1262
  %v1450 = vadd.f32 %v1449, %v1265
  %v1451 = vadd.f32 %v1450, %v1270
  %v1452 = vadd.f32 %v1451, %v1273
  %v1453 = vadd.f32 %v1452, %v1278
  %v1454 = vadd.f32 %v1453, %v1281
  %v1455 = vadd.f32 %v1454, %v1286
  %v1456 = vadd.f32 %v1455, %v1289
  %v1457 = vadd.f32 %v1456, %v1294
  %v1458 = vadd.f32 %v1457, %v1297
  %v1459 = vadd.f32 %v1458, %v1302
  %v1460 = vadd.f32 %v1459, %v1305
  %v1461 = vadd.f32 %v1460, %v1310
  %v1462 = vadd.f32 %v1461, %v1313
  %v1463 = vadd.f32 %v1462, %v1318
  %v1464 = vadd.f32 %v1463, %v1321
  %v1465 = vadd.f32 %v1464, %v1326
  %v1466 = vadd.f32 %v1465, %v1329
  %v1467 = vadd.f32 %v1466, %v1334
  %v1468 = vadd.f32 %v1467, %v1337
  %v1469 = vadd.f32 %v1468, %v1342
  %v1470 = vadd.f32 %v1469, %v1345
  %v1471 = vadd.f32 %v1470, %v1350
  %v1472 = vadd.f32 %v1471, %v1353
  %v1473 = vadd.f32 %v1472, %v1358
  %v1474 = vadd.f32 %v1473, %v1361
  %v1475 = vadd.f32 %v1474, %v1366
  %v1476 = vadd.f32 %v1475, %v1369
  %v1477 = vadd.f32 %v1476, %v1374
  %v1478 = vadd.f32 %v1477, %v1377
  %v1479 = vadd.f32 %v1478, %v1382
  %v1480 = vadd.f32 %v1479, %v1385
  %v1481 = vadd.f32 %v1480, %v1390
  %v1482 = vadd.f32 %v1481, %v1393
  %v1483 = vadd.f32 %v1482, %v1398
  %v1484 = vadd.f32 %v1483, %v1401
  %v1485 = vadd.f32 %v1484, %v1406
  %v1486 = vadd.f32 %v1485, %v1409
  %v1487 = vadd.f32 %v1486, %v1414
  %v1488 = vadd.f32 %v1487, %v1417
  %v1489 = vadd.f32 %v1488, %v1422
  %v1490 = vadd.f32 %v1489, %v1425
  %v1491 = vrot.slane %v1490, 4
  %v1492 = vadd.f32 %v1490, %v1491
  %v1493 = vrot.slane %v1492, 2
  %v1494 = vadd.f32 %v1492, %v1493
  %v1495 = vrot.slane %v1494, 1
  %v1496 = vadd.f32 %v1494, %v1495
  %v1497 = vmul.f32 %v1496, 0.001953125
  %v1498 = vmul.f32 %v1174, %v1174
  %v1499 = vmul.f32 %v1177, %v1177
  %v1500 = vmul.f32 %v1182, %v1182
  %v1501 = vmul.f32 %v1185, %v1185
  %v1502 = vmul.f32 %v1190, %v1190
  %v1503 = vmul.f32 %v1193, %v1193
  %v1504 = vmul.f32 %v1198, %v1198
  %v1505 = vmul.f32 %v1201, %v1201
  %v1506 = vmul.f32 %v1206, %v1206
  %v1507 = vmul.f32 %v1209, %v1209
  %v1508 = vmul.f32 %v1214, %v1214
  %v1509 = vmul.f32 %v1217, %v1217
  %v1510 = vmul.f32 %v1222, %v1222
  %v1511 = vmul.f32 %v1225, %v1225
  %v1512 = vmul.f32 %v1230, %v1230
  %v1513 = vmul.f32 %v1233, %v1233
  %v1514 = vmul.f32 %v1238, %v1238
  %v1515 = vmul.f32 %v1241, %v1241
  %v1516 = vmul.f32 %v1246, %v1246
  %v1517 = vmul.f32 %v1249, %v1249
  %v1518 = vmul.f32 %v1254, %v1254
  %v1519 = vmul.f32 %v1257, %v1257
  %v1520 = vmul.f32 %v1262, %v1262
  %v1521 = vmul.f32 %v1265, %v1265
  %v1522 = vmul.f32 %v1270, %v1270
  %v1523 = vmul.f32 %v1273, %v1273
  %v1524 = vmul.f32 %v1278, %v1278
  %v1525 = vmul.f32 %v1281, %v1281
  %v1526 = vmul.f32 %v1286, %v1286
  %v1527 = vmul.f32 %v1289, %v1289
  %v1528 = vmul.f32 %v1294, %v1294
  %v1529 = vmul.f32 %v1297, %v1297
  %v1530 = vmul.f32 %v1302, %v1302
  %v1531 = vmul.f32 %v1305, %v1305
  %v1532 = vmul.f32 %v1310, %v1310
  %v1533 = vmul.f32 %v1313, %v1313
  %v1534 = vmul.f32 %v1318, %v1318
  %v1535 = vmul.f32 %v1321, %v1321
  %v1536 = vmul.f32 %v1326, %v1326
  %v1537 = vmul.f32 %v1329, %v1329
  %v1538 = vmul.f32 %v1334, %v1334
  %v1539 = vmul.f32 %v1337, %v1337
  %v1540 = vmul.f32 %v1342, %v1342
  %v1541 = vmul.f32 %v1345, %v1345
  %v1542 = vmul.f32 %v1350, %v1350
  %v1543 = vmul.f32 %v1353, %v1353
  %v1544 = vmul.f32 %v1358, %v1358
  %v1545 = vmul.f32 %v1361, %v1361
  %v1546 = vmul.f32 %v1366, %v1366
  %v1547 = vmul.f32 %v1369, %v1369
  %v1548 = vmul.f32 %v1374, %v1374
  %v1549 = vmul.f32 %v1377, %v1377
  %v1550 = vmul.f32 %v1382, %v1382
  %v1551 = vmul.f32 %v1385, %v1385
  %v1552 = vmul.f32 %v1390, %v1390
  %v1553 = vmul.f32 %v1393, %v1393
  %v1554 = vmul.f32 %v1398, %v1398
  %v1555 = vmul.f32 %v1401, %v1401
  %v1556 = vmul.f32 %v1406, %v1406
  %v1557 = vmul.f32 %v1409, %v1409
  %v1558 = vmul.f32 %v1414, %v1414
  %v1559 = vmul.f32 %v1417, %v1417
  %v1560 = vmul.f32 %v1422, %v1422
  %v1561 = vmul.f32 %v1425, %v1425
  %v1562 = vadd.f32 %v1498, %v1499
  %v1563 = vadd.f32 %v1562, %v1500
  %v1564 = vadd.f32 %v1563, %v1501
  %v1565 = vadd.f32 %v1564, %v1502
  %v1566 = vadd.f32 %v1565, %v1503
  %v1567 = vadd.f32 %v1566, %v1504
  %v1568 = vadd.f32 %v1567, %v1505
  %v1569 = vadd.f32 %v1568, %v1506
  %v1570 = vadd.f32 %v1569, %v1507
  %v1571 = vadd.f32 %v1570, %v1508
  %v1572 = vadd.f32 %v1571, %v1509
  %v1573 = vadd.f32 %v1572, %v1510
  %v1574 = vadd.f32 %v1573, %v1511
  %v1575 = vadd.f32 %v1574, %v1512
  %v1576 = vadd.f32 %v1575, %v1513
  %v1577 = vadd.f32 %v1576, %v1514
  %v1578 = vadd.f32 %v1577, %v1515
  %v1579 = vadd.f32 %v1578, %v1516
  %v1580 = vadd.f32 %v1579, %v1517
  %v1581 = vadd.f32 %v1580, %v1518
  %v1582 = vadd.f32 %v1581, %v1519
  %v1583 = vadd.f32 %v1582, %v1520
  %v1584 = vadd.f32 %v1583, %v1521
  %v1585 = vadd.f32 %v1584, %v1522
  %v1586 = vadd.f32 %v1585, %v1523
  %v1587 = vadd.f32 %v1586, %v1524
  %v1588 = vadd.f32 %v1587, %v1525
  %v1589 = vadd.f32 %v1588, %v1526
  %v1590 = vadd.f32 %v1589, %v1527
  %v1591 = vadd.f32 %v1590, %v1528
  %v1592 = vadd.f32 %v1591, %v1529
  %v1593 = vadd.f32 %v1592, %v1530
  %v1594 = vadd.f32 %v1593, %v1531
  %v1595 = vadd.f32 %v1594, %v1532
  %v1596 = vadd.f32 %v1595, %v1533
  %v1597 = vadd.f32 %v1596, %v1534
  %v1598 = vadd.f32 %v1597, %v1535
  %v1599 = vadd.f32 %v1598, %v1536
  %v1600 = vadd.f32 %v1599, %v1537
  %v1601 = vadd.f32 %v1600, %v1538
  %v1602 = vadd.f32 %v1601, %v1539
  %v1603 = vadd.f32 %v1602, %v1540
  %v1604 = vadd.f32 %v1603, %v1541
  %v1605 = vadd.f32 %v1604, %v1542
  %v1606 = vadd.f32 %v1605, %v1543
  %v1607 = vadd.f32 %v1606, %v1544
  %v1608 = vadd.f32 %v1607, %v1545
  %v1609 = vadd.f32 %v1608, %v1546
  %v1610 = vadd.f32 %v1609, %v1547
  %v1611 = vadd.f32 %v1610, %v1548
  %v1612 = vadd.f32 %v1611, %v1549
  %v1613 = vadd.f32 %v1612, %v1550
  %v1614 = vadd.f32 %v1613, %v1551
  %v1615 = vadd.f32 %v1614, %v1552
  %v1616 = vadd.f32 %v1615, %v1553
  %v1617 = vadd.f32 %v1616, %v1554
  %v1618 = vadd.f32 %v1617, %v1555
  %v1619 = vadd.f32 %v1618, %v1556
  %v1620 = vadd.f32 %v1619, %v1557
  %v1621 = vadd.f32 %v1620, %v1558
  %v1622 = vadd.f32 %v1621, %v1559
  %v1623 = vadd.f32 %v1622, %v1560
  %v1624 = vadd.f32 %v1623, %v1561
  %v1625 = vrot.slane %v1624, 4
  %v1626 = vadd.f32 %v1624, %v1625
  %v1627 = vrot.slane %v1626, 2
  %v1628 = vadd.f32 %v1626, %v1627
  %v1629 = vrot.slane %v1628, 1
  %v1630 = vadd.f32 %v1628, %v1629
  %v1631 = vmul.f32 %v1630, 0.001953125
  %v1632 = vmul.f32 %v1497, %v1497
  %v1633 = vsub.f32 %v1631, %v1632
  %v1634 = vmax.f32 %v1633, 0.0
  %v1635 = vld [vmem:[%s2] sm:$0x1]
  %v1636 = vadd.f32 %v1634, 1e-05
  %v1637 = vrsqrt.pop %v1636
  %v1638 = vmul.f32 %v1635, %v1637
  %v1639 = vld [vmem:[%s3] sm:$0x1]
  %v1640 = vmul.f32 %v1497, %v1638
  %v1641 = vsub.f32 %v1639, %v1640
  %v1643 = vlaneseq
  %v1644 = vshrl.u32 %v1643, 7
  %v1645 = vsub.s32 0, %v1644
  %v1646 = vrot.slane %v1638, %v1645
  %v1648 = vmul.f32 %v1174, %v1646
  %v1649 = vmul.f32 %v1177, %v1646
  %v1650 = vmul.f32 %v1182, %v1646
  %v1651 = vmul.f32 %v1185, %v1646
  %v1652 = vmul.f32 %v1190, %v1646
  %v1653 = vmul.f32 %v1193, %v1646
  %v1654 = vmul.f32 %v1198, %v1646
  %v1655 = vmul.f32 %v1201, %v1646
  %v1656 = vmul.f32 %v1206, %v1646
  %v1657 = vmul.f32 %v1209, %v1646
  %v1658 = vmul.f32 %v1214, %v1646
  %v1659 = vmul.f32 %v1217, %v1646
  %v1660 = vmul.f32 %v1222, %v1646
  %v1661 = vmul.f32 %v1225, %v1646
  %v1662 = vmul.f32 %v1230, %v1646
  %v1663 = vmul.f32 %v1233, %v1646
  %v1664 = vmul.f32 %v1238, %v1646
  %v1665 = vmul.f32 %v1241, %v1646
  %v1666 = vmul.f32 %v1246, %v1646
  %v1667 = vmul.f32 %v1249, %v1646
  %v1668 = vmul.f32 %v1254, %v1646
  %v1669 = vmul.f32 %v1257, %v1646
  %v1670 = vmul.f32 %v1262, %v1646
  %v1671 = vmul.f32 %v1265, %v1646
  %v1672 = vmul.f32 %v1270, %v1646
  %v1673 = vmul.f32 %v1273, %v1646
  %v1674 = vmul.f32 %v1278, %v1646
  %v1675 = vmul.f32 %v1281, %v1646
  %v1676 = vmul.f32 %v1286, %v1646
  %v1677 = vmul.f32 %v1289, %v1646
  %v1678 = vmul.f32 %v1294, %v1646
  %v1679 = vmul.f32 %v1297, %v1646
  %v1680 = vmul.f32 %v1302, %v1646
  %v1681 = vmul.f32 %v1305, %v1646
  %v1682 = vmul.f32 %v1310, %v1646
  %v1683 = vmul.f32 %v1313, %v1646
  %v1684 = vmul.f32 %v1318, %v1646
  %v1685 = vmul.f32 %v1321, %v1646
  %v1686 = vmul.f32 %v1326, %v1646
  %v1687 = vmul.f32 %v1329, %v1646
  %v1688 = vmul.f32 %v1334, %v1646
  %v1689 = vmul.f32 %v1337, %v1646
  %v1690 = vmul.f32 %v1342, %v1646
  %v1691 = vmul.f32 %v1345, %v1646
  %v1692 = vmul.f32 %v1350, %v1646
  %v1693 = vmul.f32 %v1353, %v1646
  %v1694 = vmul.f32 %v1358, %v1646
  %v1695 = vmul.f32 %v1361, %v1646
  %v1696 = vmul.f32 %v1366, %v1646
  %v1697 = vmul.f32 %v1369, %v1646
  %v1698 = vmul.f32 %v1374, %v1646
  %v1699 = vmul.f32 %v1377, %v1646
  %v1700 = vmul.f32 %v1382, %v1646
  %v1701 = vmul.f32 %v1385, %v1646
  %v1702 = vmul.f32 %v1390, %v1646
  %v1703 = vmul.f32 %v1393, %v1646
  %v1704 = vmul.f32 %v1398, %v1646
  %v1705 = vmul.f32 %v1401, %v1646
  %v1706 = vmul.f32 %v1406, %v1646
  %v1707 = vmul.f32 %v1409, %v1646
  %v1708 = vmul.f32 %v1414, %v1646
  %v1709 = vmul.f32 %v1417, %v1646
  %v1710 = vmul.f32 %v1422, %v1646
  %v1711 = vmul.f32 %v1425, %v1646
  %v1713 = vlaneseq
  %v1714 = vshrl.u32 %v1713, 7
  %v1715 = vsub.s32 0, %v1714
  %v1716 = vrot.slane %v1641, %v1715
  %v1718 = vadd.f32 %v1648, %v1716
  %v1719 = vadd.f32 %v1649, %v1716
  %v1720 = vadd.f32 %v1650, %v1716
  %v1721 = vadd.f32 %v1651, %v1716
  %v1722 = vadd.f32 %v1652, %v1716
  %v1723 = vadd.f32 %v1653, %v1716
  %v1724 = vadd.f32 %v1654, %v1716
  %v1725 = vadd.f32 %v1655, %v1716
  %v1726 = vadd.f32 %v1656, %v1716
  %v1727 = vadd.f32 %v1657, %v1716
  %v1728 = vadd.f32 %v1658, %v1716
  %v1729 = vadd.f32 %v1659, %v1716
  %v1730 = vadd.f32 %v1660, %v1716
  %v1731 = vadd.f32 %v1661, %v1716
  %v1732 = vadd.f32 %v1662, %v1716
  %v1733 = vadd.f32 %v1663, %v1716
  %v1734 = vadd.f32 %v1664, %v1716
  %v1735 = vadd.f32 %v1665, %v1716
  %v1736 = vadd.f32 %v1666, %v1716
  %v1737 = vadd.f32 %v1667, %v1716
  %v1738 = vadd.f32 %v1668, %v1716
  %v1739 = vadd.f32 %v1669, %v1716
  %v1740 = vadd.f32 %v1670, %v1716
  %v1741 = vadd.f32 %v1671, %v1716
  %v1742 = vadd.f32 %v1672, %v1716
  %v1743 = vadd.f32 %v1673, %v1716
  %v1744 = vadd.f32 %v1674, %v1716
  %v1745 = vadd.f32 %v1675, %v1716
  %v1746 = vadd.f32 %v1676, %v1716
  %v1747 = vadd.f32 %v1677, %v1716
  %v1748 = vadd.f32 %v1678, %v1716
  %v1749 = vadd.f32 %v1679, %v1716
  %v1750 = vadd.f32 %v1680, %v1716
  %v1751 = vadd.f32 %v1681, %v1716
  %v1752 = vadd.f32 %v1682, %v1716
  %v1753 = vadd.f32 %v1683, %v1716
  %v1754 = vadd.f32 %v1684, %v1716
  %v1755 = vadd.f32 %v1685, %v1716
  %v1756 = vadd.f32 %v1686, %v1716
  %v1757 = vadd.f32 %v1687, %v1716
  %v1758 = vadd.f32 %v1688, %v1716
  %v1759 = vadd.f32 %v1689, %v1716
  %v1760 = vadd.f32 %v1690, %v1716
  %v1761 = vadd.f32 %v1691, %v1716
  %v1762 = vadd.f32 %v1692, %v1716
  %v1763 = vadd.f32 %v1693, %v1716
  %v1764 = vadd.f32 %v1694, %v1716
  %v1765 = vadd.f32 %v1695, %v1716
  %v1766 = vadd.f32 %v1696, %v1716
  %v1767 = vadd.f32 %v1697, %v1716
  %v1768 = vadd.f32 %v1698, %v1716
  %v1769 = vadd.f32 %v1699, %v1716
  %v1770 = vadd.f32 %v1700, %v1716
  %v1771 = vadd.f32 %v1701, %v1716
  %v1772 = vadd.f32 %v1702, %v1716
  %v1773 = vadd.f32 %v1703, %v1716
  %v1774 = vadd.f32 %v1704, %v1716
  %v1775 = vadd.f32 %v1705, %v1716
  %v1776 = vadd.f32 %v1706, %v1716
  %v1777 = vadd.f32 %v1707, %v1716
  %v1778 = vadd.f32 %v1708, %v1716
  %v1779 = vadd.f32 %v1709, %v1716
  %v1780 = vadd.f32 %v1710, %v1716
  %v1781 = vadd.f32 %v1711, %v1716
  %vm1782 = vcmp.gt.f32.partialorder %v1718, 0.0
  %vm1783 = vcmp.gt.f32.partialorder %v1719, 0.0
  %vm1784 = vcmp.gt.f32.partialorder %v1720, 0.0
  %vm1785 = vcmp.gt.f32.partialorder %v1721, 0.0
  %vm1786 = vcmp.gt.f32.partialorder %v1722, 0.0
  %vm1787 = vcmp.gt.f32.partialorder %v1723, 0.0
  %vm1788 = vcmp.gt.f32.partialorder %v1724, 0.0
  %vm1789 = vcmp.gt.f32.partialorder %v1725, 0.0
  %vm1790 = vcmp.gt.f32.partialorder %v1726, 0.0
  %vm1791 = vcmp.gt.f32.partialorder %v1727, 0.0
  %vm1792 = vcmp.gt.f32.partialorder %v1728, 0.0
  %vm1793 = vcmp.gt.f32.partialorder %v1729, 0.0
  %vm1794 = vcmp.gt.f32.partialorder %v1730, 0.0
  %vm1795 = vcmp.gt.f32.partialorder %v1731, 0.0
  %vm1796 = vcmp.gt.f32.partialorder %v1732, 0.0
  %vm1797 = vcmp.gt.f32.partialorder %v1733, 0.0
  %vm1798 = vcmp.gt.f32.partialorder %v1734, 0.0
  %vm1799 = vcmp.gt.f32.partialorder %v1735, 0.0
  %vm1800 = vcmp.gt.f32.partialorder %v1736, 0.0
  %vm1801 = vcmp.gt.f32.partialorder %v1737, 0.0
  %vm1802 = vcmp.gt.f32.partialorder %v1738, 0.0
  %vm1803 = vcmp.gt.f32.partialorder %v1739, 0.0
  %vm1804 = vcmp.gt.f32.partialorder %v1740, 0.0
  %vm1805 = vcmp.gt.f32.partialorder %v1741, 0.0
  %vm1806 = vcmp.gt.f32.partialorder %v1742, 0.0
  %vm1807 = vcmp.gt.f32.partialorder %v1743, 0.0
  %vm1808 = vcmp.gt.f32.partialorder %v1744, 0.0
  %vm1809 = vcmp.gt.f32.partialorder %v1745, 0.0
  %vm1810 = vcmp.gt.f32.partialorder %v1746, 0.0
  %vm1811 = vcmp.gt.f32.partialorder %v1747, 0.0
  %vm1812 = vcmp.gt.f32.partialorder %v1748, 0.0
  %vm1813 = vcmp.gt.f32.partialorder %v1749, 0.0
  %vm1814 = vcmp.gt.f32.partialorder %v1750, 0.0
  %vm1815 = vcmp.gt.f32.partialorder %v1751, 0.0
  %vm1816 = vcmp.gt.f32.partialorder %v1752, 0.0
  %vm1817 = vcmp.gt.f32.partialorder %v1753, 0.0
  %vm1818 = vcmp.gt.f32.partialorder %v1754, 0.0
  %vm1819 = vcmp.gt.f32.partialorder %v1755, 0.0
  %vm1820 = vcmp.gt.f32.partialorder %v1756, 0.0
  %vm1821 = vcmp.gt.f32.partialorder %v1757, 0.0
  %vm1822 = vcmp.gt.f32.partialorder %v1758, 0.0
  %vm1823 = vcmp.gt.f32.partialorder %v1759, 0.0
  %vm1824 = vcmp.gt.f32.partialorder %v1760, 0.0
  %vm1825 = vcmp.gt.f32.partialorder %v1761, 0.0
  %vm1826 = vcmp.gt.f32.partialorder %v1762, 0.0
  %vm1827 = vcmp.gt.f32.partialorder %v1763, 0.0
  %vm1828 = vcmp.gt.f32.partialorder %v1764, 0.0
  %vm1829 = vcmp.gt.f32.partialorder %v1765, 0.0
  %vm1830 = vcmp.gt.f32.partialorder %v1766, 0.0
  %vm1831 = vcmp.gt.f32.partialorder %v1767, 0.0
  %vm1832 = vcmp.gt.f32.partialorder %v1768, 0.0
  %vm1833 = vcmp.gt.f32.partialorder %v1769, 0.0
  %vm1834 = vcmp.gt.f32.partialorder %v1770, 0.0
  %vm1835 = vcmp.gt.f32.partialorder %v1771, 0.0
  %vm1836 = vcmp.gt.f32.partialorder %v1772, 0.0
  %vm1837 = vcmp.gt.f32.partialorder %v1773, 0.0
  %vm1838 = vcmp.gt.f32.partialorder %v1774, 0.0
  %vm1839 = vcmp.gt.f32.partialorder %v1775, 0.0
  %vm1840 = vcmp.gt.f32.partialorder %v1776, 0.0
  %vm1841 = vcmp.gt.f32.partialorder %v1777, 0.0
  %vm1842 = vcmp.gt.f32.partialorder %v1778, 0.0
  %vm1843 = vcmp.gt.f32.partialorder %v1779, 0.0
  %vm1844 = vcmp.gt.f32.partialorder %v1780, 0.0
  %vm1845 = vcmp.gt.f32.partialorder %v1781, 0.0
  %v1846 = vmul.f32 %v1718, 0.1
  %v1847 = vmul.f32 %v1719, 0.1
  %v1848 = vmul.f32 %v1720, 0.1
  %v1849 = vmul.f32 %v1721, 0.1
  %v1850 = vmul.f32 %v1722, 0.1
  %v1851 = vmul.f32 %v1723, 0.1
  %v1852 = vmul.f32 %v1724, 0.1
  %v1853 = vmul.f32 %v1725, 0.1
  %v1854 = vmul.f32 %v1726, 0.1
  %v1855 = vmul.f32 %v1727, 0.1
  %v1856 = vmul.f32 %v1728, 0.1
  %v1857 = vmul.f32 %v1729, 0.1
  %v1858 = vmul.f32 %v1730, 0.1
  %v1859 = vmul.f32 %v1731, 0.1
  %v1860 = vmul.f32 %v1732, 0.1
  %v1861 = vmul.f32 %v1733, 0.1
  %v1862 = vmul.f32 %v1734, 0.1
  %v1863 = vmul.f32 %v1735, 0.1
  %v1864 = vmul.f32 %v1736, 0.1
  %v1865 = vmul.f32 %v1737, 0.1
  %v1866 = vmul.f32 %v1738, 0.1
  %v1867 = vmul.f32 %v1739, 0.1
  %v1868 = vmul.f32 %v1740, 0.1
  %v1869 = vmul.f32 %v1741, 0.1
  %v1870 = vmul.f32 %v1742, 0.1
  %v1871 = vmul.f32 %v1743, 0.1
  %v1872 = vmul.f32 %v1744, 0.1
  %v1873 = vmul.f32 %v1745, 0.1
  %v1874 = vmul.f32 %v1746, 0.1
  %v1875 = vmul.f32 %v1747, 0.1
  %v1876 = vmul.f32 %v1748, 0.1
  %v1877 = vmul.f32 %v1749, 0.1
  %v1878 = vmul.f32 %v1750, 0.1
  %v1879 = vmul.f32 %v1751, 0.1
  %v1880 = vmul.f32 %v1752, 0.1
  %v1881 = vmul.f32 %v1753, 0.1
  %v1882 = vmul.f32 %v1754, 0.1
  %v1883 = vmul.f32 %v1755, 0.1
  %v1884 = vmul.f32 %v1756, 0.1
  %v1885 = vmul.f32 %v1757, 0.1
  %v1886 = vmul.f32 %v1758, 0.1
  %v1887 = vmul.f32 %v1759, 0.1
  %v1888 = vmul.f32 %v1760, 0.1
  %v1889 = vmul.f32 %v1761, 0.1
  %v1890 = vmul.f32 %v1762, 0.1
  %v1891 = vmul.f32 %v1763, 0.1
  %v1892 = vmul.f32 %v1764, 0.1
  %v1893 = vmul.f32 %v1765, 0.1
  %v1894 = vmul.f32 %v1766, 0.1
  %v1895 = vmul.f32 %v1767, 0.1
  %v1896 = vmul.f32 %v1768, 0.1
  %v1897 = vmul.f32 %v1769, 0.1
  %v1898 = vmul.f32 %v1770, 0.1
  %v1899 = vmul.f32 %v1771, 0.1
  %v1900 = vmul.f32 %v1772, 0.1
  %v1901 = vmul.f32 %v1773, 0.1
  %v1902 = vmul.f32 %v1774, 0.1
  %v1903 = vmul.f32 %v1775, 0.1
  %v1904 = vmul.f32 %v1776, 0.1
  %v1905 = vmul.f32 %v1777, 0.1
  %v1906 = vmul.f32 %v1778, 0.1
  %v1907 = vmul.f32 %v1779, 0.1
  %v1908 = vmul.f32 %v1780, 0.1
  %v1909 = vmul.f32 %v1781, 0.1
  %v1910 = vsel %vm1782, %v1718, %v1846
  %v1911 = vsel %vm1783, %v1719, %v1847
  %v1912 = vsel %vm1784, %v1720, %v1848
  %v1913 = vsel %vm1785, %v1721, %v1849
  %v1914 = vsel %vm1786, %v1722, %v1850
  %v1915 = vsel %vm1787, %v1723, %v1851
  %v1916 = vsel %vm1788, %v1724, %v1852
  %v1917 = vsel %vm1789, %v1725, %v1853
  %v1918 = vsel %vm1790, %v1726, %v1854
  %v1919 = vsel %vm1791, %v1727, %v1855
  %v1920 = vsel %vm1792, %v1728, %v1856
  %v1921 = vsel %vm1793, %v1729, %v1857
  %v1922 = vsel %vm1794, %v1730, %v1858
  %v1923 = vsel %vm1795, %v1731, %v1859
  %v1924 = vsel %vm1796, %v1732, %v1860
  %v1925 = vsel %vm1797, %v1733, %v1861
  %v1926 = vsel %vm1798, %v1734, %v1862
  %v1927 = vsel %vm1799, %v1735, %v1863
  %v1928 = vsel %vm1800, %v1736, %v1864
  %v1929 = vsel %vm1801, %v1737, %v1865
  %v1930 = vsel %vm1802, %v1738, %v1866
  %v1931 = vsel %vm1803, %v1739, %v1867
  %v1932 = vsel %vm1804, %v1740, %v1868
  %v1933 = vsel %vm1805, %v1741, %v1869
  %v1934 = vsel %vm1806, %v1742, %v1870
  %v1935 = vsel %vm1807, %v1743, %v1871
  %v1936 = vsel %vm1808, %v1744, %v1872
  %v1937 = vsel %vm1809, %v1745, %v1873
  %v1938 = vsel %vm1810, %v1746, %v1874
  %v1939 = vsel %vm1811, %v1747, %v1875
  %v1940 = vsel %vm1812, %v1748, %v1876
  %v1941 = vsel %vm1813, %v1749, %v1877
  %v1942 = vsel %vm1814, %v1750, %v1878
  %v1943 = vsel %vm1815, %v1751, %v1879
  %v1944 = vsel %vm1816, %v1752, %v1880
  %v1945 = vsel %vm1817, %v1753, %v1881
  %v1946 = vsel %vm1818, %v1754, %v1882
  %v1947 = vsel %vm1819, %v1755, %v1883
  %v1948 = vsel %vm1820, %v1756, %v1884
  %v1949 = vsel %vm1821, %v1757, %v1885
  %v1950 = vsel %vm1822, %v1758, %v1886
  %v1951 = vsel %vm1823, %v1759, %v1887
  %v1952 = vsel %vm1824, %v1760, %v1888
  %v1953 = vsel %vm1825, %v1761, %v1889
  %v1954 = vsel %vm1826, %v1762, %v1890
  %v1955 = vsel %vm1827, %v1763, %v1891
  %v1956 = vsel %vm1828, %v1764, %v1892
  %v1957 = vsel %vm1829, %v1765, %v1893
  %v1958 = vsel %vm1830, %v1766, %v1894
  %v1959 = vsel %vm1831, %v1767, %v1895
  %v1960 = vsel %vm1832, %v1768, %v1896
  %v1961 = vsel %vm1833, %v1769, %v1897
  %v1962 = vsel %vm1834, %v1770, %v1898
  %v1963 = vsel %vm1835, %v1771, %v1899
  %v1964 = vsel %vm1836, %v1772, %v1900
  %v1965 = vsel %vm1837, %v1773, %v1901
  %v1966 = vsel %vm1838, %v1774, %v1902
  %v1967 = vsel %vm1839, %v1775, %v1903
  %v1968 = vsel %vm1840, %v1776, %v1904
  %v1969 = vsel %vm1841, %v1777, %v1905
  %v1970 = vsel %vm1842, %v1778, %v1906
  %v1971 = vsel %vm1843, %v1779, %v1907
  %v1972 = vsel %vm1844, %v1780, %v1908
  %v1973 = vsel %vm1845, %v1781, %v1909
  %1974 = vst [vmem:[%s4] sm:$0xff] %v1910
  %1975 = vst [vmem:[%s4 + $0x8] sm:$0xff] %v1911
  %1976 = vst [vmem:[%s4 + $0x10] sm:$0xff] %v1912
  %1977 = vst [vmem:[%s4 + $0x18] sm:$0xff] %v1913
  %1978 = vst [vmem:[%s4 + $0x20] sm:$0xff] %v1914
  %1979 = vst [vmem:[%s4 + $0x28] sm:$0xff] %v1915
  %1980 = vst [vmem:[%s4 + $0x30] sm:$0xff] %v1916
  %1981 = vst [vmem:[%s4 + $0x38] sm:$0xff] %v1917
  %1982 = vst [vmem:[%s4 + $0x40] sm:$0xff] %v1918
  %1983 = vst [vmem:[%s4 + $0x48] sm:$0xff] %v1919
  %1984 = vst [vmem:[%s4 + $0x50] sm:$0xff] %v1920
  %1985 = vst [vmem:[%s4 + $0x58] sm:$0xff] %v1921
  %1986 = vst [vmem:[%s4 + $0x60] sm:$0xff] %v1922
  %1987 = vst [vmem:[%s4 + $0x68] sm:$0xff] %v1923
  %1988 = vst [vmem:[%s4 + $0x70] sm:$0xff] %v1924
  %1989 = vst [vmem:[%s4 + $0x78] sm:$0xff] %v1925
  %1990 = vst [vmem:[%s4 + $0x80] sm:$0xff] %v1926
  %1991 = vst [vmem:[%s4 + $0x88] sm:$0xff] %v1927
  %1992 = vst [vmem:[%s4 + $0x90] sm:$0xff] %v1928
  %1993 = vst [vmem:[%s4 + $0x98] sm:$0xff] %v1929
  %1994 = vst [vmem:[%s4 + $0xa0] sm:$0xff] %v1930
  %1995 = vst [vmem:[%s4 + $0xa8] sm:$0xff] %v1931
  %1996 = vst [vmem:[%s4 + $0xb0] sm:$0xff] %v1932
  %1997 = vst [vmem:[%s4 + $0xb8] sm:$0xff] %v1933
  %1998 = vst [vmem:[%s4 + $0xc0] sm:$0xff] %v1934
  %1999 = vst [vmem:[%s4 + $0xc8] sm:$0xff] %v1935
  %2000 = vst [vmem:[%s4 + $0xd0] sm:$0xff] %v1936
  %2001 = vst [vmem:[%s4 + $0xd8] sm:$0xff] %v1937
  %2002 = vst [vmem:[%s4 + $0xe0] sm:$0xff] %v1938
  %2003 = vst [vmem:[%s4 + $0xe8] sm:$0xff] %v1939
  %2004 = vst [vmem:[%s4 + $0xf0] sm:$0xff] %v1940
  %2005 = vst [vmem:[%s4 + $0xf8] sm:$0xff] %v1941
  %2006 = vst [vmem:[%s4 + $0x100] sm:$0xff] %v1942
  %2007 = vst [vmem:[%s4 + $0x108] sm:$0xff] %v1943
  %2008 = vst [vmem:[%s4 + $0x110] sm:$0xff] %v1944
  %2009 = vst [vmem:[%s4 + $0x118] sm:$0xff] %v1945
  %2010 = vst [vmem:[%s4 + $0x120] sm:$0xff] %v1946
  %2011 = vst [vmem:[%s4 + $0x128] sm:$0xff] %v1947
  %2012 = vst [vmem:[%s4 + $0x130] sm:$0xff] %v1948
  %2013 = vst [vmem:[%s4 + $0x138] sm:$0xff] %v1949
  %2014 = vst [vmem:[%s4 + $0x140] sm:$0xff] %v1950
  %2015 = vst [vmem:[%s4 + $0x148] sm:$0xff] %v1951
  %2016 = vst [vmem:[%s4 + $0x150] sm:$0xff] %v1952
  %2017 = vst [vmem:[%s4 + $0x158] sm:$0xff] %v1953
  %2018 = vst [vmem:[%s4 + $0x160] sm:$0xff] %v1954
  %2019 = vst [vmem:[%s4 + $0x168] sm:$0xff] %v1955
  %2020 = vst [vmem:[%s4 + $0x170] sm:$0xff] %v1956
  %2021 = vst [vmem:[%s4 + $0x178] sm:$0xff] %v1957
  %2022 = vst [vmem:[%s4 + $0x180] sm:$0xff] %v1958
  %2023 = vst [vmem:[%s4 + $0x188] sm:$0xff] %v1959
  %2024 = vst [vmem:[%s4 + $0x190] sm:$0xff] %v1960
  %2025 = vst [vmem:[%s4 + $0x198] sm:$0xff] %v1961
  %2026 = vst [vmem:[%s4 + $0x1a0] sm:$0xff] %v1962
  %2027 = vst [vmem:[%s4 + $0x1a8] sm:$0xff] %v1963
  %2028 = vst [vmem:[%s4 + $0x1b0] sm:$0xff] %v1964
  %2029 = vst [vmem:[%s4 + $0x1b8] sm:$0xff] %v1965
  %2030 = vst [vmem:[%s4 + $0x1c0] sm:$0xff] %v1966
  %2031 = vst [vmem:[%s4 + $0x1c8] sm:$0xff] %v1967
  %2032 = vst [vmem:[%s4 + $0x1d0] sm:$0xff] %v1968
  %2033 = vst [vmem:[%s4 + $0x1d8] sm:$0xff] %v1969
  %2034 = vst [vmem:[%s4 + $0x1e0] sm:$0xff] %v1970
  %2035 = vst [vmem:[%s4 + $0x1e8] sm:$0xff] %v1971
  %2036 = vst [vmem:[%s4 + $0x1f0] sm:$0xff] %v1972
  %2037 = vst [vmem:[%s4 + $0x1f8] sm:$0xff] %v1973
  // Predicated region
  $region18: #{darknet_forward.16} parent=0 // pred_check
    _
  $region19: #{darknet_forward.16} parent=0 // pred_check_branch
    %2039 = sbr.rel (0) target = $region21
  $region20: #{darknet_forward.16} parent=0 // pred_region
    _
  $region21: #{darknet_forward.16} parent=0 // pred_fallthru
    _
  // Predicated region
  $region22: #{darknet_forward.16} parent=0 // pred_check
    _
  $region23: #{darknet_forward.16} parent=0 // pred_check_branch
    %2041 = sbr.rel (0) target = $region25
  $region24: #{darknet_forward.16} parent=0 // pred_region
    _
  $region25: #{darknet_forward.16} parent=0 // pred_fallthru
    _

</llo_original>
